<compile_context>
chip_gen: v7x
topology: tpu7x:2x2x1
jax: 0.10.0
libtpu: 0.0.40
codegen_flags: <defaults>
</compile_context>

<pallas_src>
import functools

import jax
import jax.numpy as jnp
import numpy as np
from jax.experimental import pallas as pl
from jax.experimental.pallas import tpu as pltpu

IMAGE_SIZE = 32          # small, module-consistent stand-in for image_size=128
NUM_CLASSES = 6
BATCH = 2
FC_INPUT_DIM = 64 * (IMAGE_SIZE // 8) * (IMAGE_SIZE // 8)
COUT_PAD = 128           # conv output channels / fc widths padded to 128 lanes


def _round_up(x, m):
    return (x + m - 1) // m * m


# ---------------------------------------------------------------------------
# Pallas kernels
# ---------------------------------------------------------------------------
def _conv3x3_relu_pool_kernel(x_ref, w_ref, b_ref, o_ref, *, w2, m_out):
    """Fused conv3x3(pad=1) + bias + ReLU + maxpool2x2 on a space-to-depth input.

    x: (m_in, K)    bf16  flat s2d activation; row = n*H2*W2 + hh*W2 + ww, K = 4*Cin_pad
    w: (4, K, 512)  bf16  per-2x2-tap weights; the 128-lane blocks are the 4 pool phases
    b: (1, 128)     f32
    o: (m_out, 128) bf16  pooled output on the same (padded) s2d grid

    For each output row the 4 taps are rows at offsets {0, 1, W2, W2+1} (contiguous
    slices -> no gather / im2col).  Each tap is ONE matmul whose 512 output lanes hold
    all 4 pooling phases; the pool is a VPU max over vreg-aligned lane blocks, then
    bias + ReLU (valid: bias is phase-invariant and ReLU is monotone).
    """
    offs = (0, 1, w2, w2 + 1)
    acc = jnp.dot(x_ref[pl.ds(offs[0], m_out), :], w_ref[0],
                  preferred_element_type=jnp.float32)
    for t in range(1, 4):
        acc = acc + jnp.dot(x_ref[pl.ds(offs[t], m_out), :], w_ref[t],
                            preferred_element_type=jnp.float32)
    ph = jnp.maximum(
        jnp.maximum(acc[:, 0:COUT_PAD], acc[:, COUT_PAD:2 * COUT_PAD]),
        jnp.maximum(acc[:, 2 * COUT_PAD:3 * COUT_PAD], acc[:, 3 * COUT_PAD:4 * COUT_PAD]))
    o_ref[...] = jnp.maximum(ph + b_ref[...], 0.0).astype(o_ref.dtype)


def _mlp_kernel(x_ref, w1_ref, b1_ref, w2_ref, b2_ref, o_ref):
    """Fused classifier: (relu(x @ w1 + b1)) @ w2 + b2 ; bf16 operands, f32 acc."""
    h = jnp.dot(x_ref[...], w1_ref[...], preferred_element_type=jnp.float32)
    h = jnp.maximum(h + b1_ref[...], 0.0).astype(x_ref.dtype)
    y = jnp.dot(h, w2_ref[...], preferred_element_type=jnp.float32) + b2_ref[...]
    o_ref[...] = y.astype(o_ref.dtype)


# ---------------------------------------------------------------------------
# Layer wrappers (thin glue, fused under the single jit around the forward)
# ---------------------------------------------------------------------------
def conv3x3_relu_pool(x_nhwc, w_packed, b_packed):
    """x: (N, H, W, C) bf16 -> (N, H//2, W//2, 128) bf16 (lanes >= true cout are zero)."""
    cpad = w_packed.shape[1] // 4
    N, H, W, C = x_nhwc.shape
    if C > cpad:                      # previous layer kept 128 lanes; true channels first
        x_nhwc = x_nhwc[..., :cpad]
        C = cpad
    Hp, Wp = H + 2, W + 2
    H2, W2 = Hp // 2, Wp // 2
    Ho, Wo = H // 2, W // 2
    K = 4 * cpad

    m_valid = N * H2 * W2
    m_out = _round_up(m_valid, 8)
    m_in = _round_up(m_out + W2 + 1, 8)

    # KB-scale glue: zero-pad spatially/channel, space-to-depth, flatten, pad rows.
    xp = jnp.pad(x_nhwc, ((0, 0), (1, 1), (1, 1), (0, cpad - C)))
    xs = xp.reshape(N, H2, 2, W2, 2, cpad).transpose(0, 1, 3, 2, 4, 5)
    xs = xs.reshape(m_valid, K)
    xs = jnp.pad(xs, ((0, m_in - m_valid), (0, 0)))

    cost = pl.CostEstimate(
        flops=2 * 4 * m_out * K * 4 * COUT_PAD + 6 * m_out * COUT_PAD,
        transcendentals=0,
        bytes_accessed=m_in * K * 2 + w_packed.size * 2 + b_packed.size * 4
                       + m_out * COUT_PAD * 2)

    out = pl.pallas_call(
        functools.partial(_conv3x3_relu_pool_kernel, w2=W2, m_out=m_out),
        out_shape=jax.ShapeDtypeStruct((m_out, COUT_PAD), jnp.bfloat16),
        grid_spec=pltpu.PrefetchScalarGridSpec(
            num_scalar_prefetch=0,
            grid=(1,),   # whole layer per step: overhead-bound, splitting is pure cost
            in_specs=[
                pl.BlockSpec((m_in, K), lambda i: (0, 0)),
                pl.BlockSpec((4, K, 4 * COUT_PAD), lambda i: (0, 0, 0)),
                pl.BlockSpec((1, COUT_PAD), lambda i: (0, 0)),
            ],
            out_specs=pl.BlockSpec((m_out, COUT_PAD), lambda i: (0, 0)),
        ),
        compiler_params=pltpu.CompilerParams(dimension_semantics=("arbitrary",)),
        cost_estimate=cost,
    )(xs, w_packed, b_packed)

    # drop the padded-grid junk row / column (cheap glue)
    return out[:m_valid].reshape(N, H2, W2, COUT_PAD)[:, :Ho, :Wo, :]


def mlp_head(x, w1, b1, w2, b2):
    B, K = x.shape
    cost = pl.CostEstimate(
        flops=2 * B * K * 128 + 2 * B * 128 * COUT_PAD,
        transcendentals=0,
        bytes_accessed=x.size * 2 + w1.size * 2 + w2.size * 2
                       + (b1.size + b2.size) * 4 + B * COUT_PAD * 4)
    return pl.pallas_call(
        _mlp_kernel,
        out_shape=jax.ShapeDtypeStruct((B, COUT_PAD), jnp.float32),
        grid_spec=pltpu.PrefetchScalarGridSpec(
            num_scalar_prefetch=0,
            grid=(1,),
            in_specs=[
                pl.BlockSpec((B, K), lambda i: (0, 0)),
                pl.BlockSpec((K, 128), lambda i: (0, 0)),
                pl.BlockSpec((1, 128), lambda i: (0, 0)),
                pl.BlockSpec((128, COUT_PAD), lambda i: (0, 0)),
                pl.BlockSpec((1, COUT_PAD), lambda i: (0, 0)),
            ],
            out_specs=pl.BlockSpec((B, COUT_PAD), lambda i: (0, 0)),
        ),
        compiler_params=pltpu.CompilerParams(dimension_semantics=("arbitrary",)),
        cost_estimate=cost,
    )(x, w1, b1, w2, b2)


# ---------------------------------------------------------------------------
# Parameters: PyTorch-native raw shapes + one-time (host-side) packing
# ---------------------------------------------------------------------------
def init_raw_params(key):
    ks = jax.random.split(key, 10)
    p = {}
    p["conv1_w"] = jax.random.normal(ks[0], (16, 3, 3, 3), jnp.float32) * 0.05   # OIHW
    p["conv1_b"] = jax.random.normal(ks[1], (16,), jnp.float32) * 0.05
    p["conv2_w"] = jax.random.normal(ks[2], (32, 16, 3, 3), jnp.float32) * 0.05
    p["conv2_b"] = jax.random.normal(ks[3], (32,), jnp.float32) * 0.05
    p["conv3_w"] = jax.random.normal(ks[4], (64, 32, 3, 3), jnp.float32) * 0.05
    p["conv3_b"] = jax.random.normal(ks[5], (64,), jnp.float32) * 0.05
    p["fc1_w"] = jax.random.normal(ks[6], (128, FC_INPUT_DIM), jnp.float32) * 0.02  # (out, in)
    p["fc1_b"] = jax.random.normal(ks[7], (128,), jnp.float32) * 0.02
    p["fc2_w"] = jax.random.normal(ks[8], (NUM_CLASSES, 128), jnp.float32) * 0.02
    p["fc2_b"] = jax.random.normal(ks[9], (NUM_CLASSES,), jnp.float32) * 0.02
    return p


def _pack_conv(w_oihw, bias, cpad):
    """OIHW conv weight -> (4 taps, 4*cpad, 4 phases * 128) bf16 for the s2d kernel.

    For tap t=(ty,tx), s2d channel k=(r,s,c), phase p=(pa,pb):
      WT[t, k, p, o] = W[o, c, 2*ty+r-pa, 2*tx+s-pb]  if both kernel indices in [0,2].
    """
    w = np.asarray(w_oihw, np.float32)            # (O, I, 3, 3)
    O, I = w.shape[0], w.shape[1]
    K = 4 * cpad
    wt = np.zeros((4, K, 4, COUT_PAD), np.float32)
    for ty in range(2):
        for tx in range(2):
            t = 2 * ty + tx
            for r in range(2):
                for s in range(2):
                    kblk = (2 * r + s) * cpad
                    for pa in range(2):
                        for pb in range(2):
                            p = 2 * pa + pb
                            dy, dx = 2 * ty + r - pa, 2 * tx + s - pb
                            if 0 <= dy <= 2 and 0 <= dx <= 2:
                                wt[t, kblk:kblk + I, p, :O] = w[:, :, dy, dx].T
    bp = np.zeros((1, COUT_PAD), np.float32)
    bp[0, :O] = np.asarray(bias, np.float32)
    return (jnp.asarray(wt.reshape(4, K, 4 * COUT_PAD), dtype=jnp.bfloat16),
            jnp.asarray(bp, dtype=jnp.float32))


def pack_params(raw):
    packed = {}
    packed["conv1_w"], packed["conv1_b"] = _pack_conv(raw["conv1_w"], raw["conv1_b"], cpad=8)
    packed["conv2_w"], packed["conv2_b"] = _pack_conv(raw["conv2_w"], raw["conv2_b"], cpad=16)
    packed["conv3_w"], packed["conv3_b"] = _pack_conv(raw["conv3_w"], raw["conv3_b"], cpad=32)

    # fc1 consumes the NHWC-flattened, 128-lane-padded conv3 output directly
    # (kills the runtime NCHW transpose): packed row = (h*Wo + w)*128 + c.
    Ho = Wo = IMAGE_SIZE // 8
    w1 = np.asarray(raw["fc1_w"], np.float32)     # (128, 64*Ho*Wo), torch (c, h, w) order
    w1p = np.zeros((Ho * Wo * COUT_PAD, 128), np.float32)
    for c in range(64):
        for h in range(Ho):
            for w in range(Wo):
                w1p[(h * Wo + w) * COUT_PAD + c, :] = w1[:, c * Ho * Wo + h * Wo + w]
    packed["fc1_w"] = jnp.asarray(w1p, dtype=jnp.bfloat16)
    packed["fc1_b"] = jnp.asarray(np.asarray(raw["fc1_b"], np.float32).reshape(1, 128))

    w2p = np.zeros((128, COUT_PAD), np.float32)
    w2p[:, :NUM_CLASSES] = np.asarray(raw["fc2_w"], np.float32).T
    b2p = np.zeros((1, COUT_PAD), np.float32)
    b2p[0, :NUM_CLASSES] = np.asarray(raw["fc2_b"], np.float32)
    packed["fc2_w"] = jnp.asarray(w2p, dtype=jnp.bfloat16)
    packed["fc2_b"] = jnp.asarray(b2p)
    return packed


# ---------------------------------------------------------------------------
# Forward pass (Pallas) and a bf16-matched pure-JAX reference
# ---------------------------------------------------------------------------
@jax.jit
def simple_cnn_forward(x_nchw, packed):
    x = jnp.transpose(x_nchw, (0, 2, 3, 1)).astype(jnp.bfloat16)   # NCHW -> NHWC, bf16
    x = conv3x3_relu_pool(x, packed["conv1_w"], packed["conv1_b"])
    x = conv3x3_relu_pool(x, packed["conv2_w"], packed["conv2_b"])
    x = conv3x3_relu_pool(x, packed["conv3_w"], packed["conv3_b"])
    feat = x.reshape(x.shape[0], -1)          # (N, Ho*Wo*128); fc1 is pre-permuted for this
    out = mlp_head(feat, packed["fc1_w"], packed["fc1_b"],
                   packed["fc2_w"], packed["fc2_b"])
    return out[:, :NUM_CLASSES]


@jax.jit
def reference_forward(x_nchw, raw):
    # Independent math path (XLA conv / reduce_window) with the same bf16 operand /
    # f32 accumulation policy as the Pallas pipeline.
    def conv_block(x, w, b):
        y = jax.lax.conv_general_dilated(
            x.astype(jnp.bfloat16), w.astype(jnp.bfloat16),
            window_strides=(1, 1), padding="SAME",
            dimension_numbers=("NCHW", "OIHW", "NCHW"),
            preferred_element_type=jnp.float32)
        y = jnp.maximum(y + b[None, :, None, None], 0.0)
        y = jax.lax.reduce_window(y, -jnp.inf, jax.lax.max,
                                  (1, 1, 2, 2), (1, 1, 2, 2), "VALID")
        return y.astype(jnp.bfloat16)

    x = conv_block(x_nchw, raw["conv1_w"], raw["conv1_b"])
    x = conv_block(x, raw["conv2_w"], raw["conv2_b"])
    x = conv_block(x, raw["conv3_w"], raw["conv3_b"])
    x = x.reshape(x.shape[0], FC_INPUT_DIM)
    h = jnp.dot(x, raw["fc1_w"].T.astype(jnp.bfloat16),
                preferred_element_type=jnp.float32)
    h = jnp.maximum(h + raw["fc1_b"], 0.0).astype(jnp.bfloat16)
    y = jnp.dot(h, raw["fc2_w"].T.astype(jnp.bfloat16),
                preferred_element_type=jnp.float32)
    return y + raw["fc2_b"]


if __name__ == "__main__":
    key = jax.random.PRNGKey(0)
    k_in, k_par = jax.random.split(key)
    x = jax.random.normal(k_in, (BATCH, 3, IMAGE_SIZE, IMAGE_SIZE), jnp.float32)  # NCHW
    raw = init_raw_params(k_par)
    packed = pack_params(raw)                    # one-time host-side weight packing

    out = jax.block_until_ready(simple_cnn_forward(x, packed))
    assert out.shape == (BATCH, NUM_CLASSES), out.shape

    ref = jax.block_until_ready(reference_forward(x, raw))
    np.testing.assert_allclose(np.asarray(out, dtype=np.float32),
                               np.asarray(ref, dtype=np.float32),
                               rtol=2e-2, atol=1e-3)

    print("KERNEL_OK")
</pallas_src>

<mosaic_0001>
module attributes {stable_mosaic.version = 11 : i64} {
  func.func @_conv3x3_relu_pool_kernel(%arg0: i32, %arg1: memref<608x32xbf16, #tpu.memory_space<vmem>>, %arg2: memref<4x32x512xbf16, #tpu.memory_space<vmem>>, %arg3: memref<1x128xf32, #tpu.memory_space<vmem>>, %arg4: memref<584x128xbf16, #tpu.memory_space<vmem>>) attributes {dimension_semantics = [#tpu.dimension_semantics<arbitrary>], iteration_bounds = array<i64: 1>, scalar_prefetch = 0 : i64, scratch_operands = 0 : i64, tpu.core_type = #tpu.core_type<tc>, window_params = [{pipeline_mode = #tpu.pipeline_mode<synchronous>, transform_indices = @transform_0, window_bounds = array<i64: 608, 32>}, {pipeline_mode = #tpu.pipeline_mode<synchronous>, transform_indices = @transform_1, window_bounds = array<i64: 4, 32, 512>}, {pipeline_mode = #tpu.pipeline_mode<synchronous>, transform_indices = @transform_2, window_bounds = array<i64: 1, 128>}, {pipeline_mode = #tpu.pipeline_mode<synchronous>, transform_indices = @transform_3, window_bounds = array<i64: 584, 128>}]} {
    %c0 = arith.constant 0 : index
    %c0_0 = arith.constant 0 : index
    %0 = vector.load %arg1[%c0, %c0_0] : memref<608x32xbf16, #tpu.memory_space<vmem>>, vector<584x32xbf16>
    %c0_1 = arith.constant 0 : index
    %c0_2 = arith.constant 0 : index
    %c0_3 = arith.constant 0 : index
    %1 = vector.load %arg2[%c0_1, %c0_2, %c0_3] : memref<4x32x512xbf16, #tpu.memory_space<vmem>>, vector<1x32x512xbf16>
    %2 = vector.shape_cast %1 : vector<1x32x512xbf16> to vector<32x512xbf16>
    %cst = arith.constant dense<0.000000e+00> : vector<584x512xf32>
    %3 = tpu.matmul %0, %2, %cst {dimension_numbers = #tpu.dot_dimension_numbers<[1], [0], [0], [1], [0, 0, 1, 1], [], []>} : vector<584x32xbf16>, vector<32x512xbf16>, vector<584x512xf32> -> vector<584x512xf32>
    %c1 = arith.constant 1 : index
    %c0_4 = arith.constant 0 : index
    %4 = vector.load %arg1[%c1, %c0_4] : memref<608x32xbf16, #tpu.memory_space<vmem>>, vector<584x32xbf16>
    %c1_5 = arith.constant 1 : index
    %c0_6 = arith.constant 0 : index
    %c0_7 = arith.constant 0 : index
    %5 = vector.load %arg2[%c1_5, %c0_6, %c0_7] : memref<4x32x512xbf16, #tpu.memory_space<vmem>>, vector<1x32x512xbf16>
    %6 = vector.shape_cast %5 : vector<1x32x512xbf16> to vector<32x512xbf16>
    %cst_8 = arith.constant dense<0.000000e+00> : vector<584x512xf32>
    %7 = tpu.matmul %4, %6, %cst_8 {dimension_numbers = #tpu.dot_dimension_numbers<[1], [0], [0], [1], [0, 0, 1, 1], [], []>} : vector<584x32xbf16>, vector<32x512xbf16>, vector<584x512xf32> -> vector<584x512xf32>
    %8 = arith.addf %3, %7 : vector<584x512xf32>
    %c17 = arith.constant 17 : index
    %c0_9 = arith.constant 0 : index
    %9 = vector.load %arg1[%c17, %c0_9] : memref<608x32xbf16, #tpu.memory_space<vmem>>, vector<584x32xbf16>
    %c2 = arith.constant 2 : index
    %c0_10 = arith.constant 0 : index
    %c0_11 = arith.constant 0 : index
    %10 = vector.load %arg2[%c2, %c0_10, %c0_11] : memref<4x32x512xbf16, #tpu.memory_space<vmem>>, vector<1x32x512xbf16>
    %11 = vector.shape_cast %10 : vector<1x32x512xbf16> to vector<32x512xbf16>
    %cst_12 = arith.constant dense<0.000000e+00> : vector<584x512xf32>
    %12 = tpu.matmul %9, %11, %cst_12 {dimension_numbers = #tpu.dot_dimension_numbers<[1], [0], [0], [1], [0, 0, 1, 1], [], []>} : vector<584x32xbf16>, vector<32x512xbf16>, vector<584x512xf32> -> vector<584x512xf32>
    %13 = arith.addf %8, %12 : vector<584x512xf32>
    %c18 = arith.constant 18 : index
    %c0_13 = arith.constant 0 : index
    %14 = vector.load %arg1[%c18, %c0_13] : memref<608x32xbf16, #tpu.memory_space<vmem>>, vector<584x32xbf16>
    %c3 = arith.constant 3 : index
    %c0_14 = arith.constant 0 : index
    %c0_15 = arith.constant 0 : index
    %15 = vector.load %arg2[%c3, %c0_14, %c0_15] : memref<4x32x512xbf16, #tpu.memory_space<vmem>>, vector<1x32x512xbf16>
    %16 = vector.shape_cast %15 : vector<1x32x512xbf16> to vector<32x512xbf16>
    %cst_16 = arith.constant dense<0.000000e+00> : vector<584x512xf32>
    %17 = tpu.matmul %14, %16, %cst_16 {dimension_numbers = #tpu.dot_dimension_numbers<[1], [0], [0], [1], [0, 0, 1, 1], [], []>} : vector<584x32xbf16>, vector<32x512xbf16>, vector<584x512xf32> -> vector<584x512xf32>
    %18 = arith.addf %13, %17 : vector<584x512xf32>
    %19 = vector.extract_strided_slice %18 {offsets = [0, 0], sizes = [584, 128], strides = [1, 1]} : vector<584x512xf32> to vector<584x128xf32>
    %20 = vector.extract_strided_slice %18 {offsets = [0, 128], sizes = [584, 128], strides = [1, 1]} : vector<584x512xf32> to vector<584x128xf32>
    %21 = arith.maximumf %19, %20 : vector<584x128xf32>
    %22 = vector.extract_strided_slice %18 {offsets = [0, 256], sizes = [584, 128], strides = [1, 1]} : vector<584x512xf32> to vector<584x128xf32>
    %23 = vector.extract_strided_slice %18 {offsets = [0, 384], sizes = [584, 128], strides = [1, 1]} : vector<584x512xf32> to vector<584x128xf32>
    %24 = arith.maximumf %22, %23 : vector<584x128xf32>
    %25 = arith.maximumf %21, %24 : vector<584x128xf32>
    %c0_17 = arith.constant 0 : index
    %c0_18 = arith.constant 0 : index
    %26 = vector.load %arg3[%c0_17, %c0_18] : memref<1x128xf32, #tpu.memory_space<vmem>>, vector<1x128xf32>
    %27 = vector.broadcast %26 : vector<1x128xf32> to vector<584x128xf32>
    %28 = arith.addf %25, %27 : vector<584x128xf32>
    %cst_19 = arith.constant 0.000000e+00 : f32
    %29 = vector.broadcast %cst_19 : f32 to vector<584x128xf32>
    %30 = arith.maximumf %28, %29 : vector<584x128xf32>
    %31 = arith.truncf %30 : vector<584x128xf32> to vector<584x128xbf16>
    %c0_20 = arith.constant 0 : index
    %c0_21 = arith.constant 0 : index
    %32 = vector.load %arg4[%c0_20, %c0_21] : memref<584x128xbf16, #tpu.memory_space<vmem>>, vector<584x128xbf16>
    tpu.vector_store %arg4[%c0_20, %c0_21], %31 {strides = array<i32>} : memref<584x128xbf16, #tpu.memory_space<vmem>>, vector<584x128xbf16>,
    return
  }
  func.func @transform_0(%arg0: i32) -> (i32, i32) {
    %c0_i32 = arith.constant 0 : i32
    %c0_i32_0 = arith.constant 0 : i32
    %c0_i32_1 = arith.constant 0 : i32
    return %c0_i32, %c0_i32_0 : i32, i32
  }
  func.func @transform_1(%arg0: i32) -> (i32, i32, i32) {
    %c0_i32 = arith.constant 0 : i32
    %c0_i32_0 = arith.constant 0 : i32
    %c0_i32_1 = arith.constant 0 : i32
    %c0_i32_2 = arith.constant 0 : i32
    return %c0_i32, %c0_i32_0, %c0_i32_1 : i32, i32, i32
  }
  func.func @transform_2(%arg0: i32) -> (i32, i32) {
    %c0_i32 = arith.constant 0 : i32
    %c0_i32_0 = arith.constant 0 : i32
    %c0_i32_1 = arith.constant 0 : i32
    return %c0_i32, %c0_i32_0 : i32, i32
  }
  func.func @transform_3(%arg0: i32) -> (i32, i32) {
    %c0_i32 = arith.constant 0 : i32
    %c0_i32_0 = arith.constant 0 : i32
    %c0_i32_1 = arith.constant 0 : i32
    return %c0_i32, %c0_i32_0 : i32, i32
  }
}

module attributes {stable_mosaic.version = 11 : i64} {
  func.func @_conv3x3_relu_pool_kernel(%arg0: i32, %arg1: memref<184x64xbf16, #tpu.memory_space<vmem>>, %arg2: memref<4x64x512xbf16, #tpu.memory_space<vmem>>, %arg3: memref<1x128xf32, #tpu.memory_space<vmem>>, %arg4: memref<168x128xbf16, #tpu.memory_space<vmem>>) attributes {dimension_semantics = [#tpu.dimension_semantics<arbitrary>], iteration_bounds = array<i64: 1>, scalar_prefetch = 0 : i64, scratch_operands = 0 : i64, tpu.core_type = #tpu.core_type<tc>, window_params = [{pipeline_mode = #tpu.pipeline_mode<synchronous>, transform_indices = @transform_0, window_bounds = array<i64: 184, 64>}, {pipeline_mode = #tpu.pipeline_mode<synchronous>, transform_indices = @transform_1, window_bounds = array<i64: 4, 64, 512>}, {pipeline_mode = #tpu.pipeline_mode<synchronous>, transform_indices = @transform_2, window_bounds = array<i64: 1, 128>}, {pipeline_mode = #tpu.pipeline_mode<synchronous>, transform_indices = @transform_3, window_bounds = array<i64: 168, 128>}]} {
    %c0 = arith.constant 0 : index
    %c0_0 = arith.constant 0 : index
    %0 = vector.load %arg1[%c0, %c0_0] : memref<184x64xbf16, #tpu.memory_space<vmem>>, vector<168x64xbf16>
    %c0_1 = arith.constant 0 : index
    %c0_2 = arith.constant 0 : index
    %c0_3 = arith.constant 0 : index
    %1 = vector.load %arg2[%c0_1, %c0_2, %c0_3] : memref<4x64x512xbf16, #tpu.memory_space<vmem>>, vector<1x64x512xbf16>
    %2 = vector.shape_cast %1 : vector<1x64x512xbf16> to vector<64x512xbf16>
    %cst = arith.constant dense<0.000000e+00> : vector<168x512xf32>
    %3 = tpu.matmul %0, %2, %cst {dimension_numbers = #tpu.dot_dimension_numbers<[1], [0], [0], [1], [0, 0, 1, 1], [], []>} : vector<168x64xbf16>, vector<64x512xbf16>, vector<168x512xf32> -> vector<168x512xf32>
    %c1 = arith.constant 1 : index
    %c0_4 = arith.constant 0 : index
    %4 = vector.load %arg1[%c1, %c0_4] : memref<184x64xbf16, #tpu.memory_space<vmem>>, vector<168x64xbf16>
    %c1_5 = arith.constant 1 : index
    %c0_6 = arith.constant 0 : index
    %c0_7 = arith.constant 0 : index
    %5 = vector.load %arg2[%c1_5, %c0_6, %c0_7] : memref<4x64x512xbf16, #tpu.memory_space<vmem>>, vector<1x64x512xbf16>
    %6 = vector.shape_cast %5 : vector<1x64x512xbf16> to vector<64x512xbf16>
    %cst_8 = arith.constant dense<0.000000e+00> : vector<168x512xf32>
    %7 = tpu.matmul %4, %6, %cst_8 {dimension_numbers = #tpu.dot_dimension_numbers<[1], [0], [0], [1], [0, 0, 1, 1], [], []>} : vector<168x64xbf16>, vector<64x512xbf16>, vector<168x512xf32> -> vector<168x512xf32>
    %8 = arith.addf %3, %7 : vector<168x512xf32>
    %c9 = arith.constant 9 : index
    %c0_9 = arith.constant 0 : index
    %9 = vector.load %arg1[%c9, %c0_9] : memref<184x64xbf16, #tpu.memory_space<vmem>>, vector<168x64xbf16>
    %c2 = arith.constant 2 : index
    %c0_10 = arith.constant 0 : index
    %c0_11 = arith.constant 0 : index
    %10 = vector.load %arg2[%c2, %c0_10, %c0_11] : memref<4x64x512xbf16, #tpu.memory_space<vmem>>, vector<1x64x512xbf16>
    %11 = vector.shape_cast %10 : vector<1x64x512xbf16> to vector<64x512xbf16>
    %cst_12 = arith.constant dense<0.000000e+00> : vector<168x512xf32>
    %12 = tpu.matmul %9, %11, %cst_12 {dimension_numbers = #tpu.dot_dimension_numbers<[1], [0], [0], [1], [0, 0, 1, 1], [], []>} : vector<168x64xbf16>, vector<64x512xbf16>, vector<168x512xf32> -> vector<168x512xf32>
    %13 = arith.addf %8, %12 : vector<168x512xf32>
    %c10 = arith.constant 10 : index
    %c0_13 = arith.constant 0 : index
    %14 = vector.load %arg1[%c10, %c0_13] : memref<184x64xbf16, #tpu.memory_space<vmem>>, vector<168x64xbf16>
    %c3 = arith.constant 3 : index
    %c0_14 = arith.constant 0 : index
    %c0_15 = arith.constant 0 : index
    %15 = vector.load %arg2[%c3, %c0_14, %c0_15] : memref<4x64x512xbf16, #tpu.memory_space<vmem>>, vector<1x64x512xbf16>
    %16 = vector.shape_cast %15 : vector<1x64x512xbf16> to vector<64x512xbf16>
    %cst_16 = arith.constant dense<0.000000e+00> : vector<168x512xf32>
    %17 = tpu.matmul %14, %16, %cst_16 {dimension_numbers = #tpu.dot_dimension_numbers<[1], [0], [0], [1], [0, 0, 1, 1], [], []>} : vector<168x64xbf16>, vector<64x512xbf16>, vector<168x512xf32> -> vector<168x512xf32>
    %18 = arith.addf %13, %17 : vector<168x512xf32>
    %19 = vector.extract_strided_slice %18 {offsets = [0, 0], sizes = [168, 128], strides = [1, 1]} : vector<168x512xf32> to vector<168x128xf32>
    %20 = vector.extract_strided_slice %18 {offsets = [0, 128], sizes = [168, 128], strides = [1, 1]} : vector<168x512xf32> to vector<168x128xf32>
    %21 = arith.maximumf %19, %20 : vector<168x128xf32>
    %22 = vector.extract_strided_slice %18 {offsets = [0, 256], sizes = [168, 128], strides = [1, 1]} : vector<168x512xf32> to vector<168x128xf32>
    %23 = vector.extract_strided_slice %18 {offsets = [0, 384], sizes = [168, 128], strides = [1, 1]} : vector<168x512xf32> to vector<168x128xf32>
    %24 = arith.maximumf %22, %23 : vector<168x128xf32>
    %25 = arith.maximumf %21, %24 : vector<168x128xf32>
    %c0_17 = arith.constant 0 : index
    %c0_18 = arith.constant 0 : index
    %26 = vector.load %arg3[%c0_17, %c0_18] : memref<1x128xf32, #tpu.memory_space<vmem>>, vector<1x128xf32>
    %27 = vector.broadcast %26 : vector<1x128xf32> to vector<168x128xf32>
    %28 = arith.addf %25, %27 : vector<168x128xf32>
    %cst_19 = arith.constant 0.000000e+00 : f32
    %29 = vector.broadcast %cst_19 : f32 to vector<168x128xf32>
    %30 = arith.maximumf %28, %29 : vector<168x128xf32>
    %31 = arith.truncf %30 : vector<168x128xf32> to vector<168x128xbf16>
    %c0_20 = arith.constant 0 : index
    %c0_21 = arith.constant 0 : index
    %32 = vector.load %arg4[%c0_20, %c0_21] : memref<168x128xbf16, #tpu.memory_space<vmem>>, vector<168x128xbf16>
    tpu.vector_store %arg4[%c0_20, %c0_21], %31 {strides = array<i32>} : memref<168x128xbf16, #tpu.memory_space<vmem>>, vector<168x128xbf16>,
    return
  }
  func.func @transform_0(%arg0: i32) -> (i32, i32) {
    %c0_i32 = arith.constant 0 : i32
    %c0_i32_0 = arith.constant 0 : i32
    %c0_i32_1 = arith.constant 0 : i32
    return %c0_i32, %c0_i32_0 : i32, i32
  }
  func.func @transform_1(%arg0: i32) -> (i32, i32, i32) {
    %c0_i32 = arith.constant 0 : i32
    %c0_i32_0 = arith.constant 0 : i32
    %c0_i32_1 = arith.constant 0 : i32
    %c0_i32_2 = arith.constant 0 : i32
    return %c0_i32, %c0_i32_0, %c0_i32_1 : i32, i32, i32
  }
  func.func @transform_2(%arg0: i32) -> (i32, i32) {
    %c0_i32 = arith.constant 0 : i32
    %c0_i32_0 = arith.constant 0 : i32
    %c0_i32_1 = arith.constant 0 : i32
    return %c0_i32, %c0_i32_0 : i32, i32
  }
  func.func @transform_3(%arg0: i32) -> (i32, i32) {
    %c0_i32 = arith.constant 0 : i32
    %c0_i32_0 = arith.constant 0 : i32
    %c0_i32_1 = arith.constant 0 : i32
    return %c0_i32, %c0_i32_0 : i32, i32
  }
}

module attributes {stable_mosaic.version = 11 : i64} {
  func.func @_conv3x3_relu_pool_kernel(%arg0: i32, %arg1: memref<64x128xbf16, #tpu.memory_space<vmem>>, %arg2: memref<4x128x512xbf16, #tpu.memory_space<vmem>>, %arg3: memref<1x128xf32, #tpu.memory_space<vmem>>, %arg4: memref<56x128xbf16, #tpu.memory_space<vmem>>) attributes {dimension_semantics = [#tpu.dimension_semantics<arbitrary>], iteration_bounds = array<i64: 1>, scalar_prefetch = 0 : i64, scratch_operands = 0 : i64, tpu.core_type = #tpu.core_type<tc>, window_params = [{pipeline_mode = #tpu.pipeline_mode<synchronous>, transform_indices = @transform_0, window_bounds = array<i64: 64, 128>}, {pipeline_mode = #tpu.pipeline_mode<synchronous>, transform_indices = @transform_1, window_bounds = array<i64: 4, 128, 512>}, {pipeline_mode = #tpu.pipeline_mode<synchronous>, transform_indices = @transform_2, window_bounds = array<i64: 1, 128>}, {pipeline_mode = #tpu.pipeline_mode<synchronous>, transform_indices = @transform_3, window_bounds = array<i64: 56, 128>}]} {
    %c0 = arith.constant 0 : index
    %c0_0 = arith.constant 0 : index
    %0 = vector.load %arg1[%c0, %c0_0] : memref<64x128xbf16, #tpu.memory_space<vmem>>, vector<56x128xbf16>
    %c0_1 = arith.constant 0 : index
    %c0_2 = arith.constant 0 : index
    %c0_3 = arith.constant 0 : index
    %1 = vector.load %arg2[%c0_1, %c0_2, %c0_3] : memref<4x128x512xbf16, #tpu.memory_space<vmem>>, vector<1x128x512xbf16>
    %2 = vector.shape_cast %1 : vector<1x128x512xbf16> to vector<128x512xbf16>
    %cst = arith.constant dense<0.000000e+00> : vector<56x512xf32>
    %3 = tpu.matmul %0, %2, %cst {dimension_numbers = #tpu.dot_dimension_numbers<[1], [0], [0], [1], [0, 0, 1, 1], [], []>} : vector<56x128xbf16>, vector<128x512xbf16>, vector<56x512xf32> -> vector<56x512xf32>
    %c1 = arith.constant 1 : index
    %c0_4 = arith.constant 0 : index
    %4 = vector.load %arg1[%c1, %c0_4] : memref<64x128xbf16, #tpu.memory_space<vmem>>, vector<56x128xbf16>
    %c1_5 = arith.constant 1 : index
    %c0_6 = arith.constant 0 : index
    %c0_7 = arith.constant 0 : index
    %5 = vector.load %arg2[%c1_5, %c0_6, %c0_7] : memref<4x128x512xbf16, #tpu.memory_space<vmem>>, vector<1x128x512xbf16>
    %6 = vector.shape_cast %5 : vector<1x128x512xbf16> to vector<128x512xbf16>
    %cst_8 = arith.constant dense<0.000000e+00> : vector<56x512xf32>
    %7 = tpu.matmul %4, %6, %cst_8 {dimension_numbers = #tpu.dot_dimension_numbers<[1], [0], [0], [1], [0, 0, 1, 1], [], []>} : vector<56x128xbf16>, vector<128x512xbf16>, vector<56x512xf32> -> vector<56x512xf32>
    %8 = arith.addf %3, %7 : vector<56x512xf32>
    %c5 = arith.constant 5 : index
    %c0_9 = arith.constant 0 : index
    %9 = vector.load %arg1[%c5, %c0_9] : memref<64x128xbf16, #tpu.memory_space<vmem>>, vector<56x128xbf16>
    %c2 = arith.constant 2 : index
    %c0_10 = arith.constant 0 : index
    %c0_11 = arith.constant 0 : index
    %10 = vector.load %arg2[%c2, %c0_10, %c0_11] : memref<4x128x512xbf16, #tpu.memory_space<vmem>>, vector<1x128x512xbf16>
    %11 = vector.shape_cast %10 : vector<1x128x512xbf16> to vector<128x512xbf16>
    %cst_12 = arith.constant dense<0.000000e+00> : vector<56x512xf32>
    %12 = tpu.matmul %9, %11, %cst_12 {dimension_numbers = #tpu.dot_dimension_numbers<[1], [0], [0], [1], [0, 0, 1, 1], [], []>} : vector<56x128xbf16>, vector<128x512xbf16>, vector<56x512xf32> -> vector<56x512xf32>
    %13 = arith.addf %8, %12 : vector<56x512xf32>
    %c6 = arith.constant 6 : index
    %c0_13 = arith.constant 0 : index
    %14 = vector.load %arg1[%c6, %c0_13] : memref<64x128xbf16, #tpu.memory_space<vmem>>, vector<56x128xbf16>
    %c3 = arith.constant 3 : index
    %c0_14 = arith.constant 0 : index
    %c0_15 = arith.constant 0 : index
    %15 = vector.load %arg2[%c3, %c0_14, %c0_15] : memref<4x128x512xbf16, #tpu.memory_space<vmem>>, vector<1x128x512xbf16>
    %16 = vector.shape_cast %15 : vector<1x128x512xbf16> to vector<128x512xbf16>
    %cst_16 = arith.constant dense<0.000000e+00> : vector<56x512xf32>
    %17 = tpu.matmul %14, %16, %cst_16 {dimension_numbers = #tpu.dot_dimension_numbers<[1], [0], [0], [1], [0, 0, 1, 1], [], []>} : vector<56x128xbf16>, vector<128x512xbf16>, vector<56x512xf32> -> vector<56x512xf32>
    %18 = arith.addf %13, %17 : vector<56x512xf32>
    %19 = vector.extract_strided_slice %18 {offsets = [0, 0], sizes = [56, 128], strides = [1, 1]} : vector<56x512xf32> to vector<56x128xf32>
    %20 = vector.extract_strided_slice %18 {offsets = [0, 128], sizes = [56, 128], strides = [1, 1]} : vector<56x512xf32> to vector<56x128xf32>
    %21 = arith.maximumf %19, %20 : vector<56x128xf32>
    %22 = vector.extract_strided_slice %18 {offsets = [0, 256], sizes = [56, 128], strides = [1, 1]} : vector<56x512xf32> to vector<56x128xf32>
    %23 = vector.extract_strided_slice %18 {offsets = [0, 384], sizes = [56, 128], strides = [1, 1]} : vector<56x512xf32> to vector<56x128xf32>
    %24 = arith.maximumf %22, %23 : vector<56x128xf32>
    %25 = arith.maximumf %21, %24 : vector<56x128xf32>
    %c0_17 = arith.constant 0 : index
    %c0_18 = arith.constant 0 : index
    %26 = vector.load %arg3[%c0_17, %c0_18] : memref<1x128xf32, #tpu.memory_space<vmem>>, vector<1x128xf32>
    %27 = vector.broadcast %26 : vector<1x128xf32> to vector<56x128xf32>
    %28 = arith.addf %25, %27 : vector<56x128xf32>
    %cst_19 = arith.constant 0.000000e+00 : f32
    %29 = vector.broadcast %cst_19 : f32 to vector<56x128xf32>
    %30 = arith.maximumf %28, %29 : vector<56x128xf32>
    %31 = arith.truncf %30 : vector<56x128xf32> to vector<56x128xbf16>
    %c0_20 = arith.constant 0 : index
    %c0_21 = arith.constant 0 : index
    %32 = vector.load %arg4[%c0_20, %c0_21] : memref<56x128xbf16, #tpu.memory_space<vmem>>, vector<56x128xbf16>
    tpu.vector_store %arg4[%c0_20, %c0_21], %31 {strides = array<i32>} : memref<56x128xbf16, #tpu.memory_space<vmem>>, vector<56x128xbf16>,
    return
  }
  func.func @transform_0(%arg0: i32) -> (i32, i32) {
    %c0_i32 = arith.constant 0 : i32
    %c0_i32_0 = arith.constant 0 : i32
    %c0_i32_1 = arith.constant 0 : i32
    return %c0_i32, %c0_i32_0 : i32, i32
  }
  func.func @transform_1(%arg0: i32) -> (i32, i32, i32) {
    %c0_i32 = arith.constant 0 : i32
    %c0_i32_0 = arith.constant 0 : i32
    %c0_i32_1 = arith.constant 0 : i32
    %c0_i32_2 = arith.constant 0 : i32
    return %c0_i32, %c0_i32_0, %c0_i32_1 : i32, i32, i32
  }
  func.func @transform_2(%arg0: i32) -> (i32, i32) {
    %c0_i32 = arith.constant 0 : i32
    %c0_i32_0 = arith.constant 0 : i32
    %c0_i32_1 = arith.constant 0 : i32
    return %c0_i32, %c0_i32_0 : i32, i32
  }
  func.func @transform_3(%arg0: i32) -> (i32, i32) {
    %c0_i32 = arith.constant 0 : i32
    %c0_i32_0 = arith.constant 0 : i32
    %c0_i32_1 = arith.constant 0 : i32
    return %c0_i32, %c0_i32_0 : i32, i32
  }
}

module attributes {stable_mosaic.version = 11 : i64} {
  func.func @_mlp_kernel(%arg0: i32, %arg1: memref<2x2048xbf16, #tpu.memory_space<vmem>>, %arg2: memref<2048x128xbf16, #tpu.memory_space<vmem>>, %arg3: memref<1x128xf32, #tpu.memory_space<vmem>>, %arg4: memref<128x128xbf16, #tpu.memory_space<vmem>>, %arg5: memref<1x128xf32, #tpu.memory_space<vmem>>, %arg6: memref<2x128xf32, #tpu.memory_space<vmem>>) attributes {dimension_semantics = [#tpu.dimension_semantics<arbitrary>], iteration_bounds = array<i64: 1>, scalar_prefetch = 0 : i64, scratch_operands = 0 : i64, tpu.core_type = #tpu.core_type<tc>, window_params = [{pipeline_mode = #tpu.pipeline_mode<synchronous>, transform_indices = @transform_0, window_bounds = array<i64: 2, 2048>}, {pipeline_mode = #tpu.pipeline_mode<synchronous>, transform_indices = @transform_1, window_bounds = array<i64: 2048, 128>}, {pipeline_mode = #tpu.pipeline_mode<synchronous>, transform_indices = @transform_2, window_bounds = array<i64: 1, 128>}, {pipeline_mode = #tpu.pipeline_mode<synchronous>, transform_indices = @transform_3, window_bounds = array<i64: 128, 128>}, {pipeline_mode = #tpu.pipeline_mode<synchronous>, transform_indices = @transform_4, window_bounds = array<i64: 1, 128>}, {pipeline_mode = #tpu.pipeline_mode<synchronous>, transform_indices = @transform_5, window_bounds = array<i64: 2, 128>}]} {
    %c0 = arith.constant 0 : index
    %c0_0 = arith.constant 0 : index
    %0 = vector.load %arg1[%c0, %c0_0] : memref<2x2048xbf16, #tpu.memory_space<vmem>>, vector<2x2048xbf16>
    %c0_1 = arith.constant 0 : index
    %c0_2 = arith.constant 0 : index
    %1 = vector.load %arg2[%c0_1, %c0_2] : memref<2048x128xbf16, #tpu.memory_space<vmem>>, vector<2048x128xbf16>
    %cst = arith.constant dense<0.000000e+00> : vector<2x128xf32>
    %2 = tpu.matmul %0, %1, %cst {dimension_numbers = #tpu.dot_dimension_numbers<[1], [0], [0], [1], [0, 0, 1, 1], [], []>} : vector<2x2048xbf16>, vector<2048x128xbf16>, vector<2x128xf32> -> vector<2x128xf32>
    %c0_3 = arith.constant 0 : index
    %c0_4 = arith.constant 0 : index
    %3 = vector.load %arg3[%c0_3, %c0_4] : memref<1x128xf32, #tpu.memory_space<vmem>>, vector<1x128xf32>
    %4 = vector.broadcast %3 : vector<1x128xf32> to vector<2x128xf32>
    %5 = arith.addf %2, %4 : vector<2x128xf32>
    %cst_5 = arith.constant 0.000000e+00 : f32
    %6 = vector.broadcast %cst_5 : f32 to vector<2x128xf32>
    %7 = arith.maximumf %5, %6 : vector<2x128xf32>
    %8 = arith.truncf %7 : vector<2x128xf32> to vector<2x128xbf16>
    %c0_6 = arith.constant 0 : index
    %c0_7 = arith.constant 0 : index
    %9 = vector.load %arg4[%c0_6, %c0_7] : memref<128x128xbf16, #tpu.memory_space<vmem>>, vector<128x128xbf16>
    %cst_8 = arith.constant dense<0.000000e+00> : vector<2x128xf32>
    %10 = tpu.matmul %8, %9, %cst_8 {dimension_numbers = #tpu.dot_dimension_numbers<[1], [0], [0], [1], [0, 0, 1, 1], [], []>} : vector<2x128xbf16>, vector<128x128xbf16>, vector<2x128xf32> -> vector<2x128xf32>
    %c0_9 = arith.constant 0 : index
    %c0_10 = arith.constant 0 : index
    %11 = vector.load %arg5[%c0_9, %c0_10] : memref<1x128xf32, #tpu.memory_space<vmem>>, vector<1x128xf32>
    %12 = vector.broadcast %11 : vector<1x128xf32> to vector<2x128xf32>
    %13 = arith.addf %10, %12 : vector<2x128xf32>
    %c0_11 = arith.constant 0 : index
    %c0_12 = arith.constant 0 : index
    %14 = vector.load %arg6[%c0_11, %c0_12] : memref<2x128xf32, #tpu.memory_space<vmem>>, vector<2x128xf32>
    tpu.vector_store %arg6[%c0_11, %c0_12], %13 {strides = array<i32>} : memref<2x128xf32, #tpu.memory_space<vmem>>, vector<2x128xf32>,
    return
  }
  func.func @transform_0(%arg0: i32) -> (i32, i32) {
    %c0_i32 = arith.constant 0 : i32
    %c0_i32_0 = arith.constant 0 : i32
    %c0_i32_1 = arith.constant 0 : i32
    return %c0_i32, %c0_i32_0 : i32, i32
  }
  func.func @transform_1(%arg0: i32) -> (i32, i32) {
    %c0_i32 = arith.constant 0 : i32
    %c0_i32_0 = arith.constant 0 : i32
    %c0_i32_1 = arith.constant 0 : i32
    return %c0_i32, %c0_i32_0 : i32, i32
  }
  func.func @transform_2(%arg0: i32) -> (i32, i32) {
    %c0_i32 = arith.constant 0 : i32
    %c0_i32_0 = arith.constant 0 : i32
    %c0_i32_1 = arith.constant 0 : i32
    return %c0_i32, %c0_i32_0 : i32, i32
  }
  func.func @transform_3(%arg0: i32) -> (i32, i32) {
    %c0_i32 = arith.constant 0 : i32
    %c0_i32_0 = arith.constant 0 : i32
    %c0_i32_1 = arith.constant 0 : i32
    return %c0_i32, %c0_i32_0 : i32, i32
  }
  func.func @transform_4(%arg0: i32) -> (i32, i32) {
    %c0_i32 = arith.constant 0 : i32
    %c0_i32_0 = arith.constant 0 : i32
    %c0_i32_1 = arith.constant 0 : i32
    return %c0_i32, %c0_i32_0 : i32, i32
  }
  func.func @transform_5(%arg0: i32) -> (i32, i32) {
    %c0_i32 = arith.constant 0 : i32
    %c0_i32_0 = arith.constant 0 : i32
    %c0_i32_1 = arith.constant 0 : i32
    return %c0_i32, %c0_i32_0 : i32, i32
  }
}

</mosaic_0001>

<llo_original>
// kernel: simple_cnn_forward.4
$region0: #{simple_cnn_forward.4}
  #allocation0 [shape = 'u32[]', space=smem, size = 0x4, offset = 0x4, fixed_abs, tag = 'smem constant byte address 0x4 - core index']
  #allocation1 [shape = 'u32[144,128]{1,0:T(1,128)}', space=vmem, size = 0x12000, scoped, tag = 'internal scratch']
  %s0 = inlined_call_operand.vmem [shape: bf16[608,32], index: 0, kind: input, shape index: {}]
  %s1 = inlined_call_operand.vmem [shape: bf16[4,32,512], index: 1, kind: input, shape index: {}]
  %s2 = inlined_call_operand.vmem [shape: f32[1,128], index: 2, kind: input, shape index: {}]
  %s3 = inlined_call_operand.vmem [shape: bf16[584,128], index: 3, kind: output, shape index: {}]
  %s4 = sld [smem:[#allocation0]]
  $region22: #{simple_cnn_forward.4} parent=0
    _
  %s6 = ssub.s32 1, %s4
  %s7 = scalar_select 0, %s6, %s4
  // Predicated region
  $region2: #{simple_cnn_forward.4} parent=0 // pred_check
    _
  $region3: #{simple_cnn_forward.4} parent=0 // pred_check_branch
    %9 = sbr.rel (0) target = $region5
  $region4: #{simple_cnn_forward.4} parent=0 // pred_region
    _
  $region5: #{simple_cnn_forward.4} parent=0 // pred_fallthru
    _
  // Predicated region
  $region6: #{simple_cnn_forward.4} parent=0 // pred_check
    _
  $region7: #{simple_cnn_forward.4} parent=0 // pred_check_branch
    %11 = sbr.rel (0) target = $region9
  $region8: #{simple_cnn_forward.4} parent=0 // pred_region
    _
  $region9: #{simple_cnn_forward.4} parent=0 // pred_fallthru
    _
  // Predicated region
  $region10: #{simple_cnn_forward.4} parent=0 // pred_check
    _
  $region11: #{simple_cnn_forward.4} parent=0 // pred_check_branch
    %13 = sbr.rel (0) target = $region13
  $region12: #{simple_cnn_forward.4} parent=0 // pred_region
    _
  $region13: #{simple_cnn_forward.4} parent=0 // pred_fallthru
    _
  %v15 = vld [vmem:[%s0] sm:$0xf]
  %v16 = vld [vmem:[%s0 + $0x4] sm:$0xf]
  %v17 = vld [vmem:[%s0 + $0x8] sm:$0xf]
  %v18 = vld [vmem:[%s0 + $0xc] sm:$0xf]
  %v19 = vld [vmem:[%s0 + $0x10] sm:$0xf]
  %v20 = vld [vmem:[%s0 + $0x14] sm:$0xf]
  %v21 = vld [vmem:[%s0 + $0x18] sm:$0xf]
  %v22 = vld [vmem:[%s0 + $0x1c] sm:$0xf]
  %v23 = vld [vmem:[%s0 + $0x20] sm:$0xf]
  %v24 = vld [vmem:[%s0 + $0x24] sm:$0xf]
  %v25 = vld [vmem:[%s0 + $0x28] sm:$0xf]
  %v26 = vld [vmem:[%s0 + $0x2c] sm:$0xf]
  %v27 = vld [vmem:[%s0 + $0x30] sm:$0xf]
  %v28 = vld [vmem:[%s0 + $0x34] sm:$0xf]
  %v29 = vld [vmem:[%s0 + $0x38] sm:$0xf]
  %v30 = vld [vmem:[%s0 + $0x3c] sm:$0xf]
  %v31 = vld [vmem:[%s0 + $0x40] sm:$0xf]
  %v32 = vld [vmem:[%s0 + $0x44] sm:$0xf]
  %v33 = vld [vmem:[%s0 + $0x48] sm:$0xf]
  %v34 = vld [vmem:[%s0 + $0x4c] sm:$0xf]
  %v35 = vld [vmem:[%s0 + $0x50] sm:$0xf]
  %v36 = vld [vmem:[%s0 + $0x54] sm:$0xf]
  %v37 = vld [vmem:[%s0 + $0x58] sm:$0xf]
  %v38 = vld [vmem:[%s0 + $0x5c] sm:$0xf]
  %v39 = vld [vmem:[%s0 + $0x60] sm:$0xf]
  %v40 = vld [vmem:[%s0 + $0x64] sm:$0xf]
  %v41 = vld [vmem:[%s0 + $0x68] sm:$0xf]
  %v42 = vld [vmem:[%s0 + $0x6c] sm:$0xf]
  %v43 = vld [vmem:[%s0 + $0x70] sm:$0xf]
  %v44 = vld [vmem:[%s0 + $0x74] sm:$0xf]
  %v45 = vld [vmem:[%s0 + $0x78] sm:$0xf]
  %v46 = vld [vmem:[%s0 + $0x7c] sm:$0xf]
  %v47 = vld [vmem:[%s0 + $0x80] sm:$0xf]
  %v48 = vld [vmem:[%s0 + $0x84] sm:$0xf]
  %v49 = vld [vmem:[%s0 + $0x88] sm:$0xf]
  %v50 = vld [vmem:[%s0 + $0x8c] sm:$0xf]
  %v51 = vld [vmem:[%s0 + $0x90] sm:$0xf]
  %v52 = vld [vmem:[%s0 + $0x94] sm:$0xf]
  %v53 = vld [vmem:[%s0 + $0x98] sm:$0xf]
  %v54 = vld [vmem:[%s0 + $0x9c] sm:$0xf]
  %v55 = vld [vmem:[%s0 + $0xa0] sm:$0xf]
  %v56 = vld [vmem:[%s0 + $0xa4] sm:$0xf]
  %v57 = vld [vmem:[%s0 + $0xa8] sm:$0xf]
  %v58 = vld [vmem:[%s0 + $0xac] sm:$0xf]
  %v59 = vld [vmem:[%s0 + $0xb0] sm:$0xf]
  %v60 = vld [vmem:[%s0 + $0xb4] sm:$0xf]
  %v61 = vld [vmem:[%s0 + $0xb8] sm:$0xf]
  %v62 = vld [vmem:[%s0 + $0xbc] sm:$0xf]
  %v63 = vld [vmem:[%s0 + $0xc0] sm:$0xf]
  %v64 = vld [vmem:[%s0 + $0xc4] sm:$0xf]
  %v65 = vld [vmem:[%s0 + $0xc8] sm:$0xf]
  %v66 = vld [vmem:[%s0 + $0xcc] sm:$0xf]
  %v67 = vld [vmem:[%s0 + $0xd0] sm:$0xf]
  %v68 = vld [vmem:[%s0 + $0xd4] sm:$0xf]
  %v69 = vld [vmem:[%s0 + $0xd8] sm:$0xf]
  %v70 = vld [vmem:[%s0 + $0xdc] sm:$0xf]
  %v71 = vld [vmem:[%s0 + $0xe0] sm:$0xf]
  %v72 = vld [vmem:[%s0 + $0xe4] sm:$0xf]
  %v73 = vld [vmem:[%s0 + $0xe8] sm:$0xf]
  %v74 = vld [vmem:[%s0 + $0xec] sm:$0xf]
  %v75 = vld [vmem:[%s0 + $0xf0] sm:$0xf]
  %v76 = vld [vmem:[%s0 + $0xf4] sm:$0xf]
  %v77 = vld [vmem:[%s0 + $0xf8] sm:$0xf]
  %v78 = vld [vmem:[%s0 + $0xfc] sm:$0xf]
  %v79 = vld [vmem:[%s0 + $0x100] sm:$0xf]
  %v80 = vld [vmem:[%s0 + $0x104] sm:$0xf]
  %v81 = vld [vmem:[%s0 + $0x108] sm:$0xf]
  %v82 = vld [vmem:[%s0 + $0x10c] sm:$0xf]
  %v83 = vld [vmem:[%s0 + $0x110] sm:$0xf]
  %v84 = vld [vmem:[%s0 + $0x114] sm:$0xf]
  %v85 = vld [vmem:[%s0 + $0x118] sm:$0xf]
  %v86 = vld [vmem:[%s0 + $0x11c] sm:$0xf]
  %v87 = vld [vmem:[%s0 + $0x120] sm:$0xf]
  %v88 = vld [vmem:[%s1] sm:$0xff]
  %v89 = vld [vmem:[%s1 + $0x8] sm:$0xff]
  %v90 = vld [vmem:[%s1 + $0x10] sm:$0xff]
  %v91 = vld [vmem:[%s1 + $0x18] sm:$0xff]
  %v92 = vld [vmem:[%s1 + $0x20] sm:$0xff]
  %v93 = vld [vmem:[%s1 + $0x28] sm:$0xff]
  %v94 = vld [vmem:[%s1 + $0x30] sm:$0xff]
  %v95 = vld [vmem:[%s1 + $0x38] sm:$0xff]
  %v96 = vld [vmem:[%s0 + $0x124] sm:$0x1]
  %s97 = scalar_lea.vmem %s1, 64
  %v98 = vld [vmem:[%s97] sm:$0xff]
  %v99 = vld [vmem:[%s97 + $0x8] sm:$0xff]
  %v100 = vld [vmem:[%s97 + $0x10] sm:$0xff]
  %v101 = vld [vmem:[%s97 + $0x18] sm:$0xff]
  %v102 = vld [vmem:[%s97 + $0x20] sm:$0xff]
  %v103 = vld [vmem:[%s97 + $0x28] sm:$0xff]
  %v104 = vld [vmem:[%s97 + $0x30] sm:$0xff]
  %v105 = vld [vmem:[%s97 + $0x38] sm:$0xff]
  %v180 = vunpack.c.l.b16 %v15
  %v181 = vunpack.c.l.b16 %v16
  %v182 = vunpack.c.l.b16 %v17
  %v183 = vunpack.c.l.b16 %v18
  %v184 = vunpack.c.l.b16 %v19
  %v185 = vunpack.c.l.b16 %v20
  %v186 = vunpack.c.l.b16 %v21
  %v187 = vunpack.c.l.b16 %v22
  %v188 = vunpack.c.l.b16 %v23
  %v189 = vunpack.c.l.b16 %v24
  %v190 = vunpack.c.l.b16 %v25
  %v191 = vunpack.c.l.b16 %v26
  %v192 = vunpack.c.l.b16 %v27
  %v193 = vunpack.c.l.b16 %v28
  %v194 = vunpack.c.l.b16 %v29
  %v195 = vunpack.c.l.b16 %v30
  %v196 = vunpack.c.l.b16 %v31
  %v197 = vunpack.c.l.b16 %v32
  %v198 = vunpack.c.l.b16 %v33
  %v199 = vunpack.c.l.b16 %v34
  %v200 = vunpack.c.l.b16 %v35
  %v201 = vunpack.c.l.b16 %v36
  %v202 = vunpack.c.l.b16 %v37
  %v203 = vunpack.c.l.b16 %v38
  %v204 = vunpack.c.l.b16 %v39
  %v205 = vunpack.c.l.b16 %v40
  %v206 = vunpack.c.l.b16 %v41
  %v207 = vunpack.c.l.b16 %v42
  %v208 = vunpack.c.l.b16 %v43
  %v209 = vunpack.c.l.b16 %v44
  %v210 = vunpack.c.l.b16 %v45
  %v211 = vunpack.c.l.b16 %v46
  %v212 = vunpack.c.l.b16 %v47
  %v213 = vunpack.c.l.b16 %v48
  %v214 = vunpack.c.l.b16 %v49
  %v215 = vunpack.c.l.b16 %v50
  %v216 = vunpack.c.l.b16 %v51
  %v217 = vunpack.c.l.b16 %v52
  %v218 = vunpack.c.l.b16 %v53
  %v219 = vunpack.c.l.b16 %v54
  %v220 = vunpack.c.l.b16 %v55
  %v221 = vunpack.c.l.b16 %v56
  %v222 = vunpack.c.l.b16 %v57
  %v223 = vunpack.c.l.b16 %v58
  %v224 = vunpack.c.l.b16 %v59
  %v225 = vunpack.c.l.b16 %v60
  %v226 = vunpack.c.l.b16 %v61
  %v227 = vunpack.c.l.b16 %v62
  %v228 = vunpack.c.l.b16 %v63
  %v229 = vunpack.c.l.b16 %v64
  %v230 = vunpack.c.l.b16 %v65
  %v231 = vunpack.c.l.b16 %v66
  %v232 = vunpack.c.l.b16 %v67
  %v233 = vunpack.c.l.b16 %v68
  %v234 = vunpack.c.l.b16 %v69
  %v235 = vunpack.c.l.b16 %v70
  %v236 = vunpack.c.l.b16 %v71
  %v237 = vunpack.c.l.b16 %v72
  %v238 = vunpack.c.l.b16 %v73
  %v239 = vunpack.c.l.b16 %v74
  %v240 = vunpack.c.l.b16 %v75
  %v241 = vunpack.c.l.b16 %v76
  %v242 = vunpack.c.l.b16 %v77
  %v243 = vunpack.c.l.b16 %v78
  %v244 = vunpack.c.l.b16 %v79
  %v245 = vunpack.c.l.b16 %v80
  %v246 = vunpack.c.l.b16 %v81
  %v247 = vunpack.c.l.b16 %v82
  %v248 = vunpack.c.l.b16 %v83
  %v249 = vunpack.c.l.b16 %v84
  %v250 = vunpack.c.l.b16 %v85
  %v251 = vunpack.c.l.b16 %v86
  %v252 = vunpack.c.l.b16 %v87
  %v253 = vunpack.c.l.b16 %v96
  %v254 = vpack.c.b16 %v181, %v180
  %v255 = vpack.c.b16 %v183, %v182
  %v256 = vpack.c.b16 %v185, %v184
  %v257 = vpack.c.b16 %v187, %v186
  %v258 = vpack.c.b16 %v189, %v188
  %v259 = vpack.c.b16 %v191, %v190
  %v260 = vpack.c.b16 %v193, %v192
  %v261 = vpack.c.b16 %v195, %v194
  %v262 = vpack.c.b16 %v197, %v196
  %v263 = vpack.c.b16 %v199, %v198
  %v264 = vpack.c.b16 %v201, %v200
  %v265 = vpack.c.b16 %v203, %v202
  %v266 = vpack.c.b16 %v205, %v204
  %v267 = vpack.c.b16 %v207, %v206
  %v268 = vpack.c.b16 %v209, %v208
  %v269 = vpack.c.b16 %v211, %v210
  %v270 = vpack.c.b16 %v213, %v212
  %v271 = vpack.c.b16 %v215, %v214
  %v272 = vpack.c.b16 %v217, %v216
  %v273 = vpack.c.b16 %v219, %v218
  %v274 = vpack.c.b16 %v221, %v220
  %v275 = vpack.c.b16 %v223, %v222
  %v276 = vpack.c.b16 %v225, %v224
  %v277 = vpack.c.b16 %v227, %v226
  %v278 = vpack.c.b16 %v229, %v228
  %v279 = vpack.c.b16 %v231, %v230
  %v280 = vpack.c.b16 %v233, %v232
  %v281 = vpack.c.b16 %v235, %v234
  %v282 = vpack.c.b16 %v237, %v236
  %v283 = vpack.c.b16 %v239, %v238
  %v284 = vpack.c.b16 %v241, %v240
  %v285 = vpack.c.b16 %v243, %v242
  %v286 = vpack.c.b16 %v245, %v244
  %v287 = vpack.c.b16 %v247, %v246
  %v288 = vpack.c.b16 %v249, %v248
  %v289 = vpack.c.b16 %v251, %v250
  %v290 = vpack.c.b16 %v253, %v252
  %vm291 = vsmask.f32 7424
  %v293 = vshrl.u32 %v254, 16
  %v295 = vshll.u32 %v254, 16
  %v297 = vrot.slane %v295, 1
  %v298 = vor.u32 %v293, %v297
  %v300 = vshll.u32 %v255, 16
  %v302 = vrot.slane %v300, 1
  %v303 = vsel %vm291, %v298, %v302
  %v304 = vshrl.u32 %v255, 16
  %v306 = vor.u32 %v304, %v302
  %v308 = vshll.u32 %v256, 16
  %v310 = vrot.slane %v308, 1
  %v311 = vsel %vm291, %v306, %v310
  %v312 = vshrl.u32 %v256, 16
  %v314 = vor.u32 %v312, %v310
  %v316 = vshll.u32 %v257, 16
  %v318 = vrot.slane %v316, 1
  %v319 = vsel %vm291, %v314, %v318
  %v320 = vshrl.u32 %v257, 16
  %v322 = vor.u32 %v320, %v318
  %v324 = vshll.u32 %v258, 16
  %v326 = vrot.slane %v324, 1
  %v327 = vsel %vm291, %v322, %v326
  %v328 = vshrl.u32 %v258, 16
  %v330 = vor.u32 %v328, %v326
  %v332 = vshll.u32 %v259, 16
  %v334 = vrot.slane %v332, 1
  %v335 = vsel %vm291, %v330, %v334
  %v336 = vshrl.u32 %v259, 16
  %v338 = vor.u32 %v336, %v334
  %v340 = vshll.u32 %v260, 16
  %v342 = vrot.slane %v340, 1
  %v343 = vsel %vm291, %v338, %v342
  %v344 = vshrl.u32 %v260, 16
  %v346 = vor.u32 %v344, %v342
  %v348 = vshll.u32 %v261, 16
  %v350 = vrot.slane %v348, 1
  %v351 = vsel %vm291, %v346, %v350
  %v352 = vshrl.u32 %v261, 16
  %v354 = vor.u32 %v352, %v350
  %v356 = vshll.u32 %v262, 16
  %v358 = vrot.slane %v356, 1
  %v359 = vsel %vm291, %v354, %v358
  %v360 = vshrl.u32 %v262, 16
  %v362 = vor.u32 %v360, %v358
  %v364 = vshll.u32 %v263, 16
  %v366 = vrot.slane %v364, 1
  %v367 = vsel %vm291, %v362, %v366
  %v368 = vshrl.u32 %v263, 16
  %v370 = vor.u32 %v368, %v366
  %v372 = vshll.u32 %v264, 16
  %v374 = vrot.slane %v372, 1
  %v375 = vsel %vm291, %v370, %v374
  %v376 = vshrl.u32 %v264, 16
  %v378 = vor.u32 %v376, %v374
  %v380 = vshll.u32 %v265, 16
  %v382 = vrot.slane %v380, 1
  %v383 = vsel %vm291, %v378, %v382
  %v384 = vshrl.u32 %v265, 16
  %v386 = vor.u32 %v384, %v382
  %v388 = vshll.u32 %v266, 16
  %v390 = vrot.slane %v388, 1
  %v391 = vsel %vm291, %v386, %v390
  %v392 = vshrl.u32 %v266, 16
  %v394 = vor.u32 %v392, %v390
  %v396 = vshll.u32 %v267, 16
  %v398 = vrot.slane %v396, 1
  %v399 = vsel %vm291, %v394, %v398
  %v400 = vshrl.u32 %v267, 16
  %v402 = vor.u32 %v400, %v398
  %v404 = vshll.u32 %v268, 16
  %v406 = vrot.slane %v404, 1
  %v407 = vsel %vm291, %v402, %v406
  %v408 = vshrl.u32 %v268, 16
  %v410 = vor.u32 %v408, %v406
  %v412 = vshll.u32 %v269, 16
  %v414 = vrot.slane %v412, 1
  %v415 = vsel %vm291, %v410, %v414
  %v416 = vshrl.u32 %v269, 16
  %v418 = vor.u32 %v416, %v414
  %v420 = vshll.u32 %v270, 16
  %v422 = vrot.slane %v420, 1
  %v423 = vsel %vm291, %v418, %v422
  %v424 = vshrl.u32 %v270, 16
  %v426 = vor.u32 %v424, %v422
  %v428 = vshll.u32 %v271, 16
  %v430 = vrot.slane %v428, 1
  %v431 = vsel %vm291, %v426, %v430
  %v432 = vshrl.u32 %v271, 16
  %v434 = vor.u32 %v432, %v430
  %v436 = vshll.u32 %v272, 16
  %v438 = vrot.slane %v436, 1
  %v439 = vsel %vm291, %v434, %v438
  %v440 = vshrl.u32 %v272, 16
  %v442 = vor.u32 %v440, %v438
  %v444 = vshll.u32 %v273, 16
  %v446 = vrot.slane %v444, 1
  %v447 = vsel %vm291, %v442, %v446
  %v448 = vshrl.u32 %v273, 16
  %v450 = vor.u32 %v448, %v446
  %v452 = vshll.u32 %v274, 16
  %v454 = vrot.slane %v452, 1
  %v455 = vsel %vm291, %v450, %v454
  %v456 = vshrl.u32 %v274, 16
  %v458 = vor.u32 %v456, %v454
  %v460 = vshll.u32 %v275, 16
  %v462 = vrot.slane %v460, 1
  %v463 = vsel %vm291, %v458, %v462
  %v464 = vshrl.u32 %v275, 16
  %v466 = vor.u32 %v464, %v462
  %v468 = vshll.u32 %v276, 16
  %v470 = vrot.slane %v468, 1
  %v471 = vsel %vm291, %v466, %v470
  %v472 = vshrl.u32 %v276, 16
  %v474 = vor.u32 %v472, %v470
  %v476 = vshll.u32 %v277, 16
  %v478 = vrot.slane %v476, 1
  %v479 = vsel %vm291, %v474, %v478
  %v480 = vshrl.u32 %v277, 16
  %v482 = vor.u32 %v480, %v478
  %v484 = vshll.u32 %v278, 16
  %v486 = vrot.slane %v484, 1
  %v487 = vsel %vm291, %v482, %v486
  %v488 = vshrl.u32 %v278, 16
  %v490 = vor.u32 %v488, %v486
  %v492 = vshll.u32 %v279, 16
  %v494 = vrot.slane %v492, 1
  %v495 = vsel %vm291, %v490, %v494
  %v496 = vshrl.u32 %v279, 16
  %v498 = vor.u32 %v496, %v494
  %v500 = vshll.u32 %v280, 16
  %v502 = vrot.slane %v500, 1
  %v503 = vsel %vm291, %v498, %v502
  %v504 = vshrl.u32 %v280, 16
  %v506 = vor.u32 %v504, %v502
  %v508 = vshll.u32 %v281, 16
  %v510 = vrot.slane %v508, 1
  %v511 = vsel %vm291, %v506, %v510
  %v512 = vshrl.u32 %v281, 16
  %v514 = vor.u32 %v512, %v510
  %v516 = vshll.u32 %v282, 16
  %v518 = vrot.slane %v516, 1
  %v519 = vsel %vm291, %v514, %v518
  %v520 = vshrl.u32 %v282, 16
  %v522 = vor.u32 %v520, %v518
  %v524 = vshll.u32 %v283, 16
  %v526 = vrot.slane %v524, 1
  %v527 = vsel %vm291, %v522, %v526
  %v528 = vshrl.u32 %v283, 16
  %v530 = vor.u32 %v528, %v526
  %v532 = vshll.u32 %v284, 16
  %v534 = vrot.slane %v532, 1
  %v535 = vsel %vm291, %v530, %v534
  %v536 = vshrl.u32 %v284, 16
  %v538 = vor.u32 %v536, %v534
  %v540 = vshll.u32 %v285, 16
  %v542 = vrot.slane %v540, 1
  %v543 = vsel %vm291, %v538, %v542
  %v544 = vshrl.u32 %v285, 16
  %v546 = vor.u32 %v544, %v542
  %v548 = vshll.u32 %v286, 16
  %v550 = vrot.slane %v548, 1
  %v551 = vsel %vm291, %v546, %v550
  %v552 = vshrl.u32 %v286, 16
  %v554 = vor.u32 %v552, %v550
  %v556 = vshll.u32 %v287, 16
  %v558 = vrot.slane %v556, 1
  %v559 = vsel %vm291, %v554, %v558
  %v560 = vshrl.u32 %v287, 16
  %v562 = vor.u32 %v560, %v558
  %v564 = vshll.u32 %v288, 16
  %v566 = vrot.slane %v564, 1
  %v567 = vsel %vm291, %v562, %v566
  %v568 = vshrl.u32 %v288, 16
  %v570 = vor.u32 %v568, %v566
  %v572 = vshll.u32 %v289, 16
  %v574 = vrot.slane %v572, 1
  %v575 = vsel %vm291, %v570, %v574
  %v576 = vshrl.u32 %v289, 16
  %v578 = vor.u32 %v576, %v574
  %v580 = vshll.u32 %v290, 16
  %v582 = vrot.slane %v580, 1
  %v583 = vsel %vm291, %v578, %v582
  %v584 = vshrl.u32 %v290, 16
  %v586 = vor.u32 %v584, %v582
  %v595 = vunpack.c.l.b16 %v98
  %v596 = vunpack.c.h.b16 %v98
  %v597 = vunpack.c.l.b16 %v99
  %v598 = vunpack.c.h.b16 %v99
  %v599 = vunpack.c.l.b16 %v100
  %v600 = vunpack.c.h.b16 %v100
  %v601 = vunpack.c.l.b16 %v101
  %v602 = vunpack.c.h.b16 %v101
  %v603 = vunpack.c.l.b16 %v102
  %v604 = vunpack.c.h.b16 %v102
  %v605 = vunpack.c.l.b16 %v103
  %v606 = vunpack.c.h.b16 %v103
  %v607 = vunpack.c.l.b16 %v104
  %v608 = vunpack.c.h.b16 %v104
  %v609 = vunpack.c.l.b16 %v105
  %v610 = vunpack.c.h.b16 %v105
  %v611 = vpack.c.b16 %v599, %v595
  %v612 = vpack.c.b16 %v600, %v596
  %v613 = vpack.c.b16 %v601, %v597
  %v614 = vpack.c.b16 %v602, %v598
  %v615 = vpack.c.b16 %v607, %v603
  %v616 = vpack.c.b16 %v608, %v604
  %v617 = vpack.c.b16 %v609, %v605
  %v618 = vpack.c.b16 %v610, %v606
  %vm627 = vcmask 261120
  %v629 = vsel %vm627, %v303, 0
  %v632 = vsel %vm627, %v311, 0
  %v635 = vsel %vm627, %v319, 0
  %v638 = vsel %vm627, %v327, 0
  %v641 = vsel %vm627, %v335, 0
  %v644 = vsel %vm627, %v343, 0
  %v647 = vsel %vm627, %v351, 0
  %v650 = vsel %vm627, %v359, 0
  %v653 = vsel %vm627, %v367, 0
  %v656 = vsel %vm627, %v375, 0
  %v659 = vsel %vm627, %v383, 0
  %v662 = vsel %vm627, %v391, 0
  %v665 = vsel %vm627, %v399, 0
  %v668 = vsel %vm627, %v407, 0
  %v671 = vsel %vm627, %v415, 0
  %v674 = vsel %vm627, %v423, 0
  %v677 = vsel %vm627, %v431, 0
  %v680 = vsel %vm627, %v439, 0
  %v683 = vsel %vm627, %v447, 0
  %v686 = vsel %vm627, %v455, 0
  %v689 = vsel %vm627, %v463, 0
  %v692 = vsel %vm627, %v471, 0
  %v695 = vsel %vm627, %v479, 0
  %v698 = vsel %vm627, %v487, 0
  %v701 = vsel %vm627, %v495, 0
  %v704 = vsel %vm627, %v503, 0
  %v707 = vsel %vm627, %v511, 0
  %v710 = vsel %vm627, %v519, 0
  %v713 = vsel %vm627, %v527, 0
  %v716 = vsel %vm627, %v535, 0
  %v719 = vsel %vm627, %v543, 0
  %v722 = vsel %vm627, %v551, 0
  %v725 = vsel %vm627, %v559, 0
  %v728 = vsel %vm627, %v567, 0
  %v731 = vsel %vm627, %v575, 0
  %v734 = vsel %vm627, %v583, 0
  %v737 = vsel %vm627, %v586, 0
  %739 = vmatprep.subr.bf16.mxu0 %v612
  %740 = vmatpush1.bf16.msra.mxu0 %v611
  %741 = vmatprep.subr.bf16.mxu0 %v616
  %742 = vmatpush1.bf16.msra.mxu0 %v615
  %743 = vmatprep.subr.bf16.mxu0 0
  %744 = vmatpush1.bf16.msra.mxu0 0
  %745 = vmatprep.subr.bf16.mxu0 0
  %746 = vmatpush1.bf16.msra.mxu0 0
  %747 = vmatprep.subr.bf16.mxu0 0
  %748 = vmatpush1.bf16.msra.mxu0 0
  %749 = vmatprep.subr.bf16.mxu0 0
  %750 = vmatpush1.bf16.msra.mxu0 0
  %751 = vmatprep.subr.bf16.mxu0 0
  %752 = vmatpush1.bf16.msra.mxu0 0
  %753 = vmatprep.subr.bf16.mxu0 0
  %754 = vmatpush1.bf16.msra.mxu0 0
  %755 = vmatprep.subr.bf16.mxu0 0
  %756 = vmatpush1.bf16.msra.mxu0 0
  %757 = vmatprep.subr.bf16.mxu0 0
  %758 = vmatpush1.bf16.msra.mxu0 0
  %759 = vmatprep.subr.bf16.mxu0 0
  %760 = vmatpush1.bf16.msra.mxu0 0
  %761 = vmatprep.subr.bf16.mxu0 0
  %762 = vmatpush1.bf16.msra.mxu0 0
  %763 = vmatprep.subr.bf16.mxu0 0
  %764 = vmatpush1.bf16.msra.mxu0 0
  %765 = vmatprep.subr.bf16.mxu0 0
  %766 = vmatpush1.bf16.msra.mxu0 0
  %767 = vmatprep.subr.bf16.mxu0 0
  %768 = vmatpush1.bf16.msra.mxu0 0
  %769 = vmatprep.subr.bf16.mxu0 0
  %770 = vmatpush1.bf16.msra.mxu0 0
  %771 = vmatprep.mubr.bf16.mxu0 0
  %772 = vmatmul.mubr.bf16.gmra.mrb[0].mxu0 %v629
  %v773 = vpop.f32.mrb[0].mxu0
  %v774 = vadd.f32 0.0, %v773
  %v775 = vpop.f32.mrb[0].mxu0
  %v776 = vadd.f32 0.0, %v775
  %v777 = vpop.f32.mrb[0].mxu0
  %v778 = vadd.f32 0.0, %v777
  %v779 = vpop.f32.mrb[0].mxu0
  %v780 = vadd.f32 0.0, %v779
  %781 = vmatprep.mubr.bf16.mxu0 0
  %782 = vmatmul.mubr.bf16.gmra.mrb[0].mxu0 %v632
  %v783 = vpop.f32.mrb[0].mxu0
  %v784 = vadd.f32 0.0, %v783
  %v785 = vpop.f32.mrb[0].mxu0
  %v786 = vadd.f32 0.0, %v785
  %v787 = vpop.f32.mrb[0].mxu0
  %v788 = vadd.f32 0.0, %v787
  %v789 = vpop.f32.mrb[0].mxu0
  %v790 = vadd.f32 0.0, %v789
  %791 = vmatprep.mubr.bf16.mxu0 0
  %792 = vmatmul.mubr.bf16.gmra.mrb[0].mxu0 %v635
  %v793 = vpop.f32.mrb[0].mxu0
  %v794 = vadd.f32 0.0, %v793
  %v795 = vpop.f32.mrb[0].mxu0
  %v796 = vadd.f32 0.0, %v795
  %v797 = vpop.f32.mrb[0].mxu0
  %v798 = vadd.f32 0.0, %v797
  %v799 = vpop.f32.mrb[0].mxu0
  %v800 = vadd.f32 0.0, %v799
  %801 = vmatprep.mubr.bf16.mxu0 0
  %802 = vmatmul.mubr.bf16.gmra.mrb[0].mxu0 %v638
  %v803 = vpop.f32.mrb[0].mxu0
  %v804 = vadd.f32 0.0, %v803
  %v805 = vpop.f32.mrb[0].mxu0
  %v806 = vadd.f32 0.0, %v805
  %v807 = vpop.f32.mrb[0].mxu0
  %v808 = vadd.f32 0.0, %v807
  %v809 = vpop.f32.mrb[0].mxu0
  %v810 = vadd.f32 0.0, %v809
  %811 = vmatprep.mubr.bf16.mxu0 0
  %812 = vmatmul.mubr.bf16.gmra.mrb[0].mxu0 %v641
  %v813 = vpop.f32.mrb[0].mxu0
  %v814 = vadd.f32 0.0, %v813
  %v815 = vpop.f32.mrb[0].mxu0
  %v816 = vadd.f32 0.0, %v815
  %v817 = vpop.f32.mrb[0].mxu0
  %v818 = vadd.f32 0.0, %v817
  %v819 = vpop.f32.mrb[0].mxu0
  %v820 = vadd.f32 0.0, %v819
  %821 = vmatprep.mubr.bf16.mxu0 0
  %822 = vmatmul.mubr.bf16.gmra.mrb[0].mxu0 %v644
  %v823 = vpop.f32.mrb[0].mxu0
  %v824 = vadd.f32 0.0, %v823
  %v825 = vpop.f32.mrb[0].mxu0
  %v826 = vadd.f32 0.0, %v825
  %v827 = vpop.f32.mrb[0].mxu0
  %v828 = vadd.f32 0.0, %v827
  %v829 = vpop.f32.mrb[0].mxu0
  %v830 = vadd.f32 0.0, %v829
  %831 = vmatprep.mubr.bf16.mxu0 0
  %832 = vmatmul.mubr.bf16.gmra.mrb[0].mxu0 %v647
  %v833 = vpop.f32.mrb[0].mxu0
  %v834 = vadd.f32 0.0, %v833
  %v835 = vpop.f32.mrb[0].mxu0
  %v836 = vadd.f32 0.0, %v835
  %v837 = vpop.f32.mrb[0].mxu0
  %v838 = vadd.f32 0.0, %v837
  %v839 = vpop.f32.mrb[0].mxu0
  %v840 = vadd.f32 0.0, %v839
  %841 = vmatprep.mubr.bf16.mxu0 0
  %842 = vmatmul.mubr.bf16.gmra.mrb[0].mxu0 %v650
  %v843 = vpop.f32.mrb[0].mxu0
  %v844 = vadd.f32 0.0, %v843
  %v845 = vpop.f32.mrb[0].mxu0
  %v846 = vadd.f32 0.0, %v845
  %v847 = vpop.f32.mrb[0].mxu0
  %v848 = vadd.f32 0.0, %v847
  %v849 = vpop.f32.mrb[0].mxu0
  %v850 = vadd.f32 0.0, %v849
  %851 = vmatprep.mubr.bf16.mxu0 0
  %852 = vmatmul.mubr.bf16.gmra.mrb[0].mxu0 %v653
  %v853 = vpop.f32.mrb[0].mxu0
  %v854 = vadd.f32 0.0, %v853
  %v855 = vpop.f32.mrb[0].mxu0
  %v856 = vadd.f32 0.0, %v855
  %v857 = vpop.f32.mrb[0].mxu0
  %v858 = vadd.f32 0.0, %v857
  %v859 = vpop.f32.mrb[0].mxu0
  %v860 = vadd.f32 0.0, %v859
  %861 = vmatprep.mubr.bf16.mxu0 0
  %862 = vmatmul.mubr.bf16.gmra.mrb[0].mxu0 %v656
  %v863 = vpop.f32.mrb[0].mxu0
  %v864 = vadd.f32 0.0, %v863
  %v865 = vpop.f32.mrb[0].mxu0
  %v866 = vadd.f32 0.0, %v865
  %v867 = vpop.f32.mrb[0].mxu0
  %v868 = vadd.f32 0.0, %v867
  %v869 = vpop.f32.mrb[0].mxu0
  %v870 = vadd.f32 0.0, %v869
  %871 = vmatprep.mubr.bf16.mxu0 0
  %872 = vmatmul.mubr.bf16.gmra.mrb[0].mxu0 %v659
  %v873 = vpop.f32.mrb[0].mxu0
  %v874 = vadd.f32 0.0, %v873
  %v875 = vpop.f32.mrb[0].mxu0
  %v876 = vadd.f32 0.0, %v875
  %v877 = vpop.f32.mrb[0].mxu0
  %v878 = vadd.f32 0.0, %v877
  %v879 = vpop.f32.mrb[0].mxu0
  %v880 = vadd.f32 0.0, %v879
  %881 = vmatprep.mubr.bf16.mxu0 0
  %882 = vmatmul.mubr.bf16.gmra.mrb[0].mxu0 %v662
  %v883 = vpop.f32.mrb[0].mxu0
  %v884 = vadd.f32 0.0, %v883
  %v885 = vpop.f32.mrb[0].mxu0
  %v886 = vadd.f32 0.0, %v885
  %v887 = vpop.f32.mrb[0].mxu0
  %v888 = vadd.f32 0.0, %v887
  %v889 = vpop.f32.mrb[0].mxu0
  %v890 = vadd.f32 0.0, %v889
  %891 = vmatprep.mubr.bf16.mxu0 0
  %892 = vmatmul.mubr.bf16.gmra.mrb[0].mxu0 %v665
  %v893 = vpop.f32.mrb[0].mxu0
  %v894 = vadd.f32 0.0, %v893
  %v895 = vpop.f32.mrb[0].mxu0
  %v896 = vadd.f32 0.0, %v895
  %v897 = vpop.f32.mrb[0].mxu0
  %v898 = vadd.f32 0.0, %v897
  %v899 = vpop.f32.mrb[0].mxu0
  %v900 = vadd.f32 0.0, %v899
  %901 = vmatprep.mubr.bf16.mxu0 0
  %902 = vmatmul.mubr.bf16.gmra.mrb[0].mxu0 %v668
  %v903 = vpop.f32.mrb[0].mxu0
  %v904 = vadd.f32 0.0, %v903
  %v905 = vpop.f32.mrb[0].mxu0
  %v906 = vadd.f32 0.0, %v905
  %v907 = vpop.f32.mrb[0].mxu0
  %v908 = vadd.f32 0.0, %v907
  %v909 = vpop.f32.mrb[0].mxu0
  %v910 = vadd.f32 0.0, %v909
  %911 = vmatprep.mubr.bf16.mxu0 0
  %912 = vmatmul.mubr.bf16.gmra.mrb[0].mxu0 %v671
  %v913 = vpop.f32.mrb[0].mxu0
  %v914 = vadd.f32 0.0, %v913
  %v915 = vpop.f32.mrb[0].mxu0
  %v916 = vadd.f32 0.0, %v915
  %v917 = vpop.f32.mrb[0].mxu0
  %v918 = vadd.f32 0.0, %v917
  %v919 = vpop.f32.mrb[0].mxu0
  %v920 = vadd.f32 0.0, %v919
  %921 = vmatprep.mubr.bf16.mxu0 0
  %922 = vmatmul.mubr.bf16.gmra.mrb[0].mxu0 %v674
  %v923 = vpop.f32.mrb[0].mxu0
  %v924 = vadd.f32 0.0, %v923
  %v925 = vpop.f32.mrb[0].mxu0
  %v926 = vadd.f32 0.0, %v925
  %v927 = vpop.f32.mrb[0].mxu0
  %v928 = vadd.f32 0.0, %v927
  %v929 = vpop.f32.mrb[0].mxu0
  %v930 = vadd.f32 0.0, %v929
  %931 = vmatprep.mubr.bf16.mxu0 0
  %932 = vmatmul.mubr.bf16.gmra.mrb[0].mxu0 %v677
  %v933 = vpop.f32.mrb[0].mxu0
  %v934 = vadd.f32 0.0, %v933
  %v935 = vpop.f32.mrb[0].mxu0
  %v936 = vadd.f32 0.0, %v935
  %v937 = vpop.f32.mrb[0].mxu0
  %v938 = vadd.f32 0.0, %v937
  %v939 = vpop.f32.mrb[0].mxu0
  %v940 = vadd.f32 0.0, %v939
  %941 = vmatprep.mubr.bf16.mxu0 0
  %942 = vmatmul.mubr.bf16.gmra.mrb[0].mxu0 %v680
  %v943 = vpop.f32.mrb[0].mxu0
  %v944 = vadd.f32 0.0, %v943
  %v945 = vpop.f32.mrb[0].mxu0
  %v946 = vadd.f32 0.0, %v945
  %v947 = vpop.f32.mrb[0].mxu0
  %v948 = vadd.f32 0.0, %v947
  %v949 = vpop.f32.mrb[0].mxu0
  %v950 = vadd.f32 0.0, %v949
  %951 = vmatprep.mubr.bf16.mxu0 0
  %952 = vmatmul.mubr.bf16.gmra.mrb[0].mxu0 %v683
  %v953 = vpop.f32.mrb[0].mxu0
  %v954 = vadd.f32 0.0, %v953
  %v955 = vpop.f32.mrb[0].mxu0
  %v956 = vadd.f32 0.0, %v955
  %v957 = vpop.f32.mrb[0].mxu0
  %v958 = vadd.f32 0.0, %v957
  %v959 = vpop.f32.mrb[0].mxu0
  %v960 = vadd.f32 0.0, %v959
  %961 = vmatprep.mubr.bf16.mxu0 0
  %962 = vmatmul.mubr.bf16.gmra.mrb[0].mxu0 %v686
  %v963 = vpop.f32.mrb[0].mxu0
  %v964 = vadd.f32 0.0, %v963
  %v965 = vpop.f32.mrb[0].mxu0
  %v966 = vadd.f32 0.0, %v965
  %v967 = vpop.f32.mrb[0].mxu0
  %v968 = vadd.f32 0.0, %v967
  %v969 = vpop.f32.mrb[0].mxu0
  %v970 = vadd.f32 0.0, %v969
  %971 = vmatprep.mubr.bf16.mxu0 0
  %972 = vmatmul.mubr.bf16.gmra.mrb[0].mxu0 %v689
  %v973 = vpop.f32.mrb[0].mxu0
  %v974 = vadd.f32 0.0, %v973
  %v975 = vpop.f32.mrb[0].mxu0
  %v976 = vadd.f32 0.0, %v975
  %v977 = vpop.f32.mrb[0].mxu0
  %v978 = vadd.f32 0.0, %v977
  %v979 = vpop.f32.mrb[0].mxu0
  %v980 = vadd.f32 0.0, %v979
  %981 = vmatprep.mubr.bf16.mxu0 0
  %982 = vmatmul.mubr.bf16.gmra.mrb[0].mxu0 %v692
  %v983 = vpop.f32.mrb[0].mxu0
  %v984 = vadd.f32 0.0, %v983
  %v985 = vpop.f32.mrb[0].mxu0
  %v986 = vadd.f32 0.0, %v985
  %v987 = vpop.f32.mrb[0].mxu0
  %v988 = vadd.f32 0.0, %v987
  %v989 = vpop.f32.mrb[0].mxu0
  %v990 = vadd.f32 0.0, %v989
  %991 = vmatprep.mubr.bf16.mxu0 0
  %992 = vmatmul.mubr.bf16.gmra.mrb[0].mxu0 %v695
  %v993 = vpop.f32.mrb[0].mxu0
  %v994 = vadd.f32 0.0, %v993
  %v995 = vpop.f32.mrb[0].mxu0
  %v996 = vadd.f32 0.0, %v995
  %v997 = vpop.f32.mrb[0].mxu0
  %v998 = vadd.f32 0.0, %v997
  %v999 = vpop.f32.mrb[0].mxu0
  %v1000 = vadd.f32 0.0, %v999
  %1001 = vmatprep.mubr.bf16.mxu0 0
  %1002 = vmatmul.mubr.bf16.gmra.mrb[0].mxu0 %v698
  %v1003 = vpop.f32.mrb[0].mxu0
  %v1004 = vadd.f32 0.0, %v1003
  %v1005 = vpop.f32.mrb[0].mxu0
  %v1006 = vadd.f32 0.0, %v1005
  %v1007 = vpop.f32.mrb[0].mxu0
  %v1008 = vadd.f32 0.0, %v1007
  %v1009 = vpop.f32.mrb[0].mxu0
  %v1010 = vadd.f32 0.0, %v1009
  %1011 = vmatprep.mubr.bf16.mxu0 0
  %1012 = vmatmul.mubr.bf16.gmra.mrb[0].mxu0 %v701
  %v1013 = vpop.f32.mrb[0].mxu0
  %v1014 = vadd.f32 0.0, %v1013
  %v1015 = vpop.f32.mrb[0].mxu0
  %v1016 = vadd.f32 0.0, %v1015
  %v1017 = vpop.f32.mrb[0].mxu0
  %v1018 = vadd.f32 0.0, %v1017
  %v1019 = vpop.f32.mrb[0].mxu0
  %v1020 = vadd.f32 0.0, %v1019
  %1021 = vmatprep.mubr.bf16.mxu0 0
  %1022 = vmatmul.mubr.bf16.gmra.mrb[0].mxu0 %v704
  %v1023 = vpop.f32.mrb[0].mxu0
  %v1024 = vadd.f32 0.0, %v1023
  %v1025 = vpop.f32.mrb[0].mxu0
  %v1026 = vadd.f32 0.0, %v1025
  %v1027 = vpop.f32.mrb[0].mxu0
  %v1028 = vadd.f32 0.0, %v1027
  %v1029 = vpop.f32.mrb[0].mxu0
  %v1030 = vadd.f32 0.0, %v1029
  %1031 = vmatprep.mubr.bf16.mxu0 0
  %1032 = vmatmul.mubr.bf16.gmra.mrb[0].mxu0 %v707
  %v1033 = vpop.f32.mrb[0].mxu0
  %v1034 = vadd.f32 0.0, %v1033
  %v1035 = vpop.f32.mrb[0].mxu0
  %v1036 = vadd.f32 0.0, %v1035
  %v1037 = vpop.f32.mrb[0].mxu0
  %v1038 = vadd.f32 0.0, %v1037
  %v1039 = vpop.f32.mrb[0].mxu0
  %v1040 = vadd.f32 0.0, %v1039
  %1041 = vmatprep.mubr.bf16.mxu0 0
  %1042 = vmatmul.mubr.bf16.gmra.mrb[0].mxu0 %v710
  %v1043 = vpop.f32.mrb[0].mxu0
  %v1044 = vadd.f32 0.0, %v1043
  %v1045 = vpop.f32.mrb[0].mxu0
  %v1046 = vadd.f32 0.0, %v1045
  %v1047 = vpop.f32.mrb[0].mxu0
  %v1048 = vadd.f32 0.0, %v1047
  %v1049 = vpop.f32.mrb[0].mxu0
  %v1050 = vadd.f32 0.0, %v1049
  %1051 = vmatprep.mubr.bf16.mxu0 0
  %1052 = vmatmul.mubr.bf16.gmra.mrb[0].mxu0 %v713
  %v1053 = vpop.f32.mrb[0].mxu0
  %v1054 = vadd.f32 0.0, %v1053
  %v1055 = vpop.f32.mrb[0].mxu0
  %v1056 = vadd.f32 0.0, %v1055
  %v1057 = vpop.f32.mrb[0].mxu0
  %v1058 = vadd.f32 0.0, %v1057
  %v1059 = vpop.f32.mrb[0].mxu0
  %v1060 = vadd.f32 0.0, %v1059
  %1061 = vmatprep.mubr.bf16.mxu0 0
  %1062 = vmatmul.mubr.bf16.gmra.mrb[0].mxu0 %v716
  %v1063 = vpop.f32.mrb[0].mxu0
  %v1064 = vadd.f32 0.0, %v1063
  %v1065 = vpop.f32.mrb[0].mxu0
  %v1066 = vadd.f32 0.0, %v1065
  %v1067 = vpop.f32.mrb[0].mxu0
  %v1068 = vadd.f32 0.0, %v1067
  %v1069 = vpop.f32.mrb[0].mxu0
  %v1070 = vadd.f32 0.0, %v1069
  %1071 = vmatprep.mubr.bf16.mxu0 0
  %1072 = vmatmul.mubr.bf16.gmra.mrb[0].mxu0 %v719
  %v1073 = vpop.f32.mrb[0].mxu0
  %v1074 = vadd.f32 0.0, %v1073
  %v1075 = vpop.f32.mrb[0].mxu0
  %v1076 = vadd.f32 0.0, %v1075
  %v1077 = vpop.f32.mrb[0].mxu0
  %v1078 = vadd.f32 0.0, %v1077
  %v1079 = vpop.f32.mrb[0].mxu0
  %v1080 = vadd.f32 0.0, %v1079
  %1081 = vmatprep.mubr.bf16.mxu0 0
  %1082 = vmatmul.mubr.bf16.gmra.mrb[0].mxu0 %v722
  %v1083 = vpop.f32.mrb[0].mxu0
  %v1084 = vadd.f32 0.0, %v1083
  %v1085 = vpop.f32.mrb[0].mxu0
  %v1086 = vadd.f32 0.0, %v1085
  %v1087 = vpop.f32.mrb[0].mxu0
  %v1088 = vadd.f32 0.0, %v1087
  %v1089 = vpop.f32.mrb[0].mxu0
  %v1090 = vadd.f32 0.0, %v1089
  %1091 = vmatprep.mubr.bf16.mxu0 0
  %1092 = vmatmul.mubr.bf16.gmra.mrb[0].mxu0 %v725
  %v1093 = vpop.f32.mrb[0].mxu0
  %v1094 = vadd.f32 0.0, %v1093
  %v1095 = vpop.f32.mrb[0].mxu0
  %v1096 = vadd.f32 0.0, %v1095
  %v1097 = vpop.f32.mrb[0].mxu0
  %v1098 = vadd.f32 0.0, %v1097
  %v1099 = vpop.f32.mrb[0].mxu0
  %v1100 = vadd.f32 0.0, %v1099
  %1101 = vmatprep.mubr.bf16.mxu0 0
  %1102 = vmatmul.mubr.bf16.gmra.mrb[0].mxu0 %v728
  %v1103 = vpop.f32.mrb[0].mxu0
  %v1104 = vadd.f32 0.0, %v1103
  %v1105 = vpop.f32.mrb[0].mxu0
  %v1106 = vadd.f32 0.0, %v1105
  %v1107 = vpop.f32.mrb[0].mxu0
  %v1108 = vadd.f32 0.0, %v1107
  %v1109 = vpop.f32.mrb[0].mxu0
  %v1110 = vadd.f32 0.0, %v1109
  %1111 = vmatprep.mubr.bf16.mxu0 0
  %1112 = vmatmul.mubr.bf16.gmra.mrb[0].mxu0 %v731
  %v1113 = vpop.f32.mrb[0].mxu0
  %v1114 = vadd.f32 0.0, %v1113
  %v1115 = vpop.f32.mrb[0].mxu0
  %v1116 = vadd.f32 0.0, %v1115
  %v1117 = vpop.f32.mrb[0].mxu0
  %v1118 = vadd.f32 0.0, %v1117
  %v1119 = vpop.f32.mrb[0].mxu0
  %v1120 = vadd.f32 0.0, %v1119
  %1121 = vmatprep.mubr.bf16.mxu0 0
  %1122 = vmatmul.mubr.bf16.gmra.mrb[0].mxu0 %v734
  %v1123 = vpop.f32.mrb[0].mxu0
  %v1124 = vadd.f32 0.0, %v1123
  %v1125 = vpop.f32.mrb[0].mxu0
  %v1126 = vadd.f32 0.0, %v1125
  %v1127 = vpop.f32.mrb[0].mxu0
  %v1128 = vadd.f32 0.0, %v1127
  %v1129 = vpop.f32.mrb[0].mxu0
  %v1130 = vadd.f32 0.0, %v1129
  %1131 = vmatprep.mubr.bf16.mxu0 0
  %1132 = vmatmul.mubr.bf16.gmra.mrb[0].mxu0 %v737
  %v1133 = vpop.f32.mrb[0].mxu0
  %v1134 = vadd.f32 0.0, %v1133
  %v1135 = vpop.f32.mrb[0].mxu0
  %v1136 = vadd.f32 0.0, %v1135
  %v1137 = vpop.f32.mrb[0].mxu0
  %v1138 = vpop.f32.mrb[0].mxu0
  %1139 = vdwg.mxu0
  %1140 = vmatprep.subr.bf16.mxu0 %v614
  %1141 = vmatpush1.bf16.msra.mxu0 %v613
  %1142 = vmatprep.subr.bf16.mxu0 %v618
  %1143 = vmatpush1.bf16.msra.mxu0 %v617
  %1144 = vmatprep.subr.bf16.mxu0 0
  %1145 = vmatpush1.bf16.msra.mxu0 0
  %1146 = vmatprep.subr.bf16.mxu0 0
  %1147 = vmatpush1.bf16.msra.mxu0 0
  %1148 = vmatprep.subr.bf16.mxu0 0
  %1149 = vmatpush1.bf16.msra.mxu0 0
  %1150 = vmatprep.subr.bf16.mxu0 0
  %1151 = vmatpush1.bf16.msra.mxu0 0
  %1152 = vmatprep.subr.bf16.mxu0 0
  %1153 = vmatpush1.bf16.msra.mxu0 0
  %1154 = vmatprep.subr.bf16.mxu0 0
  %1155 = vmatpush1.bf16.msra.mxu0 0
  %1156 = vmatprep.subr.bf16.mxu0 0
  %1157 = vmatpush1.bf16.msra.mxu0 0
  %1158 = vmatprep.subr.bf16.mxu0 0
  %1159 = vmatpush1.bf16.msra.mxu0 0
  %1160 = vmatprep.subr.bf16.mxu0 0
  %1161 = vmatpush1.bf16.msra.mxu0 0
  %1162 = vmatprep.subr.bf16.mxu0 0
  %1163 = vmatpush1.bf16.msra.mxu0 0
  %1164 = vmatprep.subr.bf16.mxu0 0
  %1165 = vmatpush1.bf16.msra.mxu0 0
  %1166 = vmatprep.subr.bf16.mxu0 0
  %1167 = vmatpush1.bf16.msra.mxu0 0
  %1168 = vmatprep.subr.bf16.mxu0 0
  %1169 = vmatpush1.bf16.msra.mxu0 0
  %1170 = vmatprep.subr.bf16.mxu0 0
  %1171 = vmatpush1.bf16.msra.mxu0 0
  %1172 = vmatprep.mubr.bf16.mxu0 0
  %1173 = vmatmul.mubr.bf16.gmra.mrb[0].mxu0 %v629
  %v1174 = vpop.f32.mrb[0].mxu0
  %v1175 = vadd.f32 0.0, %v1174
  %v1176 = vpop.f32.mrb[0].mxu0
  %v1177 = vadd.f32 0.0, %v1176
  %v1178 = vpop.f32.mrb[0].mxu0
  %v1179 = vadd.f32 0.0, %v1178
  %v1180 = vpop.f32.mrb[0].mxu0
  %v1181 = vadd.f32 0.0, %v1180
  %1182 = vmatprep.mubr.bf16.mxu0 0
  %1183 = vmatmul.mubr.bf16.gmra.mrb[0].mxu0 %v632
  %v1184 = vpop.f32.mrb[0].mxu0
  %v1185 = vadd.f32 0.0, %v1184
  %v1186 = vpop.f32.mrb[0].mxu0
  %v1187 = vadd.f32 0.0, %v1186
  %v1188 = vpop.f32.mrb[0].mxu0
  %v1189 = vadd.f32 0.0, %v1188
  %v1190 = vpop.f32.mrb[0].mxu0
  %v1191 = vadd.f32 0.0, %v1190
  %1192 = vmatprep.mubr.bf16.mxu0 0
  %1193 = vmatmul.mubr.bf16.gmra.mrb[0].mxu0 %v635
  %v1194 = vpop.f32.mrb[0].mxu0
  %v1195 = vadd.f32 0.0, %v1194
  %v1196 = vpop.f32.mrb[0].mxu0
  %v1197 = vadd.f32 0.0, %v1196
  %v1198 = vpop.f32.mrb[0].mxu0
  %v1199 = vadd.f32 0.0, %v1198
  %v1200 = vpop.f32.mrb[0].mxu0
  %v1201 = vadd.f32 0.0, %v1200
  %1202 = vmatprep.mubr.bf16.mxu0 0
  %1203 = vmatmul.mubr.bf16.gmra.mrb[0].mxu0 %v638
  %v1204 = vpop.f32.mrb[0].mxu0
  %v1205 = vadd.f32 0.0, %v1204
  %v1206 = vpop.f32.mrb[0].mxu0
  %v1207 = vadd.f32 0.0, %v1206
  %v1208 = vpop.f32.mrb[0].mxu0
  %v1209 = vadd.f32 0.0, %v1208
  %v1210 = vpop.f32.mrb[0].mxu0
  %v1211 = vadd.f32 0.0, %v1210
  %1212 = vmatprep.mubr.bf16.mxu0 0
  %1213 = vmatmul.mubr.bf16.gmra.mrb[0].mxu0 %v641
  %v1214 = vpop.f32.mrb[0].mxu0
  %v1215 = vadd.f32 0.0, %v1214
  %v1216 = vpop.f32.mrb[0].mxu0
  %v1217 = vadd.f32 0.0, %v1216
  %v1218 = vpop.f32.mrb[0].mxu0
  %v1219 = vadd.f32 0.0, %v1218
  %v1220 = vpop.f32.mrb[0].mxu0
  %v1221 = vadd.f32 0.0, %v1220
  %1222 = vmatprep.mubr.bf16.mxu0 0
  %1223 = vmatmul.mubr.bf16.gmra.mrb[0].mxu0 %v644
  %v1224 = vpop.f32.mrb[0].mxu0
  %v1225 = vadd.f32 0.0, %v1224
  %v1226 = vpop.f32.mrb[0].mxu0
  %v1227 = vadd.f32 0.0, %v1226
  %v1228 = vpop.f32.mrb[0].mxu0
  %v1229 = vadd.f32 0.0, %v1228
  %v1230 = vpop.f32.mrb[0].mxu0
  %v1231 = vadd.f32 0.0, %v1230
  %1232 = vmatprep.mubr.bf16.mxu0 0
  %1233 = vmatmul.mubr.bf16.gmra.mrb[0].mxu0 %v647
  %v1234 = vpop.f32.mrb[0].mxu0
  %v1235 = vadd.f32 0.0, %v1234
  %v1236 = vpop.f32.mrb[0].mxu0
  %v1237 = vadd.f32 0.0, %v1236
  %v1238 = vpop.f32.mrb[0].mxu0
  %v1239 = vadd.f32 0.0, %v1238
  %v1240 = vpop.f32.mrb[0].mxu0
  %v1241 = vadd.f32 0.0, %v1240
  %1242 = vmatprep.mubr.bf16.mxu0 0
  %1243 = vmatmul.mubr.bf16.gmra.mrb[0].mxu0 %v650
  %v1244 = vpop.f32.mrb[0].mxu0
  %v1245 = vadd.f32 0.0, %v1244
  %v1246 = vpop.f32.mrb[0].mxu0
  %v1247 = vadd.f32 0.0, %v1246
  %v1248 = vpop.f32.mrb[0].mxu0
  %v1249 = vadd.f32 0.0, %v1248
  %v1250 = vpop.f32.mrb[0].mxu0
  %v1251 = vadd.f32 0.0, %v1250
  %1252 = vmatprep.mubr.bf16.mxu0 0
  %1253 = vmatmul.mubr.bf16.gmra.mrb[0].mxu0 %v653
  %v1254 = vpop.f32.mrb[0].mxu0
  %v1255 = vadd.f32 0.0, %v1254
  %v1256 = vpop.f32.mrb[0].mxu0
  %v1257 = vadd.f32 0.0, %v1256
  %v1258 = vpop.f32.mrb[0].mxu0
  %v1259 = vadd.f32 0.0, %v1258
  %v1260 = vpop.f32.mrb[0].mxu0
  %v1261 = vadd.f32 0.0, %v1260
  %1262 = vmatprep.mubr.bf16.mxu0 0
  %1263 = vmatmul.mubr.bf16.gmra.mrb[0].mxu0 %v656
  %v1264 = vpop.f32.mrb[0].mxu0
  %v1265 = vadd.f32 0.0, %v1264
  %v1266 = vpop.f32.mrb[0].mxu0
  %v1267 = vadd.f32 0.0, %v1266
  %v1268 = vpop.f32.mrb[0].mxu0
  %v1269 = vadd.f32 0.0, %v1268
  %v1270 = vpop.f32.mrb[0].mxu0
  %v1271 = vadd.f32 0.0, %v1270
  %1272 = vmatprep.mubr.bf16.mxu0 0
  %1273 = vmatmul.mubr.bf16.gmra.mrb[0].mxu0 %v659
  %v1274 = vpop.f32.mrb[0].mxu0
  %v1275 = vadd.f32 0.0, %v1274
  %v1276 = vpop.f32.mrb[0].mxu0
  %v1277 = vadd.f32 0.0, %v1276
  %v1278 = vpop.f32.mrb[0].mxu0
  %v1279 = vadd.f32 0.0, %v1278
  %v1280 = vpop.f32.mrb[0].mxu0
  %v1281 = vadd.f32 0.0, %v1280
  %1282 = vmatprep.mubr.bf16.mxu0 0
  %1283 = vmatmul.mubr.bf16.gmra.mrb[0].mxu0 %v662
  %v1284 = vpop.f32.mrb[0].mxu0
  %v1285 = vadd.f32 0.0, %v1284
  %v1286 = vpop.f32.mrb[0].mxu0
  %v1287 = vadd.f32 0.0, %v1286
  %v1288 = vpop.f32.mrb[0].mxu0
  %v1289 = vadd.f32 0.0, %v1288
  %v1290 = vpop.f32.mrb[0].mxu0
  %v1291 = vadd.f32 0.0, %v1290
  %1292 = vmatprep.mubr.bf16.mxu0 0
  %1293 = vmatmul.mubr.bf16.gmra.mrb[0].mxu0 %v665
  %v1294 = vpop.f32.mrb[0].mxu0
  %v1295 = vadd.f32 0.0, %v1294
  %v1296 = vpop.f32.mrb[0].mxu0
  %v1297 = vadd.f32 0.0, %v1296
  %v1298 = vpop.f32.mrb[0].mxu0
  %v1299 = vadd.f32 0.0, %v1298
  %v1300 = vpop.f32.mrb[0].mxu0
  %v1301 = vadd.f32 0.0, %v1300
  %1302 = vmatprep.mubr.bf16.mxu0 0
  %1303 = vmatmul.mubr.bf16.gmra.mrb[0].mxu0 %v668
  %v1304 = vpop.f32.mrb[0].mxu0
  %v1305 = vadd.f32 0.0, %v1304
  %v1306 = vpop.f32.mrb[0].mxu0
  %v1307 = vadd.f32 0.0, %v1306
  %v1308 = vpop.f32.mrb[0].mxu0
  %v1309 = vadd.f32 0.0, %v1308
  %v1310 = vpop.f32.mrb[0].mxu0
  %v1311 = vadd.f32 0.0, %v1310
  %1312 = vmatprep.mubr.bf16.mxu0 0
  %1313 = vmatmul.mubr.bf16.gmra.mrb[0].mxu0 %v671
  %v1314 = vpop.f32.mrb[0].mxu0
  %v1315 = vadd.f32 0.0, %v1314
  %v1316 = vpop.f32.mrb[0].mxu0
  %v1317 = vadd.f32 0.0, %v1316
  %v1318 = vpop.f32.mrb[0].mxu0
  %v1319 = vadd.f32 0.0, %v1318
  %v1320 = vpop.f32.mrb[0].mxu0
  %v1321 = vadd.f32 0.0, %v1320
  %1322 = vmatprep.mubr.bf16.mxu0 0
  %1323 = vmatmul.mubr.bf16.gmra.mrb[0].mxu0 %v674
  %v1324 = vpop.f32.mrb[0].mxu0
  %v1325 = vadd.f32 0.0, %v1324
  %v1326 = vpop.f32.mrb[0].mxu0
  %v1327 = vadd.f32 0.0, %v1326
  %v1328 = vpop.f32.mrb[0].mxu0
  %v1329 = vadd.f32 0.0, %v1328
  %v1330 = vpop.f32.mrb[0].mxu0
  %v1331 = vadd.f32 0.0, %v1330
  %1332 = vmatprep.mubr.bf16.mxu0 0
  %1333 = vmatmul.mubr.bf16.gmra.mrb[0].mxu0 %v677
  %v1334 = vpop.f32.mrb[0].mxu0
  %v1335 = vadd.f32 0.0, %v1334
  %v1336 = vpop.f32.mrb[0].mxu0
  %v1337 = vadd.f32 0.0, %v1336
  %v1338 = vpop.f32.mrb[0].mxu0
  %v1339 = vadd.f32 0.0, %v1338
  %v1340 = vpop.f32.mrb[0].mxu0
  %v1341 = vadd.f32 0.0, %v1340
  %1342 = vmatprep.mubr.bf16.mxu0 0
  %1343 = vmatmul.mubr.bf16.gmra.mrb[0].mxu0 %v680
  %v1344 = vpop.f32.mrb[0].mxu0
  %v1345 = vadd.f32 0.0, %v1344
  %v1346 = vpop.f32.mrb[0].mxu0
  %v1347 = vadd.f32 0.0, %v1346
  %v1348 = vpop.f32.mrb[0].mxu0
  %v1349 = vadd.f32 0.0, %v1348
  %v1350 = vpop.f32.mrb[0].mxu0
  %v1351 = vadd.f32 0.0, %v1350
  %1352 = vmatprep.mubr.bf16.mxu0 0
  %1353 = vmatmul.mubr.bf16.gmra.mrb[0].mxu0 %v683
  %v1354 = vpop.f32.mrb[0].mxu0
  %v1355 = vadd.f32 0.0, %v1354
  %v1356 = vpop.f32.mrb[0].mxu0
  %v1357 = vadd.f32 0.0, %v1356
  %v1358 = vpop.f32.mrb[0].mxu0
  %v1359 = vadd.f32 0.0, %v1358
  %v1360 = vpop.f32.mrb[0].mxu0
  %v1361 = vadd.f32 0.0, %v1360
  %1362 = vmatprep.mubr.bf16.mxu0 0
  %1363 = vmatmul.mubr.bf16.gmra.mrb[0].mxu0 %v686
  %v1364 = vpop.f32.mrb[0].mxu0
  %v1365 = vadd.f32 0.0, %v1364
  %v1366 = vpop.f32.mrb[0].mxu0
  %v1367 = vadd.f32 0.0, %v1366
  %v1368 = vpop.f32.mrb[0].mxu0
  %v1369 = vadd.f32 0.0, %v1368
  %v1370 = vpop.f32.mrb[0].mxu0
  %v1371 = vadd.f32 0.0, %v1370
  %1372 = vmatprep.mubr.bf16.mxu0 0
  %1373 = vmatmul.mubr.bf16.gmra.mrb[0].mxu0 %v689
  %v1374 = vpop.f32.mrb[0].mxu0
  %v1375 = vadd.f32 0.0, %v1374
  %v1376 = vpop.f32.mrb[0].mxu0
  %v1377 = vadd.f32 0.0, %v1376
  %v1378 = vpop.f32.mrb[0].mxu0
  %v1379 = vadd.f32 0.0, %v1378
  %v1380 = vpop.f32.mrb[0].mxu0
  %v1381 = vadd.f32 0.0, %v1380
  %1382 = vmatprep.mubr.bf16.mxu0 0
  %1383 = vmatmul.mubr.bf16.gmra.mrb[0].mxu0 %v692
  %v1384 = vpop.f32.mrb[0].mxu0
  %v1385 = vadd.f32 0.0, %v1384
  %v1386 = vpop.f32.mrb[0].mxu0
  %v1387 = vadd.f32 0.0, %v1386
  %v1388 = vpop.f32.mrb[0].mxu0
  %v1389 = vadd.f32 0.0, %v1388
  %v1390 = vpop.f32.mrb[0].mxu0
  %v1391 = vadd.f32 0.0, %v1390
  %1392 = vmatprep.mubr.bf16.mxu0 0
  %1393 = vmatmul.mubr.bf16.gmra.mrb[0].mxu0 %v695
  %v1394 = vpop.f32.mrb[0].mxu0
  %v1395 = vadd.f32 0.0, %v1394
  %v1396 = vpop.f32.mrb[0].mxu0
  %v1397 = vadd.f32 0.0, %v1396
  %v1398 = vpop.f32.mrb[0].mxu0
  %v1399 = vadd.f32 0.0, %v1398
  %v1400 = vpop.f32.mrb[0].mxu0
  %v1401 = vadd.f32 0.0, %v1400
  %1402 = vmatprep.mubr.bf16.mxu0 0
  %1403 = vmatmul.mubr.bf16.gmra.mrb[0].mxu0 %v698
  %v1404 = vpop.f32.mrb[0].mxu0
  %v1405 = vadd.f32 0.0, %v1404
  %v1406 = vpop.f32.mrb[0].mxu0
  %v1407 = vadd.f32 0.0, %v1406
  %v1408 = vpop.f32.mrb[0].mxu0
  %v1409 = vadd.f32 0.0, %v1408
  %v1410 = vpop.f32.mrb[0].mxu0
  %v1411 = vadd.f32 0.0, %v1410
  %1412 = vmatprep.mubr.bf16.mxu0 0
  %1413 = vmatmul.mubr.bf16.gmra.mrb[0].mxu0 %v701
  %v1414 = vpop.f32.mrb[0].mxu0
  %v1415 = vadd.f32 0.0, %v1414
  %v1416 = vpop.f32.mrb[0].mxu0
  %v1417 = vadd.f32 0.0, %v1416
  %v1418 = vpop.f32.mrb[0].mxu0
  %v1419 = vadd.f32 0.0, %v1418
  %v1420 = vpop.f32.mrb[0].mxu0
  %v1421 = vadd.f32 0.0, %v1420
  %1422 = vmatprep.mubr.bf16.mxu0 0
  %1423 = vmatmul.mubr.bf16.gmra.mrb[0].mxu0 %v704
  %v1424 = vpop.f32.mrb[0].mxu0
  %v1425 = vadd.f32 0.0, %v1424
  %v1426 = vpop.f32.mrb[0].mxu0
  %v1427 = vadd.f32 0.0, %v1426
  %v1428 = vpop.f32.mrb[0].mxu0
  %v1429 = vadd.f32 0.0, %v1428
  %v1430 = vpop.f32.mrb[0].mxu0
  %v1431 = vadd.f32 0.0, %v1430
  %1432 = vmatprep.mubr.bf16.mxu0 0
  %1433 = vmatmul.mubr.bf16.gmra.mrb[0].mxu0 %v707
  %v1434 = vpop.f32.mrb[0].mxu0
  %v1435 = vadd.f32 0.0, %v1434
  %v1436 = vpop.f32.mrb[0].mxu0
  %v1437 = vadd.f32 0.0, %v1436
  %v1438 = vpop.f32.mrb[0].mxu0
  %v1439 = vadd.f32 0.0, %v1438
  %v1440 = vpop.f32.mrb[0].mxu0
  %v1441 = vadd.f32 0.0, %v1440
  %1442 = vmatprep.mubr.bf16.mxu0 0
  %1443 = vmatmul.mubr.bf16.gmra.mrb[0].mxu0 %v710
  %v1444 = vpop.f32.mrb[0].mxu0
  %v1445 = vadd.f32 0.0, %v1444
  %v1446 = vpop.f32.mrb[0].mxu0
  %v1447 = vadd.f32 0.0, %v1446
  %v1448 = vpop.f32.mrb[0].mxu0
  %v1449 = vadd.f32 0.0, %v1448
  %v1450 = vpop.f32.mrb[0].mxu0
  %v1451 = vadd.f32 0.0, %v1450
  %1452 = vmatprep.mubr.bf16.mxu0 0
  %1453 = vmatmul.mubr.bf16.gmra.mrb[0].mxu0 %v713
  %v1454 = vpop.f32.mrb[0].mxu0
  %v1455 = vadd.f32 0.0, %v1454
  %v1456 = vpop.f32.mrb[0].mxu0
  %v1457 = vadd.f32 0.0, %v1456
  %v1458 = vpop.f32.mrb[0].mxu0
  %v1459 = vadd.f32 0.0, %v1458
  %v1460 = vpop.f32.mrb[0].mxu0
  %v1461 = vadd.f32 0.0, %v1460
  %1462 = vmatprep.mubr.bf16.mxu0 0
  %1463 = vmatmul.mubr.bf16.gmra.mrb[0].mxu0 %v716
  %v1464 = vpop.f32.mrb[0].mxu0
  %v1465 = vadd.f32 0.0, %v1464
  %v1466 = vpop.f32.mrb[0].mxu0
  %v1467 = vadd.f32 0.0, %v1466
  %v1468 = vpop.f32.mrb[0].mxu0
  %v1469 = vadd.f32 0.0, %v1468
  %v1470 = vpop.f32.mrb[0].mxu0
  %v1471 = vadd.f32 0.0, %v1470
  %1472 = vmatprep.mubr.bf16.mxu0 0
  %1473 = vmatmul.mubr.bf16.gmra.mrb[0].mxu0 %v719
  %v1474 = vpop.f32.mrb[0].mxu0
  %v1475 = vadd.f32 0.0, %v1474
  %v1476 = vpop.f32.mrb[0].mxu0
  %v1477 = vadd.f32 0.0, %v1476
  %v1478 = vpop.f32.mrb[0].mxu0
  %v1479 = vadd.f32 0.0, %v1478
  %v1480 = vpop.f32.mrb[0].mxu0
  %v1481 = vadd.f32 0.0, %v1480
  %1482 = vmatprep.mubr.bf16.mxu0 0
  %1483 = vmatmul.mubr.bf16.gmra.mrb[0].mxu0 %v722
  %v1484 = vpop.f32.mrb[0].mxu0
  %v1485 = vadd.f32 0.0, %v1484
  %v1486 = vpop.f32.mrb[0].mxu0
  %v1487 = vadd.f32 0.0, %v1486
  %v1488 = vpop.f32.mrb[0].mxu0
  %v1489 = vadd.f32 0.0, %v1488
  %v1490 = vpop.f32.mrb[0].mxu0
  %v1491 = vadd.f32 0.0, %v1490
  %1492 = vmatprep.mubr.bf16.mxu0 0
  %1493 = vmatmul.mubr.bf16.gmra.mrb[0].mxu0 %v725
  %v1494 = vpop.f32.mrb[0].mxu0
  %v1495 = vadd.f32 0.0, %v1494
  %v1496 = vpop.f32.mrb[0].mxu0
  %v1497 = vadd.f32 0.0, %v1496
  %v1498 = vpop.f32.mrb[0].mxu0
  %v1499 = vadd.f32 0.0, %v1498
  %v1500 = vpop.f32.mrb[0].mxu0
  %v1501 = vadd.f32 0.0, %v1500
  %1502 = vmatprep.mubr.bf16.mxu0 0
  %1503 = vmatmul.mubr.bf16.gmra.mrb[0].mxu0 %v728
  %v1504 = vpop.f32.mrb[0].mxu0
  %v1505 = vadd.f32 0.0, %v1504
  %v1506 = vpop.f32.mrb[0].mxu0
  %v1507 = vadd.f32 0.0, %v1506
  %v1508 = vpop.f32.mrb[0].mxu0
  %v1509 = vadd.f32 0.0, %v1508
  %v1510 = vpop.f32.mrb[0].mxu0
  %v1511 = vadd.f32 0.0, %v1510
  %1512 = vmatprep.mubr.bf16.mxu0 0
  %1513 = vmatmul.mubr.bf16.gmra.mrb[0].mxu0 %v731
  %v1514 = vpop.f32.mrb[0].mxu0
  %v1515 = vadd.f32 0.0, %v1514
  %v1516 = vpop.f32.mrb[0].mxu0
  %v1517 = vadd.f32 0.0, %v1516
  %v1518 = vpop.f32.mrb[0].mxu0
  %v1519 = vadd.f32 0.0, %v1518
  %v1520 = vpop.f32.mrb[0].mxu0
  %v1521 = vadd.f32 0.0, %v1520
  %1522 = vmatprep.mubr.bf16.mxu0 0
  %1523 = vmatmul.mubr.bf16.gmra.mrb[0].mxu0 %v734
  %v1524 = vpop.f32.mrb[0].mxu0
  %v1525 = vadd.f32 0.0, %v1524
  %v1526 = vpop.f32.mrb[0].mxu0
  %v1527 = vadd.f32 0.0, %v1526
  %v1528 = vpop.f32.mrb[0].mxu0
  %v1529 = vadd.f32 0.0, %v1528
  %v1530 = vpop.f32.mrb[0].mxu0
  %v1531 = vadd.f32 0.0, %v1530
  %1532 = vmatprep.mubr.bf16.mxu0 0
  %1533 = vmatmul.mubr.bf16.gmra.mrb[0].mxu0 %v737
  %v1534 = vpop.f32.mrb[0].mxu0
  %v1535 = vadd.f32 0.0, %v1534
  %v1536 = vpop.f32.mrb[0].mxu0
  %v1537 = vadd.f32 0.0, %v1536
  %v1538 = vpop.f32.mrb[0].mxu0
  %v1539 = vpop.f32.mrb[0].mxu0
  %1540 = vdwg.mxu0
  %v1541 = vpack.c.b16 %v252, %v252
  %v1550 = vunpack.c.l.b16 %v88
  %v1551 = vunpack.c.h.b16 %v88
  %v1552 = vunpack.c.l.b16 %v89
  %v1553 = vunpack.c.h.b16 %v89
  %v1554 = vunpack.c.l.b16 %v90
  %v1555 = vunpack.c.h.b16 %v90
  %v1556 = vunpack.c.l.b16 %v91
  %v1557 = vunpack.c.h.b16 %v91
  %v1558 = vunpack.c.l.b16 %v92
  %v1559 = vunpack.c.h.b16 %v92
  %v1560 = vunpack.c.l.b16 %v93
  %v1561 = vunpack.c.h.b16 %v93
  %v1562 = vunpack.c.l.b16 %v94
  %v1563 = vunpack.c.h.b16 %v94
  %v1564 = vunpack.c.l.b16 %v95
  %v1565 = vunpack.c.h.b16 %v95
  %v1566 = vpack.c.b16 %v1554, %v1550
  %v1567 = vpack.c.b16 %v1555, %v1551
  %v1568 = vpack.c.b16 %v1556, %v1552
  %v1569 = vpack.c.b16 %v1557, %v1553
  %v1570 = vpack.c.b16 %v1562, %v1558
  %v1571 = vpack.c.b16 %v1563, %v1559
  %v1572 = vpack.c.b16 %v1564, %v1560
  %v1573 = vpack.c.b16 %v1565, %v1561
  %v1582 = vsel %vm627, %v254, 0
  %v1584 = vsel %vm627, %v255, 0
  %v1586 = vsel %vm627, %v256, 0
  %v1588 = vsel %vm627, %v257, 0
  %v1590 = vsel %vm627, %v258, 0
  %v1592 = vsel %vm627, %v259, 0
  %v1594 = vsel %vm627, %v260, 0
  %v1596 = vsel %vm627, %v261, 0
  %v1598 = vsel %vm627, %v262, 0
  %v1600 = vsel %vm627, %v263, 0
  %v1602 = vsel %vm627, %v264, 0
  %v1604 = vsel %vm627, %v265, 0
  %v1606 = vsel %vm627, %v266, 0
  %v1608 = vsel %vm627, %v267, 0
  %v1610 = vsel %vm627, %v268, 0
  %v1612 = vsel %vm627, %v269, 0
  %v1614 = vsel %vm627, %v270, 0
  %v1616 = vsel %vm627, %v271, 0
  %v1618 = vsel %vm627, %v272, 0
  %v1620 = vsel %vm627, %v273, 0
  %v1622 = vsel %vm627, %v274, 0
  %v1624 = vsel %vm627, %v275, 0
  %v1626 = vsel %vm627, %v276, 0
  %v1628 = vsel %vm627, %v277, 0
  %v1630 = vsel %vm627, %v278, 0
  %v1632 = vsel %vm627, %v279, 0
  %v1634 = vsel %vm627, %v280, 0
  %v1636 = vsel %vm627, %v281, 0
  %v1638 = vsel %vm627, %v282, 0
  %v1640 = vsel %vm627, %v283, 0
  %v1642 = vsel %vm627, %v284, 0
  %v1644 = vsel %vm627, %v285, 0
  %v1646 = vsel %vm627, %v286, 0
  %v1648 = vsel %vm627, %v287, 0
  %v1650 = vsel %vm627, %v288, 0
  %v1652 = vsel %vm627, %v289, 0
  %v1655 = vsel %vm627, %v1541, 0
  %1657 = vmatprep.subr.bf16.mxu0 %v1567
  %1658 = vmatpush1.bf16.msra.mxu0 %v1566
  %1659 = vmatprep.subr.bf16.mxu0 %v1571
  %1660 = vmatpush1.bf16.msra.mxu0 %v1570
  %1661 = vmatprep.subr.bf16.mxu0 0
  %1662 = vmatpush1.bf16.msra.mxu0 0
  %1663 = vmatprep.subr.bf16.mxu0 0
  %1664 = vmatpush1.bf16.msra.mxu0 0
  %1665 = vmatprep.subr.bf16.mxu0 0
  %1666 = vmatpush1.bf16.msra.mxu0 0
  %1667 = vmatprep.subr.bf16.mxu0 0
  %1668 = vmatpush1.bf16.msra.mxu0 0
  %1669 = vmatprep.subr.bf16.mxu0 0
  %1670 = vmatpush1.bf16.msra.mxu0 0
  %1671 = vmatprep.subr.bf16.mxu0 0
  %1672 = vmatpush1.bf16.msra.mxu0 0
  %1673 = vmatprep.subr.bf16.mxu0 0
  %1674 = vmatpush1.bf16.msra.mxu0 0
  %1675 = vmatprep.subr.bf16.mxu0 0
  %1676 = vmatpush1.bf16.msra.mxu0 0
  %1677 = vmatprep.subr.bf16.mxu0 0
  %1678 = vmatpush1.bf16.msra.mxu0 0
  %1679 = vmatprep.subr.bf16.mxu0 0
  %1680 = vmatpush1.bf16.msra.mxu0 0
  %1681 = vmatprep.subr.bf16.mxu0 0
  %1682 = vmatpush1.bf16.msra.mxu0 0
  %1683 = vmatprep.subr.bf16.mxu0 0
  %1684 = vmatpush1.bf16.msra.mxu0 0
  %1685 = vmatprep.subr.bf16.mxu0 0
  %1686 = vmatpush1.bf16.msra.mxu0 0
  %1687 = vmatprep.subr.bf16.mxu0 0
  %1688 = vmatpush1.bf16.msra.mxu0 0
  %1689 = vmatprep.mubr.bf16.mxu0 0
  %1690 = vmatmul.mubr.bf16.gmra.mrb[0].mxu0 %v1582
  %v1691 = vpop.f32.mrb[0].mxu0
  %v1692 = vadd.f32 %v774, %v1691
  %v1693 = vpop.f32.mrb[0].mxu0
  %v1694 = vadd.f32 %v776, %v1693
  %v1695 = vpop.f32.mrb[0].mxu0
  %v1696 = vadd.f32 %v778, %v1695
  %v1697 = vpop.f32.mrb[0].mxu0
  %v1698 = vadd.f32 %v780, %v1697
  %1699 = vmatprep.mubr.bf16.mxu0 0
  %1700 = vmatmul.mubr.bf16.gmra.mrb[0].mxu0 %v1584
  %v1701 = vpop.f32.mrb[0].mxu0
  %v1702 = vadd.f32 %v784, %v1701
  %v1703 = vpop.f32.mrb[0].mxu0
  %v1704 = vadd.f32 %v786, %v1703
  %v1705 = vpop.f32.mrb[0].mxu0
  %v1706 = vadd.f32 %v788, %v1705
  %v1707 = vpop.f32.mrb[0].mxu0
  %v1708 = vadd.f32 %v790, %v1707
  %1709 = vmatprep.mubr.bf16.mxu0 0
  %1710 = vmatmul.mubr.bf16.gmra.mrb[0].mxu0 %v1586
  %v1711 = vpop.f32.mrb[0].mxu0
  %v1712 = vadd.f32 %v794, %v1711
  %v1713 = vpop.f32.mrb[0].mxu0
  %v1714 = vadd.f32 %v796, %v1713
  %v1715 = vpop.f32.mrb[0].mxu0
  %v1716 = vadd.f32 %v798, %v1715
  %v1717 = vpop.f32.mrb[0].mxu0
  %v1718 = vadd.f32 %v800, %v1717
  %1719 = vmatprep.mubr.bf16.mxu0 0
  %1720 = vmatmul.mubr.bf16.gmra.mrb[0].mxu0 %v1588
  %v1721 = vpop.f32.mrb[0].mxu0
  %v1722 = vadd.f32 %v804, %v1721
  %v1723 = vpop.f32.mrb[0].mxu0
  %v1724 = vadd.f32 %v806, %v1723
  %v1725 = vpop.f32.mrb[0].mxu0
  %v1726 = vadd.f32 %v808, %v1725
  %v1727 = vpop.f32.mrb[0].mxu0
  %v1728 = vadd.f32 %v810, %v1727
  %1729 = vmatprep.mubr.bf16.mxu0 0
  %1730 = vmatmul.mubr.bf16.gmra.mrb[0].mxu0 %v1590
  %v1731 = vpop.f32.mrb[0].mxu0
  %v1732 = vadd.f32 %v814, %v1731
  %v1733 = vpop.f32.mrb[0].mxu0
  %v1734 = vadd.f32 %v816, %v1733
  %v1735 = vpop.f32.mrb[0].mxu0
  %v1736 = vadd.f32 %v818, %v1735
  %v1737 = vpop.f32.mrb[0].mxu0
  %v1738 = vadd.f32 %v820, %v1737
  %1739 = vmatprep.mubr.bf16.mxu0 0
  %1740 = vmatmul.mubr.bf16.gmra.mrb[0].mxu0 %v1592
  %v1741 = vpop.f32.mrb[0].mxu0
  %v1742 = vadd.f32 %v824, %v1741
  %v1743 = vpop.f32.mrb[0].mxu0
  %v1744 = vadd.f32 %v826, %v1743
  %v1745 = vpop.f32.mrb[0].mxu0
  %v1746 = vadd.f32 %v828, %v1745
  %v1747 = vpop.f32.mrb[0].mxu0
  %v1748 = vadd.f32 %v830, %v1747
  %1749 = vmatprep.mubr.bf16.mxu0 0
  %1750 = vmatmul.mubr.bf16.gmra.mrb[0].mxu0 %v1594
  %v1751 = vpop.f32.mrb[0].mxu0
  %v1752 = vadd.f32 %v834, %v1751
  %v1753 = vpop.f32.mrb[0].mxu0
  %v1754 = vadd.f32 %v836, %v1753
  %v1755 = vpop.f32.mrb[0].mxu0
  %v1756 = vadd.f32 %v838, %v1755
  %v1757 = vpop.f32.mrb[0].mxu0
  %v1758 = vadd.f32 %v840, %v1757
  %1759 = vmatprep.mubr.bf16.mxu0 0
  %1760 = vmatmul.mubr.bf16.gmra.mrb[0].mxu0 %v1596
  %v1761 = vpop.f32.mrb[0].mxu0
  %v1762 = vadd.f32 %v844, %v1761
  %v1763 = vpop.f32.mrb[0].mxu0
  %v1764 = vadd.f32 %v846, %v1763
  %v1765 = vpop.f32.mrb[0].mxu0
  %v1766 = vadd.f32 %v848, %v1765
  %v1767 = vpop.f32.mrb[0].mxu0
  %v1768 = vadd.f32 %v850, %v1767
  %1769 = vmatprep.mubr.bf16.mxu0 0
  %1770 = vmatmul.mubr.bf16.gmra.mrb[0].mxu0 %v1598
  %v1771 = vpop.f32.mrb[0].mxu0
  %v1772 = vadd.f32 %v854, %v1771
  %v1773 = vpop.f32.mrb[0].mxu0
  %v1774 = vadd.f32 %v856, %v1773
  %v1775 = vpop.f32.mrb[0].mxu0
  %v1776 = vadd.f32 %v858, %v1775
  %v1777 = vpop.f32.mrb[0].mxu0
  %v1778 = vadd.f32 %v860, %v1777
  %1779 = vmatprep.mubr.bf16.mxu0 0
  %1780 = vmatmul.mubr.bf16.gmra.mrb[0].mxu0 %v1600
  %v1781 = vpop.f32.mrb[0].mxu0
  %v1782 = vadd.f32 %v864, %v1781
  %v1783 = vpop.f32.mrb[0].mxu0
  %v1784 = vadd.f32 %v866, %v1783
  %v1785 = vpop.f32.mrb[0].mxu0
  %v1786 = vadd.f32 %v868, %v1785
  %v1787 = vpop.f32.mrb[0].mxu0
  %v1788 = vadd.f32 %v870, %v1787
  %1789 = vmatprep.mubr.bf16.mxu0 0
  %1790 = vmatmul.mubr.bf16.gmra.mrb[0].mxu0 %v1602
  %v1791 = vpop.f32.mrb[0].mxu0
  %v1792 = vadd.f32 %v874, %v1791
  %v1793 = vpop.f32.mrb[0].mxu0
  %v1794 = vadd.f32 %v876, %v1793
  %v1795 = vpop.f32.mrb[0].mxu0
  %v1796 = vadd.f32 %v878, %v1795
  %v1797 = vpop.f32.mrb[0].mxu0
  %v1798 = vadd.f32 %v880, %v1797
  %1799 = vmatprep.mubr.bf16.mxu0 0
  %1800 = vmatmul.mubr.bf16.gmra.mrb[0].mxu0 %v1604
  %v1801 = vpop.f32.mrb[0].mxu0
  %v1802 = vadd.f32 %v884, %v1801
  %v1803 = vpop.f32.mrb[0].mxu0
  %v1804 = vadd.f32 %v886, %v1803
  %v1805 = vpop.f32.mrb[0].mxu0
  %v1806 = vadd.f32 %v888, %v1805
  %v1807 = vpop.f32.mrb[0].mxu0
  %v1808 = vadd.f32 %v890, %v1807
  %1809 = vmatprep.mubr.bf16.mxu0 0
  %1810 = vmatmul.mubr.bf16.gmra.mrb[0].mxu0 %v1606
  %v1811 = vpop.f32.mrb[0].mxu0
  %v1812 = vadd.f32 %v894, %v1811
  %v1813 = vpop.f32.mrb[0].mxu0
  %v1814 = vadd.f32 %v896, %v1813
  %v1815 = vpop.f32.mrb[0].mxu0
  %v1816 = vadd.f32 %v898, %v1815
  %v1817 = vpop.f32.mrb[0].mxu0
  %v1818 = vadd.f32 %v900, %v1817
  %1819 = vmatprep.mubr.bf16.mxu0 0
  %1820 = vmatmul.mubr.bf16.gmra.mrb[0].mxu0 %v1608
  %v1821 = vpop.f32.mrb[0].mxu0
  %v1822 = vadd.f32 %v904, %v1821
  %v1823 = vpop.f32.mrb[0].mxu0
  %v1824 = vadd.f32 %v906, %v1823
  %v1825 = vpop.f32.mrb[0].mxu0
  %v1826 = vadd.f32 %v908, %v1825
  %v1827 = vpop.f32.mrb[0].mxu0
  %v1828 = vadd.f32 %v910, %v1827
  %1829 = vmatprep.mubr.bf16.mxu0 0
  %1830 = vmatmul.mubr.bf16.gmra.mrb[0].mxu0 %v1610
  %v1831 = vpop.f32.mrb[0].mxu0
  %v1832 = vadd.f32 %v914, %v1831
  %v1833 = vpop.f32.mrb[0].mxu0
  %v1834 = vadd.f32 %v916, %v1833
  %v1835 = vpop.f32.mrb[0].mxu0
  %v1836 = vadd.f32 %v918, %v1835
  %v1837 = vpop.f32.mrb[0].mxu0
  %v1838 = vadd.f32 %v920, %v1837
  %1839 = vmatprep.mubr.bf16.mxu0 0
  %1840 = vmatmul.mubr.bf16.gmra.mrb[0].mxu0 %v1612
  %v1841 = vpop.f32.mrb[0].mxu0
  %v1842 = vadd.f32 %v924, %v1841
  %v1843 = vpop.f32.mrb[0].mxu0
  %v1844 = vadd.f32 %v926, %v1843
  %v1845 = vpop.f32.mrb[0].mxu0
  %v1846 = vadd.f32 %v928, %v1845
  %v1847 = vpop.f32.mrb[0].mxu0
  %v1848 = vadd.f32 %v930, %v1847
  %1849 = vmatprep.mubr.bf16.mxu0 0
  %1850 = vmatmul.mubr.bf16.gmra.mrb[0].mxu0 %v1614
  %v1851 = vpop.f32.mrb[0].mxu0
  %v1852 = vadd.f32 %v934, %v1851
  %v1853 = vpop.f32.mrb[0].mxu0
  %v1854 = vadd.f32 %v936, %v1853
  %v1855 = vpop.f32.mrb[0].mxu0
  %v1856 = vadd.f32 %v938, %v1855
  %v1857 = vpop.f32.mrb[0].mxu0
  %v1858 = vadd.f32 %v940, %v1857
  %1859 = vmatprep.mubr.bf16.mxu0 0
  %1860 = vmatmul.mubr.bf16.gmra.mrb[0].mxu0 %v1616
  %v1861 = vpop.f32.mrb[0].mxu0
  %v1862 = vadd.f32 %v944, %v1861
  %v1863 = vpop.f32.mrb[0].mxu0
  %v1864 = vadd.f32 %v946, %v1863
  %v1865 = vpop.f32.mrb[0].mxu0
  %v1866 = vadd.f32 %v948, %v1865
  %v1867 = vpop.f32.mrb[0].mxu0
  %v1868 = vadd.f32 %v950, %v1867
  %1869 = vmatprep.mubr.bf16.mxu0 0
  %1870 = vmatmul.mubr.bf16.gmra.mrb[0].mxu0 %v1618
  %v1871 = vpop.f32.mrb[0].mxu0
  %v1872 = vadd.f32 %v954, %v1871
  %v1873 = vpop.f32.mrb[0].mxu0
  %v1874 = vadd.f32 %v956, %v1873
  %v1875 = vpop.f32.mrb[0].mxu0
  %v1876 = vadd.f32 %v958, %v1875
  %v1877 = vpop.f32.mrb[0].mxu0
  %v1878 = vadd.f32 %v960, %v1877
  %1879 = vmatprep.mubr.bf16.mxu0 0
  %1880 = vmatmul.mubr.bf16.gmra.mrb[0].mxu0 %v1620
  %v1881 = vpop.f32.mrb[0].mxu0
  %v1882 = vadd.f32 %v964, %v1881
  %v1883 = vpop.f32.mrb[0].mxu0
  %v1884 = vadd.f32 %v966, %v1883
  %v1885 = vpop.f32.mrb[0].mxu0
  %v1886 = vadd.f32 %v968, %v1885
  %v1887 = vpop.f32.mrb[0].mxu0
  %v1888 = vadd.f32 %v970, %v1887
  %1889 = vmatprep.mubr.bf16.mxu0 0
  %1890 = vmatmul.mubr.bf16.gmra.mrb[0].mxu0 %v1622
  %v1891 = vpop.f32.mrb[0].mxu0
  %v1892 = vadd.f32 %v974, %v1891
  %v1893 = vpop.f32.mrb[0].mxu0
  %v1894 = vadd.f32 %v976, %v1893
  %v1895 = vpop.f32.mrb[0].mxu0
  %v1896 = vadd.f32 %v978, %v1895
  %v1897 = vpop.f32.mrb[0].mxu0
  %v1898 = vadd.f32 %v980, %v1897
  %1899 = vmatprep.mubr.bf16.mxu0 0
  %1900 = vmatmul.mubr.bf16.gmra.mrb[0].mxu0 %v1624
  %v1901 = vpop.f32.mrb[0].mxu0
  %v1902 = vadd.f32 %v984, %v1901
  %v1903 = vpop.f32.mrb[0].mxu0
  %v1904 = vadd.f32 %v986, %v1903
  %v1905 = vpop.f32.mrb[0].mxu0
  %v1906 = vadd.f32 %v988, %v1905
  %v1907 = vpop.f32.mrb[0].mxu0
  %v1908 = vadd.f32 %v990, %v1907
  %1909 = vmatprep.mubr.bf16.mxu0 0
  %1910 = vmatmul.mubr.bf16.gmra.mrb[0].mxu0 %v1626
  %v1911 = vpop.f32.mrb[0].mxu0
  %v1912 = vadd.f32 %v994, %v1911
  %v1913 = vpop.f32.mrb[0].mxu0
  %v1914 = vadd.f32 %v996, %v1913
  %v1915 = vpop.f32.mrb[0].mxu0
  %v1916 = vadd.f32 %v998, %v1915
  %v1917 = vpop.f32.mrb[0].mxu0
  %v1918 = vadd.f32 %v1000, %v1917
  %1919 = vmatprep.mubr.bf16.mxu0 0
  %1920 = vmatmul.mubr.bf16.gmra.mrb[0].mxu0 %v1628
  %v1921 = vpop.f32.mrb[0].mxu0
  %v1922 = vadd.f32 %v1004, %v1921
  %v1923 = vpop.f32.mrb[0].mxu0
  %v1924 = vadd.f32 %v1006, %v1923
  %v1925 = vpop.f32.mrb[0].mxu0
  %v1926 = vadd.f32 %v1008, %v1925
  %v1927 = vpop.f32.mrb[0].mxu0
  %v1928 = vadd.f32 %v1010, %v1927
  %1929 = vmatprep.mubr.bf16.mxu0 0
  %1930 = vmatmul.mubr.bf16.gmra.mrb[0].mxu0 %v1630
  %v1931 = vpop.f32.mrb[0].mxu0
  %v1932 = vadd.f32 %v1014, %v1931
  %v1933 = vpop.f32.mrb[0].mxu0
  %v1934 = vadd.f32 %v1016, %v1933
  %v1935 = vpop.f32.mrb[0].mxu0
  %v1936 = vadd.f32 %v1018, %v1935
  %v1937 = vpop.f32.mrb[0].mxu0
  %v1938 = vadd.f32 %v1020, %v1937
  %1939 = vmatprep.mubr.bf16.mxu0 0
  %1940 = vmatmul.mubr.bf16.gmra.mrb[0].mxu0 %v1632
  %v1941 = vpop.f32.mrb[0].mxu0
  %v1942 = vadd.f32 %v1024, %v1941
  %v1943 = vpop.f32.mrb[0].mxu0
  %v1944 = vadd.f32 %v1026, %v1943
  %v1945 = vpop.f32.mrb[0].mxu0
  %v1946 = vadd.f32 %v1028, %v1945
  %v1947 = vpop.f32.mrb[0].mxu0
  %v1948 = vadd.f32 %v1030, %v1947
  %1949 = vmatprep.mubr.bf16.mxu0 0
  %1950 = vmatmul.mubr.bf16.gmra.mrb[0].mxu0 %v1634
  %v1951 = vpop.f32.mrb[0].mxu0
  %v1952 = vadd.f32 %v1034, %v1951
  %v1953 = vpop.f32.mrb[0].mxu0
  %v1954 = vadd.f32 %v1036, %v1953
  %v1955 = vpop.f32.mrb[0].mxu0
  %v1956 = vadd.f32 %v1038, %v1955
  %v1957 = vpop.f32.mrb[0].mxu0
  %v1958 = vadd.f32 %v1040, %v1957
  %1959 = vmatprep.mubr.bf16.mxu0 0
  %1960 = vmatmul.mubr.bf16.gmra.mrb[0].mxu0 %v1636
  %v1961 = vpop.f32.mrb[0].mxu0
  %v1962 = vadd.f32 %v1044, %v1961
  %v1963 = vpop.f32.mrb[0].mxu0
  %v1964 = vadd.f32 %v1046, %v1963
  %v1965 = vpop.f32.mrb[0].mxu0
  %v1966 = vadd.f32 %v1048, %v1965
  %v1967 = vpop.f32.mrb[0].mxu0
  %v1968 = vadd.f32 %v1050, %v1967
  %1969 = vmatprep.mubr.bf16.mxu0 0
  %1970 = vmatmul.mubr.bf16.gmra.mrb[0].mxu0 %v1638
  %v1971 = vpop.f32.mrb[0].mxu0
  %v1972 = vadd.f32 %v1054, %v1971
  %v1973 = vpop.f32.mrb[0].mxu0
  %v1974 = vadd.f32 %v1056, %v1973
  %v1975 = vpop.f32.mrb[0].mxu0
  %v1976 = vadd.f32 %v1058, %v1975
  %v1977 = vpop.f32.mrb[0].mxu0
  %v1978 = vadd.f32 %v1060, %v1977
  %1979 = vmatprep.mubr.bf16.mxu0 0
  %1980 = vmatmul.mubr.bf16.gmra.mrb[0].mxu0 %v1640
  %v1981 = vpop.f32.mrb[0].mxu0
  %v1982 = vadd.f32 %v1064, %v1981
  %v1983 = vpop.f32.mrb[0].mxu0
  %v1984 = vadd.f32 %v1066, %v1983
  %v1985 = vpop.f32.mrb[0].mxu0
  %v1986 = vadd.f32 %v1068, %v1985
  %v1987 = vpop.f32.mrb[0].mxu0
  %v1988 = vadd.f32 %v1070, %v1987
  %1989 = vmatprep.mubr.bf16.mxu0 0
  %1990 = vmatmul.mubr.bf16.gmra.mrb[0].mxu0 %v1642
  %v1991 = vpop.f32.mrb[0].mxu0
  %v1992 = vadd.f32 %v1074, %v1991
  %v1993 = vpop.f32.mrb[0].mxu0
  %v1994 = vadd.f32 %v1076, %v1993
  %v1995 = vpop.f32.mrb[0].mxu0
  %v1996 = vadd.f32 %v1078, %v1995
  %v1997 = vpop.f32.mrb[0].mxu0
  %v1998 = vadd.f32 %v1080, %v1997
  %1999 = vmatprep.mubr.bf16.mxu0 0
  %2000 = vmatmul.mubr.bf16.gmra.mrb[0].mxu0 %v1644
  %v2001 = vpop.f32.mrb[0].mxu0
  %v2002 = vadd.f32 %v1084, %v2001
  %v2003 = vpop.f32.mrb[0].mxu0
  %v2004 = vadd.f32 %v1086, %v2003
  %v2005 = vpop.f32.mrb[0].mxu0
  %v2006 = vadd.f32 %v1088, %v2005
  %v2007 = vpop.f32.mrb[0].mxu0
  %v2008 = vadd.f32 %v1090, %v2007
  %2009 = vmatprep.mubr.bf16.mxu0 0
  %2010 = vmatmul.mubr.bf16.gmra.mrb[0].mxu0 %v1646
  %v2011 = vpop.f32.mrb[0].mxu0
  %v2012 = vadd.f32 %v1094, %v2011
  %v2013 = vpop.f32.mrb[0].mxu0
  %v2014 = vadd.f32 %v1096, %v2013
  %v2015 = vpop.f32.mrb[0].mxu0
  %v2016 = vadd.f32 %v1098, %v2015
  %v2017 = vpop.f32.mrb[0].mxu0
  %v2018 = vadd.f32 %v1100, %v2017
  %2019 = vmatprep.mubr.bf16.mxu0 0
  %2020 = vmatmul.mubr.bf16.gmra.mrb[0].mxu0 %v1648
  %v2021 = vpop.f32.mrb[0].mxu0
  %v2022 = vadd.f32 %v1104, %v2021
  %v2023 = vpop.f32.mrb[0].mxu0
  %v2024 = vadd.f32 %v1106, %v2023
  %v2025 = vpop.f32.mrb[0].mxu0
  %v2026 = vadd.f32 %v1108, %v2025
  %v2027 = vpop.f32.mrb[0].mxu0
  %v2028 = vadd.f32 %v1110, %v2027
  %2029 = vmatprep.mubr.bf16.mxu0 0
  %2030 = vmatmul.mubr.bf16.gmra.mrb[0].mxu0 %v1650
  %v2031 = vpop.f32.mrb[0].mxu0
  %v2032 = vadd.f32 %v1114, %v2031
  %v2033 = vpop.f32.mrb[0].mxu0
  %v2034 = vadd.f32 %v1116, %v2033
  %v2035 = vpop.f32.mrb[0].mxu0
  %v2036 = vadd.f32 %v1118, %v2035
  %v2037 = vpop.f32.mrb[0].mxu0
  %v2038 = vadd.f32 %v1120, %v2037
  %2039 = vmatprep.mubr.bf16.mxu0 0
  %2040 = vmatmul.mubr.bf16.gmra.mrb[0].mxu0 %v1652
  %v2041 = vpop.f32.mrb[0].mxu0
  %v2042 = vadd.f32 %v1124, %v2041
  %v2043 = vpop.f32.mrb[0].mxu0
  %v2044 = vadd.f32 %v1126, %v2043
  %v2045 = vpop.f32.mrb[0].mxu0
  %v2046 = vadd.f32 %v1128, %v2045
  %v2047 = vpop.f32.mrb[0].mxu0
  %v2048 = vadd.f32 %v1130, %v2047
  %2049 = vmatprep.mubr.bf16.mxu0 0
  %2050 = vmatmul.mubr.bf16.gmra.mrb[0].mxu0 %v1655
  %v2051 = vpop.f32.mrb[0].mxu0
  %v2052 = vadd.f32 %v1134, %v2051
  %v2053 = vpop.f32.mrb[0].mxu0
  %v2054 = vadd.f32 %v1136, %v2053
  %v2055 = vpop.f32.mrb[0].mxu0
  %v2056 = vpop.f32.mrb[0].mxu0
  %2057 = vdwg.mxu0
  %2058 = vmatprep.subr.bf16.mxu0 %v1569
  %2059 = vmatpush1.bf16.msra.mxu0 %v1568
  %2060 = vmatprep.subr.bf16.mxu0 %v1573
  %2061 = vmatpush1.bf16.msra.mxu0 %v1572
  %2062 = vmatprep.subr.bf16.mxu0 0
  %2063 = vmatpush1.bf16.msra.mxu0 0
  %2064 = vmatprep.subr.bf16.mxu0 0
  %2065 = vmatpush1.bf16.msra.mxu0 0
  %2066 = vmatprep.subr.bf16.mxu0 0
  %2067 = vmatpush1.bf16.msra.mxu0 0
  %2068 = vmatprep.subr.bf16.mxu0 0
  %2069 = vmatpush1.bf16.msra.mxu0 0
  %2070 = vmatprep.subr.bf16.mxu0 0
  %2071 = vmatpush1.bf16.msra.mxu0 0
  %2072 = vmatprep.subr.bf16.mxu0 0
  %2073 = vmatpush1.bf16.msra.mxu0 0
  %2074 = vmatprep.subr.bf16.mxu0 0
  %2075 = vmatpush1.bf16.msra.mxu0 0
  %2076 = vmatprep.subr.bf16.mxu0 0
  %2077 = vmatpush1.bf16.msra.mxu0 0
  %2078 = vmatprep.subr.bf16.mxu0 0
  %2079 = vmatpush1.bf16.msra.mxu0 0
  %2080 = vmatprep.subr.bf16.mxu0 0
  %2081 = vmatpush1.bf16.msra.mxu0 0
  %2082 = vmatprep.subr.bf16.mxu0 0
  %2083 = vmatpush1.bf16.msra.mxu0 0
  %2084 = vmatprep.subr.bf16.mxu0 0
  %2085 = vmatpush1.bf16.msra.mxu0 0
  %2086 = vmatprep.subr.bf16.mxu0 0
  %2087 = vmatpush1.bf16.msra.mxu0 0
  %2088 = vmatprep.subr.bf16.mxu0 0
  %2089 = vmatpush1.bf16.msra.mxu0 0
  %2090 = vmatprep.mubr.bf16.mxu0 0
  %2091 = vmatmul.mubr.bf16.gmra.mrb[0].mxu0 %v1582
  %v2092 = vpop.f32.mrb[0].mxu0
  %v2093 = vadd.f32 %v1175, %v2092
  %v2094 = vpop.f32.mrb[0].mxu0
  %v2095 = vadd.f32 %v1177, %v2094
  %v2096 = vpop.f32.mrb[0].mxu0
  %v2097 = vadd.f32 %v1179, %v2096
  %v2098 = vpop.f32.mrb[0].mxu0
  %v2099 = vadd.f32 %v1181, %v2098
  %2100 = vmatprep.mubr.bf16.mxu0 0
  %2101 = vmatmul.mubr.bf16.gmra.mrb[0].mxu0 %v1584
  %v2102 = vpop.f32.mrb[0].mxu0
  %v2103 = vadd.f32 %v1185, %v2102
  %v2104 = vpop.f32.mrb[0].mxu0
  %v2105 = vadd.f32 %v1187, %v2104
  %v2106 = vpop.f32.mrb[0].mxu0
  %v2107 = vadd.f32 %v1189, %v2106
  %v2108 = vpop.f32.mrb[0].mxu0
  %v2109 = vadd.f32 %v1191, %v2108
  %2110 = vmatprep.mubr.bf16.mxu0 0
  %2111 = vmatmul.mubr.bf16.gmra.mrb[0].mxu0 %v1586
  %v2112 = vpop.f32.mrb[0].mxu0
  %v2113 = vadd.f32 %v1195, %v2112
  %v2114 = vpop.f32.mrb[0].mxu0
  %v2115 = vadd.f32 %v1197, %v2114
  %v2116 = vpop.f32.mrb[0].mxu0
  %v2117 = vadd.f32 %v1199, %v2116
  %v2118 = vpop.f32.mrb[0].mxu0
  %v2119 = vadd.f32 %v1201, %v2118
  %2120 = vmatprep.mubr.bf16.mxu0 0
  %2121 = vmatmul.mubr.bf16.gmra.mrb[0].mxu0 %v1588
  %v2122 = vpop.f32.mrb[0].mxu0
  %v2123 = vadd.f32 %v1205, %v2122
  %v2124 = vpop.f32.mrb[0].mxu0
  %v2125 = vadd.f32 %v1207, %v2124
  %v2126 = vpop.f32.mrb[0].mxu0
  %v2127 = vadd.f32 %v1209, %v2126
  %v2128 = vpop.f32.mrb[0].mxu0
  %v2129 = vadd.f32 %v1211, %v2128
  %2130 = vmatprep.mubr.bf16.mxu0 0
  %2131 = vmatmul.mubr.bf16.gmra.mrb[0].mxu0 %v1590
  %v2132 = vpop.f32.mrb[0].mxu0
  %v2133 = vadd.f32 %v1215, %v2132
  %v2134 = vpop.f32.mrb[0].mxu0
  %v2135 = vadd.f32 %v1217, %v2134
  %v2136 = vpop.f32.mrb[0].mxu0
  %v2137 = vadd.f32 %v1219, %v2136
  %v2138 = vpop.f32.mrb[0].mxu0
  %v2139 = vadd.f32 %v1221, %v2138
  %2140 = vmatprep.mubr.bf16.mxu0 0
  %2141 = vmatmul.mubr.bf16.gmra.mrb[0].mxu0 %v1592
  %v2142 = vpop.f32.mrb[0].mxu0
  %v2143 = vadd.f32 %v1225, %v2142
  %v2144 = vpop.f32.mrb[0].mxu0
  %v2145 = vadd.f32 %v1227, %v2144
  %v2146 = vpop.f32.mrb[0].mxu0
  %v2147 = vadd.f32 %v1229, %v2146
  %v2148 = vpop.f32.mrb[0].mxu0
  %v2149 = vadd.f32 %v1231, %v2148
  %2150 = vmatprep.mubr.bf16.mxu0 0
  %2151 = vmatmul.mubr.bf16.gmra.mrb[0].mxu0 %v1594
  %v2152 = vpop.f32.mrb[0].mxu0
  %v2153 = vadd.f32 %v1235, %v2152
  %v2154 = vpop.f32.mrb[0].mxu0
  %v2155 = vadd.f32 %v1237, %v2154
  %v2156 = vpop.f32.mrb[0].mxu0
  %v2157 = vadd.f32 %v1239, %v2156
  %v2158 = vpop.f32.mrb[0].mxu0
  %v2159 = vadd.f32 %v1241, %v2158
  %2160 = vmatprep.mubr.bf16.mxu0 0
  %2161 = vmatmul.mubr.bf16.gmra.mrb[0].mxu0 %v1596
  %v2162 = vpop.f32.mrb[0].mxu0
  %v2163 = vadd.f32 %v1245, %v2162
  %v2164 = vpop.f32.mrb[0].mxu0
  %v2165 = vadd.f32 %v1247, %v2164
  %v2166 = vpop.f32.mrb[0].mxu0
  %v2167 = vadd.f32 %v1249, %v2166
  %v2168 = vpop.f32.mrb[0].mxu0
  %v2169 = vadd.f32 %v1251, %v2168
  %2170 = vmatprep.mubr.bf16.mxu0 0
  %2171 = vmatmul.mubr.bf16.gmra.mrb[0].mxu0 %v1598
  %v2172 = vpop.f32.mrb[0].mxu0
  %v2173 = vadd.f32 %v1255, %v2172
  %v2174 = vpop.f32.mrb[0].mxu0
  %v2175 = vadd.f32 %v1257, %v2174
  %v2176 = vpop.f32.mrb[0].mxu0
  %v2177 = vadd.f32 %v1259, %v2176
  %v2178 = vpop.f32.mrb[0].mxu0
  %v2179 = vadd.f32 %v1261, %v2178
  %2180 = vmatprep.mubr.bf16.mxu0 0
  %2181 = vmatmul.mubr.bf16.gmra.mrb[0].mxu0 %v1600
  %v2182 = vpop.f32.mrb[0].mxu0
  %v2183 = vadd.f32 %v1265, %v2182
  %v2184 = vpop.f32.mrb[0].mxu0
  %v2185 = vadd.f32 %v1267, %v2184
  %v2186 = vpop.f32.mrb[0].mxu0
  %v2187 = vadd.f32 %v1269, %v2186
  %v2188 = vpop.f32.mrb[0].mxu0
  %v2189 = vadd.f32 %v1271, %v2188
  %2190 = vmatprep.mubr.bf16.mxu0 0
  %2191 = vmatmul.mubr.bf16.gmra.mrb[0].mxu0 %v1602
  %v2192 = vpop.f32.mrb[0].mxu0
  %v2193 = vadd.f32 %v1275, %v2192
  %v2194 = vpop.f32.mrb[0].mxu0
  %v2195 = vadd.f32 %v1277, %v2194
  %v2196 = vpop.f32.mrb[0].mxu0
  %v2197 = vadd.f32 %v1279, %v2196
  %v2198 = vpop.f32.mrb[0].mxu0
  %v2199 = vadd.f32 %v1281, %v2198
  %2200 = vmatprep.mubr.bf16.mxu0 0
  %2201 = vmatmul.mubr.bf16.gmra.mrb[0].mxu0 %v1604
  %v2202 = vpop.f32.mrb[0].mxu0
  %v2203 = vadd.f32 %v1285, %v2202
  %v2204 = vpop.f32.mrb[0].mxu0
  %v2205 = vadd.f32 %v1287, %v2204
  %v2206 = vpop.f32.mrb[0].mxu0
  %v2207 = vadd.f32 %v1289, %v2206
  %v2208 = vpop.f32.mrb[0].mxu0
  %v2209 = vadd.f32 %v1291, %v2208
  %2210 = vmatprep.mubr.bf16.mxu0 0
  %2211 = vmatmul.mubr.bf16.gmra.mrb[0].mxu0 %v1606
  %v2212 = vpop.f32.mrb[0].mxu0
  %v2213 = vadd.f32 %v1295, %v2212
  %v2214 = vpop.f32.mrb[0].mxu0
  %v2215 = vadd.f32 %v1297, %v2214
  %v2216 = vpop.f32.mrb[0].mxu0
  %v2217 = vadd.f32 %v1299, %v2216
  %v2218 = vpop.f32.mrb[0].mxu0
  %v2219 = vadd.f32 %v1301, %v2218
  %2220 = vmatprep.mubr.bf16.mxu0 0
  %2221 = vmatmul.mubr.bf16.gmra.mrb[0].mxu0 %v1608
  %v2222 = vpop.f32.mrb[0].mxu0
  %v2223 = vadd.f32 %v1305, %v2222
  %v2224 = vpop.f32.mrb[0].mxu0
  %v2225 = vadd.f32 %v1307, %v2224
  %v2226 = vpop.f32.mrb[0].mxu0
  %v2227 = vadd.f32 %v1309, %v2226
  %v2228 = vpop.f32.mrb[0].mxu0
  %v2229 = vadd.f32 %v1311, %v2228
  %2230 = vmatprep.mubr.bf16.mxu0 0
  %2231 = vmatmul.mubr.bf16.gmra.mrb[0].mxu0 %v1610
  %v2232 = vpop.f32.mrb[0].mxu0
  %v2233 = vadd.f32 %v1315, %v2232
  %v2234 = vpop.f32.mrb[0].mxu0
  %v2235 = vadd.f32 %v1317, %v2234
  %v2236 = vpop.f32.mrb[0].mxu0
  %v2237 = vadd.f32 %v1319, %v2236
  %v2238 = vpop.f32.mrb[0].mxu0
  %v2239 = vadd.f32 %v1321, %v2238
  %2240 = vmatprep.mubr.bf16.mxu0 0
  %2241 = vmatmul.mubr.bf16.gmra.mrb[0].mxu0 %v1612
  %v2242 = vpop.f32.mrb[0].mxu0
  %v2243 = vadd.f32 %v1325, %v2242
  %v2244 = vpop.f32.mrb[0].mxu0
  %v2245 = vadd.f32 %v1327, %v2244
  %v2246 = vpop.f32.mrb[0].mxu0
  %v2247 = vadd.f32 %v1329, %v2246
  %v2248 = vpop.f32.mrb[0].mxu0
  %v2249 = vadd.f32 %v1331, %v2248
  %2250 = vmatprep.mubr.bf16.mxu0 0
  %2251 = vmatmul.mubr.bf16.gmra.mrb[0].mxu0 %v1614
  %v2252 = vpop.f32.mrb[0].mxu0
  %v2253 = vadd.f32 %v1335, %v2252
  %v2254 = vpop.f32.mrb[0].mxu0
  %v2255 = vadd.f32 %v1337, %v2254
  %v2256 = vpop.f32.mrb[0].mxu0
  %v2257 = vadd.f32 %v1339, %v2256
  %v2258 = vpop.f32.mrb[0].mxu0
  %v2259 = vadd.f32 %v1341, %v2258
  %2260 = vmatprep.mubr.bf16.mxu0 0
  %2261 = vmatmul.mubr.bf16.gmra.mrb[0].mxu0 %v1616
  %v2262 = vpop.f32.mrb[0].mxu0
  %v2263 = vadd.f32 %v1345, %v2262
  %v2264 = vpop.f32.mrb[0].mxu0
  %v2265 = vadd.f32 %v1347, %v2264
  %v2266 = vpop.f32.mrb[0].mxu0
  %v2267 = vadd.f32 %v1349, %v2266
  %v2268 = vpop.f32.mrb[0].mxu0
  %v2269 = vadd.f32 %v1351, %v2268
  %2270 = vmatprep.mubr.bf16.mxu0 0
  %2271 = vmatmul.mubr.bf16.gmra.mrb[0].mxu0 %v1618
  %v2272 = vpop.f32.mrb[0].mxu0
  %v2273 = vadd.f32 %v1355, %v2272
  %v2274 = vpop.f32.mrb[0].mxu0
  %v2275 = vadd.f32 %v1357, %v2274
  %v2276 = vpop.f32.mrb[0].mxu0
  %v2277 = vadd.f32 %v1359, %v2276
  %v2278 = vpop.f32.mrb[0].mxu0
  %v2279 = vadd.f32 %v1361, %v2278
  %2280 = vmatprep.mubr.bf16.mxu0 0
  %2281 = vmatmul.mubr.bf16.gmra.mrb[0].mxu0 %v1620
  %v2282 = vpop.f32.mrb[0].mxu0
  %v2283 = vadd.f32 %v1365, %v2282
  %v2284 = vpop.f32.mrb[0].mxu0
  %v2285 = vadd.f32 %v1367, %v2284
  %v2286 = vpop.f32.mrb[0].mxu0
  %v2287 = vadd.f32 %v1369, %v2286
  %v2288 = vpop.f32.mrb[0].mxu0
  %v2289 = vadd.f32 %v1371, %v2288
  %2290 = vmatprep.mubr.bf16.mxu0 0
  %2291 = vmatmul.mubr.bf16.gmra.mrb[0].mxu0 %v1622
  %v2292 = vpop.f32.mrb[0].mxu0
  %v2293 = vadd.f32 %v1375, %v2292
  %v2294 = vpop.f32.mrb[0].mxu0
  %v2295 = vadd.f32 %v1377, %v2294
  %v2296 = vpop.f32.mrb[0].mxu0
  %v2297 = vadd.f32 %v1379, %v2296
  %v2298 = vpop.f32.mrb[0].mxu0
  %v2299 = vadd.f32 %v1381, %v2298
  %2300 = vmatprep.mubr.bf16.mxu0 0
  %2301 = vmatmul.mubr.bf16.gmra.mrb[0].mxu0 %v1624
  %v2302 = vpop.f32.mrb[0].mxu0
  %v2303 = vadd.f32 %v1385, %v2302
  %v2304 = vpop.f32.mrb[0].mxu0
  %v2305 = vadd.f32 %v1387, %v2304
  %v2306 = vpop.f32.mrb[0].mxu0
  %v2307 = vadd.f32 %v1389, %v2306
  %v2308 = vpop.f32.mrb[0].mxu0
  %v2309 = vadd.f32 %v1391, %v2308
  %2310 = vmatprep.mubr.bf16.mxu0 0
  %2311 = vmatmul.mubr.bf16.gmra.mrb[0].mxu0 %v1626
  %v2312 = vpop.f32.mrb[0].mxu0
  %v2313 = vadd.f32 %v1395, %v2312
  %v2314 = vpop.f32.mrb[0].mxu0
  %v2315 = vadd.f32 %v1397, %v2314
  %v2316 = vpop.f32.mrb[0].mxu0
  %v2317 = vadd.f32 %v1399, %v2316
  %v2318 = vpop.f32.mrb[0].mxu0
  %v2319 = vadd.f32 %v1401, %v2318
  %2320 = vmatprep.mubr.bf16.mxu0 0
  %2321 = vmatmul.mubr.bf16.gmra.mrb[0].mxu0 %v1628
  %v2322 = vpop.f32.mrb[0].mxu0
  %v2323 = vadd.f32 %v1405, %v2322
  %v2324 = vpop.f32.mrb[0].mxu0
  %v2325 = vadd.f32 %v1407, %v2324
  %v2326 = vpop.f32.mrb[0].mxu0
  %v2327 = vadd.f32 %v1409, %v2326
  %v2328 = vpop.f32.mrb[0].mxu0
  %v2329 = vadd.f32 %v1411, %v2328
  %2330 = vmatprep.mubr.bf16.mxu0 0
  %2331 = vmatmul.mubr.bf16.gmra.mrb[0].mxu0 %v1630
  %v2332 = vpop.f32.mrb[0].mxu0
  %v2333 = vadd.f32 %v1415, %v2332
  %v2334 = vpop.f32.mrb[0].mxu0
  %v2335 = vadd.f32 %v1417, %v2334
  %v2336 = vpop.f32.mrb[0].mxu0
  %v2337 = vadd.f32 %v1419, %v2336
  %v2338 = vpop.f32.mrb[0].mxu0
  %v2339 = vadd.f32 %v1421, %v2338
  %2340 = vmatprep.mubr.bf16.mxu0 0
  %2341 = vmatmul.mubr.bf16.gmra.mrb[0].mxu0 %v1632
  %v2342 = vpop.f32.mrb[0].mxu0
  %v2343 = vadd.f32 %v1425, %v2342
  %v2344 = vpop.f32.mrb[0].mxu0
  %v2345 = vadd.f32 %v1427, %v2344
  %v2346 = vpop.f32.mrb[0].mxu0
  %v2347 = vadd.f32 %v1429, %v2346
  %v2348 = vpop.f32.mrb[0].mxu0
  %v2349 = vadd.f32 %v1431, %v2348
  %2350 = vmatprep.mubr.bf16.mxu0 0
  %2351 = vmatmul.mubr.bf16.gmra.mrb[0].mxu0 %v1634
  %v2352 = vpop.f32.mrb[0].mxu0
  %v2353 = vadd.f32 %v1435, %v2352
  %v2354 = vpop.f32.mrb[0].mxu0
  %v2355 = vadd.f32 %v1437, %v2354
  %v2356 = vpop.f32.mrb[0].mxu0
  %v2357 = vadd.f32 %v1439, %v2356
  %v2358 = vpop.f32.mrb[0].mxu0
  %v2359 = vadd.f32 %v1441, %v2358
  %2360 = vmatprep.mubr.bf16.mxu0 0
  %2361 = vmatmul.mubr.bf16.gmra.mrb[0].mxu0 %v1636
  %v2362 = vpop.f32.mrb[0].mxu0
  %v2363 = vadd.f32 %v1445, %v2362
  %v2364 = vpop.f32.mrb[0].mxu0
  %v2365 = vadd.f32 %v1447, %v2364
  %v2366 = vpop.f32.mrb[0].mxu0
  %v2367 = vadd.f32 %v1449, %v2366
  %v2368 = vpop.f32.mrb[0].mxu0
  %v2369 = vadd.f32 %v1451, %v2368
  %2370 = vmatprep.mubr.bf16.mxu0 0
  %2371 = vmatmul.mubr.bf16.gmra.mrb[0].mxu0 %v1638
  %v2372 = vpop.f32.mrb[0].mxu0
  %v2373 = vadd.f32 %v1455, %v2372
  %v2374 = vpop.f32.mrb[0].mxu0
  %v2375 = vadd.f32 %v1457, %v2374
  %v2376 = vpop.f32.mrb[0].mxu0
  %v2377 = vadd.f32 %v1459, %v2376
  %v2378 = vpop.f32.mrb[0].mxu0
  %v2379 = vadd.f32 %v1461, %v2378
  %2380 = vmatprep.mubr.bf16.mxu0 0
  %2381 = vmatmul.mubr.bf16.gmra.mrb[0].mxu0 %v1640
  %v2382 = vpop.f32.mrb[0].mxu0
  %v2383 = vadd.f32 %v1465, %v2382
  %v2384 = vpop.f32.mrb[0].mxu0
  %v2385 = vadd.f32 %v1467, %v2384
  %v2386 = vpop.f32.mrb[0].mxu0
  %v2387 = vadd.f32 %v1469, %v2386
  %v2388 = vpop.f32.mrb[0].mxu0
  %v2389 = vadd.f32 %v1471, %v2388
  %2390 = vmatprep.mubr.bf16.mxu0 0
  %2391 = vmatmul.mubr.bf16.gmra.mrb[0].mxu0 %v1642
  %v2392 = vpop.f32.mrb[0].mxu0
  %v2393 = vadd.f32 %v1475, %v2392
  %v2394 = vpop.f32.mrb[0].mxu0
  %v2395 = vadd.f32 %v1477, %v2394
  %v2396 = vpop.f32.mrb[0].mxu0
  %v2397 = vadd.f32 %v1479, %v2396
  %v2398 = vpop.f32.mrb[0].mxu0
  %v2399 = vadd.f32 %v1481, %v2398
  %2400 = vmatprep.mubr.bf16.mxu0 0
  %2401 = vmatmul.mubr.bf16.gmra.mrb[0].mxu0 %v1644
  %v2402 = vpop.f32.mrb[0].mxu0
  %v2403 = vadd.f32 %v1485, %v2402
  %v2404 = vpop.f32.mrb[0].mxu0
  %v2405 = vadd.f32 %v1487, %v2404
  %v2406 = vpop.f32.mrb[0].mxu0
  %v2407 = vadd.f32 %v1489, %v2406
  %v2408 = vpop.f32.mrb[0].mxu0
  %v2409 = vadd.f32 %v1491, %v2408
  %2410 = vmatprep.mubr.bf16.mxu0 0
  %2411 = vmatmul.mubr.bf16.gmra.mrb[0].mxu0 %v1646
  %v2412 = vpop.f32.mrb[0].mxu0
  %v2413 = vadd.f32 %v1495, %v2412
  %v2414 = vpop.f32.mrb[0].mxu0
  %v2415 = vadd.f32 %v1497, %v2414
  %v2416 = vpop.f32.mrb[0].mxu0
  %v2417 = vadd.f32 %v1499, %v2416
  %v2418 = vpop.f32.mrb[0].mxu0
  %v2419 = vadd.f32 %v1501, %v2418
  %2420 = vmatprep.mubr.bf16.mxu0 0
  %2421 = vmatmul.mubr.bf16.gmra.mrb[0].mxu0 %v1648
  %v2422 = vpop.f32.mrb[0].mxu0
  %v2423 = vadd.f32 %v1505, %v2422
  %v2424 = vpop.f32.mrb[0].mxu0
  %v2425 = vadd.f32 %v1507, %v2424
  %v2426 = vpop.f32.mrb[0].mxu0
  %v2427 = vadd.f32 %v1509, %v2426
  %v2428 = vpop.f32.mrb[0].mxu0
  %v2429 = vadd.f32 %v1511, %v2428
  %2430 = vmatprep.mubr.bf16.mxu0 0
  %2431 = vmatmul.mubr.bf16.gmra.mrb[0].mxu0 %v1650
  %v2432 = vpop.f32.mrb[0].mxu0
  %v2433 = vadd.f32 %v1515, %v2432
  %v2434 = vpop.f32.mrb[0].mxu0
  %v2435 = vadd.f32 %v1517, %v2434
  %v2436 = vpop.f32.mrb[0].mxu0
  %v2437 = vadd.f32 %v1519, %v2436
  %v2438 = vpop.f32.mrb[0].mxu0
  %v2439 = vadd.f32 %v1521, %v2438
  %2440 = vmatprep.mubr.bf16.mxu0 0
  %2441 = vmatmul.mubr.bf16.gmra.mrb[0].mxu0 %v1652
  %v2442 = vpop.f32.mrb[0].mxu0
  %v2443 = vadd.f32 %v1525, %v2442
  %v2444 = vpop.f32.mrb[0].mxu0
  %v2445 = vadd.f32 %v1527, %v2444
  %v2446 = vpop.f32.mrb[0].mxu0
  %v2447 = vadd.f32 %v1529, %v2446
  %v2448 = vpop.f32.mrb[0].mxu0
  %v2449 = vadd.f32 %v1531, %v2448
  %2450 = vmatprep.mubr.bf16.mxu0 0
  %2451 = vmatmul.mubr.bf16.gmra.mrb[0].mxu0 %v1655
  %v2452 = vpop.f32.mrb[0].mxu0
  %v2453 = vadd.f32 %v1535, %v2452
  %v2454 = vpop.f32.mrb[0].mxu0
  %v2455 = vadd.f32 %v1537, %v2454
  %v2456 = vpop.f32.mrb[0].mxu0
  %v2457 = vpop.f32.mrb[0].mxu0
  %2458 = vdwg.mxu0
  %v2459 = vld [vmem:[%s0 + $0x8] sm:$0xf]
  %v2460 = vld [vmem:[%s0 + $0xc] sm:$0xf]
  %v2461 = vld [vmem:[%s0 + $0x10] sm:$0xf]
  %v2462 = vld [vmem:[%s0 + $0x14] sm:$0xf]
  %v2463 = vld [vmem:[%s0 + $0x18] sm:$0xf]
  %v2464 = vld [vmem:[%s0 + $0x1c] sm:$0xf]
  %v2465 = vld [vmem:[%s0 + $0x20] sm:$0xf]
  %v2466 = vld [vmem:[%s0 + $0x24] sm:$0xf]
  %v2467 = vld [vmem:[%s0 + $0x28] sm:$0xf]
  %v2468 = vld [vmem:[%s0 + $0x2c] sm:$0xf]
  %v2469 = vld [vmem:[%s0 + $0x30] sm:$0xf]
  %v2470 = vld [vmem:[%s0 + $0x34] sm:$0xf]
  %v2471 = vld [vmem:[%s0 + $0x38] sm:$0xf]
  %v2472 = vld [vmem:[%s0 + $0x3c] sm:$0xf]
  %v2473 = vld [vmem:[%s0 + $0x40] sm:$0xf]
  %v2474 = vld [vmem:[%s0 + $0x44] sm:$0xf]
  %v2475 = vld [vmem:[%s0 + $0x48] sm:$0xf]
  %v2476 = vld [vmem:[%s0 + $0x4c] sm:$0xf]
  %v2477 = vld [vmem:[%s0 + $0x50] sm:$0xf]
  %v2478 = vld [vmem:[%s0 + $0x54] sm:$0xf]
  %v2479 = vld [vmem:[%s0 + $0x58] sm:$0xf]
  %v2480 = vld [vmem:[%s0 + $0x5c] sm:$0xf]
  %v2481 = vld [vmem:[%s0 + $0x60] sm:$0xf]
  %v2482 = vld [vmem:[%s0 + $0x64] sm:$0xf]
  %v2483 = vld [vmem:[%s0 + $0x68] sm:$0xf]
  %v2484 = vld [vmem:[%s0 + $0x6c] sm:$0xf]
  %v2485 = vld [vmem:[%s0 + $0x70] sm:$0xf]
  %v2486 = vld [vmem:[%s0 + $0x74] sm:$0xf]
  %v2487 = vld [vmem:[%s0 + $0x78] sm:$0xf]
  %v2488 = vld [vmem:[%s0 + $0x7c] sm:$0xf]
  %v2489 = vld [vmem:[%s0 + $0x80] sm:$0xf]
  %v2490 = vld [vmem:[%s0 + $0x84] sm:$0xf]
  %v2491 = vld [vmem:[%s0 + $0x88] sm:$0xf]
  %v2492 = vld [vmem:[%s0 + $0x8c] sm:$0xf]
  %v2493 = vld [vmem:[%s0 + $0x90] sm:$0xf]
  %v2494 = vld [vmem:[%s0 + $0x94] sm:$0xf]
  %v2495 = vld [vmem:[%s0 + $0x98] sm:$0xf]
  %v2496 = vld [vmem:[%s0 + $0x9c] sm:$0xf]
  %v2497 = vld [vmem:[%s0 + $0xa0] sm:$0xf]
  %v2498 = vld [vmem:[%s0 + $0xa4] sm:$0xf]
  %v2499 = vld [vmem:[%s0 + $0xa8] sm:$0xf]
  %v2500 = vld [vmem:[%s0 + $0xac] sm:$0xf]
  %v2501 = vld [vmem:[%s0 + $0xb0] sm:$0xf]
  %v2502 = vld [vmem:[%s0 + $0xb4] sm:$0xf]
  %v2503 = vld [vmem:[%s0 + $0xb8] sm:$0xf]
  %v2504 = vld [vmem:[%s0 + $0xbc] sm:$0xf]
  %v2505 = vld [vmem:[%s0 + $0xc0] sm:$0xf]
  %v2506 = vld [vmem:[%s0 + $0xc4] sm:$0xf]
  %v2507 = vld [vmem:[%s0 + $0xc8] sm:$0xf]
  %v2508 = vld [vmem:[%s0 + $0xcc] sm:$0xf]
  %v2509 = vld [vmem:[%s0 + $0xd0] sm:$0xf]
  %v2510 = vld [vmem:[%s0 + $0xd4] sm:$0xf]
  %v2511 = vld [vmem:[%s0 + $0xd8] sm:$0xf]
  %v2512 = vld [vmem:[%s0 + $0xdc] sm:$0xf]
  %v2513 = vld [vmem:[%s0 + $0xe0] sm:$0xf]
  %v2514 = vld [vmem:[%s0 + $0xe4] sm:$0xf]
  %v2515 = vld [vmem:[%s0 + $0xe8] sm:$0xf]
  %v2516 = vld [vmem:[%s0 + $0xec] sm:$0xf]
  %v2517 = vld [vmem:[%s0 + $0xf0] sm:$0xf]
  %v2518 = vld [vmem:[%s0 + $0xf4] sm:$0xf]
  %v2519 = vld [vmem:[%s0 + $0xf8] sm:$0xf]
  %v2520 = vld [vmem:[%s0 + $0xfc] sm:$0xf]
  %v2521 = vld [vmem:[%s0 + $0x100] sm:$0xf]
  %v2522 = vld [vmem:[%s0 + $0x104] sm:$0xf]
  %v2523 = vld [vmem:[%s0 + $0x108] sm:$0xf]
  %v2524 = vld [vmem:[%s0 + $0x10c] sm:$0xf]
  %v2525 = vld [vmem:[%s0 + $0x110] sm:$0xf]
  %v2526 = vld [vmem:[%s0 + $0x114] sm:$0xf]
  %v2527 = vld [vmem:[%s0 + $0x118] sm:$0xf]
  %v2528 = vld [vmem:[%s0 + $0x11c] sm:$0xf]
  %v2529 = vld [vmem:[%s0 + $0x120] sm:$0xf]
  %v2530 = vld [vmem:[%s0 + $0x124] sm:$0xf]
  %v2531 = vld [vmem:[%s0 + $0x128] sm:$0xf]
  %v2532 = vld [vmem:[%s0 + $0x12c] sm:$0x1]
  %s2533 = scalar_lea.vmem %s1, 128
  %v2534 = vld [vmem:[%s2533] sm:$0xff]
  %v2535 = vld [vmem:[%s2533 + $0x8] sm:$0xff]
  %v2536 = vld [vmem:[%s2533 + $0x10] sm:$0xff]
  %v2537 = vld [vmem:[%s2533 + $0x18] sm:$0xff]
  %v2538 = vld [vmem:[%s2533 + $0x20] sm:$0xff]
  %v2539 = vld [vmem:[%s2533 + $0x28] sm:$0xff]
  %v2540 = vld [vmem:[%s2533 + $0x30] sm:$0xff]
  %v2541 = vld [vmem:[%s2533 + $0x38] sm:$0xff]
  %v2616 = vunpack.c.l.b16 %v2459
  %v2617 = vunpack.c.l.b16 %v2460
  %v2618 = vunpack.c.l.b16 %v2461
  %v2619 = vunpack.c.l.b16 %v2462
  %v2620 = vunpack.c.l.b16 %v2463
  %v2621 = vunpack.c.l.b16 %v2464
  %v2622 = vunpack.c.l.b16 %v2465
  %v2623 = vunpack.c.l.b16 %v2466
  %v2624 = vunpack.c.l.b16 %v2467
  %v2625 = vunpack.c.l.b16 %v2468
  %v2626 = vunpack.c.l.b16 %v2469
  %v2627 = vunpack.c.l.b16 %v2470
  %v2628 = vunpack.c.l.b16 %v2471
  %v2629 = vunpack.c.l.b16 %v2472
  %v2630 = vunpack.c.l.b16 %v2473
  %v2631 = vunpack.c.l.b16 %v2474
  %v2632 = vunpack.c.l.b16 %v2475
  %v2633 = vunpack.c.l.b16 %v2476
  %v2634 = vunpack.c.l.b16 %v2477
  %v2635 = vunpack.c.l.b16 %v2478
  %v2636 = vunpack.c.l.b16 %v2479
  %v2637 = vunpack.c.l.b16 %v2480
  %v2638 = vunpack.c.l.b16 %v2481
  %v2639 = vunpack.c.l.b16 %v2482
  %v2640 = vunpack.c.l.b16 %v2483
  %v2641 = vunpack.c.l.b16 %v2484
  %v2642 = vunpack.c.l.b16 %v2485
  %v2643 = vunpack.c.l.b16 %v2486
  %v2644 = vunpack.c.l.b16 %v2487
  %v2645 = vunpack.c.l.b16 %v2488
  %v2646 = vunpack.c.l.b16 %v2489
  %v2647 = vunpack.c.l.b16 %v2490
  %v2648 = vunpack.c.l.b16 %v2491
  %v2649 = vunpack.c.l.b16 %v2492
  %v2650 = vunpack.c.l.b16 %v2493
  %v2651 = vunpack.c.l.b16 %v2494
  %v2652 = vunpack.c.l.b16 %v2495
  %v2653 = vunpack.c.l.b16 %v2496
  %v2654 = vunpack.c.l.b16 %v2497
  %v2655 = vunpack.c.l.b16 %v2498
  %v2656 = vunpack.c.l.b16 %v2499
  %v2657 = vunpack.c.l.b16 %v2500
  %v2658 = vunpack.c.l.b16 %v2501
  %v2659 = vunpack.c.l.b16 %v2502
  %v2660 = vunpack.c.l.b16 %v2503
  %v2661 = vunpack.c.l.b16 %v2504
  %v2662 = vunpack.c.l.b16 %v2505
  %v2663 = vunpack.c.l.b16 %v2506
  %v2664 = vunpack.c.l.b16 %v2507
  %v2665 = vunpack.c.l.b16 %v2508
  %v2666 = vunpack.c.l.b16 %v2509
  %v2667 = vunpack.c.l.b16 %v2510
  %v2668 = vunpack.c.l.b16 %v2511
  %v2669 = vunpack.c.l.b16 %v2512
  %v2670 = vunpack.c.l.b16 %v2513
  %v2671 = vunpack.c.l.b16 %v2514
  %v2672 = vunpack.c.l.b16 %v2515
  %v2673 = vunpack.c.l.b16 %v2516
  %v2674 = vunpack.c.l.b16 %v2517
  %v2675 = vunpack.c.l.b16 %v2518
  %v2676 = vunpack.c.l.b16 %v2519
  %v2677 = vunpack.c.l.b16 %v2520
  %v2678 = vunpack.c.l.b16 %v2521
  %v2679 = vunpack.c.l.b16 %v2522
  %v2680 = vunpack.c.l.b16 %v2523
  %v2681 = vunpack.c.l.b16 %v2524
  %v2682 = vunpack.c.l.b16 %v2525
  %v2683 = vunpack.c.l.b16 %v2526
  %v2684 = vunpack.c.l.b16 %v2527
  %v2685 = vunpack.c.l.b16 %v2528
  %v2686 = vunpack.c.l.b16 %v2529
  %v2687 = vunpack.c.l.b16 %v2530
  %v2688 = vunpack.c.l.b16 %v2531
  %v2689 = vunpack.c.l.b16 %v2532
  %v2690 = vpack.c.b16 %v2617, %v2616
  %v2691 = vpack.c.b16 %v2619, %v2618
  %v2692 = vpack.c.b16 %v2621, %v2620
  %v2693 = vpack.c.b16 %v2623, %v2622
  %v2694 = vpack.c.b16 %v2625, %v2624
  %v2695 = vpack.c.b16 %v2627, %v2626
  %v2696 = vpack.c.b16 %v2629, %v2628
  %v2697 = vpack.c.b16 %v2631, %v2630
  %v2698 = vpack.c.b16 %v2633, %v2632
  %v2699 = vpack.c.b16 %v2635, %v2634
  %v2700 = vpack.c.b16 %v2637, %v2636
  %v2701 = vpack.c.b16 %v2639, %v2638
  %v2702 = vpack.c.b16 %v2641, %v2640
  %v2703 = vpack.c.b16 %v2643, %v2642
  %v2704 = vpack.c.b16 %v2645, %v2644
  %v2705 = vpack.c.b16 %v2647, %v2646
  %v2706 = vpack.c.b16 %v2649, %v2648
  %v2707 = vpack.c.b16 %v2651, %v2650
  %v2708 = vpack.c.b16 %v2653, %v2652
  %v2709 = vpack.c.b16 %v2655, %v2654
  %v2710 = vpack.c.b16 %v2657, %v2656
  %v2711 = vpack.c.b16 %v2659, %v2658
  %v2712 = vpack.c.b16 %v2661, %v2660
  %v2713 = vpack.c.b16 %v2663, %v2662
  %v2714 = vpack.c.b16 %v2665, %v2664
  %v2715 = vpack.c.b16 %v2667, %v2666
  %v2716 = vpack.c.b16 %v2669, %v2668
  %v2717 = vpack.c.b16 %v2671, %v2670
  %v2718 = vpack.c.b16 %v2673, %v2672
  %v2719 = vpack.c.b16 %v2675, %v2674
  %v2720 = vpack.c.b16 %v2677, %v2676
  %v2721 = vpack.c.b16 %v2679, %v2678
  %v2722 = vpack.c.b16 %v2681, %v2680
  %v2723 = vpack.c.b16 %v2683, %v2682
  %v2724 = vpack.c.b16 %v2685, %v2684
  %v2725 = vpack.c.b16 %v2687, %v2686
  %v2726 = vpack.c.b16 %v2689, %v2688
  %v2728 = vshrl.u32 %v2690, 16
  %v2730 = vshll.u32 %v2690, 16
  %v2732 = vrot.slane %v2730, 1
  %v2733 = vor.u32 %v2728, %v2732
  %v2735 = vshll.u32 %v2691, 16
  %v2737 = vrot.slane %v2735, 1
  %v2738 = vsel %vm291, %v2733, %v2737
  %v2739 = vshrl.u32 %v2691, 16
  %v2741 = vor.u32 %v2739, %v2737
  %v2743 = vshll.u32 %v2692, 16
  %v2745 = vrot.slane %v2743, 1
  %v2746 = vsel %vm291, %v2741, %v2745
  %v2747 = vshrl.u32 %v2692, 16
  %v2749 = vor.u32 %v2747, %v2745
  %v2751 = vshll.u32 %v2693, 16
  %v2753 = vrot.slane %v2751, 1
  %v2754 = vsel %vm291, %v2749, %v2753
  %v2755 = vshrl.u32 %v2693, 16
  %v2757 = vor.u32 %v2755, %v2753
  %v2759 = vshll.u32 %v2694, 16
  %v2761 = vrot.slane %v2759, 1
  %v2762 = vsel %vm291, %v2757, %v2761
  %v2763 = vshrl.u32 %v2694, 16
  %v2765 = vor.u32 %v2763, %v2761
  %v2767 = vshll.u32 %v2695, 16
  %v2769 = vrot.slane %v2767, 1
  %v2770 = vsel %vm291, %v2765, %v2769
  %v2771 = vshrl.u32 %v2695, 16
  %v2773 = vor.u32 %v2771, %v2769
  %v2775 = vshll.u32 %v2696, 16
  %v2777 = vrot.slane %v2775, 1
  %v2778 = vsel %vm291, %v2773, %v2777
  %v2779 = vshrl.u32 %v2696, 16
  %v2781 = vor.u32 %v2779, %v2777
  %v2783 = vshll.u32 %v2697, 16
  %v2785 = vrot.slane %v2783, 1
  %v2786 = vsel %vm291, %v2781, %v2785
  %v2787 = vshrl.u32 %v2697, 16
  %v2789 = vor.u32 %v2787, %v2785
  %v2791 = vshll.u32 %v2698, 16
  %v2793 = vrot.slane %v2791, 1
  %v2794 = vsel %vm291, %v2789, %v2793
  %v2795 = vshrl.u32 %v2698, 16
  %v2797 = vor.u32 %v2795, %v2793
  %v2799 = vshll.u32 %v2699, 16
  %v2801 = vrot.slane %v2799, 1
  %v2802 = vsel %vm291, %v2797, %v2801
  %v2803 = vshrl.u32 %v2699, 16
  %v2805 = vor.u32 %v2803, %v2801
  %v2807 = vshll.u32 %v2700, 16
  %v2809 = vrot.slane %v2807, 1
  %v2810 = vsel %vm291, %v2805, %v2809
  %v2811 = vshrl.u32 %v2700, 16
  %v2813 = vor.u32 %v2811, %v2809
  %v2815 = vshll.u32 %v2701, 16
  %v2817 = vrot.slane %v2815, 1
  %v2818 = vsel %vm291, %v2813, %v2817
  %v2819 = vshrl.u32 %v2701, 16
  %v2821 = vor.u32 %v2819, %v2817
  %v2823 = vshll.u32 %v2702, 16
  %v2825 = vrot.slane %v2823, 1
  %v2826 = vsel %vm291, %v2821, %v2825
  %v2827 = vshrl.u32 %v2702, 16
  %v2829 = vor.u32 %v2827, %v2825
  %v2831 = vshll.u32 %v2703, 16
  %v2833 = vrot.slane %v2831, 1
  %v2834 = vsel %vm291, %v2829, %v2833
  %v2835 = vshrl.u32 %v2703, 16
  %v2837 = vor.u32 %v2835, %v2833
  %v2839 = vshll.u32 %v2704, 16
  %v2841 = vrot.slane %v2839, 1
  %v2842 = vsel %vm291, %v2837, %v2841
  %v2843 = vshrl.u32 %v2704, 16
  %v2845 = vor.u32 %v2843, %v2841
  %v2847 = vshll.u32 %v2705, 16
  %v2849 = vrot.slane %v2847, 1
  %v2850 = vsel %vm291, %v2845, %v2849
  %v2851 = vshrl.u32 %v2705, 16
  %v2853 = vor.u32 %v2851, %v2849
  %v2855 = vshll.u32 %v2706, 16
  %v2857 = vrot.slane %v2855, 1
  %v2858 = vsel %vm291, %v2853, %v2857
  %v2859 = vshrl.u32 %v2706, 16
  %v2861 = vor.u32 %v2859, %v2857
  %v2863 = vshll.u32 %v2707, 16
  %v2865 = vrot.slane %v2863, 1
  %v2866 = vsel %vm291, %v2861, %v2865
  %v2867 = vshrl.u32 %v2707, 16
  %v2869 = vor.u32 %v2867, %v2865
  %v2871 = vshll.u32 %v2708, 16
  %v2873 = vrot.slane %v2871, 1
  %v2874 = vsel %vm291, %v2869, %v2873
  %v2875 = vshrl.u32 %v2708, 16
  %v2877 = vor.u32 %v2875, %v2873
  %v2879 = vshll.u32 %v2709, 16
  %v2881 = vrot.slane %v2879, 1
  %v2882 = vsel %vm291, %v2877, %v2881
  %v2883 = vshrl.u32 %v2709, 16
  %v2885 = vor.u32 %v2883, %v2881
  %v2887 = vshll.u32 %v2710, 16
  %v2889 = vrot.slane %v2887, 1
  %v2890 = vsel %vm291, %v2885, %v2889
  %v2891 = vshrl.u32 %v2710, 16
  %v2893 = vor.u32 %v2891, %v2889
  %v2895 = vshll.u32 %v2711, 16
  %v2897 = vrot.slane %v2895, 1
  %v2898 = vsel %vm291, %v2893, %v2897
  %v2899 = vshrl.u32 %v2711, 16
  %v2901 = vor.u32 %v2899, %v2897
  %v2903 = vshll.u32 %v2712, 16
  %v2905 = vrot.slane %v2903, 1
  %v2906 = vsel %vm291, %v2901, %v2905
  %v2907 = vshrl.u32 %v2712, 16
  %v2909 = vor.u32 %v2907, %v2905
  %v2911 = vshll.u32 %v2713, 16
  %v2913 = vrot.slane %v2911, 1
  %v2914 = vsel %vm291, %v2909, %v2913
  %v2915 = vshrl.u32 %v2713, 16
  %v2917 = vor.u32 %v2915, %v2913
  %v2919 = vshll.u32 %v2714, 16
  %v2921 = vrot.slane %v2919, 1
  %v2922 = vsel %vm291, %v2917, %v2921
  %v2923 = vshrl.u32 %v2714, 16
  %v2925 = vor.u32 %v2923, %v2921
  %v2927 = vshll.u32 %v2715, 16
  %v2929 = vrot.slane %v2927, 1
  %v2930 = vsel %vm291, %v2925, %v2929
  %v2931 = vshrl.u32 %v2715, 16
  %v2933 = vor.u32 %v2931, %v2929
  %v2935 = vshll.u32 %v2716, 16
  %v2937 = vrot.slane %v2935, 1
  %v2938 = vsel %vm291, %v2933, %v2937
  %v2939 = vshrl.u32 %v2716, 16
  %v2941 = vor.u32 %v2939, %v2937
  %v2943 = vshll.u32 %v2717, 16
  %v2945 = vrot.slane %v2943, 1
  %v2946 = vsel %vm291, %v2941, %v2945
  %v2947 = vshrl.u32 %v2717, 16
  %v2949 = vor.u32 %v2947, %v2945
  %v2951 = vshll.u32 %v2718, 16
  %v2953 = vrot.slane %v2951, 1
  %v2954 = vsel %vm291, %v2949, %v2953
  %v2955 = vshrl.u32 %v2718, 16
  %v2957 = vor.u32 %v2955, %v2953
  %v2959 = vshll.u32 %v2719, 16
  %v2961 = vrot.slane %v2959, 1
  %v2962 = vsel %vm291, %v2957, %v2961
  %v2963 = vshrl.u32 %v2719, 16
  %v2965 = vor.u32 %v2963, %v2961
  %v2967 = vshll.u32 %v2720, 16
  %v2969 = vrot.slane %v2967, 1
  %v2970 = vsel %vm291, %v2965, %v2969
  %v2971 = vshrl.u32 %v2720, 16
  %v2973 = vor.u32 %v2971, %v2969
  %v2975 = vshll.u32 %v2721, 16
  %v2977 = vrot.slane %v2975, 1
  %v2978 = vsel %vm291, %v2973, %v2977
  %v2979 = vshrl.u32 %v2721, 16
  %v2981 = vor.u32 %v2979, %v2977
  %v2983 = vshll.u32 %v2722, 16
  %v2985 = vrot.slane %v2983, 1
  %v2986 = vsel %vm291, %v2981, %v2985
  %v2987 = vshrl.u32 %v2722, 16
  %v2989 = vor.u32 %v2987, %v2985
  %v2991 = vshll.u32 %v2723, 16
  %v2993 = vrot.slane %v2991, 1
  %v2994 = vsel %vm291, %v2989, %v2993
  %v2995 = vshrl.u32 %v2723, 16
  %v2997 = vor.u32 %v2995, %v2993
  %v2999 = vshll.u32 %v2724, 16
  %v3001 = vrot.slane %v2999, 1
  %v3002 = vsel %vm291, %v2997, %v3001
  %v3003 = vshrl.u32 %v2724, 16
  %v3005 = vor.u32 %v3003, %v3001
  %v3007 = vshll.u32 %v2725, 16
  %v3009 = vrot.slane %v3007, 1
  %v3010 = vsel %vm291, %v3005, %v3009
  %v3011 = vshrl.u32 %v2725, 16
  %v3013 = vor.u32 %v3011, %v3009
  %v3015 = vshll.u32 %v2726, 16
  %v3017 = vrot.slane %v3015, 1
  %v3018 = vsel %vm291, %v3013, %v3017
  %v3019 = vshrl.u32 %v2726, 16
  %v3021 = vor.u32 %v3019, %v3017
  %v3030 = vunpack.c.l.b16 %v2534
  %v3031 = vunpack.c.h.b16 %v2534
  %v3032 = vunpack.c.l.b16 %v2535
  %v3033 = vunpack.c.h.b16 %v2535
  %v3034 = vunpack.c.l.b16 %v2536
  %v3035 = vunpack.c.h.b16 %v2536
  %v3036 = vunpack.c.l.b16 %v2537
  %v3037 = vunpack.c.h.b16 %v2537
  %v3038 = vunpack.c.l.b16 %v2538
  %v3039 = vunpack.c.h.b16 %v2538
  %v3040 = vunpack.c.l.b16 %v2539
  %v3041 = vunpack.c.h.b16 %v2539
  %v3042 = vunpack.c.l.b16 %v2540
  %v3043 = vunpack.c.h.b16 %v2540
  %v3044 = vunpack.c.l.b16 %v2541
  %v3045 = vunpack.c.h.b16 %v2541
  %v3046 = vpack.c.b16 %v3034, %v3030
  %v3047 = vpack.c.b16 %v3035, %v3031
  %v3048 = vpack.c.b16 %v3036, %v3032
  %v3049 = vpack.c.b16 %v3037, %v3033
  %v3050 = vpack.c.b16 %v3042, %v3038
  %v3051 = vpack.c.b16 %v3043, %v3039
  %v3052 = vpack.c.b16 %v3044, %v3040
  %v3053 = vpack.c.b16 %v3045, %v3041
  %v3063 = vsel %vm627, %v2738, 0
  %v3066 = vsel %vm627, %v2746, 0
  %v3069 = vsel %vm627, %v2754, 0
  %v3072 = vsel %vm627, %v2762, 0
  %v3075 = vsel %vm627, %v2770, 0
  %v3078 = vsel %vm627, %v2778, 0
  %v3081 = vsel %vm627, %v2786, 0
  %v3084 = vsel %vm627, %v2794, 0
  %v3087 = vsel %vm627, %v2802, 0
  %v3090 = vsel %vm627, %v2810, 0
  %v3093 = vsel %vm627, %v2818, 0
  %v3096 = vsel %vm627, %v2826, 0
  %v3099 = vsel %vm627, %v2834, 0
  %v3102 = vsel %vm627, %v2842, 0
  %v3105 = vsel %vm627, %v2850, 0
  %v3108 = vsel %vm627, %v2858, 0
  %v3111 = vsel %vm627, %v2866, 0
  %v3114 = vsel %vm627, %v2874, 0
  %v3117 = vsel %vm627, %v2882, 0
  %v3120 = vsel %vm627, %v2890, 0
  %v3123 = vsel %vm627, %v2898, 0
  %v3126 = vsel %vm627, %v2906, 0
  %v3129 = vsel %vm627, %v2914, 0
  %v3132 = vsel %vm627, %v2922, 0
  %v3135 = vsel %vm627, %v2930, 0
  %v3138 = vsel %vm627, %v2938, 0
  %v3141 = vsel %vm627, %v2946, 0
  %v3144 = vsel %vm627, %v2954, 0
  %v3147 = vsel %vm627, %v2962, 0
  %v3150 = vsel %vm627, %v2970, 0
  %v3153 = vsel %vm627, %v2978, 0
  %v3156 = vsel %vm627, %v2986, 0
  %v3159 = vsel %vm627, %v2994, 0
  %v3162 = vsel %vm627, %v3002, 0
  %v3165 = vsel %vm627, %v3010, 0
  %v3168 = vsel %vm627, %v3018, 0
  %v3171 = vsel %vm627, %v3021, 0
  %3173 = vmatprep.subr.bf16.mxu0 %v3047
  %3174 = vmatpush1.bf16.msra.mxu0 %v3046
  %3175 = vmatprep.subr.bf16.mxu0 %v3051
  %3176 = vmatpush1.bf16.msra.mxu0 %v3050
  %3177 = vmatprep.subr.bf16.mxu0 0
  %3178 = vmatpush1.bf16.msra.mxu0 0
  %3179 = vmatprep.subr.bf16.mxu0 0
  %3180 = vmatpush1.bf16.msra.mxu0 0
  %3181 = vmatprep.subr.bf16.mxu0 0
  %3182 = vmatpush1.bf16.msra.mxu0 0
  %3183 = vmatprep.subr.bf16.mxu0 0
  %3184 = vmatpush1.bf16.msra.mxu0 0
  %3185 = vmatprep.subr.bf16.mxu0 0
  %3186 = vmatpush1.bf16.msra.mxu0 0
  %3187 = vmatprep.subr.bf16.mxu0 0
  %3188 = vmatpush1.bf16.msra.mxu0 0
  %3189 = vmatprep.subr.bf16.mxu0 0
  %3190 = vmatpush1.bf16.msra.mxu0 0
  %3191 = vmatprep.subr.bf16.mxu0 0
  %3192 = vmatpush1.bf16.msra.mxu0 0
  %3193 = vmatprep.subr.bf16.mxu0 0
  %3194 = vmatpush1.bf16.msra.mxu0 0
  %3195 = vmatprep.subr.bf16.mxu0 0
  %3196 = vmatpush1.bf16.msra.mxu0 0
  %3197 = vmatprep.subr.bf16.mxu0 0
  %3198 = vmatpush1.bf16.msra.mxu0 0
  %3199 = vmatprep.subr.bf16.mxu0 0
  %3200 = vmatpush1.bf16.msra.mxu0 0
  %3201 = vmatprep.subr.bf16.mxu0 0
  %3202 = vmatpush1.bf16.msra.mxu0 0
  %3203 = vmatprep.subr.bf16.mxu0 0
  %3204 = vmatpush1.bf16.msra.mxu0 0
  %3205 = vmatprep.mubr.bf16.mxu0 0
  %3206 = vmatmul.mubr.bf16.gmra.mrb[0].mxu0 %v3063
  %v3207 = vpop.f32.mrb[0].mxu0
  %v3208 = vadd.f32 0.0, %v3207
  %v3209 = vpop.f32.mrb[0].mxu0
  %v3210 = vadd.f32 0.0, %v3209
  %v3211 = vpop.f32.mrb[0].mxu0
  %v3212 = vadd.f32 0.0, %v3211
  %v3213 = vpop.f32.mrb[0].mxu0
  %v3214 = vadd.f32 0.0, %v3213
  %3215 = vmatprep.mubr.bf16.mxu0 0
  %3216 = vmatmul.mubr.bf16.gmra.mrb[0].mxu0 %v3066
  %v3217 = vpop.f32.mrb[0].mxu0
  %v3218 = vadd.f32 0.0, %v3217
  %v3219 = vpop.f32.mrb[0].mxu0
  %v3220 = vadd.f32 0.0, %v3219
  %v3221 = vpop.f32.mrb[0].mxu0
  %v3222 = vadd.f32 0.0, %v3221
  %v3223 = vpop.f32.mrb[0].mxu0
  %v3224 = vadd.f32 0.0, %v3223
  %3225 = vmatprep.mubr.bf16.mxu0 0
  %3226 = vmatmul.mubr.bf16.gmra.mrb[0].mxu0 %v3069
  %v3227 = vpop.f32.mrb[0].mxu0
  %v3228 = vadd.f32 0.0, %v3227
  %v3229 = vpop.f32.mrb[0].mxu0
  %v3230 = vadd.f32 0.0, %v3229
  %v3231 = vpop.f32.mrb[0].mxu0
  %v3232 = vadd.f32 0.0, %v3231
  %v3233 = vpop.f32.mrb[0].mxu0
  %v3234 = vadd.f32 0.0, %v3233
  %3235 = vmatprep.mubr.bf16.mxu0 0
  %3236 = vmatmul.mubr.bf16.gmra.mrb[0].mxu0 %v3072
  %v3237 = vpop.f32.mrb[0].mxu0
  %v3238 = vadd.f32 0.0, %v3237
  %v3239 = vpop.f32.mrb[0].mxu0
  %v3240 = vadd.f32 0.0, %v3239
  %v3241 = vpop.f32.mrb[0].mxu0
  %v3242 = vadd.f32 0.0, %v3241
  %v3243 = vpop.f32.mrb[0].mxu0
  %v3244 = vadd.f32 0.0, %v3243
  %3245 = vmatprep.mubr.bf16.mxu0 0
  %3246 = vmatmul.mubr.bf16.gmra.mrb[0].mxu0 %v3075
  %v3247 = vpop.f32.mrb[0].mxu0
  %v3248 = vadd.f32 0.0, %v3247
  %v3249 = vpop.f32.mrb[0].mxu0
  %v3250 = vadd.f32 0.0, %v3249
  %v3251 = vpop.f32.mrb[0].mxu0
  %v3252 = vadd.f32 0.0, %v3251
  %v3253 = vpop.f32.mrb[0].mxu0
  %v3254 = vadd.f32 0.0, %v3253
  %3255 = vmatprep.mubr.bf16.mxu0 0
  %3256 = vmatmul.mubr.bf16.gmra.mrb[0].mxu0 %v3078
  %v3257 = vpop.f32.mrb[0].mxu0
  %v3258 = vadd.f32 0.0, %v3257
  %v3259 = vpop.f32.mrb[0].mxu0
  %v3260 = vadd.f32 0.0, %v3259
  %v3261 = vpop.f32.mrb[0].mxu0
  %v3262 = vadd.f32 0.0, %v3261
  %v3263 = vpop.f32.mrb[0].mxu0
  %v3264 = vadd.f32 0.0, %v3263
  %3265 = vmatprep.mubr.bf16.mxu0 0
  %3266 = vmatmul.mubr.bf16.gmra.mrb[0].mxu0 %v3081
  %v3267 = vpop.f32.mrb[0].mxu0
  %v3268 = vadd.f32 0.0, %v3267
  %v3269 = vpop.f32.mrb[0].mxu0
  %v3270 = vadd.f32 0.0, %v3269
  %v3271 = vpop.f32.mrb[0].mxu0
  %v3272 = vadd.f32 0.0, %v3271
  %v3273 = vpop.f32.mrb[0].mxu0
  %v3274 = vadd.f32 0.0, %v3273
  %3275 = vmatprep.mubr.bf16.mxu0 0
  %3276 = vmatmul.mubr.bf16.gmra.mrb[0].mxu0 %v3084
  %v3277 = vpop.f32.mrb[0].mxu0
  %v3278 = vadd.f32 0.0, %v3277
  %v3279 = vpop.f32.mrb[0].mxu0
  %v3280 = vadd.f32 0.0, %v3279
  %v3281 = vpop.f32.mrb[0].mxu0
  %v3282 = vadd.f32 0.0, %v3281
  %v3283 = vpop.f32.mrb[0].mxu0
  %v3284 = vadd.f32 0.0, %v3283
  %3285 = vmatprep.mubr.bf16.mxu0 0
  %3286 = vmatmul.mubr.bf16.gmra.mrb[0].mxu0 %v3087
  %v3287 = vpop.f32.mrb[0].mxu0
  %v3288 = vadd.f32 0.0, %v3287
  %v3289 = vpop.f32.mrb[0].mxu0
  %v3290 = vadd.f32 0.0, %v3289
  %v3291 = vpop.f32.mrb[0].mxu0
  %v3292 = vadd.f32 0.0, %v3291
  %v3293 = vpop.f32.mrb[0].mxu0
  %v3294 = vadd.f32 0.0, %v3293
  %3295 = vmatprep.mubr.bf16.mxu0 0
  %3296 = vmatmul.mubr.bf16.gmra.mrb[0].mxu0 %v3090
  %v3297 = vpop.f32.mrb[0].mxu0
  %v3298 = vadd.f32 0.0, %v3297
  %v3299 = vpop.f32.mrb[0].mxu0
  %v3300 = vadd.f32 0.0, %v3299
  %v3301 = vpop.f32.mrb[0].mxu0
  %v3302 = vadd.f32 0.0, %v3301
  %v3303 = vpop.f32.mrb[0].mxu0
  %v3304 = vadd.f32 0.0, %v3303
  %3305 = vmatprep.mubr.bf16.mxu0 0
  %3306 = vmatmul.mubr.bf16.gmra.mrb[0].mxu0 %v3093
  %v3307 = vpop.f32.mrb[0].mxu0
  %v3308 = vadd.f32 0.0, %v3307
  %v3309 = vpop.f32.mrb[0].mxu0
  %v3310 = vadd.f32 0.0, %v3309
  %v3311 = vpop.f32.mrb[0].mxu0
  %v3312 = vadd.f32 0.0, %v3311
  %v3313 = vpop.f32.mrb[0].mxu0
  %v3314 = vadd.f32 0.0, %v3313
  %3315 = vmatprep.mubr.bf16.mxu0 0
  %3316 = vmatmul.mubr.bf16.gmra.mrb[0].mxu0 %v3096
  %v3317 = vpop.f32.mrb[0].mxu0
  %v3318 = vadd.f32 0.0, %v3317
  %v3319 = vpop.f32.mrb[0].mxu0
  %v3320 = vadd.f32 0.0, %v3319
  %v3321 = vpop.f32.mrb[0].mxu0
  %v3322 = vadd.f32 0.0, %v3321
  %v3323 = vpop.f32.mrb[0].mxu0
  %v3324 = vadd.f32 0.0, %v3323
  %3325 = vmatprep.mubr.bf16.mxu0 0
  %3326 = vmatmul.mubr.bf16.gmra.mrb[0].mxu0 %v3099
  %v3327 = vpop.f32.mrb[0].mxu0
  %v3328 = vadd.f32 0.0, %v3327
  %v3329 = vpop.f32.mrb[0].mxu0
  %v3330 = vadd.f32 0.0, %v3329
  %v3331 = vpop.f32.mrb[0].mxu0
  %v3332 = vadd.f32 0.0, %v3331
  %v3333 = vpop.f32.mrb[0].mxu0
  %v3334 = vadd.f32 0.0, %v3333
  %3335 = vmatprep.mubr.bf16.mxu0 0
  %3336 = vmatmul.mubr.bf16.gmra.mrb[0].mxu0 %v3102
  %v3337 = vpop.f32.mrb[0].mxu0
  %v3338 = vadd.f32 0.0, %v3337
  %v3339 = vpop.f32.mrb[0].mxu0
  %v3340 = vadd.f32 0.0, %v3339
  %v3341 = vpop.f32.mrb[0].mxu0
  %v3342 = vadd.f32 0.0, %v3341
  %v3343 = vpop.f32.mrb[0].mxu0
  %v3344 = vadd.f32 0.0, %v3343
  %3345 = vmatprep.mubr.bf16.mxu0 0
  %3346 = vmatmul.mubr.bf16.gmra.mrb[0].mxu0 %v3105
  %v3347 = vpop.f32.mrb[0].mxu0
  %v3348 = vadd.f32 0.0, %v3347
  %v3349 = vpop.f32.mrb[0].mxu0
  %v3350 = vadd.f32 0.0, %v3349
  %v3351 = vpop.f32.mrb[0].mxu0
  %v3352 = vadd.f32 0.0, %v3351
  %v3353 = vpop.f32.mrb[0].mxu0
  %v3354 = vadd.f32 0.0, %v3353
  %3355 = vmatprep.mubr.bf16.mxu0 0
  %3356 = vmatmul.mubr.bf16.gmra.mrb[0].mxu0 %v3108
  %v3357 = vpop.f32.mrb[0].mxu0
  %v3358 = vadd.f32 0.0, %v3357
  %v3359 = vpop.f32.mrb[0].mxu0
  %v3360 = vadd.f32 0.0, %v3359
  %v3361 = vpop.f32.mrb[0].mxu0
  %v3362 = vadd.f32 0.0, %v3361
  %v3363 = vpop.f32.mrb[0].mxu0
  %v3364 = vadd.f32 0.0, %v3363
  %3365 = vmatprep.mubr.bf16.mxu0 0
  %3366 = vmatmul.mubr.bf16.gmra.mrb[0].mxu0 %v3111
  %v3367 = vpop.f32.mrb[0].mxu0
  %v3368 = vadd.f32 0.0, %v3367
  %v3369 = vpop.f32.mrb[0].mxu0
  %v3370 = vadd.f32 0.0, %v3369
  %v3371 = vpop.f32.mrb[0].mxu0
  %v3372 = vadd.f32 0.0, %v3371
  %v3373 = vpop.f32.mrb[0].mxu0
  %v3374 = vadd.f32 0.0, %v3373
  %3375 = vmatprep.mubr.bf16.mxu0 0
  %3376 = vmatmul.mubr.bf16.gmra.mrb[0].mxu0 %v3114
  %v3377 = vpop.f32.mrb[0].mxu0
  %v3378 = vadd.f32 0.0, %v3377
  %v3379 = vpop.f32.mrb[0].mxu0
  %v3380 = vadd.f32 0.0, %v3379
  %v3381 = vpop.f32.mrb[0].mxu0
  %v3382 = vadd.f32 0.0, %v3381
  %v3383 = vpop.f32.mrb[0].mxu0
  %v3384 = vadd.f32 0.0, %v3383
  %3385 = vmatprep.mubr.bf16.mxu0 0
  %3386 = vmatmul.mubr.bf16.gmra.mrb[0].mxu0 %v3117
  %v3387 = vpop.f32.mrb[0].mxu0
  %v3388 = vadd.f32 0.0, %v3387
  %v3389 = vpop.f32.mrb[0].mxu0
  %v3390 = vadd.f32 0.0, %v3389
  %v3391 = vpop.f32.mrb[0].mxu0
  %v3392 = vadd.f32 0.0, %v3391
  %v3393 = vpop.f32.mrb[0].mxu0
  %v3394 = vadd.f32 0.0, %v3393
  %3395 = vmatprep.mubr.bf16.mxu0 0
  %3396 = vmatmul.mubr.bf16.gmra.mrb[0].mxu0 %v3120
  %v3397 = vpop.f32.mrb[0].mxu0
  %v3398 = vadd.f32 0.0, %v3397
  %v3399 = vpop.f32.mrb[0].mxu0
  %v3400 = vadd.f32 0.0, %v3399
  %v3401 = vpop.f32.mrb[0].mxu0
  %v3402 = vadd.f32 0.0, %v3401
  %v3403 = vpop.f32.mrb[0].mxu0
  %v3404 = vadd.f32 0.0, %v3403
  %3405 = vmatprep.mubr.bf16.mxu0 0
  %3406 = vmatmul.mubr.bf16.gmra.mrb[0].mxu0 %v3123
  %v3407 = vpop.f32.mrb[0].mxu0
  %v3408 = vadd.f32 0.0, %v3407
  %v3409 = vpop.f32.mrb[0].mxu0
  %v3410 = vadd.f32 0.0, %v3409
  %v3411 = vpop.f32.mrb[0].mxu0
  %v3412 = vadd.f32 0.0, %v3411
  %v3413 = vpop.f32.mrb[0].mxu0
  %v3414 = vadd.f32 0.0, %v3413
  %3415 = vmatprep.mubr.bf16.mxu0 0
  %3416 = vmatmul.mubr.bf16.gmra.mrb[0].mxu0 %v3126
  %v3417 = vpop.f32.mrb[0].mxu0
  %v3418 = vadd.f32 0.0, %v3417
  %v3419 = vpop.f32.mrb[0].mxu0
  %v3420 = vadd.f32 0.0, %v3419
  %v3421 = vpop.f32.mrb[0].mxu0
  %v3422 = vadd.f32 0.0, %v3421
  %v3423 = vpop.f32.mrb[0].mxu0
  %v3424 = vadd.f32 0.0, %v3423
  %3425 = vmatprep.mubr.bf16.mxu0 0
  %3426 = vmatmul.mubr.bf16.gmra.mrb[0].mxu0 %v3129
  %v3427 = vpop.f32.mrb[0].mxu0
  %v3428 = vadd.f32 0.0, %v3427
  %v3429 = vpop.f32.mrb[0].mxu0
  %v3430 = vadd.f32 0.0, %v3429
  %v3431 = vpop.f32.mrb[0].mxu0
  %v3432 = vadd.f32 0.0, %v3431
  %v3433 = vpop.f32.mrb[0].mxu0
  %v3434 = vadd.f32 0.0, %v3433
  %3435 = vmatprep.mubr.bf16.mxu0 0
  %3436 = vmatmul.mubr.bf16.gmra.mrb[0].mxu0 %v3132
  %v3437 = vpop.f32.mrb[0].mxu0
  %v3438 = vadd.f32 0.0, %v3437
  %v3439 = vpop.f32.mrb[0].mxu0
  %v3440 = vadd.f32 0.0, %v3439
  %v3441 = vpop.f32.mrb[0].mxu0
  %v3442 = vadd.f32 0.0, %v3441
  %v3443 = vpop.f32.mrb[0].mxu0
  %v3444 = vadd.f32 0.0, %v3443
  %3445 = vmatprep.mubr.bf16.mxu0 0
  %3446 = vmatmul.mubr.bf16.gmra.mrb[0].mxu0 %v3135
  %v3447 = vpop.f32.mrb[0].mxu0
  %v3448 = vadd.f32 0.0, %v3447
  %v3449 = vpop.f32.mrb[0].mxu0
  %v3450 = vadd.f32 0.0, %v3449
  %v3451 = vpop.f32.mrb[0].mxu0
  %v3452 = vadd.f32 0.0, %v3451
  %v3453 = vpop.f32.mrb[0].mxu0
  %v3454 = vadd.f32 0.0, %v3453
  %3455 = vmatprep.mubr.bf16.mxu0 0
  %3456 = vmatmul.mubr.bf16.gmra.mrb[0].mxu0 %v3138
  %v3457 = vpop.f32.mrb[0].mxu0
  %v3458 = vadd.f32 0.0, %v3457
  %v3459 = vpop.f32.mrb[0].mxu0
  %v3460 = vadd.f32 0.0, %v3459
  %v3461 = vpop.f32.mrb[0].mxu0
  %v3462 = vadd.f32 0.0, %v3461
  %v3463 = vpop.f32.mrb[0].mxu0
  %v3464 = vadd.f32 0.0, %v3463
  %3465 = vmatprep.mubr.bf16.mxu0 0
  %3466 = vmatmul.mubr.bf16.gmra.mrb[0].mxu0 %v3141
  %v3467 = vpop.f32.mrb[0].mxu0
  %v3468 = vadd.f32 0.0, %v3467
  %v3469 = vpop.f32.mrb[0].mxu0
  %v3470 = vadd.f32 0.0, %v3469
  %v3471 = vpop.f32.mrb[0].mxu0
  %v3472 = vadd.f32 0.0, %v3471
  %v3473 = vpop.f32.mrb[0].mxu0
  %v3474 = vadd.f32 0.0, %v3473
  %3475 = vmatprep.mubr.bf16.mxu0 0
  %3476 = vmatmul.mubr.bf16.gmra.mrb[0].mxu0 %v3144
  %v3477 = vpop.f32.mrb[0].mxu0
  %v3478 = vadd.f32 0.0, %v3477
  %v3479 = vpop.f32.mrb[0].mxu0
  %v3480 = vadd.f32 0.0, %v3479
  %v3481 = vpop.f32.mrb[0].mxu0
  %v3482 = vadd.f32 0.0, %v3481
  %v3483 = vpop.f32.mrb[0].mxu0
  %v3484 = vadd.f32 0.0, %v3483
  %3485 = vmatprep.mubr.bf16.mxu0 0
  %3486 = vmatmul.mubr.bf16.gmra.mrb[0].mxu0 %v3147
  %v3487 = vpop.f32.mrb[0].mxu0
  %v3488 = vadd.f32 0.0, %v3487
  %v3489 = vpop.f32.mrb[0].mxu0
  %v3490 = vadd.f32 0.0, %v3489
  %v3491 = vpop.f32.mrb[0].mxu0
  %v3492 = vadd.f32 0.0, %v3491
  %v3493 = vpop.f32.mrb[0].mxu0
  %v3494 = vadd.f32 0.0, %v3493
  %3495 = vmatprep.mubr.bf16.mxu0 0
  %3496 = vmatmul.mubr.bf16.gmra.mrb[0].mxu0 %v3150
  %v3497 = vpop.f32.mrb[0].mxu0
  %v3498 = vadd.f32 0.0, %v3497
  %v3499 = vpop.f32.mrb[0].mxu0
  %v3500 = vadd.f32 0.0, %v3499
  %v3501 = vpop.f32.mrb[0].mxu0
  %v3502 = vadd.f32 0.0, %v3501
  %v3503 = vpop.f32.mrb[0].mxu0
  %v3504 = vadd.f32 0.0, %v3503
  %3505 = vmatprep.mubr.bf16.mxu0 0
  %3506 = vmatmul.mubr.bf16.gmra.mrb[0].mxu0 %v3153
  %v3507 = vpop.f32.mrb[0].mxu0
  %v3508 = vadd.f32 0.0, %v3507
  %v3509 = vpop.f32.mrb[0].mxu0
  %v3510 = vadd.f32 0.0, %v3509
  %v3511 = vpop.f32.mrb[0].mxu0
  %v3512 = vadd.f32 0.0, %v3511
  %v3513 = vpop.f32.mrb[0].mxu0
  %v3514 = vadd.f32 0.0, %v3513
  %3515 = vmatprep.mubr.bf16.mxu0 0
  %3516 = vmatmul.mubr.bf16.gmra.mrb[0].mxu0 %v3156
  %v3517 = vpop.f32.mrb[0].mxu0
  %v3518 = vadd.f32 0.0, %v3517
  %v3519 = vpop.f32.mrb[0].mxu0
  %v3520 = vadd.f32 0.0, %v3519
  %v3521 = vpop.f32.mrb[0].mxu0
  %v3522 = vadd.f32 0.0, %v3521
  %v3523 = vpop.f32.mrb[0].mxu0
  %v3524 = vadd.f32 0.0, %v3523
  %3525 = vmatprep.mubr.bf16.mxu0 0
  %3526 = vmatmul.mubr.bf16.gmra.mrb[0].mxu0 %v3159
  %v3527 = vpop.f32.mrb[0].mxu0
  %v3528 = vadd.f32 0.0, %v3527
  %v3529 = vpop.f32.mrb[0].mxu0
  %v3530 = vadd.f32 0.0, %v3529
  %v3531 = vpop.f32.mrb[0].mxu0
  %v3532 = vadd.f32 0.0, %v3531
  %v3533 = vpop.f32.mrb[0].mxu0
  %v3534 = vadd.f32 0.0, %v3533
  %3535 = vmatprep.mubr.bf16.mxu0 0
  %3536 = vmatmul.mubr.bf16.gmra.mrb[0].mxu0 %v3162
  %v3537 = vpop.f32.mrb[0].mxu0
  %v3538 = vadd.f32 0.0, %v3537
  %v3539 = vpop.f32.mrb[0].mxu0
  %v3540 = vadd.f32 0.0, %v3539
  %v3541 = vpop.f32.mrb[0].mxu0
  %v3542 = vadd.f32 0.0, %v3541
  %v3543 = vpop.f32.mrb[0].mxu0
  %v3544 = vadd.f32 0.0, %v3543
  %3545 = vmatprep.mubr.bf16.mxu0 0
  %3546 = vmatmul.mubr.bf16.gmra.mrb[0].mxu0 %v3165
  %v3547 = vpop.f32.mrb[0].mxu0
  %v3548 = vadd.f32 0.0, %v3547
  %v3549 = vpop.f32.mrb[0].mxu0
  %v3550 = vadd.f32 0.0, %v3549
  %v3551 = vpop.f32.mrb[0].mxu0
  %v3552 = vadd.f32 0.0, %v3551
  %v3553 = vpop.f32.mrb[0].mxu0
  %v3554 = vadd.f32 0.0, %v3553
  %3555 = vmatprep.mubr.bf16.mxu0 0
  %3556 = vmatmul.mubr.bf16.gmra.mrb[0].mxu0 %v3168
  %v3557 = vpop.f32.mrb[0].mxu0
  %v3558 = vadd.f32 0.0, %v3557
  %v3559 = vpop.f32.mrb[0].mxu0
  %v3560 = vadd.f32 0.0, %v3559
  %v3561 = vpop.f32.mrb[0].mxu0
  %v3562 = vadd.f32 0.0, %v3561
  %v3563 = vpop.f32.mrb[0].mxu0
  %v3564 = vadd.f32 0.0, %v3563
  %3565 = vmatprep.mubr.bf16.mxu0 0
  %3566 = vmatmul.mubr.bf16.gmra.mrb[0].mxu0 %v3171
  %v3567 = vpop.f32.mrb[0].mxu0
  %v3568 = vadd.f32 0.0, %v3567
  %v3569 = vpop.f32.mrb[0].mxu0
  %v3570 = vadd.f32 0.0, %v3569
  %v3571 = vpop.f32.mrb[0].mxu0
  %v3572 = vpop.f32.mrb[0].mxu0
  %3573 = vdwg.mxu0
  %3574 = vmatprep.subr.bf16.mxu0 %v3049
  %3575 = vmatpush1.bf16.msra.mxu0 %v3048
  %3576 = vmatprep.subr.bf16.mxu0 %v3053
  %3577 = vmatpush1.bf16.msra.mxu0 %v3052
  %3578 = vmatprep.subr.bf16.mxu0 0
  %3579 = vmatpush1.bf16.msra.mxu0 0
  %3580 = vmatprep.subr.bf16.mxu0 0
  %3581 = vmatpush1.bf16.msra.mxu0 0
  %3582 = vmatprep.subr.bf16.mxu0 0
  %3583 = vmatpush1.bf16.msra.mxu0 0
  %3584 = vmatprep.subr.bf16.mxu0 0
  %3585 = vmatpush1.bf16.msra.mxu0 0
  %3586 = vmatprep.subr.bf16.mxu0 0
  %3587 = vmatpush1.bf16.msra.mxu0 0
  %3588 = vmatprep.subr.bf16.mxu0 0
  %3589 = vmatpush1.bf16.msra.mxu0 0
  %3590 = vmatprep.subr.bf16.mxu0 0
  %3591 = vmatpush1.bf16.msra.mxu0 0
  %3592 = vmatprep.subr.bf16.mxu0 0
  %3593 = vmatpush1.bf16.msra.mxu0 0
  %3594 = vmatprep.subr.bf16.mxu0 0
  %3595 = vmatpush1.bf16.msra.mxu0 0
  %3596 = vmatprep.subr.bf16.mxu0 0
  %3597 = vmatpush1.bf16.msra.mxu0 0
  %3598 = vmatprep.subr.bf16.mxu0 0
  %3599 = vmatpush1.bf16.msra.mxu0 0
  %3600 = vmatprep.subr.bf16.mxu0 0
  %3601 = vmatpush1.bf16.msra.mxu0 0
  %3602 = vmatprep.subr.bf16.mxu0 0
  %3603 = vmatpush1.bf16.msra.mxu0 0
  %3604 = vmatprep.subr.bf16.mxu0 0
  %3605 = vmatpush1.bf16.msra.mxu0 0
  %3606 = vmatprep.mubr.bf16.mxu0 0
  %3607 = vmatmul.mubr.bf16.gmra.mrb[0].mxu0 %v3063
  %v3608 = vpop.f32.mrb[0].mxu0
  %v3609 = vadd.f32 0.0, %v3608
  %v3610 = vpop.f32.mrb[0].mxu0
  %v3611 = vadd.f32 0.0, %v3610
  %v3612 = vpop.f32.mrb[0].mxu0
  %v3613 = vadd.f32 0.0, %v3612
  %v3614 = vpop.f32.mrb[0].mxu0
  %v3615 = vadd.f32 0.0, %v3614
  %3616 = vmatprep.mubr.bf16.mxu0 0
  %3617 = vmatmul.mubr.bf16.gmra.mrb[0].mxu0 %v3066
  %v3618 = vpop.f32.mrb[0].mxu0
  %v3619 = vadd.f32 0.0, %v3618
  %v3620 = vpop.f32.mrb[0].mxu0
  %v3621 = vadd.f32 0.0, %v3620
  %v3622 = vpop.f32.mrb[0].mxu0
  %v3623 = vadd.f32 0.0, %v3622
  %v3624 = vpop.f32.mrb[0].mxu0
  %v3625 = vadd.f32 0.0, %v3624
  %3626 = vmatprep.mubr.bf16.mxu0 0
  %3627 = vmatmul.mubr.bf16.gmra.mrb[0].mxu0 %v3069
  %v3628 = vpop.f32.mrb[0].mxu0
  %v3629 = vadd.f32 0.0, %v3628
  %v3630 = vpop.f32.mrb[0].mxu0
  %v3631 = vadd.f32 0.0, %v3630
  %v3632 = vpop.f32.mrb[0].mxu0
  %v3633 = vadd.f32 0.0, %v3632
  %v3634 = vpop.f32.mrb[0].mxu0
  %v3635 = vadd.f32 0.0, %v3634
  %3636 = vmatprep.mubr.bf16.mxu0 0
  %3637 = vmatmul.mubr.bf16.gmra.mrb[0].mxu0 %v3072
  %v3638 = vpop.f32.mrb[0].mxu0
  %v3639 = vadd.f32 0.0, %v3638
  %v3640 = vpop.f32.mrb[0].mxu0
  %v3641 = vadd.f32 0.0, %v3640
  %v3642 = vpop.f32.mrb[0].mxu0
  %v3643 = vadd.f32 0.0, %v3642
  %v3644 = vpop.f32.mrb[0].mxu0
  %v3645 = vadd.f32 0.0, %v3644
  %3646 = vmatprep.mubr.bf16.mxu0 0
  %3647 = vmatmul.mubr.bf16.gmra.mrb[0].mxu0 %v3075
  %v3648 = vpop.f32.mrb[0].mxu0
  %v3649 = vadd.f32 0.0, %v3648
  %v3650 = vpop.f32.mrb[0].mxu0
  %v3651 = vadd.f32 0.0, %v3650
  %v3652 = vpop.f32.mrb[0].mxu0
  %v3653 = vadd.f32 0.0, %v3652
  %v3654 = vpop.f32.mrb[0].mxu0
  %v3655 = vadd.f32 0.0, %v3654
  %3656 = vmatprep.mubr.bf16.mxu0 0
  %3657 = vmatmul.mubr.bf16.gmra.mrb[0].mxu0 %v3078
  %v3658 = vpop.f32.mrb[0].mxu0
  %v3659 = vadd.f32 0.0, %v3658
  %v3660 = vpop.f32.mrb[0].mxu0
  %v3661 = vadd.f32 0.0, %v3660
  %v3662 = vpop.f32.mrb[0].mxu0
  %v3663 = vadd.f32 0.0, %v3662
  %v3664 = vpop.f32.mrb[0].mxu0
  %v3665 = vadd.f32 0.0, %v3664
  %3666 = vmatprep.mubr.bf16.mxu0 0
  %3667 = vmatmul.mubr.bf16.gmra.mrb[0].mxu0 %v3081
  %v3668 = vpop.f32.mrb[0].mxu0
  %v3669 = vadd.f32 0.0, %v3668
  %v3670 = vpop.f32.mrb[0].mxu0
  %v3671 = vadd.f32 0.0, %v3670
  %v3672 = vpop.f32.mrb[0].mxu0
  %v3673 = vadd.f32 0.0, %v3672
  %v3674 = vpop.f32.mrb[0].mxu0
  %v3675 = vadd.f32 0.0, %v3674
  %3676 = vmatprep.mubr.bf16.mxu0 0
  %3677 = vmatmul.mubr.bf16.gmra.mrb[0].mxu0 %v3084
  %v3678 = vpop.f32.mrb[0].mxu0
  %v3679 = vadd.f32 0.0, %v3678
  %v3680 = vpop.f32.mrb[0].mxu0
  %v3681 = vadd.f32 0.0, %v3680
  %v3682 = vpop.f32.mrb[0].mxu0
  %v3683 = vadd.f32 0.0, %v3682
  %v3684 = vpop.f32.mrb[0].mxu0
  %v3685 = vadd.f32 0.0, %v3684
  %3686 = vmatprep.mubr.bf16.mxu0 0
  %3687 = vmatmul.mubr.bf16.gmra.mrb[0].mxu0 %v3087
  %v3688 = vpop.f32.mrb[0].mxu0
  %v3689 = vadd.f32 0.0, %v3688
  %v3690 = vpop.f32.mrb[0].mxu0
  %v3691 = vadd.f32 0.0, %v3690
  %v3692 = vpop.f32.mrb[0].mxu0
  %v3693 = vadd.f32 0.0, %v3692
  %v3694 = vpop.f32.mrb[0].mxu0
  %v3695 = vadd.f32 0.0, %v3694
  %3696 = vmatprep.mubr.bf16.mxu0 0
  %3697 = vmatmul.mubr.bf16.gmra.mrb[0].mxu0 %v3090
  %v3698 = vpop.f32.mrb[0].mxu0
  %v3699 = vadd.f32 0.0, %v3698
  %v3700 = vpop.f32.mrb[0].mxu0
  %v3701 = vadd.f32 0.0, %v3700
  %v3702 = vpop.f32.mrb[0].mxu0
  %v3703 = vadd.f32 0.0, %v3702
  %v3704 = vpop.f32.mrb[0].mxu0
  %v3705 = vadd.f32 0.0, %v3704
  %3706 = vmatprep.mubr.bf16.mxu0 0
  %3707 = vmatmul.mubr.bf16.gmra.mrb[0].mxu0 %v3093
  %v3708 = vpop.f32.mrb[0].mxu0
  %v3709 = vadd.f32 0.0, %v3708
  %v3710 = vpop.f32.mrb[0].mxu0
  %v3711 = vadd.f32 0.0, %v3710
  %v3712 = vpop.f32.mrb[0].mxu0
  %v3713 = vadd.f32 0.0, %v3712
  %v3714 = vpop.f32.mrb[0].mxu0
  %v3715 = vadd.f32 0.0, %v3714
  %3716 = vmatprep.mubr.bf16.mxu0 0
  %3717 = vmatmul.mubr.bf16.gmra.mrb[0].mxu0 %v3096
  %v3718 = vpop.f32.mrb[0].mxu0
  %v3719 = vadd.f32 0.0, %v3718
  %v3720 = vpop.f32.mrb[0].mxu0
  %v3721 = vadd.f32 0.0, %v3720
  %v3722 = vpop.f32.mrb[0].mxu0
  %v3723 = vadd.f32 0.0, %v3722
  %v3724 = vpop.f32.mrb[0].mxu0
  %v3725 = vadd.f32 0.0, %v3724
  %3726 = vmatprep.mubr.bf16.mxu0 0
  %3727 = vmatmul.mubr.bf16.gmra.mrb[0].mxu0 %v3099
  %v3728 = vpop.f32.mrb[0].mxu0
  %v3729 = vadd.f32 0.0, %v3728
  %v3730 = vpop.f32.mrb[0].mxu0
  %v3731 = vadd.f32 0.0, %v3730
  %v3732 = vpop.f32.mrb[0].mxu0
  %v3733 = vadd.f32 0.0, %v3732
  %v3734 = vpop.f32.mrb[0].mxu0
  %v3735 = vadd.f32 0.0, %v3734
  %3736 = vmatprep.mubr.bf16.mxu0 0
  %3737 = vmatmul.mubr.bf16.gmra.mrb[0].mxu0 %v3102
  %v3738 = vpop.f32.mrb[0].mxu0
  %v3739 = vadd.f32 0.0, %v3738
  %v3740 = vpop.f32.mrb[0].mxu0
  %v3741 = vadd.f32 0.0, %v3740
  %v3742 = vpop.f32.mrb[0].mxu0
  %v3743 = vadd.f32 0.0, %v3742
  %v3744 = vpop.f32.mrb[0].mxu0
  %v3745 = vadd.f32 0.0, %v3744
  %3746 = vmatprep.mubr.bf16.mxu0 0
  %3747 = vmatmul.mubr.bf16.gmra.mrb[0].mxu0 %v3105
  %v3748 = vpop.f32.mrb[0].mxu0
  %v3749 = vadd.f32 0.0, %v3748
  %v3750 = vpop.f32.mrb[0].mxu0
  %v3751 = vadd.f32 0.0, %v3750
  %v3752 = vpop.f32.mrb[0].mxu0
  %v3753 = vadd.f32 0.0, %v3752
  %v3754 = vpop.f32.mrb[0].mxu0
  %v3755 = vadd.f32 0.0, %v3754
  %3756 = vmatprep.mubr.bf16.mxu0 0
  %3757 = vmatmul.mubr.bf16.gmra.mrb[0].mxu0 %v3108
  %v3758 = vpop.f32.mrb[0].mxu0
  %v3759 = vadd.f32 0.0, %v3758
  %v3760 = vpop.f32.mrb[0].mxu0
  %v3761 = vadd.f32 0.0, %v3760
  %v3762 = vpop.f32.mrb[0].mxu0
  %v3763 = vadd.f32 0.0, %v3762
  %v3764 = vpop.f32.mrb[0].mxu0
  %v3765 = vadd.f32 0.0, %v3764
  %3766 = vmatprep.mubr.bf16.mxu0 0
  %3767 = vmatmul.mubr.bf16.gmra.mrb[0].mxu0 %v3111
  %v3768 = vpop.f32.mrb[0].mxu0
  %v3769 = vadd.f32 0.0, %v3768
  %v3770 = vpop.f32.mrb[0].mxu0
  %v3771 = vadd.f32 0.0, %v3770
  %v3772 = vpop.f32.mrb[0].mxu0
  %v3773 = vadd.f32 0.0, %v3772
  %v3774 = vpop.f32.mrb[0].mxu0
  %v3775 = vadd.f32 0.0, %v3774
  %3776 = vmatprep.mubr.bf16.mxu0 0
  %3777 = vmatmul.mubr.bf16.gmra.mrb[0].mxu0 %v3114
  %v3778 = vpop.f32.mrb[0].mxu0
  %v3779 = vadd.f32 0.0, %v3778
  %v3780 = vpop.f32.mrb[0].mxu0
  %v3781 = vadd.f32 0.0, %v3780
  %v3782 = vpop.f32.mrb[0].mxu0
  %v3783 = vadd.f32 0.0, %v3782
  %v3784 = vpop.f32.mrb[0].mxu0
  %v3785 = vadd.f32 0.0, %v3784
  %3786 = vmatprep.mubr.bf16.mxu0 0
  %3787 = vmatmul.mubr.bf16.gmra.mrb[0].mxu0 %v3117
  %v3788 = vpop.f32.mrb[0].mxu0
  %v3789 = vadd.f32 0.0, %v3788
  %v3790 = vpop.f32.mrb[0].mxu0
  %v3791 = vadd.f32 0.0, %v3790
  %v3792 = vpop.f32.mrb[0].mxu0
  %v3793 = vadd.f32 0.0, %v3792
  %v3794 = vpop.f32.mrb[0].mxu0
  %v3795 = vadd.f32 0.0, %v3794
  %3796 = vmatprep.mubr.bf16.mxu0 0
  %3797 = vmatmul.mubr.bf16.gmra.mrb[0].mxu0 %v3120
  %v3798 = vpop.f32.mrb[0].mxu0
  %v3799 = vadd.f32 0.0, %v3798
  %v3800 = vpop.f32.mrb[0].mxu0
  %v3801 = vadd.f32 0.0, %v3800
  %v3802 = vpop.f32.mrb[0].mxu0
  %v3803 = vadd.f32 0.0, %v3802
  %v3804 = vpop.f32.mrb[0].mxu0
  %v3805 = vadd.f32 0.0, %v3804
  %3806 = vmatprep.mubr.bf16.mxu0 0
  %3807 = vmatmul.mubr.bf16.gmra.mrb[0].mxu0 %v3123
  %v3808 = vpop.f32.mrb[0].mxu0
  %v3809 = vadd.f32 0.0, %v3808
  %v3810 = vpop.f32.mrb[0].mxu0
  %v3811 = vadd.f32 0.0, %v3810
  %v3812 = vpop.f32.mrb[0].mxu0
  %v3813 = vadd.f32 0.0, %v3812
  %v3814 = vpop.f32.mrb[0].mxu0
  %v3815 = vadd.f32 0.0, %v3814
  %3816 = vmatprep.mubr.bf16.mxu0 0
  %3817 = vmatmul.mubr.bf16.gmra.mrb[0].mxu0 %v3126
  %v3818 = vpop.f32.mrb[0].mxu0
  %v3819 = vadd.f32 0.0, %v3818
  %v3820 = vpop.f32.mrb[0].mxu0
  %v3821 = vadd.f32 0.0, %v3820
  %v3822 = vpop.f32.mrb[0].mxu0
  %v3823 = vadd.f32 0.0, %v3822
  %v3824 = vpop.f32.mrb[0].mxu0
  %v3825 = vadd.f32 0.0, %v3824
  %3826 = vmatprep.mubr.bf16.mxu0 0
  %3827 = vmatmul.mubr.bf16.gmra.mrb[0].mxu0 %v3129
  %v3828 = vpop.f32.mrb[0].mxu0
  %v3829 = vadd.f32 0.0, %v3828
  %v3830 = vpop.f32.mrb[0].mxu0
  %v3831 = vadd.f32 0.0, %v3830
  %v3832 = vpop.f32.mrb[0].mxu0
  %v3833 = vadd.f32 0.0, %v3832
  %v3834 = vpop.f32.mrb[0].mxu0
  %v3835 = vadd.f32 0.0, %v3834
  %3836 = vmatprep.mubr.bf16.mxu0 0
  %3837 = vmatmul.mubr.bf16.gmra.mrb[0].mxu0 %v3132
  %v3838 = vpop.f32.mrb[0].mxu0
  %v3839 = vadd.f32 0.0, %v3838
  %v3840 = vpop.f32.mrb[0].mxu0
  %v3841 = vadd.f32 0.0, %v3840
  %v3842 = vpop.f32.mrb[0].mxu0
  %v3843 = vadd.f32 0.0, %v3842
  %v3844 = vpop.f32.mrb[0].mxu0
  %v3845 = vadd.f32 0.0, %v3844
  %3846 = vmatprep.mubr.bf16.mxu0 0
  %3847 = vmatmul.mubr.bf16.gmra.mrb[0].mxu0 %v3135
  %v3848 = vpop.f32.mrb[0].mxu0
  %v3849 = vadd.f32 0.0, %v3848
  %v3850 = vpop.f32.mrb[0].mxu0
  %v3851 = vadd.f32 0.0, %v3850
  %v3852 = vpop.f32.mrb[0].mxu0
  %v3853 = vadd.f32 0.0, %v3852
  %v3854 = vpop.f32.mrb[0].mxu0
  %v3855 = vadd.f32 0.0, %v3854
  %3856 = vmatprep.mubr.bf16.mxu0 0
  %3857 = vmatmul.mubr.bf16.gmra.mrb[0].mxu0 %v3138
  %v3858 = vpop.f32.mrb[0].mxu0
  %v3859 = vadd.f32 0.0, %v3858
  %v3860 = vpop.f32.mrb[0].mxu0
  %v3861 = vadd.f32 0.0, %v3860
  %v3862 = vpop.f32.mrb[0].mxu0
  %v3863 = vadd.f32 0.0, %v3862
  %v3864 = vpop.f32.mrb[0].mxu0
  %v3865 = vadd.f32 0.0, %v3864
  %3866 = vmatprep.mubr.bf16.mxu0 0
  %3867 = vmatmul.mubr.bf16.gmra.mrb[0].mxu0 %v3141
  %v3868 = vpop.f32.mrb[0].mxu0
  %v3869 = vadd.f32 0.0, %v3868
  %v3870 = vpop.f32.mrb[0].mxu0
  %v3871 = vadd.f32 0.0, %v3870
  %v3872 = vpop.f32.mrb[0].mxu0
  %v3873 = vadd.f32 0.0, %v3872
  %v3874 = vpop.f32.mrb[0].mxu0
  %v3875 = vadd.f32 0.0, %v3874
  %3876 = vmatprep.mubr.bf16.mxu0 0
  %3877 = vmatmul.mubr.bf16.gmra.mrb[0].mxu0 %v3144
  %v3878 = vpop.f32.mrb[0].mxu0
  %v3879 = vadd.f32 0.0, %v3878
  %v3880 = vpop.f32.mrb[0].mxu0
  %v3881 = vadd.f32 0.0, %v3880
  %v3882 = vpop.f32.mrb[0].mxu0
  %v3883 = vadd.f32 0.0, %v3882
  %v3884 = vpop.f32.mrb[0].mxu0
  %v3885 = vadd.f32 0.0, %v3884
  %3886 = vmatprep.mubr.bf16.mxu0 0
  %3887 = vmatmul.mubr.bf16.gmra.mrb[0].mxu0 %v3147
  %v3888 = vpop.f32.mrb[0].mxu0
  %v3889 = vadd.f32 0.0, %v3888
  %v3890 = vpop.f32.mrb[0].mxu0
  %v3891 = vadd.f32 0.0, %v3890
  %v3892 = vpop.f32.mrb[0].mxu0
  %v3893 = vadd.f32 0.0, %v3892
  %v3894 = vpop.f32.mrb[0].mxu0
  %v3895 = vadd.f32 0.0, %v3894
  %3896 = vmatprep.mubr.bf16.mxu0 0
  %3897 = vmatmul.mubr.bf16.gmra.mrb[0].mxu0 %v3150
  %v3898 = vpop.f32.mrb[0].mxu0
  %v3899 = vadd.f32 0.0, %v3898
  %v3900 = vpop.f32.mrb[0].mxu0
  %v3901 = vadd.f32 0.0, %v3900
  %v3902 = vpop.f32.mrb[0].mxu0
  %v3903 = vadd.f32 0.0, %v3902
  %v3904 = vpop.f32.mrb[0].mxu0
  %v3905 = vadd.f32 0.0, %v3904
  %3906 = vmatprep.mubr.bf16.mxu0 0
  %3907 = vmatmul.mubr.bf16.gmra.mrb[0].mxu0 %v3153
  %v3908 = vpop.f32.mrb[0].mxu0
  %v3909 = vadd.f32 0.0, %v3908
  %v3910 = vpop.f32.mrb[0].mxu0
  %v3911 = vadd.f32 0.0, %v3910
  %v3912 = vpop.f32.mrb[0].mxu0
  %v3913 = vadd.f32 0.0, %v3912
  %v3914 = vpop.f32.mrb[0].mxu0
  %v3915 = vadd.f32 0.0, %v3914
  %3916 = vmatprep.mubr.bf16.mxu0 0
  %3917 = vmatmul.mubr.bf16.gmra.mrb[0].mxu0 %v3156
  %v3918 = vpop.f32.mrb[0].mxu0
  %v3919 = vadd.f32 0.0, %v3918
  %v3920 = vpop.f32.mrb[0].mxu0
  %v3921 = vadd.f32 0.0, %v3920
  %v3922 = vpop.f32.mrb[0].mxu0
  %v3923 = vadd.f32 0.0, %v3922
  %v3924 = vpop.f32.mrb[0].mxu0
  %v3925 = vadd.f32 0.0, %v3924
  %3926 = vmatprep.mubr.bf16.mxu0 0
  %3927 = vmatmul.mubr.bf16.gmra.mrb[0].mxu0 %v3159
  %v3928 = vpop.f32.mrb[0].mxu0
  %v3929 = vadd.f32 0.0, %v3928
  %v3930 = vpop.f32.mrb[0].mxu0
  %v3931 = vadd.f32 0.0, %v3930
  %v3932 = vpop.f32.mrb[0].mxu0
  %v3933 = vadd.f32 0.0, %v3932
  %v3934 = vpop.f32.mrb[0].mxu0
  %v3935 = vadd.f32 0.0, %v3934
  %3936 = vmatprep.mubr.bf16.mxu0 0
  %3937 = vmatmul.mubr.bf16.gmra.mrb[0].mxu0 %v3162
  %v3938 = vpop.f32.mrb[0].mxu0
  %v3939 = vadd.f32 0.0, %v3938
  %v3940 = vpop.f32.mrb[0].mxu0
  %v3941 = vadd.f32 0.0, %v3940
  %v3942 = vpop.f32.mrb[0].mxu0
  %v3943 = vadd.f32 0.0, %v3942
  %v3944 = vpop.f32.mrb[0].mxu0
  %v3945 = vadd.f32 0.0, %v3944
  %3946 = vmatprep.mubr.bf16.mxu0 0
  %3947 = vmatmul.mubr.bf16.gmra.mrb[0].mxu0 %v3165
  %v3948 = vpop.f32.mrb[0].mxu0
  %v3949 = vadd.f32 0.0, %v3948
  %v3950 = vpop.f32.mrb[0].mxu0
  %v3951 = vadd.f32 0.0, %v3950
  %v3952 = vpop.f32.mrb[0].mxu0
  %v3953 = vadd.f32 0.0, %v3952
  %v3954 = vpop.f32.mrb[0].mxu0
  %v3955 = vadd.f32 0.0, %v3954
  %3956 = vmatprep.mubr.bf16.mxu0 0
  %3957 = vmatmul.mubr.bf16.gmra.mrb[0].mxu0 %v3168
  %v3958 = vpop.f32.mrb[0].mxu0
  %v3959 = vadd.f32 0.0, %v3958
  %v3960 = vpop.f32.mrb[0].mxu0
  %v3961 = vadd.f32 0.0, %v3960
  %v3962 = vpop.f32.mrb[0].mxu0
  %v3963 = vadd.f32 0.0, %v3962
  %v3964 = vpop.f32.mrb[0].mxu0
  %v3965 = vadd.f32 0.0, %v3964
  %3966 = vmatprep.mubr.bf16.mxu0 0
  %3967 = vmatmul.mubr.bf16.gmra.mrb[0].mxu0 %v3171
  %v3968 = vpop.f32.mrb[0].mxu0
  %v3969 = vadd.f32 0.0, %v3968
  %v3970 = vpop.f32.mrb[0].mxu0
  %v3971 = vadd.f32 0.0, %v3970
  %v3972 = vpop.f32.mrb[0].mxu0
  %v3973 = vpop.f32.mrb[0].mxu0
  %3974 = vdwg.mxu0
  %v3975 = vadd.f32 %v1692, %v3208
  %v3976 = vadd.f32 %v1694, %v3210
  %v3977 = vadd.f32 %v2093, %v3609
  %v3978 = vadd.f32 %v2095, %v3611
  %v3979 = vadd.f32 %v1696, %v3212
  %v3980 = vadd.f32 %v1698, %v3214
  %v3981 = vadd.f32 %v2097, %v3613
  %v3982 = vadd.f32 %v2099, %v3615
  %v3983 = vadd.f32 %v1702, %v3218
  %v3984 = vadd.f32 %v1704, %v3220
  %v3985 = vadd.f32 %v2103, %v3619
  %v3986 = vadd.f32 %v2105, %v3621
  %v3987 = vadd.f32 %v1706, %v3222
  %v3988 = vadd.f32 %v1708, %v3224
  %v3989 = vadd.f32 %v2107, %v3623
  %v3990 = vadd.f32 %v2109, %v3625
  %v3991 = vadd.f32 %v1712, %v3228
  %v3992 = vadd.f32 %v1714, %v3230
  %v3993 = vadd.f32 %v2113, %v3629
  %v3994 = vadd.f32 %v2115, %v3631
  %v3995 = vadd.f32 %v1716, %v3232
  %v3996 = vadd.f32 %v1718, %v3234
  %v3997 = vadd.f32 %v2117, %v3633
  %v3998 = vadd.f32 %v2119, %v3635
  %v3999 = vadd.f32 %v1722, %v3238
  %v4000 = vadd.f32 %v1724, %v3240
  %v4001 = vadd.f32 %v2123, %v3639
  %v4002 = vadd.f32 %v2125, %v3641
  %v4003 = vadd.f32 %v1726, %v3242
  %v4004 = vadd.f32 %v1728, %v3244
  %v4005 = vadd.f32 %v2127, %v3643
  %v4006 = vadd.f32 %v2129, %v3645
  %v4007 = vadd.f32 %v1732, %v3248
  %v4008 = vadd.f32 %v1734, %v3250
  %v4009 = vadd.f32 %v2133, %v3649
  %v4010 = vadd.f32 %v2135, %v3651
  %v4011 = vadd.f32 %v1736, %v3252
  %v4012 = vadd.f32 %v1738, %v3254
  %v4013 = vadd.f32 %v2137, %v3653
  %v4014 = vadd.f32 %v2139, %v3655
  %v4015 = vadd.f32 %v1742, %v3258
  %v4016 = vadd.f32 %v1744, %v3260
  %v4017 = vadd.f32 %v2143, %v3659
  %v4018 = vadd.f32 %v2145, %v3661
  %v4019 = vadd.f32 %v1746, %v3262
  %v4020 = vadd.f32 %v1748, %v3264
  %v4021 = vadd.f32 %v2147, %v3663
  %v4022 = vadd.f32 %v2149, %v3665
  %v4023 = vadd.f32 %v1752, %v3268
  %v4024 = vadd.f32 %v1754, %v3270
  %v4025 = vadd.f32 %v2153, %v3669
  %v4026 = vadd.f32 %v2155, %v3671
  %v4027 = vadd.f32 %v1756, %v3272
  %v4028 = vadd.f32 %v1758, %v3274
  %v4029 = vadd.f32 %v2157, %v3673
  %v4030 = vadd.f32 %v2159, %v3675
  %v4031 = vadd.f32 %v1762, %v3278
  %v4032 = vadd.f32 %v1764, %v3280
  %v4033 = vadd.f32 %v2163, %v3679
  %v4034 = vadd.f32 %v2165, %v3681
  %v4035 = vadd.f32 %v1766, %v3282
  %v4036 = vadd.f32 %v1768, %v3284
  %v4037 = vadd.f32 %v2167, %v3683
  %v4038 = vadd.f32 %v2169, %v3685
  %v4039 = vadd.f32 %v1772, %v3288
  %v4040 = vadd.f32 %v1774, %v3290
  %v4041 = vadd.f32 %v2173, %v3689
  %v4042 = vadd.f32 %v2175, %v3691
  %v4043 = vadd.f32 %v1776, %v3292
  %v4044 = vadd.f32 %v1778, %v3294
  %v4045 = vadd.f32 %v2177, %v3693
  %v4046 = vadd.f32 %v2179, %v3695
  %v4047 = vadd.f32 %v1782, %v3298
  %v4048 = vadd.f32 %v1784, %v3300
  %v4049 = vadd.f32 %v2183, %v3699
  %v4050 = vadd.f32 %v2185, %v3701
  %v4051 = vadd.f32 %v1786, %v3302
  %v4052 = vadd.f32 %v1788, %v3304
  %v4053 = vadd.f32 %v2187, %v3703
  %v4054 = vadd.f32 %v2189, %v3705
  %v4055 = vadd.f32 %v1792, %v3308
  %v4056 = vadd.f32 %v1794, %v3310
  %v4057 = vadd.f32 %v2193, %v3709
  %v4058 = vadd.f32 %v2195, %v3711
  %v4059 = vadd.f32 %v1796, %v3312
  %v4060 = vadd.f32 %v1798, %v3314
  %v4061 = vadd.f32 %v2197, %v3713
  %v4062 = vadd.f32 %v2199, %v3715
  %v4063 = vadd.f32 %v1802, %v3318
  %v4064 = vadd.f32 %v1804, %v3320
  %v4065 = vadd.f32 %v2203, %v3719
  %v4066 = vadd.f32 %v2205, %v3721
  %v4067 = vadd.f32 %v1806, %v3322
  %v4068 = vadd.f32 %v1808, %v3324
  %v4069 = vadd.f32 %v2207, %v3723
  %v4070 = vadd.f32 %v2209, %v3725
  %v4071 = vadd.f32 %v1812, %v3328
  %v4072 = vadd.f32 %v1814, %v3330
  %v4073 = vadd.f32 %v2213, %v3729
  %v4074 = vadd.f32 %v2215, %v3731
  %v4075 = vadd.f32 %v1816, %v3332
  %v4076 = vadd.f32 %v1818, %v3334
  %v4077 = vadd.f32 %v2217, %v3733
  %v4078 = vadd.f32 %v2219, %v3735
  %v4079 = vadd.f32 %v1822, %v3338
  %v4080 = vadd.f32 %v1824, %v3340
  %v4081 = vadd.f32 %v2223, %v3739
  %v4082 = vadd.f32 %v2225, %v3741
  %v4083 = vadd.f32 %v1826, %v3342
  %v4084 = vadd.f32 %v1828, %v3344
  %v4085 = vadd.f32 %v2227, %v3743
  %v4086 = vadd.f32 %v2229, %v3745
  %v4087 = vadd.f32 %v1832, %v3348
  %v4088 = vadd.f32 %v1834, %v3350
  %v4089 = vadd.f32 %v2233, %v3749
  %v4090 = vadd.f32 %v2235, %v3751
  %v4091 = vadd.f32 %v1836, %v3352
  %v4092 = vadd.f32 %v1838, %v3354
  %v4093 = vadd.f32 %v2237, %v3753
  %v4094 = vadd.f32 %v2239, %v3755
  %v4095 = vadd.f32 %v1842, %v3358
  %v4096 = vadd.f32 %v1844, %v3360
  %v4097 = vadd.f32 %v2243, %v3759
  %v4098 = vadd.f32 %v2245, %v3761
  %v4099 = vadd.f32 %v1846, %v3362
  %v4100 = vadd.f32 %v1848, %v3364
  %v4101 = vadd.f32 %v2247, %v3763
  %v4102 = vadd.f32 %v2249, %v3765
  %v4103 = vadd.f32 %v1852, %v3368
  %v4104 = vadd.f32 %v1854, %v3370
  %v4105 = vadd.f32 %v2253, %v3769
  %v4106 = vadd.f32 %v2255, %v3771
  %v4107 = vadd.f32 %v1856, %v3372
  %v4108 = vadd.f32 %v1858, %v3374
  %v4109 = vadd.f32 %v2257, %v3773
  %v4110 = vadd.f32 %v2259, %v3775
  %v4111 = vadd.f32 %v1862, %v3378
  %v4112 = vadd.f32 %v1864, %v3380
  %v4113 = vadd.f32 %v2263, %v3779
  %v4114 = vadd.f32 %v2265, %v3781
  %v4115 = vadd.f32 %v1866, %v3382
  %v4116 = vadd.f32 %v1868, %v3384
  %v4117 = vadd.f32 %v2267, %v3783
  %v4118 = vadd.f32 %v2269, %v3785
  %v4119 = vadd.f32 %v1872, %v3388
  %v4120 = vadd.f32 %v1874, %v3390
  %v4121 = vadd.f32 %v2273, %v3789
  %v4122 = vadd.f32 %v2275, %v3791
  %v4123 = vadd.f32 %v1876, %v3392
  %v4124 = vadd.f32 %v1878, %v3394
  %v4125 = vadd.f32 %v2277, %v3793
  %v4126 = vadd.f32 %v2279, %v3795
  %v4127 = vadd.f32 %v1882, %v3398
  %v4128 = vadd.f32 %v1884, %v3400
  %v4129 = vadd.f32 %v2283, %v3799
  %v4130 = vadd.f32 %v2285, %v3801
  %v4131 = vadd.f32 %v1886, %v3402
  %v4132 = vadd.f32 %v1888, %v3404
  %v4133 = vadd.f32 %v2287, %v3803
  %v4134 = vadd.f32 %v2289, %v3805
  %v4135 = vadd.f32 %v1892, %v3408
  %v4136 = vadd.f32 %v1894, %v3410
  %v4137 = vadd.f32 %v2293, %v3809
  %v4138 = vadd.f32 %v2295, %v3811
  %v4139 = vadd.f32 %v1896, %v3412
  %v4140 = vadd.f32 %v1898, %v3414
  %v4141 = vadd.f32 %v2297, %v3813
  %v4142 = vadd.f32 %v2299, %v3815
  %v4143 = vadd.f32 %v1902, %v3418
  %v4144 = vadd.f32 %v1904, %v3420
  %v4145 = vadd.f32 %v2303, %v3819
  %v4146 = vadd.f32 %v2305, %v3821
  %v4147 = vadd.f32 %v1906, %v3422
  %v4148 = vadd.f32 %v1908, %v3424
  %v4149 = vadd.f32 %v2307, %v3823
  %v4150 = vadd.f32 %v2309, %v3825
  %v4151 = vadd.f32 %v1912, %v3428
  %v4152 = vadd.f32 %v1914, %v3430
  %v4153 = vadd.f32 %v2313, %v3829
  %v4154 = vadd.f32 %v2315, %v3831
  %v4155 = vadd.f32 %v1916, %v3432
  %v4156 = vadd.f32 %v1918, %v3434
  %v4157 = vadd.f32 %v2317, %v3833
  %v4158 = vadd.f32 %v2319, %v3835
  %v4159 = vadd.f32 %v1922, %v3438
  %v4160 = vadd.f32 %v1924, %v3440
  %v4161 = vadd.f32 %v2323, %v3839
  %v4162 = vadd.f32 %v2325, %v3841
  %v4163 = vadd.f32 %v1926, %v3442
  %v4164 = vadd.f32 %v1928, %v3444
  %v4165 = vadd.f32 %v2327, %v3843
  %v4166 = vadd.f32 %v2329, %v3845
  %v4167 = vadd.f32 %v1932, %v3448
  %v4168 = vadd.f32 %v1934, %v3450
  %v4169 = vadd.f32 %v2333, %v3849
  %v4170 = vadd.f32 %v2335, %v3851
  %v4171 = vadd.f32 %v1936, %v3452
  %v4172 = vadd.f32 %v1938, %v3454
  %v4173 = vadd.f32 %v2337, %v3853
  %v4174 = vadd.f32 %v2339, %v3855
  %v4175 = vadd.f32 %v1942, %v3458
  %v4176 = vadd.f32 %v1944, %v3460
  %v4177 = vadd.f32 %v2343, %v3859
  %v4178 = vadd.f32 %v2345, %v3861
  %v4179 = vadd.f32 %v1946, %v3462
  %v4180 = vadd.f32 %v1948, %v3464
  %v4181 = vadd.f32 %v2347, %v3863
  %v4182 = vadd.f32 %v2349, %v3865
  %v4183 = vadd.f32 %v1952, %v3468
  %v4184 = vadd.f32 %v1954, %v3470
  %v4185 = vadd.f32 %v2353, %v3869
  %v4186 = vadd.f32 %v2355, %v3871
  %v4187 = vadd.f32 %v1956, %v3472
  %v4188 = vadd.f32 %v1958, %v3474
  %v4189 = vadd.f32 %v2357, %v3873
  %v4190 = vadd.f32 %v2359, %v3875
  %v4191 = vadd.f32 %v1962, %v3478
  %v4192 = vadd.f32 %v1964, %v3480
  %v4193 = vadd.f32 %v2363, %v3879
  %v4194 = vadd.f32 %v2365, %v3881
  %v4195 = vadd.f32 %v1966, %v3482
  %v4196 = vadd.f32 %v1968, %v3484
  %v4197 = vadd.f32 %v2367, %v3883
  %v4198 = vadd.f32 %v2369, %v3885
  %v4199 = vadd.f32 %v1972, %v3488
  %v4200 = vadd.f32 %v1974, %v3490
  %v4201 = vadd.f32 %v2373, %v3889
  %v4202 = vadd.f32 %v2375, %v3891
  %v4203 = vadd.f32 %v1976, %v3492
  %v4204 = vadd.f32 %v1978, %v3494
  %v4205 = vadd.f32 %v2377, %v3893
  %v4206 = vadd.f32 %v2379, %v3895
  %v4207 = vadd.f32 %v1982, %v3498
  %v4208 = vadd.f32 %v1984, %v3500
  %v4209 = vadd.f32 %v2383, %v3899
  %v4210 = vadd.f32 %v2385, %v3901
  %v4211 = vadd.f32 %v1986, %v3502
  %v4212 = vadd.f32 %v1988, %v3504
  %v4213 = vadd.f32 %v2387, %v3903
  %v4214 = vadd.f32 %v2389, %v3905
  %v4215 = vadd.f32 %v1992, %v3508
  %v4216 = vadd.f32 %v1994, %v3510
  %v4217 = vadd.f32 %v2393, %v3909
  %v4218 = vadd.f32 %v2395, %v3911
  %v4219 = vadd.f32 %v1996, %v3512
  %v4220 = vadd.f32 %v1998, %v3514
  %v4221 = vadd.f32 %v2397, %v3913
  %v4222 = vadd.f32 %v2399, %v3915
  %v4223 = vadd.f32 %v2002, %v3518
  %v4224 = vadd.f32 %v2004, %v3520
  %v4225 = vadd.f32 %v2403, %v3919
  %v4226 = vadd.f32 %v2405, %v3921
  %v4227 = vadd.f32 %v2006, %v3522
  %v4228 = vadd.f32 %v2008, %v3524
  %v4229 = vadd.f32 %v2407, %v3923
  %v4230 = vadd.f32 %v2409, %v3925
  %v4231 = vadd.f32 %v2012, %v3528
  %v4232 = vadd.f32 %v2014, %v3530
  %v4233 = vadd.f32 %v2413, %v3929
  %v4234 = vadd.f32 %v2415, %v3931
  %v4235 = vadd.f32 %v2016, %v3532
  %v4236 = vadd.f32 %v2018, %v3534
  %v4237 = vadd.f32 %v2417, %v3933
  %v4238 = vadd.f32 %v2419, %v3935
  %v4239 = vadd.f32 %v2022, %v3538
  %v4240 = vadd.f32 %v2024, %v3540
  %v4241 = vadd.f32 %v2423, %v3939
  %v4242 = vadd.f32 %v2425, %v3941
  %v4243 = vadd.f32 %v2026, %v3542
  %v4244 = vadd.f32 %v2028, %v3544
  %v4245 = vadd.f32 %v2427, %v3943
  %v4246 = vadd.f32 %v2429, %v3945
  %v4247 = vadd.f32 %v2032, %v3548
  %v4248 = vadd.f32 %v2034, %v3550
  %v4249 = vadd.f32 %v2433, %v3949
  %v4250 = vadd.f32 %v2435, %v3951
  %v4251 = vadd.f32 %v2036, %v3552
  %v4252 = vadd.f32 %v2038, %v3554
  %v4253 = vadd.f32 %v2437, %v3953
  %v4254 = vadd.f32 %v2439, %v3955
  %v4255 = vadd.f32 %v2042, %v3558
  %v4256 = vadd.f32 %v2044, %v3560
  %v4257 = vadd.f32 %v2443, %v3959
  %v4258 = vadd.f32 %v2445, %v3961
  %v4259 = vadd.f32 %v2046, %v3562
  %v4260 = vadd.f32 %v2048, %v3564
  %v4261 = vadd.f32 %v2447, %v3963
  %v4262 = vadd.f32 %v2449, %v3965
  %v4263 = vadd.f32 %v2052, %v3568
  %v4264 = vadd.f32 %v2054, %v3570
  %v4265 = vadd.f32 %v2453, %v3969
  %v4266 = vadd.f32 %v2455, %v3971
  %v4267 = vld [vmem:[%s0 + $0x8] sm:$0xe]
  %s4268 = scalar_lea.vmem %s1, 192
  %v4269 = vld [vmem:[%s4268] sm:$0xff]
  %v4270 = vld [vmem:[%s4268 + $0x8] sm:$0xff]
  %v4271 = vld [vmem:[%s4268 + $0x10] sm:$0xff]
  %v4272 = vld [vmem:[%s4268 + $0x18] sm:$0xff]
  %v4273 = vld [vmem:[%s4268 + $0x20] sm:$0xff]
  %v4274 = vld [vmem:[%s4268 + $0x28] sm:$0xff]
  %v4275 = vld [vmem:[%s4268 + $0x30] sm:$0xff]
  %v4276 = vld [vmem:[%s4268 + $0x38] sm:$0xff]
  %v4278 = vunpack.c.l.b16 %v4267
  %v4279 = vpack.c.b16 %v2617, %v4278
  %vm4280 = vcmask 1046528
  %v4281 = vrot.slane %v4279, 1
  %v4282 = vrot.slane %v2691, 1
  %v4283 = vsel %vm4280, %v4281, %v4282
  %v4284 = vrot.slane %v2692, 1
  %v4285 = vsel %vm4280, %v4282, %v4284
  %v4286 = vrot.slane %v2693, 1
  %v4287 = vsel %vm4280, %v4284, %v4286
  %v4288 = vrot.slane %v2694, 1
  %v4289 = vsel %vm4280, %v4286, %v4288
  %v4290 = vrot.slane %v2695, 1
  %v4291 = vsel %vm4280, %v4288, %v4290
  %v4292 = vrot.slane %v2696, 1
  %v4293 = vsel %vm4280, %v4290, %v4292
  %v4294 = vrot.slane %v2697, 1
  %v4295 = vsel %vm4280, %v4292, %v4294
  %v4296 = vrot.slane %v2698, 1
  %v4297 = vsel %vm4280, %v4294, %v4296
  %v4298 = vrot.slane %v2699, 1
  %v4299 = vsel %vm4280, %v4296, %v4298
  %v4300 = vrot.slane %v2700, 1
  %v4301 = vsel %vm4280, %v4298, %v4300
  %v4302 = vrot.slane %v2701, 1
  %v4303 = vsel %vm4280, %v4300, %v4302
  %v4304 = vrot.slane %v2702, 1
  %v4305 = vsel %vm4280, %v4302, %v4304
  %v4306 = vrot.slane %v2703, 1
  %v4307 = vsel %vm4280, %v4304, %v4306
  %v4308 = vrot.slane %v2704, 1
  %v4309 = vsel %vm4280, %v4306, %v4308
  %v4310 = vrot.slane %v2705, 1
  %v4311 = vsel %vm4280, %v4308, %v4310
  %v4312 = vrot.slane %v2706, 1
  %v4313 = vsel %vm4280, %v4310, %v4312
  %v4314 = vrot.slane %v2707, 1
  %v4315 = vsel %vm4280, %v4312, %v4314
  %v4316 = vrot.slane %v2708, 1
  %v4317 = vsel %vm4280, %v4314, %v4316
  %v4318 = vrot.slane %v2709, 1
  %v4319 = vsel %vm4280, %v4316, %v4318
  %v4320 = vrot.slane %v2710, 1
  %v4321 = vsel %vm4280, %v4318, %v4320
  %v4322 = vrot.slane %v2711, 1
  %v4323 = vsel %vm4280, %v4320, %v4322
  %v4324 = vrot.slane %v2712, 1
  %v4325 = vsel %vm4280, %v4322, %v4324
  %v4326 = vrot.slane %v2713, 1
  %v4327 = vsel %vm4280, %v4324, %v4326
  %v4328 = vrot.slane %v2714, 1
  %v4329 = vsel %vm4280, %v4326, %v4328
  %v4330 = vrot.slane %v2715, 1
  %v4331 = vsel %vm4280, %v4328, %v4330
  %v4332 = vrot.slane %v2716, 1
  %v4333 = vsel %vm4280, %v4330, %v4332
  %v4334 = vrot.slane %v2717, 1
  %v4335 = vsel %vm4280, %v4332, %v4334
  %v4336 = vrot.slane %v2718, 1
  %v4337 = vsel %vm4280, %v4334, %v4336
  %v4338 = vrot.slane %v2719, 1
  %v4339 = vsel %vm4280, %v4336, %v4338
  %v4340 = vrot.slane %v2720, 1
  %v4341 = vsel %vm4280, %v4338, %v4340
  %v4342 = vrot.slane %v2721, 1
  %v4343 = vsel %vm4280, %v4340, %v4342
  %v4344 = vrot.slane %v2722, 1
  %v4345 = vsel %vm4280, %v4342, %v4344
  %v4346 = vrot.slane %v2723, 1
  %v4347 = vsel %vm4280, %v4344, %v4346
  %v4348 = vrot.slane %v2724, 1
  %v4349 = vsel %vm4280, %v4346, %v4348
  %v4350 = vrot.slane %v2725, 1
  %v4351 = vsel %vm4280, %v4348, %v4350
  %v4352 = vrot.slane %v2726, 1
  %v4353 = vsel %vm4280, %v4350, %v4352
  %v4362 = vunpack.c.l.b16 %v4269
  %v4363 = vunpack.c.h.b16 %v4269
  %v4364 = vunpack.c.l.b16 %v4270
  %v4365 = vunpack.c.h.b16 %v4270
  %v4366 = vunpack.c.l.b16 %v4271
  %v4367 = vunpack.c.h.b16 %v4271
  %v4368 = vunpack.c.l.b16 %v4272
  %v4369 = vunpack.c.h.b16 %v4272
  %v4370 = vunpack.c.l.b16 %v4273
  %v4371 = vunpack.c.h.b16 %v4273
  %v4372 = vunpack.c.l.b16 %v4274
  %v4373 = vunpack.c.h.b16 %v4274
  %v4374 = vunpack.c.l.b16 %v4275
  %v4375 = vunpack.c.h.b16 %v4275
  %v4376 = vunpack.c.l.b16 %v4276
  %v4377 = vunpack.c.h.b16 %v4276
  %v4378 = vpack.c.b16 %v4366, %v4362
  %v4379 = vpack.c.b16 %v4367, %v4363
  %v4380 = vpack.c.b16 %v4368, %v4364
  %v4381 = vpack.c.b16 %v4369, %v4365
  %v4382 = vpack.c.b16 %v4374, %v4370
  %v4383 = vpack.c.b16 %v4375, %v4371
  %v4384 = vpack.c.b16 %v4376, %v4372
  %v4385 = vpack.c.b16 %v4377, %v4373
  %v4395 = vsel %vm627, %v4283, 0
  %v4398 = vsel %vm627, %v4285, 0
  %v4401 = vsel %vm627, %v4287, 0
  %v4404 = vsel %vm627, %v4289, 0
  %v4407 = vsel %vm627, %v4291, 0
  %v4410 = vsel %vm627, %v4293, 0
  %v4413 = vsel %vm627, %v4295, 0
  %v4416 = vsel %vm627, %v4297, 0
  %v4419 = vsel %vm627, %v4299, 0
  %v4422 = vsel %vm627, %v4301, 0
  %v4425 = vsel %vm627, %v4303, 0
  %v4428 = vsel %vm627, %v4305, 0
  %v4431 = vsel %vm627, %v4307, 0
  %v4434 = vsel %vm627, %v4309, 0
  %v4437 = vsel %vm627, %v4311, 0
  %v4440 = vsel %vm627, %v4313, 0
  %v4443 = vsel %vm627, %v4315, 0
  %v4446 = vsel %vm627, %v4317, 0
  %v4449 = vsel %vm627, %v4319, 0
  %v4452 = vsel %vm627, %v4321, 0
  %v4455 = vsel %vm627, %v4323, 0
  %v4458 = vsel %vm627, %v4325, 0
  %v4461 = vsel %vm627, %v4327, 0
  %v4464 = vsel %vm627, %v4329, 0
  %v4467 = vsel %vm627, %v4331, 0
  %v4470 = vsel %vm627, %v4333, 0
  %v4473 = vsel %vm627, %v4335, 0
  %v4476 = vsel %vm627, %v4337, 0
  %v4479 = vsel %vm627, %v4339, 0
  %v4482 = vsel %vm627, %v4341, 0
  %v4485 = vsel %vm627, %v4343, 0
  %v4488 = vsel %vm627, %v4345, 0
  %v4491 = vsel %vm627, %v4347, 0
  %v4494 = vsel %vm627, %v4349, 0
  %v4497 = vsel %vm627, %v4351, 0
  %v4500 = vsel %vm627, %v4353, 0
  %v4503 = vsel %vm627, %v4352, 0
  %4505 = vmatprep.subr.bf16.mxu0 %v4379
  %4506 = vmatpush1.bf16.msra.mxu0 %v4378
  %4507 = vmatprep.subr.bf16.mxu0 %v4383
  %4508 = vmatpush1.bf16.msra.mxu0 %v4382
  %4509 = vmatprep.subr.bf16.mxu0 0
  %4510 = vmatpush1.bf16.msra.mxu0 0
  %4511 = vmatprep.subr.bf16.mxu0 0
  %4512 = vmatpush1.bf16.msra.mxu0 0
  %4513 = vmatprep.subr.bf16.mxu0 0
  %4514 = vmatpush1.bf16.msra.mxu0 0
  %4515 = vmatprep.subr.bf16.mxu0 0
  %4516 = vmatpush1.bf16.msra.mxu0 0
  %4517 = vmatprep.subr.bf16.mxu0 0
  %4518 = vmatpush1.bf16.msra.mxu0 0
  %4519 = vmatprep.subr.bf16.mxu0 0
  %4520 = vmatpush1.bf16.msra.mxu0 0
  %4521 = vmatprep.subr.bf16.mxu0 0
  %4522 = vmatpush1.bf16.msra.mxu0 0
  %4523 = vmatprep.subr.bf16.mxu0 0
  %4524 = vmatpush1.bf16.msra.mxu0 0
  %4525 = vmatprep.subr.bf16.mxu0 0
  %4526 = vmatpush1.bf16.msra.mxu0 0
  %4527 = vmatprep.subr.bf16.mxu0 0
  %4528 = vmatpush1.bf16.msra.mxu0 0
  %4529 = vmatprep.subr.bf16.mxu0 0
  %4530 = vmatpush1.bf16.msra.mxu0 0
  %4531 = vmatprep.subr.bf16.mxu0 0
  %4532 = vmatpush1.bf16.msra.mxu0 0
  %4533 = vmatprep.subr.bf16.mxu0 0
  %4534 = vmatpush1.bf16.msra.mxu0 0
  %4535 = vmatprep.subr.bf16.mxu0 0
  %4536 = vmatpush1.bf16.msra.mxu0 0
  %4537 = vmatprep.mubr.bf16.mxu0 0
  %4538 = vmatmul.mubr.bf16.gmra.mrb[0].mxu0 %v4395
  %v4539 = vpop.f32.mrb[0].mxu0
  %v4540 = vadd.f32 0.0, %v4539
  %v4541 = vpop.f32.mrb[0].mxu0
  %v4542 = vadd.f32 0.0, %v4541
  %v4543 = vpop.f32.mrb[0].mxu0
  %v4544 = vadd.f32 0.0, %v4543
  %v4545 = vpop.f32.mrb[0].mxu0
  %v4546 = vadd.f32 0.0, %v4545
  %4547 = vmatprep.mubr.bf16.mxu0 0
  %4548 = vmatmul.mubr.bf16.gmra.mrb[0].mxu0 %v4398
  %v4549 = vpop.f32.mrb[0].mxu0
  %v4550 = vadd.f32 0.0, %v4549
  %v4551 = vpop.f32.mrb[0].mxu0
  %v4552 = vadd.f32 0.0, %v4551
  %v4553 = vpop.f32.mrb[0].mxu0
  %v4554 = vadd.f32 0.0, %v4553
  %v4555 = vpop.f32.mrb[0].mxu0
  %v4556 = vadd.f32 0.0, %v4555
  %4557 = vmatprep.mubr.bf16.mxu0 0
  %4558 = vmatmul.mubr.bf16.gmra.mrb[0].mxu0 %v4401
  %v4559 = vpop.f32.mrb[0].mxu0
  %v4560 = vadd.f32 0.0, %v4559
  %v4561 = vpop.f32.mrb[0].mxu0
  %v4562 = vadd.f32 0.0, %v4561
  %v4563 = vpop.f32.mrb[0].mxu0
  %v4564 = vadd.f32 0.0, %v4563
  %v4565 = vpop.f32.mrb[0].mxu0
  %v4566 = vadd.f32 0.0, %v4565
  %4567 = vmatprep.mubr.bf16.mxu0 0
  %4568 = vmatmul.mubr.bf16.gmra.mrb[0].mxu0 %v4404
  %v4569 = vpop.f32.mrb[0].mxu0
  %v4570 = vadd.f32 0.0, %v4569
  %v4571 = vpop.f32.mrb[0].mxu0
  %v4572 = vadd.f32 0.0, %v4571
  %v4573 = vpop.f32.mrb[0].mxu0
  %v4574 = vadd.f32 0.0, %v4573
  %v4575 = vpop.f32.mrb[0].mxu0
  %v4576 = vadd.f32 0.0, %v4575
  %4577 = vmatprep.mubr.bf16.mxu0 0
  %4578 = vmatmul.mubr.bf16.gmra.mrb[0].mxu0 %v4407
  %v4579 = vpop.f32.mrb[0].mxu0
  %v4580 = vadd.f32 0.0, %v4579
  %v4581 = vpop.f32.mrb[0].mxu0
  %v4582 = vadd.f32 0.0, %v4581
  %v4583 = vpop.f32.mrb[0].mxu0
  %v4584 = vadd.f32 0.0, %v4583
  %v4585 = vpop.f32.mrb[0].mxu0
  %v4586 = vadd.f32 0.0, %v4585
  %4587 = vmatprep.mubr.bf16.mxu0 0
  %4588 = vmatmul.mubr.bf16.gmra.mrb[0].mxu0 %v4410
  %v4589 = vpop.f32.mrb[0].mxu0
  %v4590 = vadd.f32 0.0, %v4589
  %v4591 = vpop.f32.mrb[0].mxu0
  %v4592 = vadd.f32 0.0, %v4591
  %v4593 = vpop.f32.mrb[0].mxu0
  %v4594 = vadd.f32 0.0, %v4593
  %v4595 = vpop.f32.mrb[0].mxu0
  %v4596 = vadd.f32 0.0, %v4595
  %4597 = vmatprep.mubr.bf16.mxu0 0
  %4598 = vmatmul.mubr.bf16.gmra.mrb[0].mxu0 %v4413
  %v4599 = vpop.f32.mrb[0].mxu0
  %v4600 = vadd.f32 0.0, %v4599
  %v4601 = vpop.f32.mrb[0].mxu0
  %v4602 = vadd.f32 0.0, %v4601
  %v4603 = vpop.f32.mrb[0].mxu0
  %v4604 = vadd.f32 0.0, %v4603
  %v4605 = vpop.f32.mrb[0].mxu0
  %v4606 = vadd.f32 0.0, %v4605
  %4607 = vmatprep.mubr.bf16.mxu0 0
  %4608 = vmatmul.mubr.bf16.gmra.mrb[0].mxu0 %v4416
  %v4609 = vpop.f32.mrb[0].mxu0
  %v4610 = vadd.f32 0.0, %v4609
  %v4611 = vpop.f32.mrb[0].mxu0
  %v4612 = vadd.f32 0.0, %v4611
  %v4613 = vpop.f32.mrb[0].mxu0
  %v4614 = vadd.f32 0.0, %v4613
  %v4615 = vpop.f32.mrb[0].mxu0
  %v4616 = vadd.f32 0.0, %v4615
  %4617 = vmatprep.mubr.bf16.mxu0 0
  %4618 = vmatmul.mubr.bf16.gmra.mrb[0].mxu0 %v4419
  %v4619 = vpop.f32.mrb[0].mxu0
  %v4620 = vadd.f32 0.0, %v4619
  %v4621 = vpop.f32.mrb[0].mxu0
  %v4622 = vadd.f32 0.0, %v4621
  %v4623 = vpop.f32.mrb[0].mxu0
  %v4624 = vadd.f32 0.0, %v4623
  %v4625 = vpop.f32.mrb[0].mxu0
  %v4626 = vadd.f32 0.0, %v4625
  %4627 = vmatprep.mubr.bf16.mxu0 0
  %4628 = vmatmul.mubr.bf16.gmra.mrb[0].mxu0 %v4422
  %v4629 = vpop.f32.mrb[0].mxu0
  %v4630 = vadd.f32 0.0, %v4629
  %v4631 = vpop.f32.mrb[0].mxu0
  %v4632 = vadd.f32 0.0, %v4631
  %v4633 = vpop.f32.mrb[0].mxu0
  %v4634 = vadd.f32 0.0, %v4633
  %v4635 = vpop.f32.mrb[0].mxu0
  %v4636 = vadd.f32 0.0, %v4635
  %4637 = vmatprep.mubr.bf16.mxu0 0
  %4638 = vmatmul.mubr.bf16.gmra.mrb[0].mxu0 %v4425
  %v4639 = vpop.f32.mrb[0].mxu0
  %v4640 = vadd.f32 0.0, %v4639
  %v4641 = vpop.f32.mrb[0].mxu0
  %v4642 = vadd.f32 0.0, %v4641
  %v4643 = vpop.f32.mrb[0].mxu0
  %v4644 = vadd.f32 0.0, %v4643
  %v4645 = vpop.f32.mrb[0].mxu0
  %v4646 = vadd.f32 0.0, %v4645
  %4647 = vmatprep.mubr.bf16.mxu0 0
  %4648 = vmatmul.mubr.bf16.gmra.mrb[0].mxu0 %v4428
  %v4649 = vpop.f32.mrb[0].mxu0
  %v4650 = vadd.f32 0.0, %v4649
  %v4651 = vpop.f32.mrb[0].mxu0
  %v4652 = vadd.f32 0.0, %v4651
  %v4653 = vpop.f32.mrb[0].mxu0
  %v4654 = vadd.f32 0.0, %v4653
  %v4655 = vpop.f32.mrb[0].mxu0
  %v4656 = vadd.f32 0.0, %v4655
  %4657 = vmatprep.mubr.bf16.mxu0 0
  %4658 = vmatmul.mubr.bf16.gmra.mrb[0].mxu0 %v4431
  %v4659 = vpop.f32.mrb[0].mxu0
  %v4660 = vadd.f32 0.0, %v4659
  %v4661 = vpop.f32.mrb[0].mxu0
  %v4662 = vadd.f32 0.0, %v4661
  %v4663 = vpop.f32.mrb[0].mxu0
  %v4664 = vadd.f32 0.0, %v4663
  %v4665 = vpop.f32.mrb[0].mxu0
  %v4666 = vadd.f32 0.0, %v4665
  %4667 = vmatprep.mubr.bf16.mxu0 0
  %4668 = vmatmul.mubr.bf16.gmra.mrb[0].mxu0 %v4434
  %v4669 = vpop.f32.mrb[0].mxu0
  %v4670 = vadd.f32 0.0, %v4669
  %v4671 = vpop.f32.mrb[0].mxu0
  %v4672 = vadd.f32 0.0, %v4671
  %v4673 = vpop.f32.mrb[0].mxu0
  %v4674 = vadd.f32 0.0, %v4673
  %v4675 = vpop.f32.mrb[0].mxu0
  %v4676 = vadd.f32 0.0, %v4675
  %4677 = vmatprep.mubr.bf16.mxu0 0
  %4678 = vmatmul.mubr.bf16.gmra.mrb[0].mxu0 %v4437
  %v4679 = vpop.f32.mrb[0].mxu0
  %v4680 = vadd.f32 0.0, %v4679
  %v4681 = vpop.f32.mrb[0].mxu0
  %v4682 = vadd.f32 0.0, %v4681
  %v4683 = vpop.f32.mrb[0].mxu0
  %v4684 = vadd.f32 0.0, %v4683
  %v4685 = vpop.f32.mrb[0].mxu0
  %v4686 = vadd.f32 0.0, %v4685
  %4687 = vmatprep.mubr.bf16.mxu0 0
  %4688 = vmatmul.mubr.bf16.gmra.mrb[0].mxu0 %v4440
  %v4689 = vpop.f32.mrb[0].mxu0
  %v4690 = vadd.f32 0.0, %v4689
  %v4691 = vpop.f32.mrb[0].mxu0
  %v4692 = vadd.f32 0.0, %v4691
  %v4693 = vpop.f32.mrb[0].mxu0
  %v4694 = vadd.f32 0.0, %v4693
  %v4695 = vpop.f32.mrb[0].mxu0
  %v4696 = vadd.f32 0.0, %v4695
  %4697 = vmatprep.mubr.bf16.mxu0 0
  %4698 = vmatmul.mubr.bf16.gmra.mrb[0].mxu0 %v4443
  %v4699 = vpop.f32.mrb[0].mxu0
  %v4700 = vadd.f32 0.0, %v4699
  %v4701 = vpop.f32.mrb[0].mxu0
  %v4702 = vadd.f32 0.0, %v4701
  %v4703 = vpop.f32.mrb[0].mxu0
  %v4704 = vadd.f32 0.0, %v4703
  %v4705 = vpop.f32.mrb[0].mxu0
  %v4706 = vadd.f32 0.0, %v4705
  %4707 = vmatprep.mubr.bf16.mxu0 0
  %4708 = vmatmul.mubr.bf16.gmra.mrb[0].mxu0 %v4446
  %v4709 = vpop.f32.mrb[0].mxu0
  %v4710 = vadd.f32 0.0, %v4709
  %v4711 = vpop.f32.mrb[0].mxu0
  %v4712 = vadd.f32 0.0, %v4711
  %v4713 = vpop.f32.mrb[0].mxu0
  %v4714 = vadd.f32 0.0, %v4713
  %v4715 = vpop.f32.mrb[0].mxu0
  %v4716 = vadd.f32 0.0, %v4715
  %4717 = vmatprep.mubr.bf16.mxu0 0
  %4718 = vmatmul.mubr.bf16.gmra.mrb[0].mxu0 %v4449
  %v4719 = vpop.f32.mrb[0].mxu0
  %v4720 = vadd.f32 0.0, %v4719
  %v4721 = vpop.f32.mrb[0].mxu0
  %v4722 = vadd.f32 0.0, %v4721
  %v4723 = vpop.f32.mrb[0].mxu0
  %v4724 = vadd.f32 0.0, %v4723
  %v4725 = vpop.f32.mrb[0].mxu0
  %v4726 = vadd.f32 0.0, %v4725
  %4727 = vmatprep.mubr.bf16.mxu0 0
  %4728 = vmatmul.mubr.bf16.gmra.mrb[0].mxu0 %v4452
  %v4729 = vpop.f32.mrb[0].mxu0
  %v4730 = vadd.f32 0.0, %v4729
  %v4731 = vpop.f32.mrb[0].mxu0
  %v4732 = vadd.f32 0.0, %v4731
  %v4733 = vpop.f32.mrb[0].mxu0
  %v4734 = vadd.f32 0.0, %v4733
  %v4735 = vpop.f32.mrb[0].mxu0
  %v4736 = vadd.f32 0.0, %v4735
  %4737 = vmatprep.mubr.bf16.mxu0 0
  %4738 = vmatmul.mubr.bf16.gmra.mrb[0].mxu0 %v4455
  %v4739 = vpop.f32.mrb[0].mxu0
  %v4740 = vadd.f32 0.0, %v4739
  %v4741 = vpop.f32.mrb[0].mxu0
  %v4742 = vadd.f32 0.0, %v4741
  %v4743 = vpop.f32.mrb[0].mxu0
  %v4744 = vadd.f32 0.0, %v4743
  %v4745 = vpop.f32.mrb[0].mxu0
  %v4746 = vadd.f32 0.0, %v4745
  %4747 = vmatprep.mubr.bf16.mxu0 0
  %4748 = vmatmul.mubr.bf16.gmra.mrb[0].mxu0 %v4458
  %v4749 = vpop.f32.mrb[0].mxu0
  %v4750 = vadd.f32 0.0, %v4749
  %v4751 = vpop.f32.mrb[0].mxu0
  %v4752 = vadd.f32 0.0, %v4751
  %v4753 = vpop.f32.mrb[0].mxu0
  %v4754 = vadd.f32 0.0, %v4753
  %v4755 = vpop.f32.mrb[0].mxu0
  %v4756 = vadd.f32 0.0, %v4755
  %4757 = vmatprep.mubr.bf16.mxu0 0
  %4758 = vmatmul.mubr.bf16.gmra.mrb[0].mxu0 %v4461
  %v4759 = vpop.f32.mrb[0].mxu0
  %v4760 = vadd.f32 0.0, %v4759
  %v4761 = vpop.f32.mrb[0].mxu0
  %v4762 = vadd.f32 0.0, %v4761
  %v4763 = vpop.f32.mrb[0].mxu0
  %v4764 = vadd.f32 0.0, %v4763
  %v4765 = vpop.f32.mrb[0].mxu0
  %v4766 = vadd.f32 0.0, %v4765
  %4767 = vmatprep.mubr.bf16.mxu0 0
  %4768 = vmatmul.mubr.bf16.gmra.mrb[0].mxu0 %v4464
  %v4769 = vpop.f32.mrb[0].mxu0
  %v4770 = vadd.f32 0.0, %v4769
  %v4771 = vpop.f32.mrb[0].mxu0
  %v4772 = vadd.f32 0.0, %v4771
  %v4773 = vpop.f32.mrb[0].mxu0
  %v4774 = vadd.f32 0.0, %v4773
  %v4775 = vpop.f32.mrb[0].mxu0
  %v4776 = vadd.f32 0.0, %v4775
  %4777 = vmatprep.mubr.bf16.mxu0 0
  %4778 = vmatmul.mubr.bf16.gmra.mrb[0].mxu0 %v4467
  %v4779 = vpop.f32.mrb[0].mxu0
  %v4780 = vadd.f32 0.0, %v4779
  %v4781 = vpop.f32.mrb[0].mxu0
  %v4782 = vadd.f32 0.0, %v4781
  %v4783 = vpop.f32.mrb[0].mxu0
  %v4784 = vadd.f32 0.0, %v4783
  %v4785 = vpop.f32.mrb[0].mxu0
  %v4786 = vadd.f32 0.0, %v4785
  %4787 = vmatprep.mubr.bf16.mxu0 0
  %4788 = vmatmul.mubr.bf16.gmra.mrb[0].mxu0 %v4470
  %v4789 = vpop.f32.mrb[0].mxu0
  %v4790 = vadd.f32 0.0, %v4789
  %v4791 = vpop.f32.mrb[0].mxu0
  %v4792 = vadd.f32 0.0, %v4791
  %v4793 = vpop.f32.mrb[0].mxu0
  %v4794 = vadd.f32 0.0, %v4793
  %v4795 = vpop.f32.mrb[0].mxu0
  %v4796 = vadd.f32 0.0, %v4795
  %4797 = vmatprep.mubr.bf16.mxu0 0
  %4798 = vmatmul.mubr.bf16.gmra.mrb[0].mxu0 %v4473
  %v4799 = vpop.f32.mrb[0].mxu0
  %v4800 = vadd.f32 0.0, %v4799
  %v4801 = vpop.f32.mrb[0].mxu0
  %v4802 = vadd.f32 0.0, %v4801
  %v4803 = vpop.f32.mrb[0].mxu0
  %v4804 = vadd.f32 0.0, %v4803
  %v4805 = vpop.f32.mrb[0].mxu0
  %v4806 = vadd.f32 0.0, %v4805
  %4807 = vmatprep.mubr.bf16.mxu0 0
  %4808 = vmatmul.mubr.bf16.gmra.mrb[0].mxu0 %v4476
  %v4809 = vpop.f32.mrb[0].mxu0
  %v4810 = vadd.f32 0.0, %v4809
  %v4811 = vpop.f32.mrb[0].mxu0
  %v4812 = vadd.f32 0.0, %v4811
  %v4813 = vpop.f32.mrb[0].mxu0
  %v4814 = vadd.f32 0.0, %v4813
  %v4815 = vpop.f32.mrb[0].mxu0
  %v4816 = vadd.f32 0.0, %v4815
  %4817 = vmatprep.mubr.bf16.mxu0 0
  %4818 = vmatmul.mubr.bf16.gmra.mrb[0].mxu0 %v4479
  %v4819 = vpop.f32.mrb[0].mxu0
  %v4820 = vadd.f32 0.0, %v4819
  %v4821 = vpop.f32.mrb[0].mxu0
  %v4822 = vadd.f32 0.0, %v4821
  %v4823 = vpop.f32.mrb[0].mxu0
  %v4824 = vadd.f32 0.0, %v4823
  %v4825 = vpop.f32.mrb[0].mxu0
  %v4826 = vadd.f32 0.0, %v4825
  %4827 = vmatprep.mubr.bf16.mxu0 0
  %4828 = vmatmul.mubr.bf16.gmra.mrb[0].mxu0 %v4482
  %v4829 = vpop.f32.mrb[0].mxu0
  %v4830 = vadd.f32 0.0, %v4829
  %v4831 = vpop.f32.mrb[0].mxu0
  %v4832 = vadd.f32 0.0, %v4831
  %v4833 = vpop.f32.mrb[0].mxu0
  %v4834 = vadd.f32 0.0, %v4833
  %v4835 = vpop.f32.mrb[0].mxu0
  %v4836 = vadd.f32 0.0, %v4835
  %4837 = vmatprep.mubr.bf16.mxu0 0
  %4838 = vmatmul.mubr.bf16.gmra.mrb[0].mxu0 %v4485
  %v4839 = vpop.f32.mrb[0].mxu0
  %v4840 = vadd.f32 0.0, %v4839
  %v4841 = vpop.f32.mrb[0].mxu0
  %v4842 = vadd.f32 0.0, %v4841
  %v4843 = vpop.f32.mrb[0].mxu0
  %v4844 = vadd.f32 0.0, %v4843
  %v4845 = vpop.f32.mrb[0].mxu0
  %v4846 = vadd.f32 0.0, %v4845
  %4847 = vmatprep.mubr.bf16.mxu0 0
  %4848 = vmatmul.mubr.bf16.gmra.mrb[0].mxu0 %v4488
  %v4849 = vpop.f32.mrb[0].mxu0
  %v4850 = vadd.f32 0.0, %v4849
  %v4851 = vpop.f32.mrb[0].mxu0
  %v4852 = vadd.f32 0.0, %v4851
  %v4853 = vpop.f32.mrb[0].mxu0
  %v4854 = vadd.f32 0.0, %v4853
  %v4855 = vpop.f32.mrb[0].mxu0
  %v4856 = vadd.f32 0.0, %v4855
  %4857 = vmatprep.mubr.bf16.mxu0 0
  %4858 = vmatmul.mubr.bf16.gmra.mrb[0].mxu0 %v4491
  %v4859 = vpop.f32.mrb[0].mxu0
  %v4860 = vadd.f32 0.0, %v4859
  %v4861 = vpop.f32.mrb[0].mxu0
  %v4862 = vadd.f32 0.0, %v4861
  %v4863 = vpop.f32.mrb[0].mxu0
  %v4864 = vadd.f32 0.0, %v4863
  %v4865 = vpop.f32.mrb[0].mxu0
  %v4866 = vadd.f32 0.0, %v4865
  %4867 = vmatprep.mubr.bf16.mxu0 0
  %4868 = vmatmul.mubr.bf16.gmra.mrb[0].mxu0 %v4494
  %v4869 = vpop.f32.mrb[0].mxu0
  %v4870 = vadd.f32 0.0, %v4869
  %v4871 = vpop.f32.mrb[0].mxu0
  %v4872 = vadd.f32 0.0, %v4871
  %v4873 = vpop.f32.mrb[0].mxu0
  %v4874 = vadd.f32 0.0, %v4873
  %v4875 = vpop.f32.mrb[0].mxu0
  %v4876 = vadd.f32 0.0, %v4875
  %4877 = vmatprep.mubr.bf16.mxu0 0
  %4878 = vmatmul.mubr.bf16.gmra.mrb[0].mxu0 %v4497
  %v4879 = vpop.f32.mrb[0].mxu0
  %v4880 = vadd.f32 0.0, %v4879
  %v4881 = vpop.f32.mrb[0].mxu0
  %v4882 = vadd.f32 0.0, %v4881
  %v4883 = vpop.f32.mrb[0].mxu0
  %v4884 = vadd.f32 0.0, %v4883
  %v4885 = vpop.f32.mrb[0].mxu0
  %v4886 = vadd.f32 0.0, %v4885
  %4887 = vmatprep.mubr.bf16.mxu0 0
  %4888 = vmatmul.mubr.bf16.gmra.mrb[0].mxu0 %v4500
  %v4889 = vpop.f32.mrb[0].mxu0
  %v4890 = vadd.f32 0.0, %v4889
  %v4891 = vpop.f32.mrb[0].mxu0
  %v4892 = vadd.f32 0.0, %v4891
  %v4893 = vpop.f32.mrb[0].mxu0
  %v4894 = vadd.f32 0.0, %v4893
  %v4895 = vpop.f32.mrb[0].mxu0
  %v4896 = vadd.f32 0.0, %v4895
  %4897 = vmatprep.mubr.bf16.mxu0 0
  %4898 = vmatmul.mubr.bf16.gmra.mrb[0].mxu0 %v4503
  %v4899 = vpop.f32.mrb[0].mxu0
  %v4900 = vadd.f32 0.0, %v4899
  %v4901 = vpop.f32.mrb[0].mxu0
  %v4902 = vadd.f32 0.0, %v4901
  %v4903 = vpop.f32.mrb[0].mxu0
  %v4904 = vpop.f32.mrb[0].mxu0
  %4905 = vdwg.mxu0
  %4906 = vmatprep.subr.bf16.mxu0 %v4381
  %4907 = vmatpush1.bf16.msra.mxu0 %v4380
  %4908 = vmatprep.subr.bf16.mxu0 %v4385
  %4909 = vmatpush1.bf16.msra.mxu0 %v4384
  %4910 = vmatprep.subr.bf16.mxu0 0
  %4911 = vmatpush1.bf16.msra.mxu0 0
  %4912 = vmatprep.subr.bf16.mxu0 0
  %4913 = vmatpush1.bf16.msra.mxu0 0
  %4914 = vmatprep.subr.bf16.mxu0 0
  %4915 = vmatpush1.bf16.msra.mxu0 0
  %4916 = vmatprep.subr.bf16.mxu0 0
  %4917 = vmatpush1.bf16.msra.mxu0 0
  %4918 = vmatprep.subr.bf16.mxu0 0
  %4919 = vmatpush1.bf16.msra.mxu0 0
  %4920 = vmatprep.subr.bf16.mxu0 0
  %4921 = vmatpush1.bf16.msra.mxu0 0
  %4922 = vmatprep.subr.bf16.mxu0 0
  %4923 = vmatpush1.bf16.msra.mxu0 0
  %4924 = vmatprep.subr.bf16.mxu0 0
  %4925 = vmatpush1.bf16.msra.mxu0 0
  %4926 = vmatprep.subr.bf16.mxu0 0
  %4927 = vmatpush1.bf16.msra.mxu0 0
  %4928 = vmatprep.subr.bf16.mxu0 0
  %4929 = vmatpush1.bf16.msra.mxu0 0
  %4930 = vmatprep.subr.bf16.mxu0 0
  %4931 = vmatpush1.bf16.msra.mxu0 0
  %4932 = vmatprep.subr.bf16.mxu0 0
  %4933 = vmatpush1.bf16.msra.mxu0 0
  %4934 = vmatprep.subr.bf16.mxu0 0
  %4935 = vmatpush1.bf16.msra.mxu0 0
  %4936 = vmatprep.subr.bf16.mxu0 0
  %4937 = vmatpush1.bf16.msra.mxu0 0
  %4938 = vmatprep.mubr.bf16.mxu0 0
  %4939 = vmatmul.mubr.bf16.gmra.mrb[0].mxu0 %v4395
  %v4940 = vpop.f32.mrb[0].mxu0
  %v4941 = vadd.f32 0.0, %v4940
  %v4942 = vpop.f32.mrb[0].mxu0
  %v4943 = vadd.f32 0.0, %v4942
  %v4944 = vpop.f32.mrb[0].mxu0
  %v4945 = vadd.f32 0.0, %v4944
  %v4946 = vpop.f32.mrb[0].mxu0
  %v4947 = vadd.f32 0.0, %v4946
  %4948 = vmatprep.mubr.bf16.mxu0 0
  %4949 = vmatmul.mubr.bf16.gmra.mrb[0].mxu0 %v4398
  %v4950 = vpop.f32.mrb[0].mxu0
  %v4951 = vadd.f32 0.0, %v4950
  %v4952 = vpop.f32.mrb[0].mxu0
  %v4953 = vadd.f32 0.0, %v4952
  %v4954 = vpop.f32.mrb[0].mxu0
  %v4955 = vadd.f32 0.0, %v4954
  %v4956 = vpop.f32.mrb[0].mxu0
  %v4957 = vadd.f32 0.0, %v4956
  %4958 = vmatprep.mubr.bf16.mxu0 0
  %4959 = vmatmul.mubr.bf16.gmra.mrb[0].mxu0 %v4401
  %v4960 = vpop.f32.mrb[0].mxu0
  %v4961 = vadd.f32 0.0, %v4960
  %v4962 = vpop.f32.mrb[0].mxu0
  %v4963 = vadd.f32 0.0, %v4962
  %v4964 = vpop.f32.mrb[0].mxu0
  %v4965 = vadd.f32 0.0, %v4964
  %v4966 = vpop.f32.mrb[0].mxu0
  %v4967 = vadd.f32 0.0, %v4966
  %4968 = vmatprep.mubr.bf16.mxu0 0
  %4969 = vmatmul.mubr.bf16.gmra.mrb[0].mxu0 %v4404
  %v4970 = vpop.f32.mrb[0].mxu0
  %v4971 = vadd.f32 0.0, %v4970
  %v4972 = vpop.f32.mrb[0].mxu0
  %v4973 = vadd.f32 0.0, %v4972
  %v4974 = vpop.f32.mrb[0].mxu0
  %v4975 = vadd.f32 0.0, %v4974
  %v4976 = vpop.f32.mrb[0].mxu0
  %v4977 = vadd.f32 0.0, %v4976
  %4978 = vmatprep.mubr.bf16.mxu0 0
  %4979 = vmatmul.mubr.bf16.gmra.mrb[0].mxu0 %v4407
  %v4980 = vpop.f32.mrb[0].mxu0
  %v4981 = vadd.f32 0.0, %v4980
  %v4982 = vpop.f32.mrb[0].mxu0
  %v4983 = vadd.f32 0.0, %v4982
  %v4984 = vpop.f32.mrb[0].mxu0
  %v4985 = vadd.f32 0.0, %v4984
  %v4986 = vpop.f32.mrb[0].mxu0
  %v4987 = vadd.f32 0.0, %v4986
  %4988 = vmatprep.mubr.bf16.mxu0 0
  %4989 = vmatmul.mubr.bf16.gmra.mrb[0].mxu0 %v4410
  %v4990 = vpop.f32.mrb[0].mxu0
  %v4991 = vadd.f32 0.0, %v4990
  %v4992 = vpop.f32.mrb[0].mxu0
  %v4993 = vadd.f32 0.0, %v4992
  %v4994 = vpop.f32.mrb[0].mxu0
  %v4995 = vadd.f32 0.0, %v4994
  %v4996 = vpop.f32.mrb[0].mxu0
  %v4997 = vadd.f32 0.0, %v4996
  %4998 = vmatprep.mubr.bf16.mxu0 0
  %4999 = vmatmul.mubr.bf16.gmra.mrb[0].mxu0 %v4413
  %v5000 = vpop.f32.mrb[0].mxu0
  %v5001 = vadd.f32 0.0, %v5000
  %v5002 = vpop.f32.mrb[0].mxu0
  %v5003 = vadd.f32 0.0, %v5002
  %v5004 = vpop.f32.mrb[0].mxu0
  %v5005 = vadd.f32 0.0, %v5004
  %v5006 = vpop.f32.mrb[0].mxu0
  %v5007 = vadd.f32 0.0, %v5006
  %5008 = vmatprep.mubr.bf16.mxu0 0
  %5009 = vmatmul.mubr.bf16.gmra.mrb[0].mxu0 %v4416
  %v5010 = vpop.f32.mrb[0].mxu0
  %v5011 = vadd.f32 0.0, %v5010
  %v5012 = vpop.f32.mrb[0].mxu0
  %v5013 = vadd.f32 0.0, %v5012
  %v5014 = vpop.f32.mrb[0].mxu0
  %v5015 = vadd.f32 0.0, %v5014
  %v5016 = vpop.f32.mrb[0].mxu0
  %v5017 = vadd.f32 0.0, %v5016
  %5018 = vmatprep.mubr.bf16.mxu0 0
  %5019 = vmatmul.mubr.bf16.gmra.mrb[0].mxu0 %v4419
  %v5020 = vpop.f32.mrb[0].mxu0
  %v5021 = vadd.f32 0.0, %v5020
  %v5022 = vpop.f32.mrb[0].mxu0
  %v5023 = vadd.f32 0.0, %v5022
  %v5024 = vpop.f32.mrb[0].mxu0
  %v5025 = vadd.f32 0.0, %v5024
  %v5026 = vpop.f32.mrb[0].mxu0
  %v5027 = vadd.f32 0.0, %v5026
  %5028 = vmatprep.mubr.bf16.mxu0 0
  %5029 = vmatmul.mubr.bf16.gmra.mrb[0].mxu0 %v4422
  %v5030 = vpop.f32.mrb[0].mxu0
  %v5031 = vadd.f32 0.0, %v5030
  %v5032 = vpop.f32.mrb[0].mxu0
  %v5033 = vadd.f32 0.0, %v5032
  %v5034 = vpop.f32.mrb[0].mxu0
  %v5035 = vadd.f32 0.0, %v5034
  %v5036 = vpop.f32.mrb[0].mxu0
  %v5037 = vadd.f32 0.0, %v5036
  %5038 = vmatprep.mubr.bf16.mxu0 0
  %5039 = vmatmul.mubr.bf16.gmra.mrb[0].mxu0 %v4425
  %v5040 = vpop.f32.mrb[0].mxu0
  %v5041 = vadd.f32 0.0, %v5040
  %v5042 = vpop.f32.mrb[0].mxu0
  %v5043 = vadd.f32 0.0, %v5042
  %v5044 = vpop.f32.mrb[0].mxu0
  %v5045 = vadd.f32 0.0, %v5044
  %v5046 = vpop.f32.mrb[0].mxu0
  %v5047 = vadd.f32 0.0, %v5046
  %5048 = vmatprep.mubr.bf16.mxu0 0
  %5049 = vmatmul.mubr.bf16.gmra.mrb[0].mxu0 %v4428
  %v5050 = vpop.f32.mrb[0].mxu0
  %v5051 = vadd.f32 0.0, %v5050
  %v5052 = vpop.f32.mrb[0].mxu0
  %v5053 = vadd.f32 0.0, %v5052
  %v5054 = vpop.f32.mrb[0].mxu0
  %v5055 = vadd.f32 0.0, %v5054
  %v5056 = vpop.f32.mrb[0].mxu0
  %v5057 = vadd.f32 0.0, %v5056
  %5058 = vmatprep.mubr.bf16.mxu0 0
  %5059 = vmatmul.mubr.bf16.gmra.mrb[0].mxu0 %v4431
  %v5060 = vpop.f32.mrb[0].mxu0
  %v5061 = vadd.f32 0.0, %v5060
  %v5062 = vpop.f32.mrb[0].mxu0
  %v5063 = vadd.f32 0.0, %v5062
  %v5064 = vpop.f32.mrb[0].mxu0
  %v5065 = vadd.f32 0.0, %v5064
  %v5066 = vpop.f32.mrb[0].mxu0
  %v5067 = vadd.f32 0.0, %v5066
  %5068 = vmatprep.mubr.bf16.mxu0 0
  %5069 = vmatmul.mubr.bf16.gmra.mrb[0].mxu0 %v4434
  %v5070 = vpop.f32.mrb[0].mxu0
  %v5071 = vadd.f32 0.0, %v5070
  %v5072 = vpop.f32.mrb[0].mxu0
  %v5073 = vadd.f32 0.0, %v5072
  %v5074 = vpop.f32.mrb[0].mxu0
  %v5075 = vadd.f32 0.0, %v5074
  %v5076 = vpop.f32.mrb[0].mxu0
  %v5077 = vadd.f32 0.0, %v5076
  %5078 = vmatprep.mubr.bf16.mxu0 0
  %5079 = vmatmul.mubr.bf16.gmra.mrb[0].mxu0 %v4437
  %v5080 = vpop.f32.mrb[0].mxu0
  %v5081 = vadd.f32 0.0, %v5080
  %v5082 = vpop.f32.mrb[0].mxu0
  %v5083 = vadd.f32 0.0, %v5082
  %v5084 = vpop.f32.mrb[0].mxu0
  %v5085 = vadd.f32 0.0, %v5084
  %v5086 = vpop.f32.mrb[0].mxu0
  %v5087 = vadd.f32 0.0, %v5086
  %5088 = vmatprep.mubr.bf16.mxu0 0
  %5089 = vmatmul.mubr.bf16.gmra.mrb[0].mxu0 %v4440
  %v5090 = vpop.f32.mrb[0].mxu0
  %v5091 = vadd.f32 0.0, %v5090
  %v5092 = vpop.f32.mrb[0].mxu0
  %v5093 = vadd.f32 0.0, %v5092
  %v5094 = vpop.f32.mrb[0].mxu0
  %v5095 = vadd.f32 0.0, %v5094
  %v5096 = vpop.f32.mrb[0].mxu0
  %v5097 = vadd.f32 0.0, %v5096
  %5098 = vmatprep.mubr.bf16.mxu0 0
  %5099 = vmatmul.mubr.bf16.gmra.mrb[0].mxu0 %v4443
  %v5100 = vpop.f32.mrb[0].mxu0
  %v5101 = vadd.f32 0.0, %v5100
  %v5102 = vpop.f32.mrb[0].mxu0
  %v5103 = vadd.f32 0.0, %v5102
  %v5104 = vpop.f32.mrb[0].mxu0
  %v5105 = vadd.f32 0.0, %v5104
  %v5106 = vpop.f32.mrb[0].mxu0
  %v5107 = vadd.f32 0.0, %v5106
  %5108 = vmatprep.mubr.bf16.mxu0 0
  %5109 = vmatmul.mubr.bf16.gmra.mrb[0].mxu0 %v4446
  %v5110 = vpop.f32.mrb[0].mxu0
  %v5111 = vadd.f32 0.0, %v5110
  %v5112 = vpop.f32.mrb[0].mxu0
  %v5113 = vadd.f32 0.0, %v5112
  %v5114 = vpop.f32.mrb[0].mxu0
  %v5115 = vadd.f32 0.0, %v5114
  %v5116 = vpop.f32.mrb[0].mxu0
  %v5117 = vadd.f32 0.0, %v5116
  %5118 = vmatprep.mubr.bf16.mxu0 0
  %5119 = vmatmul.mubr.bf16.gmra.mrb[0].mxu0 %v4449
  %v5120 = vpop.f32.mrb[0].mxu0
  %v5121 = vadd.f32 0.0, %v5120
  %v5122 = vpop.f32.mrb[0].mxu0
  %v5123 = vadd.f32 0.0, %v5122
  %v5124 = vpop.f32.mrb[0].mxu0
  %v5125 = vadd.f32 0.0, %v5124
  %v5126 = vpop.f32.mrb[0].mxu0
  %v5127 = vadd.f32 0.0, %v5126
  %5128 = vmatprep.mubr.bf16.mxu0 0
  %5129 = vmatmul.mubr.bf16.gmra.mrb[0].mxu0 %v4452
  %v5130 = vpop.f32.mrb[0].mxu0
  %v5131 = vadd.f32 0.0, %v5130
  %v5132 = vpop.f32.mrb[0].mxu0
  %v5133 = vadd.f32 0.0, %v5132
  %v5134 = vpop.f32.mrb[0].mxu0
  %v5135 = vadd.f32 0.0, %v5134
  %v5136 = vpop.f32.mrb[0].mxu0
  %v5137 = vadd.f32 0.0, %v5136
  %5138 = vmatprep.mubr.bf16.mxu0 0
  %5139 = vmatmul.mubr.bf16.gmra.mrb[0].mxu0 %v4455
  %v5140 = vpop.f32.mrb[0].mxu0
  %v5141 = vadd.f32 0.0, %v5140
  %v5142 = vpop.f32.mrb[0].mxu0
  %v5143 = vadd.f32 0.0, %v5142
  %v5144 = vpop.f32.mrb[0].mxu0
  %v5145 = vadd.f32 0.0, %v5144
  %v5146 = vpop.f32.mrb[0].mxu0
  %v5147 = vadd.f32 0.0, %v5146
  %5148 = vmatprep.mubr.bf16.mxu0 0
  %5149 = vmatmul.mubr.bf16.gmra.mrb[0].mxu0 %v4458
  %v5150 = vpop.f32.mrb[0].mxu0
  %v5151 = vadd.f32 0.0, %v5150
  %v5152 = vpop.f32.mrb[0].mxu0
  %v5153 = vadd.f32 0.0, %v5152
  %v5154 = vpop.f32.mrb[0].mxu0
  %v5155 = vadd.f32 0.0, %v5154
  %v5156 = vpop.f32.mrb[0].mxu0
  %v5157 = vadd.f32 0.0, %v5156
  %5158 = vmatprep.mubr.bf16.mxu0 0
  %5159 = vmatmul.mubr.bf16.gmra.mrb[0].mxu0 %v4461
  %v5160 = vpop.f32.mrb[0].mxu0
  %v5161 = vadd.f32 0.0, %v5160
  %v5162 = vpop.f32.mrb[0].mxu0
  %v5163 = vadd.f32 0.0, %v5162
  %v5164 = vpop.f32.mrb[0].mxu0
  %v5165 = vadd.f32 0.0, %v5164
  %v5166 = vpop.f32.mrb[0].mxu0
  %v5167 = vadd.f32 0.0, %v5166
  %5168 = vmatprep.mubr.bf16.mxu0 0
  %5169 = vmatmul.mubr.bf16.gmra.mrb[0].mxu0 %v4464
  %v5170 = vpop.f32.mrb[0].mxu0
  %v5171 = vadd.f32 0.0, %v5170
  %v5172 = vpop.f32.mrb[0].mxu0
  %v5173 = vadd.f32 0.0, %v5172
  %v5174 = vpop.f32.mrb[0].mxu0
  %v5175 = vadd.f32 0.0, %v5174
  %v5176 = vpop.f32.mrb[0].mxu0
  %v5177 = vadd.f32 0.0, %v5176
  %5178 = vmatprep.mubr.bf16.mxu0 0
  %5179 = vmatmul.mubr.bf16.gmra.mrb[0].mxu0 %v4467
  %v5180 = vpop.f32.mrb[0].mxu0
  %v5181 = vadd.f32 0.0, %v5180
  %v5182 = vpop.f32.mrb[0].mxu0
  %v5183 = vadd.f32 0.0, %v5182
  %v5184 = vpop.f32.mrb[0].mxu0
  %v5185 = vadd.f32 0.0, %v5184
  %v5186 = vpop.f32.mrb[0].mxu0
  %v5187 = vadd.f32 0.0, %v5186
  %5188 = vmatprep.mubr.bf16.mxu0 0
  %5189 = vmatmul.mubr.bf16.gmra.mrb[0].mxu0 %v4470
  %v5190 = vpop.f32.mrb[0].mxu0
  %v5191 = vadd.f32 0.0, %v5190
  %v5192 = vpop.f32.mrb[0].mxu0
  %v5193 = vadd.f32 0.0, %v5192
  %v5194 = vpop.f32.mrb[0].mxu0
  %v5195 = vadd.f32 0.0, %v5194
  %v5196 = vpop.f32.mrb[0].mxu0
  %v5197 = vadd.f32 0.0, %v5196
  %5198 = vmatprep.mubr.bf16.mxu0 0
  %5199 = vmatmul.mubr.bf16.gmra.mrb[0].mxu0 %v4473
  %v5200 = vpop.f32.mrb[0].mxu0
  %v5201 = vadd.f32 0.0, %v5200
  %v5202 = vpop.f32.mrb[0].mxu0
  %v5203 = vadd.f32 0.0, %v5202
  %v5204 = vpop.f32.mrb[0].mxu0
  %v5205 = vadd.f32 0.0, %v5204
  %v5206 = vpop.f32.mrb[0].mxu0
  %v5207 = vadd.f32 0.0, %v5206
  %5208 = vmatprep.mubr.bf16.mxu0 0
  %5209 = vmatmul.mubr.bf16.gmra.mrb[0].mxu0 %v4476
  %v5210 = vpop.f32.mrb[0].mxu0
  %v5211 = vadd.f32 0.0, %v5210
  %v5212 = vpop.f32.mrb[0].mxu0
  %v5213 = vadd.f32 0.0, %v5212
  %v5214 = vpop.f32.mrb[0].mxu0
  %v5215 = vadd.f32 0.0, %v5214
  %v5216 = vpop.f32.mrb[0].mxu0
  %v5217 = vadd.f32 0.0, %v5216
  %5218 = vmatprep.mubr.bf16.mxu0 0
  %5219 = vmatmul.mubr.bf16.gmra.mrb[0].mxu0 %v4479
  %v5220 = vpop.f32.mrb[0].mxu0
  %v5221 = vadd.f32 0.0, %v5220
  %v5222 = vpop.f32.mrb[0].mxu0
  %v5223 = vadd.f32 0.0, %v5222
  %v5224 = vpop.f32.mrb[0].mxu0
  %v5225 = vadd.f32 0.0, %v5224
  %v5226 = vpop.f32.mrb[0].mxu0
  %v5227 = vadd.f32 0.0, %v5226
  %5228 = vmatprep.mubr.bf16.mxu0 0
  %5229 = vmatmul.mubr.bf16.gmra.mrb[0].mxu0 %v4482
  %v5230 = vpop.f32.mrb[0].mxu0
  %v5231 = vadd.f32 0.0, %v5230
  %v5232 = vpop.f32.mrb[0].mxu0
  %v5233 = vadd.f32 0.0, %v5232
  %v5234 = vpop.f32.mrb[0].mxu0
  %v5235 = vadd.f32 0.0, %v5234
  %v5236 = vpop.f32.mrb[0].mxu0
  %v5237 = vadd.f32 0.0, %v5236
  %5238 = vmatprep.mubr.bf16.mxu0 0
  %5239 = vmatmul.mubr.bf16.gmra.mrb[0].mxu0 %v4485
  %v5240 = vpop.f32.mrb[0].mxu0
  %v5241 = vadd.f32 0.0, %v5240
  %v5242 = vpop.f32.mrb[0].mxu0
  %v5243 = vadd.f32 0.0, %v5242
  %v5244 = vpop.f32.mrb[0].mxu0
  %v5245 = vadd.f32 0.0, %v5244
  %v5246 = vpop.f32.mrb[0].mxu0
  %v5247 = vadd.f32 0.0, %v5246
  %5248 = vmatprep.mubr.bf16.mxu0 0
  %5249 = vmatmul.mubr.bf16.gmra.mrb[0].mxu0 %v4488
  %v5250 = vpop.f32.mrb[0].mxu0
  %v5251 = vadd.f32 0.0, %v5250
  %v5252 = vpop.f32.mrb[0].mxu0
  %v5253 = vadd.f32 0.0, %v5252
  %v5254 = vpop.f32.mrb[0].mxu0
  %v5255 = vadd.f32 0.0, %v5254
  %v5256 = vpop.f32.mrb[0].mxu0
  %v5257 = vadd.f32 0.0, %v5256
  %5258 = vmatprep.mubr.bf16.mxu0 0
  %5259 = vmatmul.mubr.bf16.gmra.mrb[0].mxu0 %v4491
  %v5260 = vpop.f32.mrb[0].mxu0
  %v5261 = vadd.f32 0.0, %v5260
  %v5262 = vpop.f32.mrb[0].mxu0
  %v5263 = vadd.f32 0.0, %v5262
  %v5264 = vpop.f32.mrb[0].mxu0
  %v5265 = vadd.f32 0.0, %v5264
  %v5266 = vpop.f32.mrb[0].mxu0
  %v5267 = vadd.f32 0.0, %v5266
  %5268 = vmatprep.mubr.bf16.mxu0 0
  %5269 = vmatmul.mubr.bf16.gmra.mrb[0].mxu0 %v4494
  %v5270 = vpop.f32.mrb[0].mxu0
  %v5271 = vadd.f32 0.0, %v5270
  %v5272 = vpop.f32.mrb[0].mxu0
  %v5273 = vadd.f32 0.0, %v5272
  %v5274 = vpop.f32.mrb[0].mxu0
  %v5275 = vadd.f32 0.0, %v5274
  %v5276 = vpop.f32.mrb[0].mxu0
  %v5277 = vadd.f32 0.0, %v5276
  %5278 = vmatprep.mubr.bf16.mxu0 0
  %5279 = vmatmul.mubr.bf16.gmra.mrb[0].mxu0 %v4497
  %v5280 = vpop.f32.mrb[0].mxu0
  %v5281 = vadd.f32 0.0, %v5280
  %v5282 = vpop.f32.mrb[0].mxu0
  %v5283 = vadd.f32 0.0, %v5282
  %v5284 = vpop.f32.mrb[0].mxu0
  %v5285 = vadd.f32 0.0, %v5284
  %v5286 = vpop.f32.mrb[0].mxu0
  %v5287 = vadd.f32 0.0, %v5286
  %5288 = vmatprep.mubr.bf16.mxu0 0
  %5289 = vmatmul.mubr.bf16.gmra.mrb[0].mxu0 %v4500
  %v5290 = vpop.f32.mrb[0].mxu0
  %v5291 = vadd.f32 0.0, %v5290
  %v5292 = vpop.f32.mrb[0].mxu0
  %v5293 = vadd.f32 0.0, %v5292
  %v5294 = vpop.f32.mrb[0].mxu0
  %v5295 = vadd.f32 0.0, %v5294
  %v5296 = vpop.f32.mrb[0].mxu0
  %v5297 = vadd.f32 0.0, %v5296
  %5298 = vmatprep.mubr.bf16.mxu0 0
  %5299 = vmatmul.mubr.bf16.gmra.mrb[0].mxu0 %v4503
  %v5300 = vpop.f32.mrb[0].mxu0
  %v5301 = vadd.f32 0.0, %v5300
  %v5302 = vpop.f32.mrb[0].mxu0
  %v5303 = vadd.f32 0.0, %v5302
  %v5304 = vpop.f32.mrb[0].mxu0
  %v5305 = vpop.f32.mrb[0].mxu0
  %5306 = vdwg.mxu0
  %v5307 = vadd.f32 %v3975, %v4540
  %v5308 = vadd.f32 %v3976, %v4542
  %v5309 = vadd.f32 %v3977, %v4941
  %v5310 = vadd.f32 %v3978, %v4943
  %v5311 = vadd.f32 %v3979, %v4544
  %v5312 = vadd.f32 %v3980, %v4546
  %v5313 = vadd.f32 %v3981, %v4945
  %v5314 = vadd.f32 %v3982, %v4947
  %v5315 = vadd.f32 %v3983, %v4550
  %v5316 = vadd.f32 %v3984, %v4552
  %v5317 = vadd.f32 %v3985, %v4951
  %v5318 = vadd.f32 %v3986, %v4953
  %v5319 = vadd.f32 %v3987, %v4554
  %v5320 = vadd.f32 %v3988, %v4556
  %v5321 = vadd.f32 %v3989, %v4955
  %v5322 = vadd.f32 %v3990, %v4957
  %v5323 = vadd.f32 %v3991, %v4560
  %v5324 = vadd.f32 %v3992, %v4562
  %v5325 = vadd.f32 %v3993, %v4961
  %v5326 = vadd.f32 %v3994, %v4963
  %v5327 = vadd.f32 %v3995, %v4564
  %v5328 = vadd.f32 %v3996, %v4566
  %v5329 = vadd.f32 %v3997, %v4965
  %v5330 = vadd.f32 %v3998, %v4967
  %v5331 = vadd.f32 %v3999, %v4570
  %v5332 = vadd.f32 %v4000, %v4572
  %v5333 = vadd.f32 %v4001, %v4971
  %v5334 = vadd.f32 %v4002, %v4973
  %v5335 = vadd.f32 %v4003, %v4574
  %v5336 = vadd.f32 %v4004, %v4576
  %v5337 = vadd.f32 %v4005, %v4975
  %v5338 = vadd.f32 %v4006, %v4977
  %v5339 = vadd.f32 %v4007, %v4580
  %v5340 = vadd.f32 %v4008, %v4582
  %v5341 = vadd.f32 %v4009, %v4981
  %v5342 = vadd.f32 %v4010, %v4983
  %v5343 = vadd.f32 %v4011, %v4584
  %v5344 = vadd.f32 %v4012, %v4586
  %v5345 = vadd.f32 %v4013, %v4985
  %v5346 = vadd.f32 %v4014, %v4987
  %v5347 = vadd.f32 %v4015, %v4590
  %v5348 = vadd.f32 %v4016, %v4592
  %v5349 = vadd.f32 %v4017, %v4991
  %v5350 = vadd.f32 %v4018, %v4993
  %v5351 = vadd.f32 %v4019, %v4594
  %v5352 = vadd.f32 %v4020, %v4596
  %v5353 = vadd.f32 %v4021, %v4995
  %v5354 = vadd.f32 %v4022, %v4997
  %v5355 = vadd.f32 %v4023, %v4600
  %v5356 = vadd.f32 %v4024, %v4602
  %v5357 = vadd.f32 %v4025, %v5001
  %v5358 = vadd.f32 %v4026, %v5003
  %v5359 = vadd.f32 %v4027, %v4604
  %v5360 = vadd.f32 %v4028, %v4606
  %v5361 = vadd.f32 %v4029, %v5005
  %v5362 = vadd.f32 %v4030, %v5007
  %v5363 = vadd.f32 %v4031, %v4610
  %v5364 = vadd.f32 %v4032, %v4612
  %v5365 = vadd.f32 %v4033, %v5011
  %v5366 = vadd.f32 %v4034, %v5013
  %v5367 = vadd.f32 %v4035, %v4614
  %v5368 = vadd.f32 %v4036, %v4616
  %v5369 = vadd.f32 %v4037, %v5015
  %v5370 = vadd.f32 %v4038, %v5017
  %v5371 = vadd.f32 %v4039, %v4620
  %v5372 = vadd.f32 %v4040, %v4622
  %v5373 = vadd.f32 %v4041, %v5021
  %v5374 = vadd.f32 %v4042, %v5023
  %v5375 = vadd.f32 %v4043, %v4624
  %v5376 = vadd.f32 %v4044, %v4626
  %v5377 = vadd.f32 %v4045, %v5025
  %v5378 = vadd.f32 %v4046, %v5027
  %v5379 = vadd.f32 %v4047, %v4630
  %v5380 = vadd.f32 %v4048, %v4632
  %v5381 = vadd.f32 %v4049, %v5031
  %v5382 = vadd.f32 %v4050, %v5033
  %v5383 = vadd.f32 %v4051, %v4634
  %v5384 = vadd.f32 %v4052, %v4636
  %v5385 = vadd.f32 %v4053, %v5035
  %v5386 = vadd.f32 %v4054, %v5037
  %v5387 = vadd.f32 %v4055, %v4640
  %v5388 = vadd.f32 %v4056, %v4642
  %v5389 = vadd.f32 %v4057, %v5041
  %v5390 = vadd.f32 %v4058, %v5043
  %v5391 = vadd.f32 %v4059, %v4644
  %v5392 = vadd.f32 %v4060, %v4646
  %v5393 = vadd.f32 %v4061, %v5045
  %v5394 = vadd.f32 %v4062, %v5047
  %v5395 = vadd.f32 %v4063, %v4650
  %v5396 = vadd.f32 %v4064, %v4652
  %v5397 = vadd.f32 %v4065, %v5051
  %v5398 = vadd.f32 %v4066, %v5053
  %v5399 = vadd.f32 %v4067, %v4654
  %v5400 = vadd.f32 %v4068, %v4656
  %v5401 = vadd.f32 %v4069, %v5055
  %v5402 = vadd.f32 %v4070, %v5057
  %v5403 = vadd.f32 %v4071, %v4660
  %v5404 = vadd.f32 %v4072, %v4662
  %v5405 = vadd.f32 %v4073, %v5061
  %v5406 = vadd.f32 %v4074, %v5063
  %v5407 = vadd.f32 %v4075, %v4664
  %v5408 = vadd.f32 %v4076, %v4666
  %v5409 = vadd.f32 %v4077, %v5065
  %v5410 = vadd.f32 %v4078, %v5067
  %v5411 = vadd.f32 %v4079, %v4670
  %v5412 = vadd.f32 %v4080, %v4672
  %v5413 = vadd.f32 %v4081, %v5071
  %v5414 = vadd.f32 %v4082, %v5073
  %v5415 = vadd.f32 %v4083, %v4674
  %v5416 = vadd.f32 %v4084, %v4676
  %v5417 = vadd.f32 %v4085, %v5075
  %v5418 = vadd.f32 %v4086, %v5077
  %v5419 = vadd.f32 %v4087, %v4680
  %v5420 = vadd.f32 %v4088, %v4682
  %v5421 = vadd.f32 %v4089, %v5081
  %v5422 = vadd.f32 %v4090, %v5083
  %v5423 = vadd.f32 %v4091, %v4684
  %v5424 = vadd.f32 %v4092, %v4686
  %v5425 = vadd.f32 %v4093, %v5085
  %v5426 = vadd.f32 %v4094, %v5087
  %v5427 = vadd.f32 %v4095, %v4690
  %v5428 = vadd.f32 %v4096, %v4692
  %v5429 = vadd.f32 %v4097, %v5091
  %v5430 = vadd.f32 %v4098, %v5093
  %v5431 = vadd.f32 %v4099, %v4694
  %v5432 = vadd.f32 %v4100, %v4696
  %v5433 = vadd.f32 %v4101, %v5095
  %v5434 = vadd.f32 %v4102, %v5097
  %v5435 = vadd.f32 %v4103, %v4700
  %v5436 = vadd.f32 %v4104, %v4702
  %v5437 = vadd.f32 %v4105, %v5101
  %v5438 = vadd.f32 %v4106, %v5103
  %v5439 = vadd.f32 %v4107, %v4704
  %v5440 = vadd.f32 %v4108, %v4706
  %v5441 = vadd.f32 %v4109, %v5105
  %v5442 = vadd.f32 %v4110, %v5107
  %v5443 = vadd.f32 %v4111, %v4710
  %v5444 = vadd.f32 %v4112, %v4712
  %v5445 = vadd.f32 %v4113, %v5111
  %v5446 = vadd.f32 %v4114, %v5113
  %v5447 = vadd.f32 %v4115, %v4714
  %v5448 = vadd.f32 %v4116, %v4716
  %v5449 = vadd.f32 %v4117, %v5115
  %v5450 = vadd.f32 %v4118, %v5117
  %v5451 = vadd.f32 %v4119, %v4720
  %v5452 = vadd.f32 %v4120, %v4722
  %v5453 = vadd.f32 %v4121, %v5121
  %v5454 = vadd.f32 %v4122, %v5123
  %v5455 = vadd.f32 %v4123, %v4724
  %v5456 = vadd.f32 %v4124, %v4726
  %v5457 = vadd.f32 %v4125, %v5125
  %v5458 = vadd.f32 %v4126, %v5127
  %v5459 = vadd.f32 %v4127, %v4730
  %v5460 = vadd.f32 %v4128, %v4732
  %v5461 = vadd.f32 %v4129, %v5131
  %v5462 = vadd.f32 %v4130, %v5133
  %v5463 = vadd.f32 %v4131, %v4734
  %v5464 = vadd.f32 %v4132, %v4736
  %v5465 = vadd.f32 %v4133, %v5135
  %v5466 = vadd.f32 %v4134, %v5137
  %v5467 = vadd.f32 %v4135, %v4740
  %v5468 = vadd.f32 %v4136, %v4742
  %v5469 = vadd.f32 %v4137, %v5141
  %v5470 = vadd.f32 %v4138, %v5143
  %v5471 = vadd.f32 %v4139, %v4744
  %v5472 = vadd.f32 %v4140, %v4746
  %v5473 = vadd.f32 %v4141, %v5145
  %v5474 = vadd.f32 %v4142, %v5147
  %v5475 = vadd.f32 %v4143, %v4750
  %v5476 = vadd.f32 %v4144, %v4752
  %v5477 = vadd.f32 %v4145, %v5151
  %v5478 = vadd.f32 %v4146, %v5153
  %v5479 = vadd.f32 %v4147, %v4754
  %v5480 = vadd.f32 %v4148, %v4756
  %v5481 = vadd.f32 %v4149, %v5155
  %v5482 = vadd.f32 %v4150, %v5157
  %v5483 = vadd.f32 %v4151, %v4760
  %v5484 = vadd.f32 %v4152, %v4762
  %v5485 = vadd.f32 %v4153, %v5161
  %v5486 = vadd.f32 %v4154, %v5163
  %v5487 = vadd.f32 %v4155, %v4764
  %v5488 = vadd.f32 %v4156, %v4766
  %v5489 = vadd.f32 %v4157, %v5165
  %v5490 = vadd.f32 %v4158, %v5167
  %v5491 = vadd.f32 %v4159, %v4770
  %v5492 = vadd.f32 %v4160, %v4772
  %v5493 = vadd.f32 %v4161, %v5171
  %v5494 = vadd.f32 %v4162, %v5173
  %v5495 = vadd.f32 %v4163, %v4774
  %v5496 = vadd.f32 %v4164, %v4776
  %v5497 = vadd.f32 %v4165, %v5175
  %v5498 = vadd.f32 %v4166, %v5177
  %v5499 = vadd.f32 %v4167, %v4780
  %v5500 = vadd.f32 %v4168, %v4782
  %v5501 = vadd.f32 %v4169, %v5181
  %v5502 = vadd.f32 %v4170, %v5183
  %v5503 = vadd.f32 %v4171, %v4784
  %v5504 = vadd.f32 %v4172, %v4786
  %v5505 = vadd.f32 %v4173, %v5185
  %v5506 = vadd.f32 %v4174, %v5187
  %v5507 = vadd.f32 %v4175, %v4790
  %v5508 = vadd.f32 %v4176, %v4792
  %v5509 = vadd.f32 %v4177, %v5191
  %v5510 = vadd.f32 %v4178, %v5193
  %v5511 = vadd.f32 %v4179, %v4794
  %v5512 = vadd.f32 %v4180, %v4796
  %v5513 = vadd.f32 %v4181, %v5195
  %v5514 = vadd.f32 %v4182, %v5197
  %v5515 = vadd.f32 %v4183, %v4800
  %v5516 = vadd.f32 %v4184, %v4802
  %v5517 = vadd.f32 %v4185, %v5201
  %v5518 = vadd.f32 %v4186, %v5203
  %v5519 = vadd.f32 %v4187, %v4804
  %v5520 = vadd.f32 %v4188, %v4806
  %v5521 = vadd.f32 %v4189, %v5205
  %v5522 = vadd.f32 %v4190, %v5207
  %v5523 = vadd.f32 %v4191, %v4810
  %v5524 = vadd.f32 %v4192, %v4812
  %v5525 = vadd.f32 %v4193, %v5211
  %v5526 = vadd.f32 %v4194, %v5213
  %v5527 = vadd.f32 %v4195, %v4814
  %v5528 = vadd.f32 %v4196, %v4816
  %v5529 = vadd.f32 %v4197, %v5215
  %v5530 = vadd.f32 %v4198, %v5217
  %v5531 = vadd.f32 %v4199, %v4820
  %v5532 = vadd.f32 %v4200, %v4822
  %v5533 = vadd.f32 %v4201, %v5221
  %v5534 = vadd.f32 %v4202, %v5223
  %v5535 = vadd.f32 %v4203, %v4824
  %v5536 = vadd.f32 %v4204, %v4826
  %v5537 = vadd.f32 %v4205, %v5225
  %v5538 = vadd.f32 %v4206, %v5227
  %v5539 = vadd.f32 %v4207, %v4830
  %v5540 = vadd.f32 %v4208, %v4832
  %v5541 = vadd.f32 %v4209, %v5231
  %v5542 = vadd.f32 %v4210, %v5233
  %v5543 = vadd.f32 %v4211, %v4834
  %v5544 = vadd.f32 %v4212, %v4836
  %v5545 = vadd.f32 %v4213, %v5235
  %v5546 = vadd.f32 %v4214, %v5237
  %v5547 = vadd.f32 %v4215, %v4840
  %v5548 = vadd.f32 %v4216, %v4842
  %v5549 = vadd.f32 %v4217, %v5241
  %v5550 = vadd.f32 %v4218, %v5243
  %v5551 = vadd.f32 %v4219, %v4844
  %v5552 = vadd.f32 %v4220, %v4846
  %v5553 = vadd.f32 %v4221, %v5245
  %v5554 = vadd.f32 %v4222, %v5247
  %v5555 = vadd.f32 %v4223, %v4850
  %v5556 = vadd.f32 %v4224, %v4852
  %v5557 = vadd.f32 %v4225, %v5251
  %v5558 = vadd.f32 %v4226, %v5253
  %v5559 = vadd.f32 %v4227, %v4854
  %v5560 = vadd.f32 %v4228, %v4856
  %v5561 = vadd.f32 %v4229, %v5255
  %v5562 = vadd.f32 %v4230, %v5257
  %v5563 = vadd.f32 %v4231, %v4860
  %v5564 = vadd.f32 %v4232, %v4862
  %v5565 = vadd.f32 %v4233, %v5261
  %v5566 = vadd.f32 %v4234, %v5263
  %v5567 = vadd.f32 %v4235, %v4864
  %v5568 = vadd.f32 %v4236, %v4866
  %v5569 = vadd.f32 %v4237, %v5265
  %v5570 = vadd.f32 %v4238, %v5267
  %v5571 = vadd.f32 %v4239, %v4870
  %v5572 = vadd.f32 %v4240, %v4872
  %v5573 = vadd.f32 %v4241, %v5271
  %v5574 = vadd.f32 %v4242, %v5273
  %v5575 = vadd.f32 %v4243, %v4874
  %v5576 = vadd.f32 %v4244, %v4876
  %v5577 = vadd.f32 %v4245, %v5275
  %v5578 = vadd.f32 %v4246, %v5277
  %v5579 = vadd.f32 %v4247, %v4880
  %v5580 = vadd.f32 %v4248, %v4882
  %v5581 = vadd.f32 %v4249, %v5281
  %v5582 = vadd.f32 %v4250, %v5283
  %v5583 = vadd.f32 %v4251, %v4884
  %v5584 = vadd.f32 %v4252, %v4886
  %v5585 = vadd.f32 %v4253, %v5285
  %v5586 = vadd.f32 %v4254, %v5287
  %v5587 = vadd.f32 %v4255, %v4890
  %v5588 = vadd.f32 %v4256, %v4892
  %v5589 = vadd.f32 %v4257, %v5291
  %v5590 = vadd.f32 %v4258, %v5293
  %v5591 = vadd.f32 %v4259, %v4894
  %v5592 = vadd.f32 %v4260, %v4896
  %v5593 = vadd.f32 %v4261, %v5295
  %v5594 = vadd.f32 %v4262, %v5297
  %v5595 = vadd.f32 %v4263, %v4900
  %v5596 = vadd.f32 %v4264, %v4902
  %v5597 = vadd.f32 %v4265, %v5301
  %v5598 = vadd.f32 %v4266, %v5303
  %v5599 = vmax.f32 %v5307, %v5308
  %v5600 = vmax.f32 %v5311, %v5312
  %v5601 = vmax.f32 %v5315, %v5316
  %v5602 = vmax.f32 %v5319, %v5320
  %v5603 = vmax.f32 %v5323, %v5324
  %v5604 = vmax.f32 %v5327, %v5328
  %v5605 = vmax.f32 %v5331, %v5332
  %v5606 = vmax.f32 %v5335, %v5336
  %v5607 = vmax.f32 %v5339, %v5340
  %v5608 = vmax.f32 %v5343, %v5344
  %v5609 = vmax.f32 %v5347, %v5348
  %v5610 = vmax.f32 %v5351, %v5352
  %v5611 = vmax.f32 %v5355, %v5356
  %v5612 = vmax.f32 %v5359, %v5360
  %v5613 = vmax.f32 %v5363, %v5364
  %v5614 = vmax.f32 %v5367, %v5368
  %v5615 = vmax.f32 %v5371, %v5372
  %v5616 = vmax.f32 %v5375, %v5376
  %v5617 = vmax.f32 %v5379, %v5380
  %v5618 = vmax.f32 %v5383, %v5384
  %v5619 = vmax.f32 %v5387, %v5388
  %v5620 = vmax.f32 %v5391, %v5392
  %v5621 = vmax.f32 %v5395, %v5396
  %v5622 = vmax.f32 %v5399, %v5400
  %v5623 = vmax.f32 %v5403, %v5404
  %v5624 = vmax.f32 %v5407, %v5408
  %v5625 = vmax.f32 %v5411, %v5412
  %v5626 = vmax.f32 %v5415, %v5416
  %v5627 = vmax.f32 %v5419, %v5420
  %v5628 = vmax.f32 %v5423, %v5424
  %v5629 = vmax.f32 %v5427, %v5428
  %v5630 = vmax.f32 %v5431, %v5432
  %v5631 = vmax.f32 %v5435, %v5436
  %v5632 = vmax.f32 %v5439, %v5440
  %v5633 = vmax.f32 %v5443, %v5444
  %v5634 = vmax.f32 %v5447, %v5448
  %v5635 = vmax.f32 %v5451, %v5452
  %v5636 = vmax.f32 %v5455, %v5456
  %v5637 = vmax.f32 %v5459, %v5460
  %v5638 = vmax.f32 %v5463, %v5464
  %v5639 = vmax.f32 %v5467, %v5468
  %v5640 = vmax.f32 %v5471, %v5472
  %v5641 = vmax.f32 %v5475, %v5476
  %v5642 = vmax.f32 %v5479, %v5480
  %v5643 = vmax.f32 %v5483, %v5484
  %v5644 = vmax.f32 %v5487, %v5488
  %v5645 = vmax.f32 %v5491, %v5492
  %v5646 = vmax.f32 %v5495, %v5496
  %v5647 = vmax.f32 %v5499, %v5500
  %v5648 = vmax.f32 %v5503, %v5504
  %v5649 = vmax.f32 %v5507, %v5508
  %v5650 = vmax.f32 %v5511, %v5512
  %v5651 = vmax.f32 %v5515, %v5516
  %v5652 = vmax.f32 %v5519, %v5520
  %v5653 = vmax.f32 %v5523, %v5524
  %v5654 = vmax.f32 %v5527, %v5528
  %v5655 = vmax.f32 %v5531, %v5532
  %v5656 = vmax.f32 %v5535, %v5536
  %v5657 = vmax.f32 %v5539, %v5540
  %v5658 = vmax.f32 %v5543, %v5544
  %v5659 = vmax.f32 %v5547, %v5548
  %v5660 = vmax.f32 %v5551, %v5552
  %v5661 = vmax.f32 %v5555, %v5556
  %v5662 = vmax.f32 %v5559, %v5560
  %v5663 = vmax.f32 %v5563, %v5564
  %v5664 = vmax.f32 %v5567, %v5568
  %v5665 = vmax.f32 %v5571, %v5572
  %v5666 = vmax.f32 %v5575, %v5576
  %v5667 = vmax.f32 %v5579, %v5580
  %v5668 = vmax.f32 %v5583, %v5584
  %v5669 = vmax.f32 %v5587, %v5588
  %v5670 = vmax.f32 %v5591, %v5592
  %v5671 = vmax.f32 %v5595, %v5596
  %v5672 = vmax.f32 %v5309, %v5310
  %v5673 = vmax.f32 %v5313, %v5314
  %v5674 = vmax.f32 %v5317, %v5318
  %v5675 = vmax.f32 %v5321, %v5322
  %v5676 = vmax.f32 %v5325, %v5326
  %v5677 = vmax.f32 %v5329, %v5330
  %v5678 = vmax.f32 %v5333, %v5334
  %v5679 = vmax.f32 %v5337, %v5338
  %v5680 = vmax.f32 %v5341, %v5342
  %v5681 = vmax.f32 %v5345, %v5346
  %v5682 = vmax.f32 %v5349, %v5350
  %v5683 = vmax.f32 %v5353, %v5354
  %v5684 = vmax.f32 %v5357, %v5358
  %v5685 = vmax.f32 %v5361, %v5362
  %v5686 = vmax.f32 %v5365, %v5366
  %v5687 = vmax.f32 %v5369, %v5370
  %v5688 = vmax.f32 %v5373, %v5374
  %v5689 = vmax.f32 %v5377, %v5378
  %v5690 = vmax.f32 %v5381, %v5382
  %v5691 = vmax.f32 %v5385, %v5386
  %v5692 = vmax.f32 %v5389, %v5390
  %v5693 = vmax.f32 %v5393, %v5394
  %v5694 = vmax.f32 %v5397, %v5398
  %v5695 = vmax.f32 %v5401, %v5402
  %v5696 = vmax.f32 %v5405, %v5406
  %v5697 = vmax.f32 %v5409, %v5410
  %v5698 = vmax.f32 %v5413, %v5414
  %v5699 = vmax.f32 %v5417, %v5418
  %v5700 = vmax.f32 %v5421, %v5422
  %v5701 = vmax.f32 %v5425, %v5426
  %v5702 = vmax.f32 %v5429, %v5430
  %v5703 = vmax.f32 %v5433, %v5434
  %v5704 = vmax.f32 %v5437, %v5438
  %v5705 = vmax.f32 %v5441, %v5442
  %v5706 = vmax.f32 %v5445, %v5446
  %v5707 = vmax.f32 %v5449, %v5450
  %v5708 = vmax.f32 %v5453, %v5454
  %v5709 = vmax.f32 %v5457, %v5458
  %v5710 = vmax.f32 %v5461, %v5462
  %v5711 = vmax.f32 %v5465, %v5466
  %v5712 = vmax.f32 %v5469, %v5470
  %v5713 = vmax.f32 %v5473, %v5474
  %v5714 = vmax.f32 %v5477, %v5478
  %v5715 = vmax.f32 %v5481, %v5482
  %v5716 = vmax.f32 %v5485, %v5486
  %v5717 = vmax.f32 %v5489, %v5490
  %v5718 = vmax.f32 %v5493, %v5494
  %v5719 = vmax.f32 %v5497, %v5498
  %v5720 = vmax.f32 %v5501, %v5502
  %v5721 = vmax.f32 %v5505, %v5506
  %v5722 = vmax.f32 %v5509, %v5510
  %v5723 = vmax.f32 %v5513, %v5514
  %v5724 = vmax.f32 %v5517, %v5518
  %v5725 = vmax.f32 %v5521, %v5522
  %v5726 = vmax.f32 %v5525, %v5526
  %v5727 = vmax.f32 %v5529, %v5530
  %v5728 = vmax.f32 %v5533, %v5534
  %v5729 = vmax.f32 %v5537, %v5538
  %v5730 = vmax.f32 %v5541, %v5542
  %v5731 = vmax.f32 %v5545, %v5546
  %v5732 = vmax.f32 %v5549, %v5550
  %v5733 = vmax.f32 %v5553, %v5554
  %v5734 = vmax.f32 %v5557, %v5558
  %v5735 = vmax.f32 %v5561, %v5562
  %v5736 = vmax.f32 %v5565, %v5566
  %v5737 = vmax.f32 %v5569, %v5570
  %v5738 = vmax.f32 %v5573, %v5574
  %v5739 = vmax.f32 %v5577, %v5578
  %v5740 = vmax.f32 %v5581, %v5582
  %v5741 = vmax.f32 %v5585, %v5586
  %v5742 = vmax.f32 %v5589, %v5590
  %v5743 = vmax.f32 %v5593, %v5594
  %v5744 = vmax.f32 %v5597, %v5598
  %v5745 = vmax.f32 %v5599, %v5672
  %v5746 = vmax.f32 %v5600, %v5673
  %v5747 = vmax.f32 %v5601, %v5674
  %v5748 = vmax.f32 %v5602, %v5675
  %v5749 = vmax.f32 %v5603, %v5676
  %v5750 = vmax.f32 %v5604, %v5677
  %v5751 = vmax.f32 %v5605, %v5678
  %v5752 = vmax.f32 %v5606, %v5679
  %v5753 = vmax.f32 %v5607, %v5680
  %v5754 = vmax.f32 %v5608, %v5681
  %v5755 = vmax.f32 %v5609, %v5682
  %v5756 = vmax.f32 %v5610, %v5683
  %v5757 = vmax.f32 %v5611, %v5684
  %v5758 = vmax.f32 %v5612, %v5685
  %v5759 = vmax.f32 %v5613, %v5686
  %v5760 = vmax.f32 %v5614, %v5687
  %v5761 = vmax.f32 %v5615, %v5688
  %v5762 = vmax.f32 %v5616, %v5689
  %v5763 = vmax.f32 %v5617, %v5690
  %v5764 = vmax.f32 %v5618, %v5691
  %v5765 = vmax.f32 %v5619, %v5692
  %v5766 = vmax.f32 %v5620, %v5693
  %v5767 = vmax.f32 %v5621, %v5694
  %v5768 = vmax.f32 %v5622, %v5695
  %v5769 = vmax.f32 %v5623, %v5696
  %v5770 = vmax.f32 %v5624, %v5697
  %v5771 = vmax.f32 %v5625, %v5698
  %v5772 = vmax.f32 %v5626, %v5699
  %v5773 = vmax.f32 %v5627, %v5700
  %v5774 = vmax.f32 %v5628, %v5701
  %v5775 = vmax.f32 %v5629, %v5702
  %v5776 = vmax.f32 %v5630, %v5703
  %v5777 = vmax.f32 %v5631, %v5704
  %v5778 = vmax.f32 %v5632, %v5705
  %v5779 = vmax.f32 %v5633, %v5706
  %v5780 = vmax.f32 %v5634, %v5707
  %v5781 = vmax.f32 %v5635, %v5708
  %v5782 = vmax.f32 %v5636, %v5709
  %v5783 = vmax.f32 %v5637, %v5710
  %v5784 = vmax.f32 %v5638, %v5711
  %v5785 = vmax.f32 %v5639, %v5712
  %v5786 = vmax.f32 %v5640, %v5713
  %v5787 = vmax.f32 %v5641, %v5714
  %v5788 = vmax.f32 %v5642, %v5715
  %v5789 = vmax.f32 %v5643, %v5716
  %v5790 = vmax.f32 %v5644, %v5717
  %v5791 = vmax.f32 %v5645, %v5718
  %v5792 = vmax.f32 %v5646, %v5719
  %v5793 = vmax.f32 %v5647, %v5720
  %v5794 = vmax.f32 %v5648, %v5721
  %v5795 = vmax.f32 %v5649, %v5722
  %v5796 = vmax.f32 %v5650, %v5723
  %v5797 = vmax.f32 %v5651, %v5724
  %v5798 = vmax.f32 %v5652, %v5725
  %v5799 = vmax.f32 %v5653, %v5726
  %v5800 = vmax.f32 %v5654, %v5727
  %v5801 = vmax.f32 %v5655, %v5728
  %v5802 = vmax.f32 %v5656, %v5729
  %v5803 = vmax.f32 %v5657, %v5730
  %v5804 = vmax.f32 %v5658, %v5731
  %v5805 = vmax.f32 %v5659, %v5732
  %v5806 = vmax.f32 %v5660, %v5733
  %v5807 = vmax.f32 %v5661, %v5734
  %v5808 = vmax.f32 %v5662, %v5735
  %v5809 = vmax.f32 %v5663, %v5736
  %v5810 = vmax.f32 %v5664, %v5737
  %v5811 = vmax.f32 %v5665, %v5738
  %v5812 = vmax.f32 %v5666, %v5739
  %v5813 = vmax.f32 %v5667, %v5740
  %v5814 = vmax.f32 %v5668, %v5741
  %v5815 = vmax.f32 %v5669, %v5742
  %v5816 = vmax.f32 %v5670, %v5743
  %v5817 = vmax.f32 %v5671, %v5744
  %v5818 = vld [vmem:[%s2] sm:$0x1]
  %v5820 = vlaneseq
  %v5821 = vshrl.u32 %v5820, 7
  %v5822 = vsub.s32 0, %v5821
  %v5823 = vrot.slane %v5818, %v5822
  %v5825 = vadd.f32 %v5745, %v5823
  %v5826 = vadd.f32 %v5746, %v5823
  %v5827 = vadd.f32 %v5747, %v5823
  %v5828 = vadd.f32 %v5748, %v5823
  %v5829 = vadd.f32 %v5749, %v5823
  %v5830 = vadd.f32 %v5750, %v5823
  %v5831 = vadd.f32 %v5751, %v5823
  %v5832 = vadd.f32 %v5752, %v5823
  %v5833 = vadd.f32 %v5753, %v5823
  %v5834 = vadd.f32 %v5754, %v5823
  %v5835 = vadd.f32 %v5755, %v5823
  %v5836 = vadd.f32 %v5756, %v5823
  %v5837 = vadd.f32 %v5757, %v5823
  %v5838 = vadd.f32 %v5758, %v5823
  %v5839 = vadd.f32 %v5759, %v5823
  %v5840 = vadd.f32 %v5760, %v5823
  %v5841 = vadd.f32 %v5761, %v5823
  %v5842 = vadd.f32 %v5762, %v5823
  %v5843 = vadd.f32 %v5763, %v5823
  %v5844 = vadd.f32 %v5764, %v5823
  %v5845 = vadd.f32 %v5765, %v5823
  %v5846 = vadd.f32 %v5766, %v5823
  %v5847 = vadd.f32 %v5767, %v5823
  %v5848 = vadd.f32 %v5768, %v5823
  %v5849 = vadd.f32 %v5769, %v5823
  %v5850 = vadd.f32 %v5770, %v5823
  %v5851 = vadd.f32 %v5771, %v5823
  %v5852 = vadd.f32 %v5772, %v5823
  %v5853 = vadd.f32 %v5773, %v5823
  %v5854 = vadd.f32 %v5774, %v5823
  %v5855 = vadd.f32 %v5775, %v5823
  %v5856 = vadd.f32 %v5776, %v5823
  %v5857 = vadd.f32 %v5777, %v5823
  %v5858 = vadd.f32 %v5778, %v5823
  %v5859 = vadd.f32 %v5779, %v5823
  %v5860 = vadd.f32 %v5780, %v5823
  %v5861 = vadd.f32 %v5781, %v5823
  %v5862 = vadd.f32 %v5782, %v5823
  %v5863 = vadd.f32 %v5783, %v5823
  %v5864 = vadd.f32 %v5784, %v5823
  %v5865 = vadd.f32 %v5785, %v5823
  %v5866 = vadd.f32 %v5786, %v5823
  %v5867 = vadd.f32 %v5787, %v5823
  %v5868 = vadd.f32 %v5788, %v5823
  %v5869 = vadd.f32 %v5789, %v5823
  %v5870 = vadd.f32 %v5790, %v5823
  %v5871 = vadd.f32 %v5791, %v5823
  %v5872 = vadd.f32 %v5792, %v5823
  %v5873 = vadd.f32 %v5793, %v5823
  %v5874 = vadd.f32 %v5794, %v5823
  %v5875 = vadd.f32 %v5795, %v5823
  %v5876 = vadd.f32 %v5796, %v5823
  %v5877 = vadd.f32 %v5797, %v5823
  %v5878 = vadd.f32 %v5798, %v5823
  %v5879 = vadd.f32 %v5799, %v5823
  %v5880 = vadd.f32 %v5800, %v5823
  %v5881 = vadd.f32 %v5801, %v5823
  %v5882 = vadd.f32 %v5802, %v5823
  %v5883 = vadd.f32 %v5803, %v5823
  %v5884 = vadd.f32 %v5804, %v5823
  %v5885 = vadd.f32 %v5805, %v5823
  %v5886 = vadd.f32 %v5806, %v5823
  %v5887 = vadd.f32 %v5807, %v5823
  %v5888 = vadd.f32 %v5808, %v5823
  %v5889 = vadd.f32 %v5809, %v5823
  %v5890 = vadd.f32 %v5810, %v5823
  %v5891 = vadd.f32 %v5811, %v5823
  %v5892 = vadd.f32 %v5812, %v5823
  %v5893 = vadd.f32 %v5813, %v5823
  %v5894 = vadd.f32 %v5814, %v5823
  %v5895 = vadd.f32 %v5815, %v5823
  %v5896 = vadd.f32 %v5816, %v5823
  %v5897 = vadd.f32 %v5817, %v5823
  %v5898 = vmax.f32 %v5825, 0.0
  %v5899 = vmax.f32 %v5826, 0.0
  %v5900 = vmax.f32 %v5827, 0.0
  %v5901 = vmax.f32 %v5828, 0.0
  %v5902 = vmax.f32 %v5829, 0.0
  %v5903 = vmax.f32 %v5830, 0.0
  %v5904 = vmax.f32 %v5831, 0.0
  %v5905 = vmax.f32 %v5832, 0.0
  %v5906 = vmax.f32 %v5833, 0.0
  %v5907 = vmax.f32 %v5834, 0.0
  %v5908 = vmax.f32 %v5835, 0.0
  %v5909 = vmax.f32 %v5836, 0.0
  %v5910 = vmax.f32 %v5837, 0.0
  %v5911 = vmax.f32 %v5838, 0.0
  %v5912 = vmax.f32 %v5839, 0.0
  %v5913 = vmax.f32 %v5840, 0.0
  %v5914 = vmax.f32 %v5841, 0.0
  %v5915 = vmax.f32 %v5842, 0.0
  %v5916 = vmax.f32 %v5843, 0.0
  %v5917 = vmax.f32 %v5844, 0.0
  %v5918 = vmax.f32 %v5845, 0.0
  %v5919 = vmax.f32 %v5846, 0.0
  %v5920 = vmax.f32 %v5847, 0.0
  %v5921 = vmax.f32 %v5848, 0.0
  %v5922 = vmax.f32 %v5849, 0.0
  %v5923 = vmax.f32 %v5850, 0.0
  %v5924 = vmax.f32 %v5851, 0.0
  %v5925 = vmax.f32 %v5852, 0.0
  %v5926 = vmax.f32 %v5853, 0.0
  %v5927 = vmax.f32 %v5854, 0.0
  %v5928 = vmax.f32 %v5855, 0.0
  %v5929 = vmax.f32 %v5856, 0.0
  %v5930 = vmax.f32 %v5857, 0.0
  %v5931 = vmax.f32 %v5858, 0.0
  %v5932 = vmax.f32 %v5859, 0.0
  %v5933 = vmax.f32 %v5860, 0.0
  %v5934 = vmax.f32 %v5861, 0.0
  %v5935 = vmax.f32 %v5862, 0.0
  %v5936 = vmax.f32 %v5863, 0.0
  %v5937 = vmax.f32 %v5864, 0.0
  %v5938 = vmax.f32 %v5865, 0.0
  %v5939 = vmax.f32 %v5866, 0.0
  %v5940 = vmax.f32 %v5867, 0.0
  %v5941 = vmax.f32 %v5868, 0.0
  %v5942 = vmax.f32 %v5869, 0.0
  %v5943 = vmax.f32 %v5870, 0.0
  %v5944 = vmax.f32 %v5871, 0.0
  %v5945 = vmax.f32 %v5872, 0.0
  %v5946 = vmax.f32 %v5873, 0.0
  %v5947 = vmax.f32 %v5874, 0.0
  %v5948 = vmax.f32 %v5875, 0.0
  %v5949 = vmax.f32 %v5876, 0.0
  %v5950 = vmax.f32 %v5877, 0.0
  %v5951 = vmax.f32 %v5878, 0.0
  %v5952 = vmax.f32 %v5879, 0.0
  %v5953 = vmax.f32 %v5880, 0.0
  %v5954 = vmax.f32 %v5881, 0.0
  %v5955 = vmax.f32 %v5882, 0.0
  %v5956 = vmax.f32 %v5883, 0.0
  %v5957 = vmax.f32 %v5884, 0.0
  %v5958 = vmax.f32 %v5885, 0.0
  %v5959 = vmax.f32 %v5886, 0.0
  %v5960 = vmax.f32 %v5887, 0.0
  %v5961 = vmax.f32 %v5888, 0.0
  %v5962 = vmax.f32 %v5889, 0.0
  %v5963 = vmax.f32 %v5890, 0.0
  %v5964 = vmax.f32 %v5891, 0.0
  %v5965 = vmax.f32 %v5892, 0.0
  %v5966 = vmax.f32 %v5893, 0.0
  %v5967 = vmax.f32 %v5894, 0.0
  %v5968 = vmax.f32 %v5895, 0.0
  %v5969 = vmax.f32 %v5896, 0.0
  %v5970 = vmax.f32 %v5897, 0.0
  %v5971 = vpack.c.bf16 %v5899, %v5898
  %v5972 = vpack.c.bf16 %v5901, %v5900
  %v5973 = vpack.c.bf16 %v5903, %v5902
  %v5974 = vpack.c.bf16 %v5905, %v5904
  %v5975 = vpack.c.bf16 %v5907, %v5906
  %v5976 = vpack.c.bf16 %v5909, %v5908
  %v5977 = vpack.c.bf16 %v5911, %v5910
  %v5978 = vpack.c.bf16 %v5913, %v5912
  %v5979 = vpack.c.bf16 %v5915, %v5914
  %v5980 = vpack.c.bf16 %v5917, %v5916
  %v5981 = vpack.c.bf16 %v5919, %v5918
  %v5982 = vpack.c.bf16 %v5921, %v5920
  %v5983 = vpack.c.bf16 %v5923, %v5922
  %v5984 = vpack.c.bf16 %v5925, %v5924
  %v5985 = vpack.c.bf16 %v5927, %v5926
  %v5986 = vpack.c.bf16 %v5929, %v5928
  %v5987 = vpack.c.bf16 %v5931, %v5930
  %v5988 = vpack.c.bf16 %v5933, %v5932
  %v5989 = vpack.c.bf16 %v5935, %v5934
  %v5990 = vpack.c.bf16 %v5937, %v5936
  %v5991 = vpack.c.bf16 %v5939, %v5938
  %v5992 = vpack.c.bf16 %v5941, %v5940
  %v5993 = vpack.c.bf16 %v5943, %v5942
  %v5994 = vpack.c.bf16 %v5945, %v5944
  %v5995 = vpack.c.bf16 %v5947, %v5946
  %v5996 = vpack.c.bf16 %v5949, %v5948
  %v5997 = vpack.c.bf16 %v5951, %v5950
  %v5998 = vpack.c.bf16 %v5953, %v5952
  %v5999 = vpack.c.bf16 %v5955, %v5954
  %v6000 = vpack.c.bf16 %v5957, %v5956
  %v6001 = vpack.c.bf16 %v5959, %v5958
  %v6002 = vpack.c.bf16 %v5961, %v5960
  %v6003 = vpack.c.bf16 %v5963, %v5962
  %v6004 = vpack.c.bf16 %v5965, %v5964
  %v6005 = vpack.c.bf16 %v5967, %v5966
  %v6006 = vpack.c.bf16 %v5969, %v5968
  %v6007 = vpack.c.bf16 %v5970, %v5970
  %v6045 = vunpack.c.l.b16 %v5971
  %v6046 = vunpack.c.h.b16 %v5971
  %v6047 = vunpack.c.l.b16 %v5972
  %v6048 = vunpack.c.h.b16 %v5972
  %v6049 = vunpack.c.l.b16 %v5973
  %v6050 = vunpack.c.h.b16 %v5973
  %v6051 = vunpack.c.l.b16 %v5974
  %v6052 = vunpack.c.h.b16 %v5974
  %v6053 = vunpack.c.l.b16 %v5975
  %v6054 = vunpack.c.h.b16 %v5975
  %v6055 = vunpack.c.l.b16 %v5976
  %v6056 = vunpack.c.h.b16 %v5976
  %v6057 = vunpack.c.l.b16 %v5977
  %v6058 = vunpack.c.h.b16 %v5977
  %v6059 = vunpack.c.l.b16 %v5978
  %v6060 = vunpack.c.h.b16 %v5978
  %v6061 = vunpack.c.l.b16 %v5979
  %v6062 = vunpack.c.h.b16 %v5979
  %v6063 = vunpack.c.l.b16 %v5980
  %v6064 = vunpack.c.h.b16 %v5980
  %v6065 = vunpack.c.l.b16 %v5981
  %v6066 = vunpack.c.h.b16 %v5981
  %v6067 = vunpack.c.l.b16 %v5982
  %v6068 = vunpack.c.h.b16 %v5982
  %v6069 = vunpack.c.l.b16 %v5983
  %v6070 = vunpack.c.h.b16 %v5983
  %v6071 = vunpack.c.l.b16 %v5984
  %v6072 = vunpack.c.h.b16 %v5984
  %v6073 = vunpack.c.l.b16 %v5985
  %v6074 = vunpack.c.h.b16 %v5985
  %v6075 = vunpack.c.l.b16 %v5986
  %v6076 = vunpack.c.h.b16 %v5986
  %v6077 = vunpack.c.l.b16 %v5987
  %v6078 = vunpack.c.h.b16 %v5987
  %v6079 = vunpack.c.l.b16 %v5988
  %v6080 = vunpack.c.h.b16 %v5988
  %v6081 = vunpack.c.l.b16 %v5989
  %v6082 = vunpack.c.h.b16 %v5989
  %v6083 = vunpack.c.l.b16 %v5990
  %v6084 = vunpack.c.h.b16 %v5990
  %v6085 = vunpack.c.l.b16 %v5991
  %v6086 = vunpack.c.h.b16 %v5991
  %v6087 = vunpack.c.l.b16 %v5992
  %v6088 = vunpack.c.h.b16 %v5992
  %v6089 = vunpack.c.l.b16 %v5993
  %v6090 = vunpack.c.h.b16 %v5993
  %v6091 = vunpack.c.l.b16 %v5994
  %v6092 = vunpack.c.h.b16 %v5994
  %v6093 = vunpack.c.l.b16 %v5995
  %v6094 = vunpack.c.h.b16 %v5995
  %v6095 = vunpack.c.l.b16 %v5996
  %v6096 = vunpack.c.h.b16 %v5996
  %v6097 = vunpack.c.l.b16 %v5997
  %v6098 = vunpack.c.h.b16 %v5997
  %v6099 = vunpack.c.l.b16 %v5998
  %v6100 = vunpack.c.h.b16 %v5998
  %v6101 = vunpack.c.l.b16 %v5999
  %v6102 = vunpack.c.h.b16 %v5999
  %v6103 = vunpack.c.l.b16 %v6000
  %v6104 = vunpack.c.h.b16 %v6000
  %v6105 = vunpack.c.l.b16 %v6001
  %v6106 = vunpack.c.h.b16 %v6001
  %v6107 = vunpack.c.l.b16 %v6002
  %v6108 = vunpack.c.h.b16 %v6002
  %v6109 = vunpack.c.l.b16 %v6003
  %v6110 = vunpack.c.h.b16 %v6003
  %v6111 = vunpack.c.l.b16 %v6004
  %v6112 = vunpack.c.h.b16 %v6004
  %v6113 = vunpack.c.l.b16 %v6005
  %v6114 = vunpack.c.h.b16 %v6005
  %v6115 = vunpack.c.l.b16 %v6006
  %v6116 = vunpack.c.h.b16 %v6006
  %v6117 = vunpack.c.l.b16 %v6007
  %v6118 = vpack.c.b16 %v6045, %v6045
  %v6119 = vpack.c.b16 %v6046, %v6046
  %v6120 = vpack.c.b16 %v6047, %v6047
  %v6121 = vpack.c.b16 %v6048, %v6048
  %v6122 = vpack.c.b16 %v6049, %v6049
  %v6123 = vpack.c.b16 %v6050, %v6050
  %v6124 = vpack.c.b16 %v6051, %v6051
  %v6125 = vpack.c.b16 %v6052, %v6052
  %v6126 = vpack.c.b16 %v6053, %v6053
  %v6127 = vpack.c.b16 %v6054, %v6054
  %v6128 = vpack.c.b16 %v6055, %v6055
  %v6129 = vpack.c.b16 %v6056, %v6056
  %v6130 = vpack.c.b16 %v6057, %v6057
  %v6131 = vpack.c.b16 %v6058, %v6058
  %v6132 = vpack.c.b16 %v6059, %v6059
  %v6133 = vpack.c.b16 %v6060, %v6060
  %v6134 = vpack.c.b16 %v6061, %v6061
  %v6135 = vpack.c.b16 %v6062, %v6062
  %v6136 = vpack.c.b16 %v6063, %v6063
  %v6137 = vpack.c.b16 %v6064, %v6064
  %v6138 = vpack.c.b16 %v6065, %v6065
  %v6139 = vpack.c.b16 %v6066, %v6066
  %v6140 = vpack.c.b16 %v6067, %v6067
  %v6141 = vpack.c.b16 %v6068, %v6068
  %v6142 = vpack.c.b16 %v6069, %v6069
  %v6143 = vpack.c.b16 %v6070, %v6070
  %v6144 = vpack.c.b16 %v6071, %v6071
  %v6145 = vpack.c.b16 %v6072, %v6072
  %v6146 = vpack.c.b16 %v6073, %v6073
  %v6147 = vpack.c.b16 %v6074, %v6074
  %v6148 = vpack.c.b16 %v6075, %v6075
  %v6149 = vpack.c.b16 %v6076, %v6076
  %v6150 = vpack.c.b16 %v6077, %v6077
  %v6151 = vpack.c.b16 %v6078, %v6078
  %v6152 = vpack.c.b16 %v6079, %v6079
  %v6153 = vpack.c.b16 %v6080, %v6080
  %v6154 = vpack.c.b16 %v6081, %v6081
  %v6155 = vpack.c.b16 %v6082, %v6082
  %v6156 = vpack.c.b16 %v6083, %v6083
  %v6157 = vpack.c.b16 %v6084, %v6084
  %v6158 = vpack.c.b16 %v6085, %v6085
  %v6159 = vpack.c.b16 %v6086, %v6086
  %v6160 = vpack.c.b16 %v6087, %v6087
  %v6161 = vpack.c.b16 %v6088, %v6088
  %v6162 = vpack.c.b16 %v6089, %v6089
  %v6163 = vpack.c.b16 %v6090, %v6090
  %v6164 = vpack.c.b16 %v6091, %v6091
  %v6165 = vpack.c.b16 %v6092, %v6092
  %v6166 = vpack.c.b16 %v6093, %v6093
  %v6167 = vpack.c.b16 %v6094, %v6094
  %v6168 = vpack.c.b16 %v6095, %v6095
  %v6169 = vpack.c.b16 %v6096, %v6096
  %v6170 = vpack.c.b16 %v6097, %v6097
  %v6171 = vpack.c.b16 %v6098, %v6098
  %v6172 = vpack.c.b16 %v6099, %v6099
  %v6173 = vpack.c.b16 %v6100, %v6100
  %v6174 = vpack.c.b16 %v6101, %v6101
  %v6175 = vpack.c.b16 %v6102, %v6102
  %v6176 = vpack.c.b16 %v6103, %v6103
  %v6177 = vpack.c.b16 %v6104, %v6104
  %v6178 = vpack.c.b16 %v6105, %v6105
  %v6179 = vpack.c.b16 %v6106, %v6106
  %v6180 = vpack.c.b16 %v6107, %v6107
  %v6181 = vpack.c.b16 %v6108, %v6108
  %v6182 = vpack.c.b16 %v6109, %v6109
  %v6183 = vpack.c.b16 %v6110, %v6110
  %v6184 = vpack.c.b16 %v6111, %v6111
  %v6185 = vpack.c.b16 %v6112, %v6112
  %v6186 = vpack.c.b16 %v6113, %v6113
  %v6187 = vpack.c.b16 %v6114, %v6114
  %v6188 = vpack.c.b16 %v6115, %v6115
  %v6189 = vpack.c.b16 %v6116, %v6116
  %v6190 = vpack.c.b16 %v6117, %v6117
  %6264 = vst [vmem:[%s3] sm:$0xf] %v6118
  %6265 = vst [vmem:[%s3 + $0x4] sm:$0xf] %v6119
  %6266 = vst [vmem:[%s3 + $0x8] sm:$0xf] %v6120
  %6267 = vst [vmem:[%s3 + $0xc] sm:$0xf] %v6121
  %6268 = vst [vmem:[%s3 + $0x10] sm:$0xf] %v6122
  %6269 = vst [vmem:[%s3 + $0x14] sm:$0xf] %v6123
  %6270 = vst [vmem:[%s3 + $0x18] sm:$0xf] %v6124
  %6271 = vst [vmem:[%s3 + $0x1c] sm:$0xf] %v6125
  %6272 = vst [vmem:[%s3 + $0x20] sm:$0xf] %v6126
  %6273 = vst [vmem:[%s3 + $0x24] sm:$0xf] %v6127
  %6274 = vst [vmem:[%s3 + $0x28] sm:$0xf] %v6128
  %6275 = vst [vmem:[%s3 + $0x2c] sm:$0xf] %v6129
  %6276 = vst [vmem:[%s3 + $0x30] sm:$0xf] %v6130
  %6277 = vst [vmem:[%s3 + $0x34] sm:$0xf] %v6131
  %6278 = vst [vmem:[%s3 + $0x38] sm:$0xf] %v6132
  %6279 = vst [vmem:[%s3 + $0x3c] sm:$0xf] %v6133
  %6280 = vst [vmem:[%s3 + $0x40] sm:$0xf] %v6134
  %6281 = vst [vmem:[%s3 + $0x44] sm:$0xf] %v6135
  %6282 = vst [vmem:[%s3 + $0x48] sm:$0xf] %v6136
  %6283 = vst [vmem:[%s3 + $0x4c] sm:$0xf] %v6137
  %6284 = vst [vmem:[%s3 + $0x50] sm:$0xf] %v6138
  %6285 = vst [vmem:[%s3 + $0x54] sm:$0xf] %v6139
  %6286 = vst [vmem:[%s3 + $0x58] sm:$0xf] %v6140
  %6287 = vst [vmem:[%s3 + $0x5c] sm:$0xf] %v6141
  %6288 = vst [vmem:[%s3 + $0x60] sm:$0xf] %v6142
  %6289 = vst [vmem:[%s3 + $0x64] sm:$0xf] %v6143
  %6290 = vst [vmem:[%s3 + $0x68] sm:$0xf] %v6144
  %6291 = vst [vmem:[%s3 + $0x6c] sm:$0xf] %v6145
  %6292 = vst [vmem:[%s3 + $0x70] sm:$0xf] %v6146
  %6293 = vst [vmem:[%s3 + $0x74] sm:$0xf] %v6147
  %6294 = vst [vmem:[%s3 + $0x78] sm:$0xf] %v6148
  %6295 = vst [vmem:[%s3 + $0x7c] sm:$0xf] %v6149
  %6296 = vst [vmem:[%s3 + $0x80] sm:$0xf] %v6150
  %6297 = vst [vmem:[%s3 + $0x84] sm:$0xf] %v6151
  %6298 = vst [vmem:[%s3 + $0x88] sm:$0xf] %v6152
  %6299 = vst [vmem:[%s3 + $0x8c] sm:$0xf] %v6153
  %6300 = vst [vmem:[%s3 + $0x90] sm:$0xf] %v6154
  %6301 = vst [vmem:[%s3 + $0x94] sm:$0xf] %v6155
  %6302 = vst [vmem:[%s3 + $0x98] sm:$0xf] %v6156
  %6303 = vst [vmem:[%s3 + $0x9c] sm:$0xf] %v6157
  %6304 = vst [vmem:[%s3 + $0xa0] sm:$0xf] %v6158
  %6305 = vst [vmem:[%s3 + $0xa4] sm:$0xf] %v6159
  %6306 = vst [vmem:[%s3 + $0xa8] sm:$0xf] %v6160
  %6307 = vst [vmem:[%s3 + $0xac] sm:$0xf] %v6161
  %6308 = vst [vmem:[%s3 + $0xb0] sm:$0xf] %v6162
  %6309 = vst [vmem:[%s3 + $0xb4] sm:$0xf] %v6163
  %6310 = vst [vmem:[%s3 + $0xb8] sm:$0xf] %v6164
  %6311 = vst [vmem:[%s3 + $0xbc] sm:$0xf] %v6165
  %6312 = vst [vmem:[%s3 + $0xc0] sm:$0xf] %v6166
  %6313 = vst [vmem:[%s3 + $0xc4] sm:$0xf] %v6167
  %6314 = vst [vmem:[%s3 + $0xc8] sm:$0xf] %v6168
  %6315 = vst [vmem:[%s3 + $0xcc] sm:$0xf] %v6169
  %6316 = vst [vmem:[%s3 + $0xd0] sm:$0xf] %v6170
  %6317 = vst [vmem:[%s3 + $0xd4] sm:$0xf] %v6171
  %6318 = vst [vmem:[%s3 + $0xd8] sm:$0xf] %v6172
  %6319 = vst [vmem:[%s3 + $0xdc] sm:$0xf] %v6173
  %6320 = vst [vmem:[%s3 + $0xe0] sm:$0xf] %v6174
  %6321 = vst [vmem:[%s3 + $0xe4] sm:$0xf] %v6175
  %6322 = vst [vmem:[%s3 + $0xe8] sm:$0xf] %v6176
  %6323 = vst [vmem:[%s3 + $0xec] sm:$0xf] %v6177
  %6324 = vst [vmem:[%s3 + $0xf0] sm:$0xf] %v6178
  %6325 = vst [vmem:[%s3 + $0xf4] sm:$0xf] %v6179
  %6326 = vst [vmem:[%s3 + $0xf8] sm:$0xf] %v6180
  %6327 = vst [vmem:[%s3 + $0xfc] sm:$0xf] %v6181
  %6328 = vst [vmem:[%s3 + $0x100] sm:$0xf] %v6182
  %6329 = vst [vmem:[%s3 + $0x104] sm:$0xf] %v6183
  %6330 = vst [vmem:[%s3 + $0x108] sm:$0xf] %v6184
  %6331 = vst [vmem:[%s3 + $0x10c] sm:$0xf] %v6185
  %6332 = vst [vmem:[%s3 + $0x110] sm:$0xf] %v6186
  %6333 = vst [vmem:[%s3 + $0x114] sm:$0xf] %v6187
  %6334 = vst [vmem:[%s3 + $0x118] sm:$0xf] %v6188
  %6335 = vst [vmem:[%s3 + $0x11c] sm:$0xf] %v6189
  %6336 = vst [vmem:[%s3 + $0x120] sm:$0xf] %v6190
  // Predicated region
  $region14: #{simple_cnn_forward.4} parent=0 // pred_check
    _
  $region15: #{simple_cnn_forward.4} parent=0 // pred_check_branch
    %6338 = sbr.rel (0) target = $region17
  $region16: #{simple_cnn_forward.4} parent=0 // pred_region
    _
  $region17: #{simple_cnn_forward.4} parent=0 // pred_fallthru
    _
  // Predicated region
  $region18: #{simple_cnn_forward.4} parent=0 // pred_check
    _
  $region19: #{simple_cnn_forward.4} parent=0 // pred_check_branch
    %6340 = sbr.rel (0) target = $region21
  $region20: #{simple_cnn_forward.4} parent=0 // pred_region
    _
  $region21: #{simple_cnn_forward.4} parent=0 // pred_fallthru
    _

// kernel: simple_cnn_forward.5
$region0: #{simple_cnn_forward.5}
  #allocation0 [shape = 'u32[]', space=smem, size = 0x4, offset = 0x4, fixed_abs, tag = 'smem constant byte address 0x4 - core index']
  #allocation1 [shape = 'u32[144,128]{1,0:T(1,128)}', space=vmem, size = 0x12000, scoped, tag = 'internal scratch']
  %s0 = inlined_call_operand.vmem [shape: bf16[184,64], index: 0, kind: input, shape index: {}]
  %s1 = inlined_call_operand.vmem [shape: bf16[4,64,512], index: 1, kind: input, shape index: {}]
  %s2 = inlined_call_operand.vmem [shape: f32[1,128], index: 2, kind: input, shape index: {}]
  %s3 = inlined_call_operand.vmem [shape: bf16[168,128], index: 3, kind: output, shape index: {}]
  %s4 = sld [smem:[#allocation0]]
  $region22: #{simple_cnn_forward.5} parent=0
    _
  %s6 = ssub.s32 1, %s4
  %s7 = scalar_select 0, %s6, %s4
  // Predicated region
  $region2: #{simple_cnn_forward.5} parent=0 // pred_check
    _
  $region3: #{simple_cnn_forward.5} parent=0 // pred_check_branch
    %9 = sbr.rel (0) target = $region5
  $region4: #{simple_cnn_forward.5} parent=0 // pred_region
    _
  $region5: #{simple_cnn_forward.5} parent=0 // pred_fallthru
    _
  // Predicated region
  $region6: #{simple_cnn_forward.5} parent=0 // pred_check
    _
  $region7: #{simple_cnn_forward.5} parent=0 // pred_check_branch
    %11 = sbr.rel (0) target = $region9
  $region8: #{simple_cnn_forward.5} parent=0 // pred_region
    _
  $region9: #{simple_cnn_forward.5} parent=0 // pred_fallthru
    _
  // Predicated region
  $region10: #{simple_cnn_forward.5} parent=0 // pred_check
    _
  $region11: #{simple_cnn_forward.5} parent=0 // pred_check_branch
    %13 = sbr.rel (0) target = $region13
  $region12: #{simple_cnn_forward.5} parent=0 // pred_region
    _
  $region13: #{simple_cnn_forward.5} parent=0 // pred_fallthru
    _
  %v15 = vld [vmem:[%s0] sm:$0xf]
  %v16 = vld [vmem:[%s0 + $0x4] sm:$0xf]
  %v17 = vld [vmem:[%s0 + $0x8] sm:$0xf]
  %v18 = vld [vmem:[%s0 + $0xc] sm:$0xf]
  %v19 = vld [vmem:[%s0 + $0x10] sm:$0xf]
  %v20 = vld [vmem:[%s0 + $0x14] sm:$0xf]
  %v21 = vld [vmem:[%s0 + $0x18] sm:$0xf]
  %v22 = vld [vmem:[%s0 + $0x1c] sm:$0xf]
  %v23 = vld [vmem:[%s0 + $0x20] sm:$0xf]
  %v24 = vld [vmem:[%s0 + $0x24] sm:$0xf]
  %v25 = vld [vmem:[%s0 + $0x28] sm:$0xf]
  %v26 = vld [vmem:[%s0 + $0x2c] sm:$0xf]
  %v27 = vld [vmem:[%s0 + $0x30] sm:$0xf]
  %v28 = vld [vmem:[%s0 + $0x34] sm:$0xf]
  %v29 = vld [vmem:[%s0 + $0x38] sm:$0xf]
  %v30 = vld [vmem:[%s0 + $0x3c] sm:$0xf]
  %v31 = vld [vmem:[%s0 + $0x40] sm:$0xf]
  %v32 = vld [vmem:[%s0 + $0x44] sm:$0xf]
  %v33 = vld [vmem:[%s0 + $0x48] sm:$0xf]
  %v34 = vld [vmem:[%s0 + $0x4c] sm:$0xf]
  %v35 = vld [vmem:[%s0 + $0x50] sm:$0xf]
  %v36 = vld [vmem:[%s1] sm:$0xff]
  %v37 = vld [vmem:[%s1 + $0x8] sm:$0xff]
  %v38 = vld [vmem:[%s1 + $0x10] sm:$0xff]
  %v39 = vld [vmem:[%s1 + $0x18] sm:$0xff]
  %v40 = vld [vmem:[%s1 + $0x20] sm:$0xff]
  %v41 = vld [vmem:[%s1 + $0x28] sm:$0xff]
  %v42 = vld [vmem:[%s1 + $0x30] sm:$0xff]
  %v43 = vld [vmem:[%s1 + $0x38] sm:$0xff]
  %v44 = vld [vmem:[%s1 + $0x40] sm:$0xff]
  %v45 = vld [vmem:[%s1 + $0x48] sm:$0xff]
  %v46 = vld [vmem:[%s1 + $0x50] sm:$0xff]
  %v47 = vld [vmem:[%s1 + $0x58] sm:$0xff]
  %v48 = vld [vmem:[%s1 + $0x60] sm:$0xff]
  %v49 = vld [vmem:[%s1 + $0x68] sm:$0xff]
  %v50 = vld [vmem:[%s1 + $0x70] sm:$0xff]
  %v51 = vld [vmem:[%s1 + $0x78] sm:$0xff]
  %v52 = vld [vmem:[%s0 + $0x54] sm:$0x1]
  %s53 = scalar_lea.vmem %s1, 128
  %v54 = vld [vmem:[%s53] sm:$0xff]
  %v55 = vld [vmem:[%s53 + $0x8] sm:$0xff]
  %v56 = vld [vmem:[%s53 + $0x10] sm:$0xff]
  %v57 = vld [vmem:[%s53 + $0x18] sm:$0xff]
  %v58 = vld [vmem:[%s53 + $0x20] sm:$0xff]
  %v59 = vld [vmem:[%s53 + $0x28] sm:$0xff]
  %v60 = vld [vmem:[%s53 + $0x30] sm:$0xff]
  %v61 = vld [vmem:[%s53 + $0x38] sm:$0xff]
  %v62 = vld [vmem:[%s53 + $0x40] sm:$0xff]
  %v63 = vld [vmem:[%s53 + $0x48] sm:$0xff]
  %v64 = vld [vmem:[%s53 + $0x50] sm:$0xff]
  %v65 = vld [vmem:[%s53 + $0x58] sm:$0xff]
  %v66 = vld [vmem:[%s53 + $0x60] sm:$0xff]
  %v67 = vld [vmem:[%s53 + $0x68] sm:$0xff]
  %v68 = vld [vmem:[%s53 + $0x70] sm:$0xff]
  %v69 = vld [vmem:[%s53 + $0x78] sm:$0xff]
  %v92 = vunpack.c.l.b16 %v15
  %v93 = vunpack.c.l.b16 %v16
  %v94 = vunpack.c.l.b16 %v17
  %v95 = vunpack.c.l.b16 %v18
  %v96 = vunpack.c.l.b16 %v19
  %v97 = vunpack.c.l.b16 %v20
  %v98 = vunpack.c.l.b16 %v21
  %v99 = vunpack.c.l.b16 %v22
  %v100 = vunpack.c.l.b16 %v23
  %v101 = vunpack.c.l.b16 %v24
  %v102 = vunpack.c.l.b16 %v25
  %v103 = vunpack.c.l.b16 %v26
  %v104 = vunpack.c.l.b16 %v27
  %v105 = vunpack.c.l.b16 %v28
  %v106 = vunpack.c.l.b16 %v29
  %v107 = vunpack.c.l.b16 %v30
  %v108 = vunpack.c.l.b16 %v31
  %v109 = vunpack.c.l.b16 %v32
  %v110 = vunpack.c.l.b16 %v33
  %v111 = vunpack.c.l.b16 %v34
  %v112 = vunpack.c.l.b16 %v35
  %v113 = vunpack.c.l.b16 %v52
  %v114 = vpack.c.b16 %v93, %v92
  %v115 = vpack.c.b16 %v95, %v94
  %v116 = vpack.c.b16 %v97, %v96
  %v117 = vpack.c.b16 %v99, %v98
  %v118 = vpack.c.b16 %v101, %v100
  %v119 = vpack.c.b16 %v103, %v102
  %v120 = vpack.c.b16 %v105, %v104
  %v121 = vpack.c.b16 %v107, %v106
  %v122 = vpack.c.b16 %v109, %v108
  %v123 = vpack.c.b16 %v111, %v110
  %v124 = vpack.c.b16 %v113, %v112
  %vm125 = vsmask.f32 7424
  %v127 = vshrl.u32 %v114, 16
  %v129 = vshll.u32 %v114, 16
  %v131 = vrot.slane %v129, 1
  %v132 = vor.u32 %v127, %v131
  %v134 = vshll.u32 %v115, 16
  %v136 = vrot.slane %v134, 1
  %v137 = vsel %vm125, %v132, %v136
  %v138 = vshrl.u32 %v115, 16
  %v140 = vor.u32 %v138, %v136
  %v142 = vshll.u32 %v116, 16
  %v144 = vrot.slane %v142, 1
  %v145 = vsel %vm125, %v140, %v144
  %v146 = vshrl.u32 %v116, 16
  %v148 = vor.u32 %v146, %v144
  %v150 = vshll.u32 %v117, 16
  %v152 = vrot.slane %v150, 1
  %v153 = vsel %vm125, %v148, %v152
  %v154 = vshrl.u32 %v117, 16
  %v156 = vor.u32 %v154, %v152
  %v158 = vshll.u32 %v118, 16
  %v160 = vrot.slane %v158, 1
  %v161 = vsel %vm125, %v156, %v160
  %v162 = vshrl.u32 %v118, 16
  %v164 = vor.u32 %v162, %v160
  %v166 = vshll.u32 %v119, 16
  %v168 = vrot.slane %v166, 1
  %v169 = vsel %vm125, %v164, %v168
  %v170 = vshrl.u32 %v119, 16
  %v172 = vor.u32 %v170, %v168
  %v174 = vshll.u32 %v120, 16
  %v176 = vrot.slane %v174, 1
  %v177 = vsel %vm125, %v172, %v176
  %v178 = vshrl.u32 %v120, 16
  %v180 = vor.u32 %v178, %v176
  %v182 = vshll.u32 %v121, 16
  %v184 = vrot.slane %v182, 1
  %v185 = vsel %vm125, %v180, %v184
  %v186 = vshrl.u32 %v121, 16
  %v188 = vor.u32 %v186, %v184
  %v190 = vshll.u32 %v122, 16
  %v192 = vrot.slane %v190, 1
  %v193 = vsel %vm125, %v188, %v192
  %v194 = vshrl.u32 %v122, 16
  %v196 = vor.u32 %v194, %v192
  %v198 = vshll.u32 %v123, 16
  %v200 = vrot.slane %v198, 1
  %v201 = vsel %vm125, %v196, %v200
  %v202 = vshrl.u32 %v123, 16
  %v204 = vor.u32 %v202, %v200
  %v206 = vshll.u32 %v124, 16
  %v208 = vrot.slane %v206, 1
  %v209 = vsel %vm125, %v204, %v208
  %v210 = vshrl.u32 %v124, 16
  %v212 = vor.u32 %v210, %v208
  %v229 = vunpack.c.l.b16 %v54
  %v230 = vunpack.c.h.b16 %v54
  %v231 = vunpack.c.l.b16 %v55
  %v232 = vunpack.c.h.b16 %v55
  %v233 = vunpack.c.l.b16 %v56
  %v234 = vunpack.c.h.b16 %v56
  %v235 = vunpack.c.l.b16 %v57
  %v236 = vunpack.c.h.b16 %v57
  %v237 = vunpack.c.l.b16 %v58
  %v238 = vunpack.c.h.b16 %v58
  %v239 = vunpack.c.l.b16 %v59
  %v240 = vunpack.c.h.b16 %v59
  %v241 = vunpack.c.l.b16 %v60
  %v242 = vunpack.c.h.b16 %v60
  %v243 = vunpack.c.l.b16 %v61
  %v244 = vunpack.c.h.b16 %v61
  %v245 = vunpack.c.l.b16 %v62
  %v246 = vunpack.c.h.b16 %v62
  %v247 = vunpack.c.l.b16 %v63
  %v248 = vunpack.c.h.b16 %v63
  %v249 = vunpack.c.l.b16 %v64
  %v250 = vunpack.c.h.b16 %v64
  %v251 = vunpack.c.l.b16 %v65
  %v252 = vunpack.c.h.b16 %v65
  %v253 = vunpack.c.l.b16 %v66
  %v254 = vunpack.c.h.b16 %v66
  %v255 = vunpack.c.l.b16 %v67
  %v256 = vunpack.c.h.b16 %v67
  %v257 = vunpack.c.l.b16 %v68
  %v258 = vunpack.c.h.b16 %v68
  %v259 = vunpack.c.l.b16 %v69
  %v260 = vunpack.c.h.b16 %v69
  %v261 = vpack.c.b16 %v233, %v229
  %v262 = vpack.c.b16 %v234, %v230
  %v263 = vpack.c.b16 %v235, %v231
  %v264 = vpack.c.b16 %v236, %v232
  %v265 = vpack.c.b16 %v241, %v237
  %v266 = vpack.c.b16 %v242, %v238
  %v267 = vpack.c.b16 %v243, %v239
  %v268 = vpack.c.b16 %v244, %v240
  %v269 = vpack.c.b16 %v249, %v245
  %v270 = vpack.c.b16 %v250, %v246
  %v271 = vpack.c.b16 %v251, %v247
  %v272 = vpack.c.b16 %v252, %v248
  %v273 = vpack.c.b16 %v257, %v253
  %v274 = vpack.c.b16 %v258, %v254
  %v275 = vpack.c.b16 %v259, %v255
  %v276 = vpack.c.b16 %v260, %v256
  %vm293 = vcmask 523264
  %v295 = vsel %vm293, %v137, 0
  %v298 = vsel %vm293, %v145, 0
  %v301 = vsel %vm293, %v153, 0
  %v304 = vsel %vm293, %v161, 0
  %v307 = vsel %vm293, %v169, 0
  %v310 = vsel %vm293, %v177, 0
  %v313 = vsel %vm293, %v185, 0
  %v316 = vsel %vm293, %v193, 0
  %v319 = vsel %vm293, %v201, 0
  %v322 = vsel %vm293, %v209, 0
  %v325 = vsel %vm293, %v212, 0
  %327 = vmatprep.subr.bf16.mxu0 %v262
  %328 = vmatpush1.bf16.msra.mxu0 %v261
  %329 = vmatprep.subr.bf16.mxu0 %v266
  %330 = vmatpush1.bf16.msra.mxu0 %v265
  %331 = vmatprep.subr.bf16.mxu0 %v270
  %332 = vmatpush1.bf16.msra.mxu0 %v269
  %333 = vmatprep.subr.bf16.mxu0 %v274
  %334 = vmatpush1.bf16.msra.mxu0 %v273
  %335 = vmatprep.subr.bf16.mxu0 0
  %336 = vmatpush1.bf16.msra.mxu0 0
  %337 = vmatprep.subr.bf16.mxu0 0
  %338 = vmatpush1.bf16.msra.mxu0 0
  %339 = vmatprep.subr.bf16.mxu0 0
  %340 = vmatpush1.bf16.msra.mxu0 0
  %341 = vmatprep.subr.bf16.mxu0 0
  %342 = vmatpush1.bf16.msra.mxu0 0
  %343 = vmatprep.subr.bf16.mxu0 0
  %344 = vmatpush1.bf16.msra.mxu0 0
  %345 = vmatprep.subr.bf16.mxu0 0
  %346 = vmatpush1.bf16.msra.mxu0 0
  %347 = vmatprep.subr.bf16.mxu0 0
  %348 = vmatpush1.bf16.msra.mxu0 0
  %349 = vmatprep.subr.bf16.mxu0 0
  %350 = vmatpush1.bf16.msra.mxu0 0
  %351 = vmatprep.subr.bf16.mxu0 0
  %352 = vmatpush1.bf16.msra.mxu0 0
  %353 = vmatprep.subr.bf16.mxu0 0
  %354 = vmatpush1.bf16.msra.mxu0 0
  %355 = vmatprep.subr.bf16.mxu0 0
  %356 = vmatpush1.bf16.msra.mxu0 0
  %357 = vmatprep.subr.bf16.mxu0 0
  %358 = vmatpush1.bf16.msra.mxu0 0
  %359 = vmatprep.mubr.bf16.mxu0 0
  %360 = vmatmul.mubr.bf16.gmra.mrb[0].mxu0 %v295
  %v361 = vpop.f32.mrb[0].mxu0
  %v362 = vadd.f32 0.0, %v361
  %v363 = vpop.f32.mrb[0].mxu0
  %v364 = vadd.f32 0.0, %v363
  %v365 = vpop.f32.mrb[0].mxu0
  %v366 = vadd.f32 0.0, %v365
  %v367 = vpop.f32.mrb[0].mxu0
  %v368 = vadd.f32 0.0, %v367
  %369 = vmatprep.mubr.bf16.mxu0 0
  %370 = vmatmul.mubr.bf16.gmra.mrb[0].mxu0 %v298
  %v371 = vpop.f32.mrb[0].mxu0
  %v372 = vadd.f32 0.0, %v371
  %v373 = vpop.f32.mrb[0].mxu0
  %v374 = vadd.f32 0.0, %v373
  %v375 = vpop.f32.mrb[0].mxu0
  %v376 = vadd.f32 0.0, %v375
  %v377 = vpop.f32.mrb[0].mxu0
  %v378 = vadd.f32 0.0, %v377
  %379 = vmatprep.mubr.bf16.mxu0 0
  %380 = vmatmul.mubr.bf16.gmra.mrb[0].mxu0 %v301
  %v381 = vpop.f32.mrb[0].mxu0
  %v382 = vadd.f32 0.0, %v381
  %v383 = vpop.f32.mrb[0].mxu0
  %v384 = vadd.f32 0.0, %v383
  %v385 = vpop.f32.mrb[0].mxu0
  %v386 = vadd.f32 0.0, %v385
  %v387 = vpop.f32.mrb[0].mxu0
  %v388 = vadd.f32 0.0, %v387
  %389 = vmatprep.mubr.bf16.mxu0 0
  %390 = vmatmul.mubr.bf16.gmra.mrb[0].mxu0 %v304
  %v391 = vpop.f32.mrb[0].mxu0
  %v392 = vadd.f32 0.0, %v391
  %v393 = vpop.f32.mrb[0].mxu0
  %v394 = vadd.f32 0.0, %v393
  %v395 = vpop.f32.mrb[0].mxu0
  %v396 = vadd.f32 0.0, %v395
  %v397 = vpop.f32.mrb[0].mxu0
  %v398 = vadd.f32 0.0, %v397
  %399 = vmatprep.mubr.bf16.mxu0 0
  %400 = vmatmul.mubr.bf16.gmra.mrb[0].mxu0 %v307
  %v401 = vpop.f32.mrb[0].mxu0
  %v402 = vadd.f32 0.0, %v401
  %v403 = vpop.f32.mrb[0].mxu0
  %v404 = vadd.f32 0.0, %v403
  %v405 = vpop.f32.mrb[0].mxu0
  %v406 = vadd.f32 0.0, %v405
  %v407 = vpop.f32.mrb[0].mxu0
  %v408 = vadd.f32 0.0, %v407
  %409 = vmatprep.mubr.bf16.mxu0 0
  %410 = vmatmul.mubr.bf16.gmra.mrb[0].mxu0 %v310
  %v411 = vpop.f32.mrb[0].mxu0
  %v412 = vadd.f32 0.0, %v411
  %v413 = vpop.f32.mrb[0].mxu0
  %v414 = vadd.f32 0.0, %v413
  %v415 = vpop.f32.mrb[0].mxu0
  %v416 = vadd.f32 0.0, %v415
  %v417 = vpop.f32.mrb[0].mxu0
  %v418 = vadd.f32 0.0, %v417
  %419 = vmatprep.mubr.bf16.mxu0 0
  %420 = vmatmul.mubr.bf16.gmra.mrb[0].mxu0 %v313
  %v421 = vpop.f32.mrb[0].mxu0
  %v422 = vadd.f32 0.0, %v421
  %v423 = vpop.f32.mrb[0].mxu0
  %v424 = vadd.f32 0.0, %v423
  %v425 = vpop.f32.mrb[0].mxu0
  %v426 = vadd.f32 0.0, %v425
  %v427 = vpop.f32.mrb[0].mxu0
  %v428 = vadd.f32 0.0, %v427
  %429 = vmatprep.mubr.bf16.mxu0 0
  %430 = vmatmul.mubr.bf16.gmra.mrb[0].mxu0 %v316
  %v431 = vpop.f32.mrb[0].mxu0
  %v432 = vadd.f32 0.0, %v431
  %v433 = vpop.f32.mrb[0].mxu0
  %v434 = vadd.f32 0.0, %v433
  %v435 = vpop.f32.mrb[0].mxu0
  %v436 = vadd.f32 0.0, %v435
  %v437 = vpop.f32.mrb[0].mxu0
  %v438 = vadd.f32 0.0, %v437
  %439 = vmatprep.mubr.bf16.mxu0 0
  %440 = vmatmul.mubr.bf16.gmra.mrb[0].mxu0 %v319
  %v441 = vpop.f32.mrb[0].mxu0
  %v442 = vadd.f32 0.0, %v441
  %v443 = vpop.f32.mrb[0].mxu0
  %v444 = vadd.f32 0.0, %v443
  %v445 = vpop.f32.mrb[0].mxu0
  %v446 = vadd.f32 0.0, %v445
  %v447 = vpop.f32.mrb[0].mxu0
  %v448 = vadd.f32 0.0, %v447
  %449 = vmatprep.mubr.bf16.mxu0 0
  %450 = vmatmul.mubr.bf16.gmra.mrb[0].mxu0 %v322
  %v451 = vpop.f32.mrb[0].mxu0
  %v452 = vadd.f32 0.0, %v451
  %v453 = vpop.f32.mrb[0].mxu0
  %v454 = vadd.f32 0.0, %v453
  %v455 = vpop.f32.mrb[0].mxu0
  %v456 = vadd.f32 0.0, %v455
  %v457 = vpop.f32.mrb[0].mxu0
  %v458 = vadd.f32 0.0, %v457
  %459 = vmatprep.mubr.bf16.mxu0 0
  %460 = vmatmul.mubr.bf16.gmra.mrb[0].mxu0 %v325
  %v461 = vpop.f32.mrb[0].mxu0
  %v462 = vadd.f32 0.0, %v461
  %v463 = vpop.f32.mrb[0].mxu0
  %v464 = vadd.f32 0.0, %v463
  %v465 = vpop.f32.mrb[0].mxu0
  %v466 = vpop.f32.mrb[0].mxu0
  %467 = vdwg.mxu0
  %468 = vmatprep.subr.bf16.mxu0 %v264
  %469 = vmatpush1.bf16.msra.mxu0 %v263
  %470 = vmatprep.subr.bf16.mxu0 %v268
  %471 = vmatpush1.bf16.msra.mxu0 %v267
  %472 = vmatprep.subr.bf16.mxu0 %v272
  %473 = vmatpush1.bf16.msra.mxu0 %v271
  %474 = vmatprep.subr.bf16.mxu0 %v276
  %475 = vmatpush1.bf16.msra.mxu0 %v275
  %476 = vmatprep.subr.bf16.mxu0 0
  %477 = vmatpush1.bf16.msra.mxu0 0
  %478 = vmatprep.subr.bf16.mxu0 0
  %479 = vmatpush1.bf16.msra.mxu0 0
  %480 = vmatprep.subr.bf16.mxu0 0
  %481 = vmatpush1.bf16.msra.mxu0 0
  %482 = vmatprep.subr.bf16.mxu0 0
  %483 = vmatpush1.bf16.msra.mxu0 0
  %484 = vmatprep.subr.bf16.mxu0 0
  %485 = vmatpush1.bf16.msra.mxu0 0
  %486 = vmatprep.subr.bf16.mxu0 0
  %487 = vmatpush1.bf16.msra.mxu0 0
  %488 = vmatprep.subr.bf16.mxu0 0
  %489 = vmatpush1.bf16.msra.mxu0 0
  %490 = vmatprep.subr.bf16.mxu0 0
  %491 = vmatpush1.bf16.msra.mxu0 0
  %492 = vmatprep.subr.bf16.mxu0 0
  %493 = vmatpush1.bf16.msra.mxu0 0
  %494 = vmatprep.subr.bf16.mxu0 0
  %495 = vmatpush1.bf16.msra.mxu0 0
  %496 = vmatprep.subr.bf16.mxu0 0
  %497 = vmatpush1.bf16.msra.mxu0 0
  %498 = vmatprep.subr.bf16.mxu0 0
  %499 = vmatpush1.bf16.msra.mxu0 0
  %500 = vmatprep.mubr.bf16.mxu0 0
  %501 = vmatmul.mubr.bf16.gmra.mrb[0].mxu0 %v295
  %v502 = vpop.f32.mrb[0].mxu0
  %v503 = vadd.f32 0.0, %v502
  %v504 = vpop.f32.mrb[0].mxu0
  %v505 = vadd.f32 0.0, %v504
  %v506 = vpop.f32.mrb[0].mxu0
  %v507 = vadd.f32 0.0, %v506
  %v508 = vpop.f32.mrb[0].mxu0
  %v509 = vadd.f32 0.0, %v508
  %510 = vmatprep.mubr.bf16.mxu0 0
  %511 = vmatmul.mubr.bf16.gmra.mrb[0].mxu0 %v298
  %v512 = vpop.f32.mrb[0].mxu0
  %v513 = vadd.f32 0.0, %v512
  %v514 = vpop.f32.mrb[0].mxu0
  %v515 = vadd.f32 0.0, %v514
  %v516 = vpop.f32.mrb[0].mxu0
  %v517 = vadd.f32 0.0, %v516
  %v518 = vpop.f32.mrb[0].mxu0
  %v519 = vadd.f32 0.0, %v518
  %520 = vmatprep.mubr.bf16.mxu0 0
  %521 = vmatmul.mubr.bf16.gmra.mrb[0].mxu0 %v301
  %v522 = vpop.f32.mrb[0].mxu0
  %v523 = vadd.f32 0.0, %v522
  %v524 = vpop.f32.mrb[0].mxu0
  %v525 = vadd.f32 0.0, %v524
  %v526 = vpop.f32.mrb[0].mxu0
  %v527 = vadd.f32 0.0, %v526
  %v528 = vpop.f32.mrb[0].mxu0
  %v529 = vadd.f32 0.0, %v528
  %530 = vmatprep.mubr.bf16.mxu0 0
  %531 = vmatmul.mubr.bf16.gmra.mrb[0].mxu0 %v304
  %v532 = vpop.f32.mrb[0].mxu0
  %v533 = vadd.f32 0.0, %v532
  %v534 = vpop.f32.mrb[0].mxu0
  %v535 = vadd.f32 0.0, %v534
  %v536 = vpop.f32.mrb[0].mxu0
  %v537 = vadd.f32 0.0, %v536
  %v538 = vpop.f32.mrb[0].mxu0
  %v539 = vadd.f32 0.0, %v538
  %540 = vmatprep.mubr.bf16.mxu0 0
  %541 = vmatmul.mubr.bf16.gmra.mrb[0].mxu0 %v307
  %v542 = vpop.f32.mrb[0].mxu0
  %v543 = vadd.f32 0.0, %v542
  %v544 = vpop.f32.mrb[0].mxu0
  %v545 = vadd.f32 0.0, %v544
  %v546 = vpop.f32.mrb[0].mxu0
  %v547 = vadd.f32 0.0, %v546
  %v548 = vpop.f32.mrb[0].mxu0
  %v549 = vadd.f32 0.0, %v548
  %550 = vmatprep.mubr.bf16.mxu0 0
  %551 = vmatmul.mubr.bf16.gmra.mrb[0].mxu0 %v310
  %v552 = vpop.f32.mrb[0].mxu0
  %v553 = vadd.f32 0.0, %v552
  %v554 = vpop.f32.mrb[0].mxu0
  %v555 = vadd.f32 0.0, %v554
  %v556 = vpop.f32.mrb[0].mxu0
  %v557 = vadd.f32 0.0, %v556
  %v558 = vpop.f32.mrb[0].mxu0
  %v559 = vadd.f32 0.0, %v558
  %560 = vmatprep.mubr.bf16.mxu0 0
  %561 = vmatmul.mubr.bf16.gmra.mrb[0].mxu0 %v313
  %v562 = vpop.f32.mrb[0].mxu0
  %v563 = vadd.f32 0.0, %v562
  %v564 = vpop.f32.mrb[0].mxu0
  %v565 = vadd.f32 0.0, %v564
  %v566 = vpop.f32.mrb[0].mxu0
  %v567 = vadd.f32 0.0, %v566
  %v568 = vpop.f32.mrb[0].mxu0
  %v569 = vadd.f32 0.0, %v568
  %570 = vmatprep.mubr.bf16.mxu0 0
  %571 = vmatmul.mubr.bf16.gmra.mrb[0].mxu0 %v316
  %v572 = vpop.f32.mrb[0].mxu0
  %v573 = vadd.f32 0.0, %v572
  %v574 = vpop.f32.mrb[0].mxu0
  %v575 = vadd.f32 0.0, %v574
  %v576 = vpop.f32.mrb[0].mxu0
  %v577 = vadd.f32 0.0, %v576
  %v578 = vpop.f32.mrb[0].mxu0
  %v579 = vadd.f32 0.0, %v578
  %580 = vmatprep.mubr.bf16.mxu0 0
  %581 = vmatmul.mubr.bf16.gmra.mrb[0].mxu0 %v319
  %v582 = vpop.f32.mrb[0].mxu0
  %v583 = vadd.f32 0.0, %v582
  %v584 = vpop.f32.mrb[0].mxu0
  %v585 = vadd.f32 0.0, %v584
  %v586 = vpop.f32.mrb[0].mxu0
  %v587 = vadd.f32 0.0, %v586
  %v588 = vpop.f32.mrb[0].mxu0
  %v589 = vadd.f32 0.0, %v588
  %590 = vmatprep.mubr.bf16.mxu0 0
  %591 = vmatmul.mubr.bf16.gmra.mrb[0].mxu0 %v322
  %v592 = vpop.f32.mrb[0].mxu0
  %v593 = vadd.f32 0.0, %v592
  %v594 = vpop.f32.mrb[0].mxu0
  %v595 = vadd.f32 0.0, %v594
  %v596 = vpop.f32.mrb[0].mxu0
  %v597 = vadd.f32 0.0, %v596
  %v598 = vpop.f32.mrb[0].mxu0
  %v599 = vadd.f32 0.0, %v598
  %600 = vmatprep.mubr.bf16.mxu0 0
  %601 = vmatmul.mubr.bf16.gmra.mrb[0].mxu0 %v325
  %v602 = vpop.f32.mrb[0].mxu0
  %v603 = vadd.f32 0.0, %v602
  %v604 = vpop.f32.mrb[0].mxu0
  %v605 = vadd.f32 0.0, %v604
  %v606 = vpop.f32.mrb[0].mxu0
  %v607 = vpop.f32.mrb[0].mxu0
  %608 = vdwg.mxu0
  %v609 = vpack.c.b16 %v112, %v112
  %v626 = vunpack.c.l.b16 %v36
  %v627 = vunpack.c.h.b16 %v36
  %v628 = vunpack.c.l.b16 %v37
  %v629 = vunpack.c.h.b16 %v37
  %v630 = vunpack.c.l.b16 %v38
  %v631 = vunpack.c.h.b16 %v38
  %v632 = vunpack.c.l.b16 %v39
  %v633 = vunpack.c.h.b16 %v39
  %v634 = vunpack.c.l.b16 %v40
  %v635 = vunpack.c.h.b16 %v40
  %v636 = vunpack.c.l.b16 %v41
  %v637 = vunpack.c.h.b16 %v41
  %v638 = vunpack.c.l.b16 %v42
  %v639 = vunpack.c.h.b16 %v42
  %v640 = vunpack.c.l.b16 %v43
  %v641 = vunpack.c.h.b16 %v43
  %v642 = vunpack.c.l.b16 %v44
  %v643 = vunpack.c.h.b16 %v44
  %v644 = vunpack.c.l.b16 %v45
  %v645 = vunpack.c.h.b16 %v45
  %v646 = vunpack.c.l.b16 %v46
  %v647 = vunpack.c.h.b16 %v46
  %v648 = vunpack.c.l.b16 %v47
  %v649 = vunpack.c.h.b16 %v47
  %v650 = vunpack.c.l.b16 %v48
  %v651 = vunpack.c.h.b16 %v48
  %v652 = vunpack.c.l.b16 %v49
  %v653 = vunpack.c.h.b16 %v49
  %v654 = vunpack.c.l.b16 %v50
  %v655 = vunpack.c.h.b16 %v50
  %v656 = vunpack.c.l.b16 %v51
  %v657 = vunpack.c.h.b16 %v51
  %v658 = vpack.c.b16 %v630, %v626
  %v659 = vpack.c.b16 %v631, %v627
  %v660 = vpack.c.b16 %v632, %v628
  %v661 = vpack.c.b16 %v633, %v629
  %v662 = vpack.c.b16 %v638, %v634
  %v663 = vpack.c.b16 %v639, %v635
  %v664 = vpack.c.b16 %v640, %v636
  %v665 = vpack.c.b16 %v641, %v637
  %v666 = vpack.c.b16 %v646, %v642
  %v667 = vpack.c.b16 %v647, %v643
  %v668 = vpack.c.b16 %v648, %v644
  %v669 = vpack.c.b16 %v649, %v645
  %v670 = vpack.c.b16 %v654, %v650
  %v671 = vpack.c.b16 %v655, %v651
  %v672 = vpack.c.b16 %v656, %v652
  %v673 = vpack.c.b16 %v657, %v653
  %v690 = vsel %vm293, %v114, 0
  %v692 = vsel %vm293, %v115, 0
  %v694 = vsel %vm293, %v116, 0
  %v696 = vsel %vm293, %v117, 0
  %v698 = vsel %vm293, %v118, 0
  %v700 = vsel %vm293, %v119, 0
  %v702 = vsel %vm293, %v120, 0
  %v704 = vsel %vm293, %v121, 0
  %v706 = vsel %vm293, %v122, 0
  %v708 = vsel %vm293, %v123, 0
  %v711 = vsel %vm293, %v609, 0
  %713 = vmatprep.subr.bf16.mxu0 %v659
  %714 = vmatpush1.bf16.msra.mxu0 %v658
  %715 = vmatprep.subr.bf16.mxu0 %v663
  %716 = vmatpush1.bf16.msra.mxu0 %v662
  %717 = vmatprep.subr.bf16.mxu0 %v667
  %718 = vmatpush1.bf16.msra.mxu0 %v666
  %719 = vmatprep.subr.bf16.mxu0 %v671
  %720 = vmatpush1.bf16.msra.mxu0 %v670
  %721 = vmatprep.subr.bf16.mxu0 0
  %722 = vmatpush1.bf16.msra.mxu0 0
  %723 = vmatprep.subr.bf16.mxu0 0
  %724 = vmatpush1.bf16.msra.mxu0 0
  %725 = vmatprep.subr.bf16.mxu0 0
  %726 = vmatpush1.bf16.msra.mxu0 0
  %727 = vmatprep.subr.bf16.mxu0 0
  %728 = vmatpush1.bf16.msra.mxu0 0
  %729 = vmatprep.subr.bf16.mxu0 0
  %730 = vmatpush1.bf16.msra.mxu0 0
  %731 = vmatprep.subr.bf16.mxu0 0
  %732 = vmatpush1.bf16.msra.mxu0 0
  %733 = vmatprep.subr.bf16.mxu0 0
  %734 = vmatpush1.bf16.msra.mxu0 0
  %735 = vmatprep.subr.bf16.mxu0 0
  %736 = vmatpush1.bf16.msra.mxu0 0
  %737 = vmatprep.subr.bf16.mxu0 0
  %738 = vmatpush1.bf16.msra.mxu0 0
  %739 = vmatprep.subr.bf16.mxu0 0
  %740 = vmatpush1.bf16.msra.mxu0 0
  %741 = vmatprep.subr.bf16.mxu0 0
  %742 = vmatpush1.bf16.msra.mxu0 0
  %743 = vmatprep.subr.bf16.mxu0 0
  %744 = vmatpush1.bf16.msra.mxu0 0
  %745 = vmatprep.mubr.bf16.mxu0 0
  %746 = vmatmul.mubr.bf16.gmra.mrb[0].mxu0 %v690
  %v747 = vpop.f32.mrb[0].mxu0
  %v748 = vadd.f32 %v362, %v747
  %v749 = vpop.f32.mrb[0].mxu0
  %v750 = vadd.f32 %v364, %v749
  %v751 = vpop.f32.mrb[0].mxu0
  %v752 = vadd.f32 %v366, %v751
  %v753 = vpop.f32.mrb[0].mxu0
  %v754 = vadd.f32 %v368, %v753
  %755 = vmatprep.mubr.bf16.mxu0 0
  %756 = vmatmul.mubr.bf16.gmra.mrb[0].mxu0 %v692
  %v757 = vpop.f32.mrb[0].mxu0
  %v758 = vadd.f32 %v372, %v757
  %v759 = vpop.f32.mrb[0].mxu0
  %v760 = vadd.f32 %v374, %v759
  %v761 = vpop.f32.mrb[0].mxu0
  %v762 = vadd.f32 %v376, %v761
  %v763 = vpop.f32.mrb[0].mxu0
  %v764 = vadd.f32 %v378, %v763
  %765 = vmatprep.mubr.bf16.mxu0 0
  %766 = vmatmul.mubr.bf16.gmra.mrb[0].mxu0 %v694
  %v767 = vpop.f32.mrb[0].mxu0
  %v768 = vadd.f32 %v382, %v767
  %v769 = vpop.f32.mrb[0].mxu0
  %v770 = vadd.f32 %v384, %v769
  %v771 = vpop.f32.mrb[0].mxu0
  %v772 = vadd.f32 %v386, %v771
  %v773 = vpop.f32.mrb[0].mxu0
  %v774 = vadd.f32 %v388, %v773
  %775 = vmatprep.mubr.bf16.mxu0 0
  %776 = vmatmul.mubr.bf16.gmra.mrb[0].mxu0 %v696
  %v777 = vpop.f32.mrb[0].mxu0
  %v778 = vadd.f32 %v392, %v777
  %v779 = vpop.f32.mrb[0].mxu0
  %v780 = vadd.f32 %v394, %v779
  %v781 = vpop.f32.mrb[0].mxu0
  %v782 = vadd.f32 %v396, %v781
  %v783 = vpop.f32.mrb[0].mxu0
  %v784 = vadd.f32 %v398, %v783
  %785 = vmatprep.mubr.bf16.mxu0 0
  %786 = vmatmul.mubr.bf16.gmra.mrb[0].mxu0 %v698
  %v787 = vpop.f32.mrb[0].mxu0
  %v788 = vadd.f32 %v402, %v787
  %v789 = vpop.f32.mrb[0].mxu0
  %v790 = vadd.f32 %v404, %v789
  %v791 = vpop.f32.mrb[0].mxu0
  %v792 = vadd.f32 %v406, %v791
  %v793 = vpop.f32.mrb[0].mxu0
  %v794 = vadd.f32 %v408, %v793
  %795 = vmatprep.mubr.bf16.mxu0 0
  %796 = vmatmul.mubr.bf16.gmra.mrb[0].mxu0 %v700
  %v797 = vpop.f32.mrb[0].mxu0
  %v798 = vadd.f32 %v412, %v797
  %v799 = vpop.f32.mrb[0].mxu0
  %v800 = vadd.f32 %v414, %v799
  %v801 = vpop.f32.mrb[0].mxu0
  %v802 = vadd.f32 %v416, %v801
  %v803 = vpop.f32.mrb[0].mxu0
  %v804 = vadd.f32 %v418, %v803
  %805 = vmatprep.mubr.bf16.mxu0 0
  %806 = vmatmul.mubr.bf16.gmra.mrb[0].mxu0 %v702
  %v807 = vpop.f32.mrb[0].mxu0
  %v808 = vadd.f32 %v422, %v807
  %v809 = vpop.f32.mrb[0].mxu0
  %v810 = vadd.f32 %v424, %v809
  %v811 = vpop.f32.mrb[0].mxu0
  %v812 = vadd.f32 %v426, %v811
  %v813 = vpop.f32.mrb[0].mxu0
  %v814 = vadd.f32 %v428, %v813
  %815 = vmatprep.mubr.bf16.mxu0 0
  %816 = vmatmul.mubr.bf16.gmra.mrb[0].mxu0 %v704
  %v817 = vpop.f32.mrb[0].mxu0
  %v818 = vadd.f32 %v432, %v817
  %v819 = vpop.f32.mrb[0].mxu0
  %v820 = vadd.f32 %v434, %v819
  %v821 = vpop.f32.mrb[0].mxu0
  %v822 = vadd.f32 %v436, %v821
  %v823 = vpop.f32.mrb[0].mxu0
  %v824 = vadd.f32 %v438, %v823
  %825 = vmatprep.mubr.bf16.mxu0 0
  %826 = vmatmul.mubr.bf16.gmra.mrb[0].mxu0 %v706
  %v827 = vpop.f32.mrb[0].mxu0
  %v828 = vadd.f32 %v442, %v827
  %v829 = vpop.f32.mrb[0].mxu0
  %v830 = vadd.f32 %v444, %v829
  %v831 = vpop.f32.mrb[0].mxu0
  %v832 = vadd.f32 %v446, %v831
  %v833 = vpop.f32.mrb[0].mxu0
  %v834 = vadd.f32 %v448, %v833
  %835 = vmatprep.mubr.bf16.mxu0 0
  %836 = vmatmul.mubr.bf16.gmra.mrb[0].mxu0 %v708
  %v837 = vpop.f32.mrb[0].mxu0
  %v838 = vadd.f32 %v452, %v837
  %v839 = vpop.f32.mrb[0].mxu0
  %v840 = vadd.f32 %v454, %v839
  %v841 = vpop.f32.mrb[0].mxu0
  %v842 = vadd.f32 %v456, %v841
  %v843 = vpop.f32.mrb[0].mxu0
  %v844 = vadd.f32 %v458, %v843
  %845 = vmatprep.mubr.bf16.mxu0 0
  %846 = vmatmul.mubr.bf16.gmra.mrb[0].mxu0 %v711
  %v847 = vpop.f32.mrb[0].mxu0
  %v848 = vadd.f32 %v462, %v847
  %v849 = vpop.f32.mrb[0].mxu0
  %v850 = vadd.f32 %v464, %v849
  %v851 = vpop.f32.mrb[0].mxu0
  %v852 = vpop.f32.mrb[0].mxu0
  %853 = vdwg.mxu0
  %854 = vmatprep.subr.bf16.mxu0 %v661
  %855 = vmatpush1.bf16.msra.mxu0 %v660
  %856 = vmatprep.subr.bf16.mxu0 %v665
  %857 = vmatpush1.bf16.msra.mxu0 %v664
  %858 = vmatprep.subr.bf16.mxu0 %v669
  %859 = vmatpush1.bf16.msra.mxu0 %v668
  %860 = vmatprep.subr.bf16.mxu0 %v673
  %861 = vmatpush1.bf16.msra.mxu0 %v672
  %862 = vmatprep.subr.bf16.mxu0 0
  %863 = vmatpush1.bf16.msra.mxu0 0
  %864 = vmatprep.subr.bf16.mxu0 0
  %865 = vmatpush1.bf16.msra.mxu0 0
  %866 = vmatprep.subr.bf16.mxu0 0
  %867 = vmatpush1.bf16.msra.mxu0 0
  %868 = vmatprep.subr.bf16.mxu0 0
  %869 = vmatpush1.bf16.msra.mxu0 0
  %870 = vmatprep.subr.bf16.mxu0 0
  %871 = vmatpush1.bf16.msra.mxu0 0
  %872 = vmatprep.subr.bf16.mxu0 0
  %873 = vmatpush1.bf16.msra.mxu0 0
  %874 = vmatprep.subr.bf16.mxu0 0
  %875 = vmatpush1.bf16.msra.mxu0 0
  %876 = vmatprep.subr.bf16.mxu0 0
  %877 = vmatpush1.bf16.msra.mxu0 0
  %878 = vmatprep.subr.bf16.mxu0 0
  %879 = vmatpush1.bf16.msra.mxu0 0
  %880 = vmatprep.subr.bf16.mxu0 0
  %881 = vmatpush1.bf16.msra.mxu0 0
  %882 = vmatprep.subr.bf16.mxu0 0
  %883 = vmatpush1.bf16.msra.mxu0 0
  %884 = vmatprep.subr.bf16.mxu0 0
  %885 = vmatpush1.bf16.msra.mxu0 0
  %886 = vmatprep.mubr.bf16.mxu0 0
  %887 = vmatmul.mubr.bf16.gmra.mrb[0].mxu0 %v690
  %v888 = vpop.f32.mrb[0].mxu0
  %v889 = vadd.f32 %v503, %v888
  %v890 = vpop.f32.mrb[0].mxu0
  %v891 = vadd.f32 %v505, %v890
  %v892 = vpop.f32.mrb[0].mxu0
  %v893 = vadd.f32 %v507, %v892
  %v894 = vpop.f32.mrb[0].mxu0
  %v895 = vadd.f32 %v509, %v894
  %896 = vmatprep.mubr.bf16.mxu0 0
  %897 = vmatmul.mubr.bf16.gmra.mrb[0].mxu0 %v692
  %v898 = vpop.f32.mrb[0].mxu0
  %v899 = vadd.f32 %v513, %v898
  %v900 = vpop.f32.mrb[0].mxu0
  %v901 = vadd.f32 %v515, %v900
  %v902 = vpop.f32.mrb[0].mxu0
  %v903 = vadd.f32 %v517, %v902
  %v904 = vpop.f32.mrb[0].mxu0
  %v905 = vadd.f32 %v519, %v904
  %906 = vmatprep.mubr.bf16.mxu0 0
  %907 = vmatmul.mubr.bf16.gmra.mrb[0].mxu0 %v694
  %v908 = vpop.f32.mrb[0].mxu0
  %v909 = vadd.f32 %v523, %v908
  %v910 = vpop.f32.mrb[0].mxu0
  %v911 = vadd.f32 %v525, %v910
  %v912 = vpop.f32.mrb[0].mxu0
  %v913 = vadd.f32 %v527, %v912
  %v914 = vpop.f32.mrb[0].mxu0
  %v915 = vadd.f32 %v529, %v914
  %916 = vmatprep.mubr.bf16.mxu0 0
  %917 = vmatmul.mubr.bf16.gmra.mrb[0].mxu0 %v696
  %v918 = vpop.f32.mrb[0].mxu0
  %v919 = vadd.f32 %v533, %v918
  %v920 = vpop.f32.mrb[0].mxu0
  %v921 = vadd.f32 %v535, %v920
  %v922 = vpop.f32.mrb[0].mxu0
  %v923 = vadd.f32 %v537, %v922
  %v924 = vpop.f32.mrb[0].mxu0
  %v925 = vadd.f32 %v539, %v924
  %926 = vmatprep.mubr.bf16.mxu0 0
  %927 = vmatmul.mubr.bf16.gmra.mrb[0].mxu0 %v698
  %v928 = vpop.f32.mrb[0].mxu0
  %v929 = vadd.f32 %v543, %v928
  %v930 = vpop.f32.mrb[0].mxu0
  %v931 = vadd.f32 %v545, %v930
  %v932 = vpop.f32.mrb[0].mxu0
  %v933 = vadd.f32 %v547, %v932
  %v934 = vpop.f32.mrb[0].mxu0
  %v935 = vadd.f32 %v549, %v934
  %936 = vmatprep.mubr.bf16.mxu0 0
  %937 = vmatmul.mubr.bf16.gmra.mrb[0].mxu0 %v700
  %v938 = vpop.f32.mrb[0].mxu0
  %v939 = vadd.f32 %v553, %v938
  %v940 = vpop.f32.mrb[0].mxu0
  %v941 = vadd.f32 %v555, %v940
  %v942 = vpop.f32.mrb[0].mxu0
  %v943 = vadd.f32 %v557, %v942
  %v944 = vpop.f32.mrb[0].mxu0
  %v945 = vadd.f32 %v559, %v944
  %946 = vmatprep.mubr.bf16.mxu0 0
  %947 = vmatmul.mubr.bf16.gmra.mrb[0].mxu0 %v702
  %v948 = vpop.f32.mrb[0].mxu0
  %v949 = vadd.f32 %v563, %v948
  %v950 = vpop.f32.mrb[0].mxu0
  %v951 = vadd.f32 %v565, %v950
  %v952 = vpop.f32.mrb[0].mxu0
  %v953 = vadd.f32 %v567, %v952
  %v954 = vpop.f32.mrb[0].mxu0
  %v955 = vadd.f32 %v569, %v954
  %956 = vmatprep.mubr.bf16.mxu0 0
  %957 = vmatmul.mubr.bf16.gmra.mrb[0].mxu0 %v704
  %v958 = vpop.f32.mrb[0].mxu0
  %v959 = vadd.f32 %v573, %v958
  %v960 = vpop.f32.mrb[0].mxu0
  %v961 = vadd.f32 %v575, %v960
  %v962 = vpop.f32.mrb[0].mxu0
  %v963 = vadd.f32 %v577, %v962
  %v964 = vpop.f32.mrb[0].mxu0
  %v965 = vadd.f32 %v579, %v964
  %966 = vmatprep.mubr.bf16.mxu0 0
  %967 = vmatmul.mubr.bf16.gmra.mrb[0].mxu0 %v706
  %v968 = vpop.f32.mrb[0].mxu0
  %v969 = vadd.f32 %v583, %v968
  %v970 = vpop.f32.mrb[0].mxu0
  %v971 = vadd.f32 %v585, %v970
  %v972 = vpop.f32.mrb[0].mxu0
  %v973 = vadd.f32 %v587, %v972
  %v974 = vpop.f32.mrb[0].mxu0
  %v975 = vadd.f32 %v589, %v974
  %976 = vmatprep.mubr.bf16.mxu0 0
  %977 = vmatmul.mubr.bf16.gmra.mrb[0].mxu0 %v708
  %v978 = vpop.f32.mrb[0].mxu0
  %v979 = vadd.f32 %v593, %v978
  %v980 = vpop.f32.mrb[0].mxu0
  %v981 = vadd.f32 %v595, %v980
  %v982 = vpop.f32.mrb[0].mxu0
  %v983 = vadd.f32 %v597, %v982
  %v984 = vpop.f32.mrb[0].mxu0
  %v985 = vadd.f32 %v599, %v984
  %986 = vmatprep.mubr.bf16.mxu0 0
  %987 = vmatmul.mubr.bf16.gmra.mrb[0].mxu0 %v711
  %v988 = vpop.f32.mrb[0].mxu0
  %v989 = vadd.f32 %v603, %v988
  %v990 = vpop.f32.mrb[0].mxu0
  %v991 = vadd.f32 %v605, %v990
  %v992 = vpop.f32.mrb[0].mxu0
  %v993 = vpop.f32.mrb[0].mxu0
  %994 = vdwg.mxu0
  %v995 = vld [vmem:[%s0 + $0x4] sm:$0xf]
  %v996 = vld [vmem:[%s0 + $0x8] sm:$0xf]
  %v997 = vld [vmem:[%s0 + $0xc] sm:$0xf]
  %v998 = vld [vmem:[%s0 + $0x10] sm:$0xf]
  %v999 = vld [vmem:[%s0 + $0x14] sm:$0xf]
  %v1000 = vld [vmem:[%s0 + $0x18] sm:$0xf]
  %v1001 = vld [vmem:[%s0 + $0x1c] sm:$0xf]
  %v1002 = vld [vmem:[%s0 + $0x20] sm:$0xf]
  %v1003 = vld [vmem:[%s0 + $0x24] sm:$0xf]
  %v1004 = vld [vmem:[%s0 + $0x28] sm:$0xf]
  %v1005 = vld [vmem:[%s0 + $0x2c] sm:$0xf]
  %v1006 = vld [vmem:[%s0 + $0x30] sm:$0xf]
  %v1007 = vld [vmem:[%s0 + $0x34] sm:$0xf]
  %v1008 = vld [vmem:[%s0 + $0x38] sm:$0xf]
  %v1009 = vld [vmem:[%s0 + $0x3c] sm:$0xf]
  %v1010 = vld [vmem:[%s0 + $0x40] sm:$0xf]
  %v1011 = vld [vmem:[%s0 + $0x44] sm:$0xf]
  %v1012 = vld [vmem:[%s0 + $0x48] sm:$0xf]
  %v1013 = vld [vmem:[%s0 + $0x4c] sm:$0xf]
  %v1014 = vld [vmem:[%s0 + $0x50] sm:$0xf]
  %v1015 = vld [vmem:[%s0 + $0x54] sm:$0xf]
  %v1016 = vld [vmem:[%s0 + $0x58] sm:$0x1]
  %s1017 = scalar_lea.vmem %s1, 256
  %v1018 = vld [vmem:[%s1017] sm:$0xff]
  %v1019 = vld [vmem:[%s1017 + $0x8] sm:$0xff]
  %v1020 = vld [vmem:[%s1017 + $0x10] sm:$0xff]
  %v1021 = vld [vmem:[%s1017 + $0x18] sm:$0xff]
  %v1022 = vld [vmem:[%s1017 + $0x20] sm:$0xff]
  %v1023 = vld [vmem:[%s1017 + $0x28] sm:$0xff]
  %v1024 = vld [vmem:[%s1017 + $0x30] sm:$0xff]
  %v1025 = vld [vmem:[%s1017 + $0x38] sm:$0xff]
  %v1026 = vld [vmem:[%s1017 + $0x40] sm:$0xff]
  %v1027 = vld [vmem:[%s1017 + $0x48] sm:$0xff]
  %v1028 = vld [vmem:[%s1017 + $0x50] sm:$0xff]
  %v1029 = vld [vmem:[%s1017 + $0x58] sm:$0xff]
  %v1030 = vld [vmem:[%s1017 + $0x60] sm:$0xff]
  %v1031 = vld [vmem:[%s1017 + $0x68] sm:$0xff]
  %v1032 = vld [vmem:[%s1017 + $0x70] sm:$0xff]
  %v1033 = vld [vmem:[%s1017 + $0x78] sm:$0xff]
  %v1056 = vunpack.c.l.b16 %v995
  %v1057 = vunpack.c.l.b16 %v996
  %v1058 = vunpack.c.l.b16 %v997
  %v1059 = vunpack.c.l.b16 %v998
  %v1060 = vunpack.c.l.b16 %v999
  %v1061 = vunpack.c.l.b16 %v1000
  %v1062 = vunpack.c.l.b16 %v1001
  %v1063 = vunpack.c.l.b16 %v1002
  %v1064 = vunpack.c.l.b16 %v1003
  %v1065 = vunpack.c.l.b16 %v1004
  %v1066 = vunpack.c.l.b16 %v1005
  %v1067 = vunpack.c.l.b16 %v1006
  %v1068 = vunpack.c.l.b16 %v1007
  %v1069 = vunpack.c.l.b16 %v1008
  %v1070 = vunpack.c.l.b16 %v1009
  %v1071 = vunpack.c.l.b16 %v1010
  %v1072 = vunpack.c.l.b16 %v1011
  %v1073 = vunpack.c.l.b16 %v1012
  %v1074 = vunpack.c.l.b16 %v1013
  %v1075 = vunpack.c.l.b16 %v1014
  %v1076 = vunpack.c.l.b16 %v1015
  %v1077 = vunpack.c.l.b16 %v1016
  %v1078 = vpack.c.b16 %v1057, %v1056
  %v1079 = vpack.c.b16 %v1059, %v1058
  %v1080 = vpack.c.b16 %v1061, %v1060
  %v1081 = vpack.c.b16 %v1063, %v1062
  %v1082 = vpack.c.b16 %v1065, %v1064
  %v1083 = vpack.c.b16 %v1067, %v1066
  %v1084 = vpack.c.b16 %v1069, %v1068
  %v1085 = vpack.c.b16 %v1071, %v1070
  %v1086 = vpack.c.b16 %v1073, %v1072
  %v1087 = vpack.c.b16 %v1075, %v1074
  %v1088 = vpack.c.b16 %v1077, %v1076
  %v1090 = vshrl.u32 %v1078, 16
  %v1092 = vshll.u32 %v1078, 16
  %v1094 = vrot.slane %v1092, 1
  %v1095 = vor.u32 %v1090, %v1094
  %v1097 = vshll.u32 %v1079, 16
  %v1099 = vrot.slane %v1097, 1
  %v1100 = vsel %vm125, %v1095, %v1099
  %v1101 = vshrl.u32 %v1079, 16
  %v1103 = vor.u32 %v1101, %v1099
  %v1105 = vshll.u32 %v1080, 16
  %v1107 = vrot.slane %v1105, 1
  %v1108 = vsel %vm125, %v1103, %v1107
  %v1109 = vshrl.u32 %v1080, 16
  %v1111 = vor.u32 %v1109, %v1107
  %v1113 = vshll.u32 %v1081, 16
  %v1115 = vrot.slane %v1113, 1
  %v1116 = vsel %vm125, %v1111, %v1115
  %v1117 = vshrl.u32 %v1081, 16
  %v1119 = vor.u32 %v1117, %v1115
  %v1121 = vshll.u32 %v1082, 16
  %v1123 = vrot.slane %v1121, 1
  %v1124 = vsel %vm125, %v1119, %v1123
  %v1125 = vshrl.u32 %v1082, 16
  %v1127 = vor.u32 %v1125, %v1123
  %v1129 = vshll.u32 %v1083, 16
  %v1131 = vrot.slane %v1129, 1
  %v1132 = vsel %vm125, %v1127, %v1131
  %v1133 = vshrl.u32 %v1083, 16
  %v1135 = vor.u32 %v1133, %v1131
  %v1137 = vshll.u32 %v1084, 16
  %v1139 = vrot.slane %v1137, 1
  %v1140 = vsel %vm125, %v1135, %v1139
  %v1141 = vshrl.u32 %v1084, 16
  %v1143 = vor.u32 %v1141, %v1139
  %v1145 = vshll.u32 %v1085, 16
  %v1147 = vrot.slane %v1145, 1
  %v1148 = vsel %vm125, %v1143, %v1147
  %v1149 = vshrl.u32 %v1085, 16
  %v1151 = vor.u32 %v1149, %v1147
  %v1153 = vshll.u32 %v1086, 16
  %v1155 = vrot.slane %v1153, 1
  %v1156 = vsel %vm125, %v1151, %v1155
  %v1157 = vshrl.u32 %v1086, 16
  %v1159 = vor.u32 %v1157, %v1155
  %v1161 = vshll.u32 %v1087, 16
  %v1163 = vrot.slane %v1161, 1
  %v1164 = vsel %vm125, %v1159, %v1163
  %v1165 = vshrl.u32 %v1087, 16
  %v1167 = vor.u32 %v1165, %v1163
  %v1169 = vshll.u32 %v1088, 16
  %v1171 = vrot.slane %v1169, 1
  %v1172 = vsel %vm125, %v1167, %v1171
  %v1173 = vshrl.u32 %v1088, 16
  %v1175 = vor.u32 %v1173, %v1171
  %v1192 = vunpack.c.l.b16 %v1018
  %v1193 = vunpack.c.h.b16 %v1018
  %v1194 = vunpack.c.l.b16 %v1019
  %v1195 = vunpack.c.h.b16 %v1019
  %v1196 = vunpack.c.l.b16 %v1020
  %v1197 = vunpack.c.h.b16 %v1020
  %v1198 = vunpack.c.l.b16 %v1021
  %v1199 = vunpack.c.h.b16 %v1021
  %v1200 = vunpack.c.l.b16 %v1022
  %v1201 = vunpack.c.h.b16 %v1022
  %v1202 = vunpack.c.l.b16 %v1023
  %v1203 = vunpack.c.h.b16 %v1023
  %v1204 = vunpack.c.l.b16 %v1024
  %v1205 = vunpack.c.h.b16 %v1024
  %v1206 = vunpack.c.l.b16 %v1025
  %v1207 = vunpack.c.h.b16 %v1025
  %v1208 = vunpack.c.l.b16 %v1026
  %v1209 = vunpack.c.h.b16 %v1026
  %v1210 = vunpack.c.l.b16 %v1027
  %v1211 = vunpack.c.h.b16 %v1027
  %v1212 = vunpack.c.l.b16 %v1028
  %v1213 = vunpack.c.h.b16 %v1028
  %v1214 = vunpack.c.l.b16 %v1029
  %v1215 = vunpack.c.h.b16 %v1029
  %v1216 = vunpack.c.l.b16 %v1030
  %v1217 = vunpack.c.h.b16 %v1030
  %v1218 = vunpack.c.l.b16 %v1031
  %v1219 = vunpack.c.h.b16 %v1031
  %v1220 = vunpack.c.l.b16 %v1032
  %v1221 = vunpack.c.h.b16 %v1032
  %v1222 = vunpack.c.l.b16 %v1033
  %v1223 = vunpack.c.h.b16 %v1033
  %v1224 = vpack.c.b16 %v1196, %v1192
  %v1225 = vpack.c.b16 %v1197, %v1193
  %v1226 = vpack.c.b16 %v1198, %v1194
  %v1227 = vpack.c.b16 %v1199, %v1195
  %v1228 = vpack.c.b16 %v1204, %v1200
  %v1229 = vpack.c.b16 %v1205, %v1201
  %v1230 = vpack.c.b16 %v1206, %v1202
  %v1231 = vpack.c.b16 %v1207, %v1203
  %v1232 = vpack.c.b16 %v1212, %v1208
  %v1233 = vpack.c.b16 %v1213, %v1209
  %v1234 = vpack.c.b16 %v1214, %v1210
  %v1235 = vpack.c.b16 %v1215, %v1211
  %v1236 = vpack.c.b16 %v1220, %v1216
  %v1237 = vpack.c.b16 %v1221, %v1217
  %v1238 = vpack.c.b16 %v1222, %v1218
  %v1239 = vpack.c.b16 %v1223, %v1219
  %v1257 = vsel %vm293, %v1100, 0
  %v1260 = vsel %vm293, %v1108, 0
  %v1263 = vsel %vm293, %v1116, 0
  %v1266 = vsel %vm293, %v1124, 0
  %v1269 = vsel %vm293, %v1132, 0
  %v1272 = vsel %vm293, %v1140, 0
  %v1275 = vsel %vm293, %v1148, 0
  %v1278 = vsel %vm293, %v1156, 0
  %v1281 = vsel %vm293, %v1164, 0
  %v1284 = vsel %vm293, %v1172, 0
  %v1287 = vsel %vm293, %v1175, 0
  %1289 = vmatprep.subr.bf16.mxu0 %v1225
  %1290 = vmatpush1.bf16.msra.mxu0 %v1224
  %1291 = vmatprep.subr.bf16.mxu0 %v1229
  %1292 = vmatpush1.bf16.msra.mxu0 %v1228
  %1293 = vmatprep.subr.bf16.mxu0 %v1233
  %1294 = vmatpush1.bf16.msra.mxu0 %v1232
  %1295 = vmatprep.subr.bf16.mxu0 %v1237
  %1296 = vmatpush1.bf16.msra.mxu0 %v1236
  %1297 = vmatprep.subr.bf16.mxu0 0
  %1298 = vmatpush1.bf16.msra.mxu0 0
  %1299 = vmatprep.subr.bf16.mxu0 0
  %1300 = vmatpush1.bf16.msra.mxu0 0
  %1301 = vmatprep.subr.bf16.mxu0 0
  %1302 = vmatpush1.bf16.msra.mxu0 0
  %1303 = vmatprep.subr.bf16.mxu0 0
  %1304 = vmatpush1.bf16.msra.mxu0 0
  %1305 = vmatprep.subr.bf16.mxu0 0
  %1306 = vmatpush1.bf16.msra.mxu0 0
  %1307 = vmatprep.subr.bf16.mxu0 0
  %1308 = vmatpush1.bf16.msra.mxu0 0
  %1309 = vmatprep.subr.bf16.mxu0 0
  %1310 = vmatpush1.bf16.msra.mxu0 0
  %1311 = vmatprep.subr.bf16.mxu0 0
  %1312 = vmatpush1.bf16.msra.mxu0 0
  %1313 = vmatprep.subr.bf16.mxu0 0
  %1314 = vmatpush1.bf16.msra.mxu0 0
  %1315 = vmatprep.subr.bf16.mxu0 0
  %1316 = vmatpush1.bf16.msra.mxu0 0
  %1317 = vmatprep.subr.bf16.mxu0 0
  %1318 = vmatpush1.bf16.msra.mxu0 0
  %1319 = vmatprep.subr.bf16.mxu0 0
  %1320 = vmatpush1.bf16.msra.mxu0 0
  %1321 = vmatprep.mubr.bf16.mxu0 0
  %1322 = vmatmul.mubr.bf16.gmra.mrb[0].mxu0 %v1257
  %v1323 = vpop.f32.mrb[0].mxu0
  %v1324 = vadd.f32 0.0, %v1323
  %v1325 = vpop.f32.mrb[0].mxu0
  %v1326 = vadd.f32 0.0, %v1325
  %v1327 = vpop.f32.mrb[0].mxu0
  %v1328 = vadd.f32 0.0, %v1327
  %v1329 = vpop.f32.mrb[0].mxu0
  %v1330 = vadd.f32 0.0, %v1329
  %1331 = vmatprep.mubr.bf16.mxu0 0
  %1332 = vmatmul.mubr.bf16.gmra.mrb[0].mxu0 %v1260
  %v1333 = vpop.f32.mrb[0].mxu0
  %v1334 = vadd.f32 0.0, %v1333
  %v1335 = vpop.f32.mrb[0].mxu0
  %v1336 = vadd.f32 0.0, %v1335
  %v1337 = vpop.f32.mrb[0].mxu0
  %v1338 = vadd.f32 0.0, %v1337
  %v1339 = vpop.f32.mrb[0].mxu0
  %v1340 = vadd.f32 0.0, %v1339
  %1341 = vmatprep.mubr.bf16.mxu0 0
  %1342 = vmatmul.mubr.bf16.gmra.mrb[0].mxu0 %v1263
  %v1343 = vpop.f32.mrb[0].mxu0
  %v1344 = vadd.f32 0.0, %v1343
  %v1345 = vpop.f32.mrb[0].mxu0
  %v1346 = vadd.f32 0.0, %v1345
  %v1347 = vpop.f32.mrb[0].mxu0
  %v1348 = vadd.f32 0.0, %v1347
  %v1349 = vpop.f32.mrb[0].mxu0
  %v1350 = vadd.f32 0.0, %v1349
  %1351 = vmatprep.mubr.bf16.mxu0 0
  %1352 = vmatmul.mubr.bf16.gmra.mrb[0].mxu0 %v1266
  %v1353 = vpop.f32.mrb[0].mxu0
  %v1354 = vadd.f32 0.0, %v1353
  %v1355 = vpop.f32.mrb[0].mxu0
  %v1356 = vadd.f32 0.0, %v1355
  %v1357 = vpop.f32.mrb[0].mxu0
  %v1358 = vadd.f32 0.0, %v1357
  %v1359 = vpop.f32.mrb[0].mxu0
  %v1360 = vadd.f32 0.0, %v1359
  %1361 = vmatprep.mubr.bf16.mxu0 0
  %1362 = vmatmul.mubr.bf16.gmra.mrb[0].mxu0 %v1269
  %v1363 = vpop.f32.mrb[0].mxu0
  %v1364 = vadd.f32 0.0, %v1363
  %v1365 = vpop.f32.mrb[0].mxu0
  %v1366 = vadd.f32 0.0, %v1365
  %v1367 = vpop.f32.mrb[0].mxu0
  %v1368 = vadd.f32 0.0, %v1367
  %v1369 = vpop.f32.mrb[0].mxu0
  %v1370 = vadd.f32 0.0, %v1369
  %1371 = vmatprep.mubr.bf16.mxu0 0
  %1372 = vmatmul.mubr.bf16.gmra.mrb[0].mxu0 %v1272
  %v1373 = vpop.f32.mrb[0].mxu0
  %v1374 = vadd.f32 0.0, %v1373
  %v1375 = vpop.f32.mrb[0].mxu0
  %v1376 = vadd.f32 0.0, %v1375
  %v1377 = vpop.f32.mrb[0].mxu0
  %v1378 = vadd.f32 0.0, %v1377
  %v1379 = vpop.f32.mrb[0].mxu0
  %v1380 = vadd.f32 0.0, %v1379
  %1381 = vmatprep.mubr.bf16.mxu0 0
  %1382 = vmatmul.mubr.bf16.gmra.mrb[0].mxu0 %v1275
  %v1383 = vpop.f32.mrb[0].mxu0
  %v1384 = vadd.f32 0.0, %v1383
  %v1385 = vpop.f32.mrb[0].mxu0
  %v1386 = vadd.f32 0.0, %v1385
  %v1387 = vpop.f32.mrb[0].mxu0
  %v1388 = vadd.f32 0.0, %v1387
  %v1389 = vpop.f32.mrb[0].mxu0
  %v1390 = vadd.f32 0.0, %v1389
  %1391 = vmatprep.mubr.bf16.mxu0 0
  %1392 = vmatmul.mubr.bf16.gmra.mrb[0].mxu0 %v1278
  %v1393 = vpop.f32.mrb[0].mxu0
  %v1394 = vadd.f32 0.0, %v1393
  %v1395 = vpop.f32.mrb[0].mxu0
  %v1396 = vadd.f32 0.0, %v1395
  %v1397 = vpop.f32.mrb[0].mxu0
  %v1398 = vadd.f32 0.0, %v1397
  %v1399 = vpop.f32.mrb[0].mxu0
  %v1400 = vadd.f32 0.0, %v1399
  %1401 = vmatprep.mubr.bf16.mxu0 0
  %1402 = vmatmul.mubr.bf16.gmra.mrb[0].mxu0 %v1281
  %v1403 = vpop.f32.mrb[0].mxu0
  %v1404 = vadd.f32 0.0, %v1403
  %v1405 = vpop.f32.mrb[0].mxu0
  %v1406 = vadd.f32 0.0, %v1405
  %v1407 = vpop.f32.mrb[0].mxu0
  %v1408 = vadd.f32 0.0, %v1407
  %v1409 = vpop.f32.mrb[0].mxu0
  %v1410 = vadd.f32 0.0, %v1409
  %1411 = vmatprep.mubr.bf16.mxu0 0
  %1412 = vmatmul.mubr.bf16.gmra.mrb[0].mxu0 %v1284
  %v1413 = vpop.f32.mrb[0].mxu0
  %v1414 = vadd.f32 0.0, %v1413
  %v1415 = vpop.f32.mrb[0].mxu0
  %v1416 = vadd.f32 0.0, %v1415
  %v1417 = vpop.f32.mrb[0].mxu0
  %v1418 = vadd.f32 0.0, %v1417
  %v1419 = vpop.f32.mrb[0].mxu0
  %v1420 = vadd.f32 0.0, %v1419
  %1421 = vmatprep.mubr.bf16.mxu0 0
  %1422 = vmatmul.mubr.bf16.gmra.mrb[0].mxu0 %v1287
  %v1423 = vpop.f32.mrb[0].mxu0
  %v1424 = vadd.f32 0.0, %v1423
  %v1425 = vpop.f32.mrb[0].mxu0
  %v1426 = vadd.f32 0.0, %v1425
  %v1427 = vpop.f32.mrb[0].mxu0
  %v1428 = vpop.f32.mrb[0].mxu0
  %1429 = vdwg.mxu0
  %1430 = vmatprep.subr.bf16.mxu0 %v1227
  %1431 = vmatpush1.bf16.msra.mxu0 %v1226
  %1432 = vmatprep.subr.bf16.mxu0 %v1231
  %1433 = vmatpush1.bf16.msra.mxu0 %v1230
  %1434 = vmatprep.subr.bf16.mxu0 %v1235
  %1435 = vmatpush1.bf16.msra.mxu0 %v1234
  %1436 = vmatprep.subr.bf16.mxu0 %v1239
  %1437 = vmatpush1.bf16.msra.mxu0 %v1238
  %1438 = vmatprep.subr.bf16.mxu0 0
  %1439 = vmatpush1.bf16.msra.mxu0 0
  %1440 = vmatprep.subr.bf16.mxu0 0
  %1441 = vmatpush1.bf16.msra.mxu0 0
  %1442 = vmatprep.subr.bf16.mxu0 0
  %1443 = vmatpush1.bf16.msra.mxu0 0
  %1444 = vmatprep.subr.bf16.mxu0 0
  %1445 = vmatpush1.bf16.msra.mxu0 0
  %1446 = vmatprep.subr.bf16.mxu0 0
  %1447 = vmatpush1.bf16.msra.mxu0 0
  %1448 = vmatprep.subr.bf16.mxu0 0
  %1449 = vmatpush1.bf16.msra.mxu0 0
  %1450 = vmatprep.subr.bf16.mxu0 0
  %1451 = vmatpush1.bf16.msra.mxu0 0
  %1452 = vmatprep.subr.bf16.mxu0 0
  %1453 = vmatpush1.bf16.msra.mxu0 0
  %1454 = vmatprep.subr.bf16.mxu0 0
  %1455 = vmatpush1.bf16.msra.mxu0 0
  %1456 = vmatprep.subr.bf16.mxu0 0
  %1457 = vmatpush1.bf16.msra.mxu0 0
  %1458 = vmatprep.subr.bf16.mxu0 0
  %1459 = vmatpush1.bf16.msra.mxu0 0
  %1460 = vmatprep.subr.bf16.mxu0 0
  %1461 = vmatpush1.bf16.msra.mxu0 0
  %1462 = vmatprep.mubr.bf16.mxu0 0
  %1463 = vmatmul.mubr.bf16.gmra.mrb[0].mxu0 %v1257
  %v1464 = vpop.f32.mrb[0].mxu0
  %v1465 = vadd.f32 0.0, %v1464
  %v1466 = vpop.f32.mrb[0].mxu0
  %v1467 = vadd.f32 0.0, %v1466
  %v1468 = vpop.f32.mrb[0].mxu0
  %v1469 = vadd.f32 0.0, %v1468
  %v1470 = vpop.f32.mrb[0].mxu0
  %v1471 = vadd.f32 0.0, %v1470
  %1472 = vmatprep.mubr.bf16.mxu0 0
  %1473 = vmatmul.mubr.bf16.gmra.mrb[0].mxu0 %v1260
  %v1474 = vpop.f32.mrb[0].mxu0
  %v1475 = vadd.f32 0.0, %v1474
  %v1476 = vpop.f32.mrb[0].mxu0
  %v1477 = vadd.f32 0.0, %v1476
  %v1478 = vpop.f32.mrb[0].mxu0
  %v1479 = vadd.f32 0.0, %v1478
  %v1480 = vpop.f32.mrb[0].mxu0
  %v1481 = vadd.f32 0.0, %v1480
  %1482 = vmatprep.mubr.bf16.mxu0 0
  %1483 = vmatmul.mubr.bf16.gmra.mrb[0].mxu0 %v1263
  %v1484 = vpop.f32.mrb[0].mxu0
  %v1485 = vadd.f32 0.0, %v1484
  %v1486 = vpop.f32.mrb[0].mxu0
  %v1487 = vadd.f32 0.0, %v1486
  %v1488 = vpop.f32.mrb[0].mxu0
  %v1489 = vadd.f32 0.0, %v1488
  %v1490 = vpop.f32.mrb[0].mxu0
  %v1491 = vadd.f32 0.0, %v1490
  %1492 = vmatprep.mubr.bf16.mxu0 0
  %1493 = vmatmul.mubr.bf16.gmra.mrb[0].mxu0 %v1266
  %v1494 = vpop.f32.mrb[0].mxu0
  %v1495 = vadd.f32 0.0, %v1494
  %v1496 = vpop.f32.mrb[0].mxu0
  %v1497 = vadd.f32 0.0, %v1496
  %v1498 = vpop.f32.mrb[0].mxu0
  %v1499 = vadd.f32 0.0, %v1498
  %v1500 = vpop.f32.mrb[0].mxu0
  %v1501 = vadd.f32 0.0, %v1500
  %1502 = vmatprep.mubr.bf16.mxu0 0
  %1503 = vmatmul.mubr.bf16.gmra.mrb[0].mxu0 %v1269
  %v1504 = vpop.f32.mrb[0].mxu0
  %v1505 = vadd.f32 0.0, %v1504
  %v1506 = vpop.f32.mrb[0].mxu0
  %v1507 = vadd.f32 0.0, %v1506
  %v1508 = vpop.f32.mrb[0].mxu0
  %v1509 = vadd.f32 0.0, %v1508
  %v1510 = vpop.f32.mrb[0].mxu0
  %v1511 = vadd.f32 0.0, %v1510
  %1512 = vmatprep.mubr.bf16.mxu0 0
  %1513 = vmatmul.mubr.bf16.gmra.mrb[0].mxu0 %v1272
  %v1514 = vpop.f32.mrb[0].mxu0
  %v1515 = vadd.f32 0.0, %v1514
  %v1516 = vpop.f32.mrb[0].mxu0
  %v1517 = vadd.f32 0.0, %v1516
  %v1518 = vpop.f32.mrb[0].mxu0
  %v1519 = vadd.f32 0.0, %v1518
  %v1520 = vpop.f32.mrb[0].mxu0
  %v1521 = vadd.f32 0.0, %v1520
  %1522 = vmatprep.mubr.bf16.mxu0 0
  %1523 = vmatmul.mubr.bf16.gmra.mrb[0].mxu0 %v1275
  %v1524 = vpop.f32.mrb[0].mxu0
  %v1525 = vadd.f32 0.0, %v1524
  %v1526 = vpop.f32.mrb[0].mxu0
  %v1527 = vadd.f32 0.0, %v1526
  %v1528 = vpop.f32.mrb[0].mxu0
  %v1529 = vadd.f32 0.0, %v1528
  %v1530 = vpop.f32.mrb[0].mxu0
  %v1531 = vadd.f32 0.0, %v1530
  %1532 = vmatprep.mubr.bf16.mxu0 0
  %1533 = vmatmul.mubr.bf16.gmra.mrb[0].mxu0 %v1278
  %v1534 = vpop.f32.mrb[0].mxu0
  %v1535 = vadd.f32 0.0, %v1534
  %v1536 = vpop.f32.mrb[0].mxu0
  %v1537 = vadd.f32 0.0, %v1536
  %v1538 = vpop.f32.mrb[0].mxu0
  %v1539 = vadd.f32 0.0, %v1538
  %v1540 = vpop.f32.mrb[0].mxu0
  %v1541 = vadd.f32 0.0, %v1540
  %1542 = vmatprep.mubr.bf16.mxu0 0
  %1543 = vmatmul.mubr.bf16.gmra.mrb[0].mxu0 %v1281
  %v1544 = vpop.f32.mrb[0].mxu0
  %v1545 = vadd.f32 0.0, %v1544
  %v1546 = vpop.f32.mrb[0].mxu0
  %v1547 = vadd.f32 0.0, %v1546
  %v1548 = vpop.f32.mrb[0].mxu0
  %v1549 = vadd.f32 0.0, %v1548
  %v1550 = vpop.f32.mrb[0].mxu0
  %v1551 = vadd.f32 0.0, %v1550
  %1552 = vmatprep.mubr.bf16.mxu0 0
  %1553 = vmatmul.mubr.bf16.gmra.mrb[0].mxu0 %v1284
  %v1554 = vpop.f32.mrb[0].mxu0
  %v1555 = vadd.f32 0.0, %v1554
  %v1556 = vpop.f32.mrb[0].mxu0
  %v1557 = vadd.f32 0.0, %v1556
  %v1558 = vpop.f32.mrb[0].mxu0
  %v1559 = vadd.f32 0.0, %v1558
  %v1560 = vpop.f32.mrb[0].mxu0
  %v1561 = vadd.f32 0.0, %v1560
  %1562 = vmatprep.mubr.bf16.mxu0 0
  %1563 = vmatmul.mubr.bf16.gmra.mrb[0].mxu0 %v1287
  %v1564 = vpop.f32.mrb[0].mxu0
  %v1565 = vadd.f32 0.0, %v1564
  %v1566 = vpop.f32.mrb[0].mxu0
  %v1567 = vadd.f32 0.0, %v1566
  %v1568 = vpop.f32.mrb[0].mxu0
  %v1569 = vpop.f32.mrb[0].mxu0
  %1570 = vdwg.mxu0
  %v1571 = vadd.f32 %v748, %v1324
  %v1572 = vadd.f32 %v750, %v1326
  %v1573 = vadd.f32 %v889, %v1465
  %v1574 = vadd.f32 %v891, %v1467
  %v1575 = vadd.f32 %v752, %v1328
  %v1576 = vadd.f32 %v754, %v1330
  %v1577 = vadd.f32 %v893, %v1469
  %v1578 = vadd.f32 %v895, %v1471
  %v1579 = vadd.f32 %v758, %v1334
  %v1580 = vadd.f32 %v760, %v1336
  %v1581 = vadd.f32 %v899, %v1475
  %v1582 = vadd.f32 %v901, %v1477
  %v1583 = vadd.f32 %v762, %v1338
  %v1584 = vadd.f32 %v764, %v1340
  %v1585 = vadd.f32 %v903, %v1479
  %v1586 = vadd.f32 %v905, %v1481
  %v1587 = vadd.f32 %v768, %v1344
  %v1588 = vadd.f32 %v770, %v1346
  %v1589 = vadd.f32 %v909, %v1485
  %v1590 = vadd.f32 %v911, %v1487
  %v1591 = vadd.f32 %v772, %v1348
  %v1592 = vadd.f32 %v774, %v1350
  %v1593 = vadd.f32 %v913, %v1489
  %v1594 = vadd.f32 %v915, %v1491
  %v1595 = vadd.f32 %v778, %v1354
  %v1596 = vadd.f32 %v780, %v1356
  %v1597 = vadd.f32 %v919, %v1495
  %v1598 = vadd.f32 %v921, %v1497
  %v1599 = vadd.f32 %v782, %v1358
  %v1600 = vadd.f32 %v784, %v1360
  %v1601 = vadd.f32 %v923, %v1499
  %v1602 = vadd.f32 %v925, %v1501
  %v1603 = vadd.f32 %v788, %v1364
  %v1604 = vadd.f32 %v790, %v1366
  %v1605 = vadd.f32 %v929, %v1505
  %v1606 = vadd.f32 %v931, %v1507
  %v1607 = vadd.f32 %v792, %v1368
  %v1608 = vadd.f32 %v794, %v1370
  %v1609 = vadd.f32 %v933, %v1509
  %v1610 = vadd.f32 %v935, %v1511
  %v1611 = vadd.f32 %v798, %v1374
  %v1612 = vadd.f32 %v800, %v1376
  %v1613 = vadd.f32 %v939, %v1515
  %v1614 = vadd.f32 %v941, %v1517
  %v1615 = vadd.f32 %v802, %v1378
  %v1616 = vadd.f32 %v804, %v1380
  %v1617 = vadd.f32 %v943, %v1519
  %v1618 = vadd.f32 %v945, %v1521
  %v1619 = vadd.f32 %v808, %v1384
  %v1620 = vadd.f32 %v810, %v1386
  %v1621 = vadd.f32 %v949, %v1525
  %v1622 = vadd.f32 %v951, %v1527
  %v1623 = vadd.f32 %v812, %v1388
  %v1624 = vadd.f32 %v814, %v1390
  %v1625 = vadd.f32 %v953, %v1529
  %v1626 = vadd.f32 %v955, %v1531
  %v1627 = vadd.f32 %v818, %v1394
  %v1628 = vadd.f32 %v820, %v1396
  %v1629 = vadd.f32 %v959, %v1535
  %v1630 = vadd.f32 %v961, %v1537
  %v1631 = vadd.f32 %v822, %v1398
  %v1632 = vadd.f32 %v824, %v1400
  %v1633 = vadd.f32 %v963, %v1539
  %v1634 = vadd.f32 %v965, %v1541
  %v1635 = vadd.f32 %v828, %v1404
  %v1636 = vadd.f32 %v830, %v1406
  %v1637 = vadd.f32 %v969, %v1545
  %v1638 = vadd.f32 %v971, %v1547
  %v1639 = vadd.f32 %v832, %v1408
  %v1640 = vadd.f32 %v834, %v1410
  %v1641 = vadd.f32 %v973, %v1549
  %v1642 = vadd.f32 %v975, %v1551
  %v1643 = vadd.f32 %v838, %v1414
  %v1644 = vadd.f32 %v840, %v1416
  %v1645 = vadd.f32 %v979, %v1555
  %v1646 = vadd.f32 %v981, %v1557
  %v1647 = vadd.f32 %v842, %v1418
  %v1648 = vadd.f32 %v844, %v1420
  %v1649 = vadd.f32 %v983, %v1559
  %v1650 = vadd.f32 %v985, %v1561
  %v1651 = vadd.f32 %v848, %v1424
  %v1652 = vadd.f32 %v850, %v1426
  %v1653 = vadd.f32 %v989, %v1565
  %v1654 = vadd.f32 %v991, %v1567
  %v1655 = vld [vmem:[%s0 + $0x4] sm:$0xe]
  %s1656 = scalar_lea.vmem %s1, 384
  %v1657 = vld [vmem:[%s1656] sm:$0xff]
  %v1658 = vld [vmem:[%s1656 + $0x8] sm:$0xff]
  %v1659 = vld [vmem:[%s1656 + $0x10] sm:$0xff]
  %v1660 = vld [vmem:[%s1656 + $0x18] sm:$0xff]
  %v1661 = vld [vmem:[%s1656 + $0x20] sm:$0xff]
  %v1662 = vld [vmem:[%s1656 + $0x28] sm:$0xff]
  %v1663 = vld [vmem:[%s1656 + $0x30] sm:$0xff]
  %v1664 = vld [vmem:[%s1656 + $0x38] sm:$0xff]
  %v1665 = vld [vmem:[%s1656 + $0x40] sm:$0xff]
  %v1666 = vld [vmem:[%s1656 + $0x48] sm:$0xff]
  %v1667 = vld [vmem:[%s1656 + $0x50] sm:$0xff]
  %v1668 = vld [vmem:[%s1656 + $0x58] sm:$0xff]
  %v1669 = vld [vmem:[%s1656 + $0x60] sm:$0xff]
  %v1670 = vld [vmem:[%s1656 + $0x68] sm:$0xff]
  %v1671 = vld [vmem:[%s1656 + $0x70] sm:$0xff]
  %v1672 = vld [vmem:[%s1656 + $0x78] sm:$0xff]
  %v1674 = vunpack.c.l.b16 %v1655
  %v1675 = vpack.c.b16 %v1057, %v1674
  %vm1676 = vcmask 1046528
  %v1677 = vrot.slane %v1675, 1
  %v1678 = vrot.slane %v1079, 1
  %v1679 = vsel %vm1676, %v1677, %v1678
  %v1680 = vrot.slane %v1080, 1
  %v1681 = vsel %vm1676, %v1678, %v1680
  %v1682 = vrot.slane %v1081, 1
  %v1683 = vsel %vm1676, %v1680, %v1682
  %v1684 = vrot.slane %v1082, 1
  %v1685 = vsel %vm1676, %v1682, %v1684
  %v1686 = vrot.slane %v1083, 1
  %v1687 = vsel %vm1676, %v1684, %v1686
  %v1688 = vrot.slane %v1084, 1
  %v1689 = vsel %vm1676, %v1686, %v1688
  %v1690 = vrot.slane %v1085, 1
  %v1691 = vsel %vm1676, %v1688, %v1690
  %v1692 = vrot.slane %v1086, 1
  %v1693 = vsel %vm1676, %v1690, %v1692
  %v1694 = vrot.slane %v1087, 1
  %v1695 = vsel %vm1676, %v1692, %v1694
  %v1696 = vrot.slane %v1088, 1
  %v1697 = vsel %vm1676, %v1694, %v1696
  %v1714 = vunpack.c.l.b16 %v1657
  %v1715 = vunpack.c.h.b16 %v1657
  %v1716 = vunpack.c.l.b16 %v1658
  %v1717 = vunpack.c.h.b16 %v1658
  %v1718 = vunpack.c.l.b16 %v1659
  %v1719 = vunpack.c.h.b16 %v1659
  %v1720 = vunpack.c.l.b16 %v1660
  %v1721 = vunpack.c.h.b16 %v1660
  %v1722 = vunpack.c.l.b16 %v1661
  %v1723 = vunpack.c.h.b16 %v1661
  %v1724 = vunpack.c.l.b16 %v1662
  %v1725 = vunpack.c.h.b16 %v1662
  %v1726 = vunpack.c.l.b16 %v1663
  %v1727 = vunpack.c.h.b16 %v1663
  %v1728 = vunpack.c.l.b16 %v1664
  %v1729 = vunpack.c.h.b16 %v1664
  %v1730 = vunpack.c.l.b16 %v1665
  %v1731 = vunpack.c.h.b16 %v1665
  %v1732 = vunpack.c.l.b16 %v1666
  %v1733 = vunpack.c.h.b16 %v1666
  %v1734 = vunpack.c.l.b16 %v1667
  %v1735 = vunpack.c.h.b16 %v1667
  %v1736 = vunpack.c.l.b16 %v1668
  %v1737 = vunpack.c.h.b16 %v1668
  %v1738 = vunpack.c.l.b16 %v1669
  %v1739 = vunpack.c.h.b16 %v1669
  %v1740 = vunpack.c.l.b16 %v1670
  %v1741 = vunpack.c.h.b16 %v1670
  %v1742 = vunpack.c.l.b16 %v1671
  %v1743 = vunpack.c.h.b16 %v1671
  %v1744 = vunpack.c.l.b16 %v1672
  %v1745 = vunpack.c.h.b16 %v1672
  %v1746 = vpack.c.b16 %v1718, %v1714
  %v1747 = vpack.c.b16 %v1719, %v1715
  %v1748 = vpack.c.b16 %v1720, %v1716
  %v1749 = vpack.c.b16 %v1721, %v1717
  %v1750 = vpack.c.b16 %v1726, %v1722
  %v1751 = vpack.c.b16 %v1727, %v1723
  %v1752 = vpack.c.b16 %v1728, %v1724
  %v1753 = vpack.c.b16 %v1729, %v1725
  %v1754 = vpack.c.b16 %v1734, %v1730
  %v1755 = vpack.c.b16 %v1735, %v1731
  %v1756 = vpack.c.b16 %v1736, %v1732
  %v1757 = vpack.c.b16 %v1737, %v1733
  %v1758 = vpack.c.b16 %v1742, %v1738
  %v1759 = vpack.c.b16 %v1743, %v1739
  %v1760 = vpack.c.b16 %v1744, %v1740
  %v1761 = vpack.c.b16 %v1745, %v1741
  %v1779 = vsel %vm293, %v1679, 0
  %v1782 = vsel %vm293, %v1681, 0
  %v1785 = vsel %vm293, %v1683, 0
  %v1788 = vsel %vm293, %v1685, 0
  %v1791 = vsel %vm293, %v1687, 0
  %v1794 = vsel %vm293, %v1689, 0
  %v1797 = vsel %vm293, %v1691, 0
  %v1800 = vsel %vm293, %v1693, 0
  %v1803 = vsel %vm293, %v1695, 0
  %v1806 = vsel %vm293, %v1697, 0
  %v1809 = vsel %vm293, %v1696, 0
  %1811 = vmatprep.subr.bf16.mxu0 %v1747
  %1812 = vmatpush1.bf16.msra.mxu0 %v1746
  %1813 = vmatprep.subr.bf16.mxu0 %v1751
  %1814 = vmatpush1.bf16.msra.mxu0 %v1750
  %1815 = vmatprep.subr.bf16.mxu0 %v1755
  %1816 = vmatpush1.bf16.msra.mxu0 %v1754
  %1817 = vmatprep.subr.bf16.mxu0 %v1759
  %1818 = vmatpush1.bf16.msra.mxu0 %v1758
  %1819 = vmatprep.subr.bf16.mxu0 0
  %1820 = vmatpush1.bf16.msra.mxu0 0
  %1821 = vmatprep.subr.bf16.mxu0 0
  %1822 = vmatpush1.bf16.msra.mxu0 0
  %1823 = vmatprep.subr.bf16.mxu0 0
  %1824 = vmatpush1.bf16.msra.mxu0 0
  %1825 = vmatprep.subr.bf16.mxu0 0
  %1826 = vmatpush1.bf16.msra.mxu0 0
  %1827 = vmatprep.subr.bf16.mxu0 0
  %1828 = vmatpush1.bf16.msra.mxu0 0
  %1829 = vmatprep.subr.bf16.mxu0 0
  %1830 = vmatpush1.bf16.msra.mxu0 0
  %1831 = vmatprep.subr.bf16.mxu0 0
  %1832 = vmatpush1.bf16.msra.mxu0 0
  %1833 = vmatprep.subr.bf16.mxu0 0
  %1834 = vmatpush1.bf16.msra.mxu0 0
  %1835 = vmatprep.subr.bf16.mxu0 0
  %1836 = vmatpush1.bf16.msra.mxu0 0
  %1837 = vmatprep.subr.bf16.mxu0 0
  %1838 = vmatpush1.bf16.msra.mxu0 0
  %1839 = vmatprep.subr.bf16.mxu0 0
  %1840 = vmatpush1.bf16.msra.mxu0 0
  %1841 = vmatprep.subr.bf16.mxu0 0
  %1842 = vmatpush1.bf16.msra.mxu0 0
  %1843 = vmatprep.mubr.bf16.mxu0 0
  %1844 = vmatmul.mubr.bf16.gmra.mrb[0].mxu0 %v1779
  %v1845 = vpop.f32.mrb[0].mxu0
  %v1846 = vadd.f32 0.0, %v1845
  %v1847 = vpop.f32.mrb[0].mxu0
  %v1848 = vadd.f32 0.0, %v1847
  %v1849 = vpop.f32.mrb[0].mxu0
  %v1850 = vadd.f32 0.0, %v1849
  %v1851 = vpop.f32.mrb[0].mxu0
  %v1852 = vadd.f32 0.0, %v1851
  %1853 = vmatprep.mubr.bf16.mxu0 0
  %1854 = vmatmul.mubr.bf16.gmra.mrb[0].mxu0 %v1782
  %v1855 = vpop.f32.mrb[0].mxu0
  %v1856 = vadd.f32 0.0, %v1855
  %v1857 = vpop.f32.mrb[0].mxu0
  %v1858 = vadd.f32 0.0, %v1857
  %v1859 = vpop.f32.mrb[0].mxu0
  %v1860 = vadd.f32 0.0, %v1859
  %v1861 = vpop.f32.mrb[0].mxu0
  %v1862 = vadd.f32 0.0, %v1861
  %1863 = vmatprep.mubr.bf16.mxu0 0
  %1864 = vmatmul.mubr.bf16.gmra.mrb[0].mxu0 %v1785
  %v1865 = vpop.f32.mrb[0].mxu0
  %v1866 = vadd.f32 0.0, %v1865
  %v1867 = vpop.f32.mrb[0].mxu0
  %v1868 = vadd.f32 0.0, %v1867
  %v1869 = vpop.f32.mrb[0].mxu0
  %v1870 = vadd.f32 0.0, %v1869
  %v1871 = vpop.f32.mrb[0].mxu0
  %v1872 = vadd.f32 0.0, %v1871
  %1873 = vmatprep.mubr.bf16.mxu0 0
  %1874 = vmatmul.mubr.bf16.gmra.mrb[0].mxu0 %v1788
  %v1875 = vpop.f32.mrb[0].mxu0
  %v1876 = vadd.f32 0.0, %v1875
  %v1877 = vpop.f32.mrb[0].mxu0
  %v1878 = vadd.f32 0.0, %v1877
  %v1879 = vpop.f32.mrb[0].mxu0
  %v1880 = vadd.f32 0.0, %v1879
  %v1881 = vpop.f32.mrb[0].mxu0
  %v1882 = vadd.f32 0.0, %v1881
  %1883 = vmatprep.mubr.bf16.mxu0 0
  %1884 = vmatmul.mubr.bf16.gmra.mrb[0].mxu0 %v1791
  %v1885 = vpop.f32.mrb[0].mxu0
  %v1886 = vadd.f32 0.0, %v1885
  %v1887 = vpop.f32.mrb[0].mxu0
  %v1888 = vadd.f32 0.0, %v1887
  %v1889 = vpop.f32.mrb[0].mxu0
  %v1890 = vadd.f32 0.0, %v1889
  %v1891 = vpop.f32.mrb[0].mxu0
  %v1892 = vadd.f32 0.0, %v1891
  %1893 = vmatprep.mubr.bf16.mxu0 0
  %1894 = vmatmul.mubr.bf16.gmra.mrb[0].mxu0 %v1794
  %v1895 = vpop.f32.mrb[0].mxu0
  %v1896 = vadd.f32 0.0, %v1895
  %v1897 = vpop.f32.mrb[0].mxu0
  %v1898 = vadd.f32 0.0, %v1897
  %v1899 = vpop.f32.mrb[0].mxu0
  %v1900 = vadd.f32 0.0, %v1899
  %v1901 = vpop.f32.mrb[0].mxu0
  %v1902 = vadd.f32 0.0, %v1901
  %1903 = vmatprep.mubr.bf16.mxu0 0
  %1904 = vmatmul.mubr.bf16.gmra.mrb[0].mxu0 %v1797
  %v1905 = vpop.f32.mrb[0].mxu0
  %v1906 = vadd.f32 0.0, %v1905
  %v1907 = vpop.f32.mrb[0].mxu0
  %v1908 = vadd.f32 0.0, %v1907
  %v1909 = vpop.f32.mrb[0].mxu0
  %v1910 = vadd.f32 0.0, %v1909
  %v1911 = vpop.f32.mrb[0].mxu0
  %v1912 = vadd.f32 0.0, %v1911
  %1913 = vmatprep.mubr.bf16.mxu0 0
  %1914 = vmatmul.mubr.bf16.gmra.mrb[0].mxu0 %v1800
  %v1915 = vpop.f32.mrb[0].mxu0
  %v1916 = vadd.f32 0.0, %v1915
  %v1917 = vpop.f32.mrb[0].mxu0
  %v1918 = vadd.f32 0.0, %v1917
  %v1919 = vpop.f32.mrb[0].mxu0
  %v1920 = vadd.f32 0.0, %v1919
  %v1921 = vpop.f32.mrb[0].mxu0
  %v1922 = vadd.f32 0.0, %v1921
  %1923 = vmatprep.mubr.bf16.mxu0 0
  %1924 = vmatmul.mubr.bf16.gmra.mrb[0].mxu0 %v1803
  %v1925 = vpop.f32.mrb[0].mxu0
  %v1926 = vadd.f32 0.0, %v1925
  %v1927 = vpop.f32.mrb[0].mxu0
  %v1928 = vadd.f32 0.0, %v1927
  %v1929 = vpop.f32.mrb[0].mxu0
  %v1930 = vadd.f32 0.0, %v1929
  %v1931 = vpop.f32.mrb[0].mxu0
  %v1932 = vadd.f32 0.0, %v1931
  %1933 = vmatprep.mubr.bf16.mxu0 0
  %1934 = vmatmul.mubr.bf16.gmra.mrb[0].mxu0 %v1806
  %v1935 = vpop.f32.mrb[0].mxu0
  %v1936 = vadd.f32 0.0, %v1935
  %v1937 = vpop.f32.mrb[0].mxu0
  %v1938 = vadd.f32 0.0, %v1937
  %v1939 = vpop.f32.mrb[0].mxu0
  %v1940 = vadd.f32 0.0, %v1939
  %v1941 = vpop.f32.mrb[0].mxu0
  %v1942 = vadd.f32 0.0, %v1941
  %1943 = vmatprep.mubr.bf16.mxu0 0
  %1944 = vmatmul.mubr.bf16.gmra.mrb[0].mxu0 %v1809
  %v1945 = vpop.f32.mrb[0].mxu0
  %v1946 = vadd.f32 0.0, %v1945
  %v1947 = vpop.f32.mrb[0].mxu0
  %v1948 = vadd.f32 0.0, %v1947
  %v1949 = vpop.f32.mrb[0].mxu0
  %v1950 = vpop.f32.mrb[0].mxu0
  %1951 = vdwg.mxu0
  %1952 = vmatprep.subr.bf16.mxu0 %v1749
  %1953 = vmatpush1.bf16.msra.mxu0 %v1748
  %1954 = vmatprep.subr.bf16.mxu0 %v1753
  %1955 = vmatpush1.bf16.msra.mxu0 %v1752
  %1956 = vmatprep.subr.bf16.mxu0 %v1757
  %1957 = vmatpush1.bf16.msra.mxu0 %v1756
  %1958 = vmatprep.subr.bf16.mxu0 %v1761
  %1959 = vmatpush1.bf16.msra.mxu0 %v1760
  %1960 = vmatprep.subr.bf16.mxu0 0
  %1961 = vmatpush1.bf16.msra.mxu0 0
  %1962 = vmatprep.subr.bf16.mxu0 0
  %1963 = vmatpush1.bf16.msra.mxu0 0
  %1964 = vmatprep.subr.bf16.mxu0 0
  %1965 = vmatpush1.bf16.msra.mxu0 0
  %1966 = vmatprep.subr.bf16.mxu0 0
  %1967 = vmatpush1.bf16.msra.mxu0 0
  %1968 = vmatprep.subr.bf16.mxu0 0
  %1969 = vmatpush1.bf16.msra.mxu0 0
  %1970 = vmatprep.subr.bf16.mxu0 0
  %1971 = vmatpush1.bf16.msra.mxu0 0
  %1972 = vmatprep.subr.bf16.mxu0 0
  %1973 = vmatpush1.bf16.msra.mxu0 0
  %1974 = vmatprep.subr.bf16.mxu0 0
  %1975 = vmatpush1.bf16.msra.mxu0 0
  %1976 = vmatprep.subr.bf16.mxu0 0
  %1977 = vmatpush1.bf16.msra.mxu0 0
  %1978 = vmatprep.subr.bf16.mxu0 0
  %1979 = vmatpush1.bf16.msra.mxu0 0
  %1980 = vmatprep.subr.bf16.mxu0 0
  %1981 = vmatpush1.bf16.msra.mxu0 0
  %1982 = vmatprep.subr.bf16.mxu0 0
  %1983 = vmatpush1.bf16.msra.mxu0 0
  %1984 = vmatprep.mubr.bf16.mxu0 0
  %1985 = vmatmul.mubr.bf16.gmra.mrb[0].mxu0 %v1779
  %v1986 = vpop.f32.mrb[0].mxu0
  %v1987 = vadd.f32 0.0, %v1986
  %v1988 = vpop.f32.mrb[0].mxu0
  %v1989 = vadd.f32 0.0, %v1988
  %v1990 = vpop.f32.mrb[0].mxu0
  %v1991 = vadd.f32 0.0, %v1990
  %v1992 = vpop.f32.mrb[0].mxu0
  %v1993 = vadd.f32 0.0, %v1992
  %1994 = vmatprep.mubr.bf16.mxu0 0
  %1995 = vmatmul.mubr.bf16.gmra.mrb[0].mxu0 %v1782
  %v1996 = vpop.f32.mrb[0].mxu0
  %v1997 = vadd.f32 0.0, %v1996
  %v1998 = vpop.f32.mrb[0].mxu0
  %v1999 = vadd.f32 0.0, %v1998
  %v2000 = vpop.f32.mrb[0].mxu0
  %v2001 = vadd.f32 0.0, %v2000
  %v2002 = vpop.f32.mrb[0].mxu0
  %v2003 = vadd.f32 0.0, %v2002
  %2004 = vmatprep.mubr.bf16.mxu0 0
  %2005 = vmatmul.mubr.bf16.gmra.mrb[0].mxu0 %v1785
  %v2006 = vpop.f32.mrb[0].mxu0
  %v2007 = vadd.f32 0.0, %v2006
  %v2008 = vpop.f32.mrb[0].mxu0
  %v2009 = vadd.f32 0.0, %v2008
  %v2010 = vpop.f32.mrb[0].mxu0
  %v2011 = vadd.f32 0.0, %v2010
  %v2012 = vpop.f32.mrb[0].mxu0
  %v2013 = vadd.f32 0.0, %v2012
  %2014 = vmatprep.mubr.bf16.mxu0 0
  %2015 = vmatmul.mubr.bf16.gmra.mrb[0].mxu0 %v1788
  %v2016 = vpop.f32.mrb[0].mxu0
  %v2017 = vadd.f32 0.0, %v2016
  %v2018 = vpop.f32.mrb[0].mxu0
  %v2019 = vadd.f32 0.0, %v2018
  %v2020 = vpop.f32.mrb[0].mxu0
  %v2021 = vadd.f32 0.0, %v2020
  %v2022 = vpop.f32.mrb[0].mxu0
  %v2023 = vadd.f32 0.0, %v2022
  %2024 = vmatprep.mubr.bf16.mxu0 0
  %2025 = vmatmul.mubr.bf16.gmra.mrb[0].mxu0 %v1791
  %v2026 = vpop.f32.mrb[0].mxu0
  %v2027 = vadd.f32 0.0, %v2026
  %v2028 = vpop.f32.mrb[0].mxu0
  %v2029 = vadd.f32 0.0, %v2028
  %v2030 = vpop.f32.mrb[0].mxu0
  %v2031 = vadd.f32 0.0, %v2030
  %v2032 = vpop.f32.mrb[0].mxu0
  %v2033 = vadd.f32 0.0, %v2032
  %2034 = vmatprep.mubr.bf16.mxu0 0
  %2035 = vmatmul.mubr.bf16.gmra.mrb[0].mxu0 %v1794
  %v2036 = vpop.f32.mrb[0].mxu0
  %v2037 = vadd.f32 0.0, %v2036
  %v2038 = vpop.f32.mrb[0].mxu0
  %v2039 = vadd.f32 0.0, %v2038
  %v2040 = vpop.f32.mrb[0].mxu0
  %v2041 = vadd.f32 0.0, %v2040
  %v2042 = vpop.f32.mrb[0].mxu0
  %v2043 = vadd.f32 0.0, %v2042
  %2044 = vmatprep.mubr.bf16.mxu0 0
  %2045 = vmatmul.mubr.bf16.gmra.mrb[0].mxu0 %v1797
  %v2046 = vpop.f32.mrb[0].mxu0
  %v2047 = vadd.f32 0.0, %v2046
  %v2048 = vpop.f32.mrb[0].mxu0
  %v2049 = vadd.f32 0.0, %v2048
  %v2050 = vpop.f32.mrb[0].mxu0
  %v2051 = vadd.f32 0.0, %v2050
  %v2052 = vpop.f32.mrb[0].mxu0
  %v2053 = vadd.f32 0.0, %v2052
  %2054 = vmatprep.mubr.bf16.mxu0 0
  %2055 = vmatmul.mubr.bf16.gmra.mrb[0].mxu0 %v1800
  %v2056 = vpop.f32.mrb[0].mxu0
  %v2057 = vadd.f32 0.0, %v2056
  %v2058 = vpop.f32.mrb[0].mxu0
  %v2059 = vadd.f32 0.0, %v2058
  %v2060 = vpop.f32.mrb[0].mxu0
  %v2061 = vadd.f32 0.0, %v2060
  %v2062 = vpop.f32.mrb[0].mxu0
  %v2063 = vadd.f32 0.0, %v2062
  %2064 = vmatprep.mubr.bf16.mxu0 0
  %2065 = vmatmul.mubr.bf16.gmra.mrb[0].mxu0 %v1803
  %v2066 = vpop.f32.mrb[0].mxu0
  %v2067 = vadd.f32 0.0, %v2066
  %v2068 = vpop.f32.mrb[0].mxu0
  %v2069 = vadd.f32 0.0, %v2068
  %v2070 = vpop.f32.mrb[0].mxu0
  %v2071 = vadd.f32 0.0, %v2070
  %v2072 = vpop.f32.mrb[0].mxu0
  %v2073 = vadd.f32 0.0, %v2072
  %2074 = vmatprep.mubr.bf16.mxu0 0
  %2075 = vmatmul.mubr.bf16.gmra.mrb[0].mxu0 %v1806
  %v2076 = vpop.f32.mrb[0].mxu0
  %v2077 = vadd.f32 0.0, %v2076
  %v2078 = vpop.f32.mrb[0].mxu0
  %v2079 = vadd.f32 0.0, %v2078
  %v2080 = vpop.f32.mrb[0].mxu0
  %v2081 = vadd.f32 0.0, %v2080
  %v2082 = vpop.f32.mrb[0].mxu0
  %v2083 = vadd.f32 0.0, %v2082
  %2084 = vmatprep.mubr.bf16.mxu0 0
  %2085 = vmatmul.mubr.bf16.gmra.mrb[0].mxu0 %v1809
  %v2086 = vpop.f32.mrb[0].mxu0
  %v2087 = vadd.f32 0.0, %v2086
  %v2088 = vpop.f32.mrb[0].mxu0
  %v2089 = vadd.f32 0.0, %v2088
  %v2090 = vpop.f32.mrb[0].mxu0
  %v2091 = vpop.f32.mrb[0].mxu0
  %2092 = vdwg.mxu0
  %v2093 = vadd.f32 %v1571, %v1846
  %v2094 = vadd.f32 %v1572, %v1848
  %v2095 = vadd.f32 %v1573, %v1987
  %v2096 = vadd.f32 %v1574, %v1989
  %v2097 = vadd.f32 %v1575, %v1850
  %v2098 = vadd.f32 %v1576, %v1852
  %v2099 = vadd.f32 %v1577, %v1991
  %v2100 = vadd.f32 %v1578, %v1993
  %v2101 = vadd.f32 %v1579, %v1856
  %v2102 = vadd.f32 %v1580, %v1858
  %v2103 = vadd.f32 %v1581, %v1997
  %v2104 = vadd.f32 %v1582, %v1999
  %v2105 = vadd.f32 %v1583, %v1860
  %v2106 = vadd.f32 %v1584, %v1862
  %v2107 = vadd.f32 %v1585, %v2001
  %v2108 = vadd.f32 %v1586, %v2003
  %v2109 = vadd.f32 %v1587, %v1866
  %v2110 = vadd.f32 %v1588, %v1868
  %v2111 = vadd.f32 %v1589, %v2007
  %v2112 = vadd.f32 %v1590, %v2009
  %v2113 = vadd.f32 %v1591, %v1870
  %v2114 = vadd.f32 %v1592, %v1872
  %v2115 = vadd.f32 %v1593, %v2011
  %v2116 = vadd.f32 %v1594, %v2013
  %v2117 = vadd.f32 %v1595, %v1876
  %v2118 = vadd.f32 %v1596, %v1878
  %v2119 = vadd.f32 %v1597, %v2017
  %v2120 = vadd.f32 %v1598, %v2019
  %v2121 = vadd.f32 %v1599, %v1880
  %v2122 = vadd.f32 %v1600, %v1882
  %v2123 = vadd.f32 %v1601, %v2021
  %v2124 = vadd.f32 %v1602, %v2023
  %v2125 = vadd.f32 %v1603, %v1886
  %v2126 = vadd.f32 %v1604, %v1888
  %v2127 = vadd.f32 %v1605, %v2027
  %v2128 = vadd.f32 %v1606, %v2029
  %v2129 = vadd.f32 %v1607, %v1890
  %v2130 = vadd.f32 %v1608, %v1892
  %v2131 = vadd.f32 %v1609, %v2031
  %v2132 = vadd.f32 %v1610, %v2033
  %v2133 = vadd.f32 %v1611, %v1896
  %v2134 = vadd.f32 %v1612, %v1898
  %v2135 = vadd.f32 %v1613, %v2037
  %v2136 = vadd.f32 %v1614, %v2039
  %v2137 = vadd.f32 %v1615, %v1900
  %v2138 = vadd.f32 %v1616, %v1902
  %v2139 = vadd.f32 %v1617, %v2041
  %v2140 = vadd.f32 %v1618, %v2043
  %v2141 = vadd.f32 %v1619, %v1906
  %v2142 = vadd.f32 %v1620, %v1908
  %v2143 = vadd.f32 %v1621, %v2047
  %v2144 = vadd.f32 %v1622, %v2049
  %v2145 = vadd.f32 %v1623, %v1910
  %v2146 = vadd.f32 %v1624, %v1912
  %v2147 = vadd.f32 %v1625, %v2051
  %v2148 = vadd.f32 %v1626, %v2053
  %v2149 = vadd.f32 %v1627, %v1916
  %v2150 = vadd.f32 %v1628, %v1918
  %v2151 = vadd.f32 %v1629, %v2057
  %v2152 = vadd.f32 %v1630, %v2059
  %v2153 = vadd.f32 %v1631, %v1920
  %v2154 = vadd.f32 %v1632, %v1922
  %v2155 = vadd.f32 %v1633, %v2061
  %v2156 = vadd.f32 %v1634, %v2063
  %v2157 = vadd.f32 %v1635, %v1926
  %v2158 = vadd.f32 %v1636, %v1928
  %v2159 = vadd.f32 %v1637, %v2067
  %v2160 = vadd.f32 %v1638, %v2069
  %v2161 = vadd.f32 %v1639, %v1930
  %v2162 = vadd.f32 %v1640, %v1932
  %v2163 = vadd.f32 %v1641, %v2071
  %v2164 = vadd.f32 %v1642, %v2073
  %v2165 = vadd.f32 %v1643, %v1936
  %v2166 = vadd.f32 %v1644, %v1938
  %v2167 = vadd.f32 %v1645, %v2077
  %v2168 = vadd.f32 %v1646, %v2079
  %v2169 = vadd.f32 %v1647, %v1940
  %v2170 = vadd.f32 %v1648, %v1942
  %v2171 = vadd.f32 %v1649, %v2081
  %v2172 = vadd.f32 %v1650, %v2083
  %v2173 = vadd.f32 %v1651, %v1946
  %v2174 = vadd.f32 %v1652, %v1948
  %v2175 = vadd.f32 %v1653, %v2087
  %v2176 = vadd.f32 %v1654, %v2089
  %v2177 = vmax.f32 %v2093, %v2094
  %v2178 = vmax.f32 %v2097, %v2098
  %v2179 = vmax.f32 %v2101, %v2102
  %v2180 = vmax.f32 %v2105, %v2106
  %v2181 = vmax.f32 %v2109, %v2110
  %v2182 = vmax.f32 %v2113, %v2114
  %v2183 = vmax.f32 %v2117, %v2118
  %v2184 = vmax.f32 %v2121, %v2122
  %v2185 = vmax.f32 %v2125, %v2126
  %v2186 = vmax.f32 %v2129, %v2130
  %v2187 = vmax.f32 %v2133, %v2134
  %v2188 = vmax.f32 %v2137, %v2138
  %v2189 = vmax.f32 %v2141, %v2142
  %v2190 = vmax.f32 %v2145, %v2146
  %v2191 = vmax.f32 %v2149, %v2150
  %v2192 = vmax.f32 %v2153, %v2154
  %v2193 = vmax.f32 %v2157, %v2158
  %v2194 = vmax.f32 %v2161, %v2162
  %v2195 = vmax.f32 %v2165, %v2166
  %v2196 = vmax.f32 %v2169, %v2170
  %v2197 = vmax.f32 %v2173, %v2174
  %v2198 = vmax.f32 %v2095, %v2096
  %v2199 = vmax.f32 %v2099, %v2100
  %v2200 = vmax.f32 %v2103, %v2104
  %v2201 = vmax.f32 %v2107, %v2108
  %v2202 = vmax.f32 %v2111, %v2112
  %v2203 = vmax.f32 %v2115, %v2116
  %v2204 = vmax.f32 %v2119, %v2120
  %v2205 = vmax.f32 %v2123, %v2124
  %v2206 = vmax.f32 %v2127, %v2128
  %v2207 = vmax.f32 %v2131, %v2132
  %v2208 = vmax.f32 %v2135, %v2136
  %v2209 = vmax.f32 %v2139, %v2140
  %v2210 = vmax.f32 %v2143, %v2144
  %v2211 = vmax.f32 %v2147, %v2148
  %v2212 = vmax.f32 %v2151, %v2152
  %v2213 = vmax.f32 %v2155, %v2156
  %v2214 = vmax.f32 %v2159, %v2160
  %v2215 = vmax.f32 %v2163, %v2164
  %v2216 = vmax.f32 %v2167, %v2168
  %v2217 = vmax.f32 %v2171, %v2172
  %v2218 = vmax.f32 %v2175, %v2176
  %v2219 = vmax.f32 %v2177, %v2198
  %v2220 = vmax.f32 %v2178, %v2199
  %v2221 = vmax.f32 %v2179, %v2200
  %v2222 = vmax.f32 %v2180, %v2201
  %v2223 = vmax.f32 %v2181, %v2202
  %v2224 = vmax.f32 %v2182, %v2203
  %v2225 = vmax.f32 %v2183, %v2204
  %v2226 = vmax.f32 %v2184, %v2205
  %v2227 = vmax.f32 %v2185, %v2206
  %v2228 = vmax.f32 %v2186, %v2207
  %v2229 = vmax.f32 %v2187, %v2208
  %v2230 = vmax.f32 %v2188, %v2209
  %v2231 = vmax.f32 %v2189, %v2210
  %v2232 = vmax.f32 %v2190, %v2211
  %v2233 = vmax.f32 %v2191, %v2212
  %v2234 = vmax.f32 %v2192, %v2213
  %v2235 = vmax.f32 %v2193, %v2214
  %v2236 = vmax.f32 %v2194, %v2215
  %v2237 = vmax.f32 %v2195, %v2216
  %v2238 = vmax.f32 %v2196, %v2217
  %v2239 = vmax.f32 %v2197, %v2218
  %v2240 = vld [vmem:[%s2] sm:$0x1]
  %v2242 = vlaneseq
  %v2243 = vshrl.u32 %v2242, 7
  %v2244 = vsub.s32 0, %v2243
  %v2245 = vrot.slane %v2240, %v2244
  %v2247 = vadd.f32 %v2219, %v2245
  %v2248 = vadd.f32 %v2220, %v2245
  %v2249 = vadd.f32 %v2221, %v2245
  %v2250 = vadd.f32 %v2222, %v2245
  %v2251 = vadd.f32 %v2223, %v2245
  %v2252 = vadd.f32 %v2224, %v2245
  %v2253 = vadd.f32 %v2225, %v2245
  %v2254 = vadd.f32 %v2226, %v2245
  %v2255 = vadd.f32 %v2227, %v2245
  %v2256 = vadd.f32 %v2228, %v2245
  %v2257 = vadd.f32 %v2229, %v2245
  %v2258 = vadd.f32 %v2230, %v2245
  %v2259 = vadd.f32 %v2231, %v2245
  %v2260 = vadd.f32 %v2232, %v2245
  %v2261 = vadd.f32 %v2233, %v2245
  %v2262 = vadd.f32 %v2234, %v2245
  %v2263 = vadd.f32 %v2235, %v2245
  %v2264 = vadd.f32 %v2236, %v2245
  %v2265 = vadd.f32 %v2237, %v2245
  %v2266 = vadd.f32 %v2238, %v2245
  %v2267 = vadd.f32 %v2239, %v2245
  %v2268 = vmax.f32 %v2247, 0.0
  %v2269 = vmax.f32 %v2248, 0.0
  %v2270 = vmax.f32 %v2249, 0.0
  %v2271 = vmax.f32 %v2250, 0.0
  %v2272 = vmax.f32 %v2251, 0.0
  %v2273 = vmax.f32 %v2252, 0.0
  %v2274 = vmax.f32 %v2253, 0.0
  %v2275 = vmax.f32 %v2254, 0.0
  %v2276 = vmax.f32 %v2255, 0.0
  %v2277 = vmax.f32 %v2256, 0.0
  %v2278 = vmax.f32 %v2257, 0.0
  %v2279 = vmax.f32 %v2258, 0.0
  %v2280 = vmax.f32 %v2259, 0.0
  %v2281 = vmax.f32 %v2260, 0.0
  %v2282 = vmax.f32 %v2261, 0.0
  %v2283 = vmax.f32 %v2262, 0.0
  %v2284 = vmax.f32 %v2263, 0.0
  %v2285 = vmax.f32 %v2264, 0.0
  %v2286 = vmax.f32 %v2265, 0.0
  %v2287 = vmax.f32 %v2266, 0.0
  %v2288 = vmax.f32 %v2267, 0.0
  %v2289 = vpack.c.bf16 %v2269, %v2268
  %v2290 = vpack.c.bf16 %v2271, %v2270
  %v2291 = vpack.c.bf16 %v2273, %v2272
  %v2292 = vpack.c.bf16 %v2275, %v2274
  %v2293 = vpack.c.bf16 %v2277, %v2276
  %v2294 = vpack.c.bf16 %v2279, %v2278
  %v2295 = vpack.c.bf16 %v2281, %v2280
  %v2296 = vpack.c.bf16 %v2283, %v2282
  %v2297 = vpack.c.bf16 %v2285, %v2284
  %v2298 = vpack.c.bf16 %v2287, %v2286
  %v2299 = vpack.c.bf16 %v2288, %v2288
  %v2311 = vunpack.c.l.b16 %v2289
  %v2312 = vunpack.c.h.b16 %v2289
  %v2313 = vunpack.c.l.b16 %v2290
  %v2314 = vunpack.c.h.b16 %v2290
  %v2315 = vunpack.c.l.b16 %v2291
  %v2316 = vunpack.c.h.b16 %v2291
  %v2317 = vunpack.c.l.b16 %v2292
  %v2318 = vunpack.c.h.b16 %v2292
  %v2319 = vunpack.c.l.b16 %v2293
  %v2320 = vunpack.c.h.b16 %v2293
  %v2321 = vunpack.c.l.b16 %v2294
  %v2322 = vunpack.c.h.b16 %v2294
  %v2323 = vunpack.c.l.b16 %v2295
  %v2324 = vunpack.c.h.b16 %v2295
  %v2325 = vunpack.c.l.b16 %v2296
  %v2326 = vunpack.c.h.b16 %v2296
  %v2327 = vunpack.c.l.b16 %v2297
  %v2328 = vunpack.c.h.b16 %v2297
  %v2329 = vunpack.c.l.b16 %v2298
  %v2330 = vunpack.c.h.b16 %v2298
  %v2331 = vunpack.c.l.b16 %v2299
  %v2332 = vpack.c.b16 %v2311, %v2311
  %v2333 = vpack.c.b16 %v2312, %v2312
  %v2334 = vpack.c.b16 %v2313, %v2313
  %v2335 = vpack.c.b16 %v2314, %v2314
  %v2336 = vpack.c.b16 %v2315, %v2315
  %v2337 = vpack.c.b16 %v2316, %v2316
  %v2338 = vpack.c.b16 %v2317, %v2317
  %v2339 = vpack.c.b16 %v2318, %v2318
  %v2340 = vpack.c.b16 %v2319, %v2319
  %v2341 = vpack.c.b16 %v2320, %v2320
  %v2342 = vpack.c.b16 %v2321, %v2321
  %v2343 = vpack.c.b16 %v2322, %v2322
  %v2344 = vpack.c.b16 %v2323, %v2323
  %v2345 = vpack.c.b16 %v2324, %v2324
  %v2346 = vpack.c.b16 %v2325, %v2325
  %v2347 = vpack.c.b16 %v2326, %v2326
  %v2348 = vpack.c.b16 %v2327, %v2327
  %v2349 = vpack.c.b16 %v2328, %v2328
  %v2350 = vpack.c.b16 %v2329, %v2329
  %v2351 = vpack.c.b16 %v2330, %v2330
  %v2352 = vpack.c.b16 %v2331, %v2331
  %2374 = vst [vmem:[%s3] sm:$0xf] %v2332
  %2375 = vst [vmem:[%s3 + $0x4] sm:$0xf] %v2333
  %2376 = vst [vmem:[%s3 + $0x8] sm:$0xf] %v2334
  %2377 = vst [vmem:[%s3 + $0xc] sm:$0xf] %v2335
  %2378 = vst [vmem:[%s3 + $0x10] sm:$0xf] %v2336
  %2379 = vst [vmem:[%s3 + $0x14] sm:$0xf] %v2337
  %2380 = vst [vmem:[%s3 + $0x18] sm:$0xf] %v2338
  %2381 = vst [vmem:[%s3 + $0x1c] sm:$0xf] %v2339
  %2382 = vst [vmem:[%s3 + $0x20] sm:$0xf] %v2340
  %2383 = vst [vmem:[%s3 + $0x24] sm:$0xf] %v2341
  %2384 = vst [vmem:[%s3 + $0x28] sm:$0xf] %v2342
  %2385 = vst [vmem:[%s3 + $0x2c] sm:$0xf] %v2343
  %2386 = vst [vmem:[%s3 + $0x30] sm:$0xf] %v2344
  %2387 = vst [vmem:[%s3 + $0x34] sm:$0xf] %v2345
  %2388 = vst [vmem:[%s3 + $0x38] sm:$0xf] %v2346
  %2389 = vst [vmem:[%s3 + $0x3c] sm:$0xf] %v2347
  %2390 = vst [vmem:[%s3 + $0x40] sm:$0xf] %v2348
  %2391 = vst [vmem:[%s3 + $0x44] sm:$0xf] %v2349
  %2392 = vst [vmem:[%s3 + $0x48] sm:$0xf] %v2350
  %2393 = vst [vmem:[%s3 + $0x4c] sm:$0xf] %v2351
  %2394 = vst [vmem:[%s3 + $0x50] sm:$0xf] %v2352
  // Predicated region
  $region14: #{simple_cnn_forward.5} parent=0 // pred_check
    _
  $region15: #{simple_cnn_forward.5} parent=0 // pred_check_branch
    %2396 = sbr.rel (0) target = $region17
  $region16: #{simple_cnn_forward.5} parent=0 // pred_region
    _
  $region17: #{simple_cnn_forward.5} parent=0 // pred_fallthru
    _
  // Predicated region
  $region18: #{simple_cnn_forward.5} parent=0 // pred_check
    _
  $region19: #{simple_cnn_forward.5} parent=0 // pred_check_branch
    %2398 = sbr.rel (0) target = $region21
  $region20: #{simple_cnn_forward.5} parent=0 // pred_region
    _
  $region21: #{simple_cnn_forward.5} parent=0 // pred_fallthru
    _

// kernel: simple_cnn_forward.6
$region0: #{simple_cnn_forward.6}
  #allocation0 [shape = 'u32[]', space=smem, size = 0x4, offset = 0x4, fixed_abs, tag = 'smem constant byte address 0x4 - core index']
  #allocation1 [shape = 'u32[144,128]{1,0:T(1,128)}', space=vmem, size = 0x12000, scoped, tag = 'internal scratch']
  %s0 = inlined_call_operand.vmem [shape: bf16[64,128], index: 0, kind: input, shape index: {}]
  %s1 = inlined_call_operand.vmem [shape: bf16[4,128,512], index: 1, kind: input, shape index: {}]
  %s2 = inlined_call_operand.vmem [shape: f32[1,128], index: 2, kind: input, shape index: {}]
  %s3 = inlined_call_operand.vmem [shape: bf16[56,128], index: 3, kind: output, shape index: {}]
  %s4 = sld [smem:[#allocation0]]
  $region22: #{simple_cnn_forward.6} parent=0
    _
  %s6 = ssub.s32 1, %s4
  %s7 = scalar_select 0, %s6, %s4
  // Predicated region
  $region2: #{simple_cnn_forward.6} parent=0 // pred_check
    _
  $region3: #{simple_cnn_forward.6} parent=0 // pred_check_branch
    %9 = sbr.rel (0) target = $region5
  $region4: #{simple_cnn_forward.6} parent=0 // pred_region
    _
  $region5: #{simple_cnn_forward.6} parent=0 // pred_fallthru
    _
  // Predicated region
  $region6: #{simple_cnn_forward.6} parent=0 // pred_check
    _
  $region7: #{simple_cnn_forward.6} parent=0 // pred_check_branch
    %11 = sbr.rel (0) target = $region9
  $region8: #{simple_cnn_forward.6} parent=0 // pred_region
    _
  $region9: #{simple_cnn_forward.6} parent=0 // pred_fallthru
    _
  // Predicated region
  $region10: #{simple_cnn_forward.6} parent=0 // pred_check
    _
  $region11: #{simple_cnn_forward.6} parent=0 // pred_check_branch
    %13 = sbr.rel (0) target = $region13
  $region12: #{simple_cnn_forward.6} parent=0 // pred_region
    _
  $region13: #{simple_cnn_forward.6} parent=0 // pred_fallthru
    _
  %v15 = vld [vmem:[%s0] sm:$0xf]
  %v16 = vld [vmem:[%s0 + $0x4] sm:$0xf]
  %v17 = vld [vmem:[%s0 + $0x8] sm:$0xf]
  %v18 = vld [vmem:[%s0 + $0xc] sm:$0xf]
  %v19 = vld [vmem:[%s0 + $0x10] sm:$0xf]
  %v20 = vld [vmem:[%s0 + $0x14] sm:$0xf]
  %v21 = vld [vmem:[%s0 + $0x18] sm:$0xf]
  %v22 = vld [vmem:[%s1] sm:$0xff]
  %v23 = vld [vmem:[%s1 + $0x8] sm:$0xff]
  %v24 = vld [vmem:[%s1 + $0x10] sm:$0xff]
  %v25 = vld [vmem:[%s1 + $0x18] sm:$0xff]
  %v26 = vld [vmem:[%s1 + $0x20] sm:$0xff]
  %v27 = vld [vmem:[%s1 + $0x28] sm:$0xff]
  %v28 = vld [vmem:[%s1 + $0x30] sm:$0xff]
  %v29 = vld [vmem:[%s1 + $0x38] sm:$0xff]
  %v30 = vld [vmem:[%s1 + $0x40] sm:$0xff]
  %v31 = vld [vmem:[%s1 + $0x48] sm:$0xff]
  %v32 = vld [vmem:[%s1 + $0x50] sm:$0xff]
  %v33 = vld [vmem:[%s1 + $0x58] sm:$0xff]
  %v34 = vld [vmem:[%s1 + $0x60] sm:$0xff]
  %v35 = vld [vmem:[%s1 + $0x68] sm:$0xff]
  %v36 = vld [vmem:[%s1 + $0x70] sm:$0xff]
  %v37 = vld [vmem:[%s1 + $0x78] sm:$0xff]
  %v38 = vld [vmem:[%s1 + $0x80] sm:$0xff]
  %v39 = vld [vmem:[%s1 + $0x88] sm:$0xff]
  %v40 = vld [vmem:[%s1 + $0x90] sm:$0xff]
  %v41 = vld [vmem:[%s1 + $0x98] sm:$0xff]
  %v42 = vld [vmem:[%s1 + $0xa0] sm:$0xff]
  %v43 = vld [vmem:[%s1 + $0xa8] sm:$0xff]
  %v44 = vld [vmem:[%s1 + $0xb0] sm:$0xff]
  %v45 = vld [vmem:[%s1 + $0xb8] sm:$0xff]
  %v46 = vld [vmem:[%s1 + $0xc0] sm:$0xff]
  %v47 = vld [vmem:[%s1 + $0xc8] sm:$0xff]
  %v48 = vld [vmem:[%s1 + $0xd0] sm:$0xff]
  %v49 = vld [vmem:[%s1 + $0xd8] sm:$0xff]
  %v50 = vld [vmem:[%s1 + $0xe0] sm:$0xff]
  %v51 = vld [vmem:[%s1 + $0xe8] sm:$0xff]
  %v52 = vld [vmem:[%s1 + $0xf0] sm:$0xff]
  %v53 = vld [vmem:[%s1 + $0xf8] sm:$0xff]
  %v54 = vld [vmem:[%s0] sm:$0xf]
  %v55 = vld [vmem:[%s0 + $0x4] sm:$0xf]
  %v56 = vld [vmem:[%s0 + $0x8] sm:$0xf]
  %v57 = vld [vmem:[%s0 + $0xc] sm:$0xf]
  %v58 = vld [vmem:[%s0 + $0x10] sm:$0xf]
  %v59 = vld [vmem:[%s0 + $0x14] sm:$0xf]
  %v60 = vld [vmem:[%s0 + $0x18] sm:$0xf]
  %v61 = vld [vmem:[%s0 + $0x1c] sm:$0x1]
  %s62 = scalar_lea.vmem %s1, 256
  %v63 = vld [vmem:[%s62] sm:$0xff]
  %v64 = vld [vmem:[%s62 + $0x8] sm:$0xff]
  %v65 = vld [vmem:[%s62 + $0x10] sm:$0xff]
  %v66 = vld [vmem:[%s62 + $0x18] sm:$0xff]
  %v67 = vld [vmem:[%s62 + $0x20] sm:$0xff]
  %v68 = vld [vmem:[%s62 + $0x28] sm:$0xff]
  %v69 = vld [vmem:[%s62 + $0x30] sm:$0xff]
  %v70 = vld [vmem:[%s62 + $0x38] sm:$0xff]
  %v71 = vld [vmem:[%s62 + $0x40] sm:$0xff]
  %v72 = vld [vmem:[%s62 + $0x48] sm:$0xff]
  %v73 = vld [vmem:[%s62 + $0x50] sm:$0xff]
  %v74 = vld [vmem:[%s62 + $0x58] sm:$0xff]
  %v75 = vld [vmem:[%s62 + $0x60] sm:$0xff]
  %v76 = vld [vmem:[%s62 + $0x68] sm:$0xff]
  %v77 = vld [vmem:[%s62 + $0x70] sm:$0xff]
  %v78 = vld [vmem:[%s62 + $0x78] sm:$0xff]
  %v79 = vld [vmem:[%s62 + $0x80] sm:$0xff]
  %v80 = vld [vmem:[%s62 + $0x88] sm:$0xff]
  %v81 = vld [vmem:[%s62 + $0x90] sm:$0xff]
  %v82 = vld [vmem:[%s62 + $0x98] sm:$0xff]
  %v83 = vld [vmem:[%s62 + $0xa0] sm:$0xff]
  %v84 = vld [vmem:[%s62 + $0xa8] sm:$0xff]
  %v85 = vld [vmem:[%s62 + $0xb0] sm:$0xff]
  %v86 = vld [vmem:[%s62 + $0xb8] sm:$0xff]
  %v87 = vld [vmem:[%s62 + $0xc0] sm:$0xff]
  %v88 = vld [vmem:[%s62 + $0xc8] sm:$0xff]
  %v89 = vld [vmem:[%s62 + $0xd0] sm:$0xff]
  %v90 = vld [vmem:[%s62 + $0xd8] sm:$0xff]
  %v91 = vld [vmem:[%s62 + $0xe0] sm:$0xff]
  %v92 = vld [vmem:[%s62 + $0xe8] sm:$0xff]
  %v93 = vld [vmem:[%s62 + $0xf0] sm:$0xff]
  %v94 = vld [vmem:[%s62 + $0xf8] sm:$0xff]
  %v103 = vunpack.c.l.b16 %v54
  %v104 = vunpack.c.l.b16 %v55
  %v105 = vunpack.c.l.b16 %v56
  %v106 = vunpack.c.l.b16 %v57
  %v107 = vunpack.c.l.b16 %v58
  %v108 = vunpack.c.l.b16 %v59
  %v109 = vunpack.c.l.b16 %v60
  %v110 = vunpack.c.l.b16 %v61
  %v111 = vpack.c.b16 %v104, %v103
  %v112 = vpack.c.b16 %v106, %v105
  %v113 = vpack.c.b16 %v108, %v107
  %v114 = vpack.c.b16 %v110, %v109
  %vm115 = vsmask.f32 7424
  %v117 = vshrl.u32 %v111, 16
  %v119 = vshll.u32 %v111, 16
  %v121 = vrot.slane %v119, 1
  %v122 = vor.u32 %v117, %v121
  %v124 = vshll.u32 %v112, 16
  %v126 = vrot.slane %v124, 1
  %v127 = vsel %vm115, %v122, %v126
  %v128 = vshrl.u32 %v112, 16
  %v130 = vor.u32 %v128, %v126
  %v132 = vshll.u32 %v113, 16
  %v134 = vrot.slane %v132, 1
  %v135 = vsel %vm115, %v130, %v134
  %v136 = vshrl.u32 %v113, 16
  %v138 = vor.u32 %v136, %v134
  %v140 = vshll.u32 %v114, 16
  %v142 = vrot.slane %v140, 1
  %v143 = vsel %vm115, %v138, %v142
  %v144 = vshrl.u32 %v114, 16
  %v146 = vor.u32 %v144, %v142
  %v183 = vunpack.c.l.b16 %v63
  %v184 = vunpack.c.h.b16 %v63
  %v185 = vunpack.c.l.b16 %v64
  %v186 = vunpack.c.h.b16 %v64
  %v187 = vunpack.c.l.b16 %v65
  %v188 = vunpack.c.h.b16 %v65
  %v189 = vunpack.c.l.b16 %v66
  %v190 = vunpack.c.h.b16 %v66
  %v191 = vunpack.c.l.b16 %v67
  %v192 = vunpack.c.h.b16 %v67
  %v193 = vunpack.c.l.b16 %v68
  %v194 = vunpack.c.h.b16 %v68
  %v195 = vunpack.c.l.b16 %v69
  %v196 = vunpack.c.h.b16 %v69
  %v197 = vunpack.c.l.b16 %v70
  %v198 = vunpack.c.h.b16 %v70
  %v199 = vunpack.c.l.b16 %v71
  %v200 = vunpack.c.h.b16 %v71
  %v201 = vunpack.c.l.b16 %v72
  %v202 = vunpack.c.h.b16 %v72
  %v203 = vunpack.c.l.b16 %v73
  %v204 = vunpack.c.h.b16 %v73
  %v205 = vunpack.c.l.b16 %v74
  %v206 = vunpack.c.h.b16 %v74
  %v207 = vunpack.c.l.b16 %v75
  %v208 = vunpack.c.h.b16 %v75
  %v209 = vunpack.c.l.b16 %v76
  %v210 = vunpack.c.h.b16 %v76
  %v211 = vunpack.c.l.b16 %v77
  %v212 = vunpack.c.h.b16 %v77
  %v213 = vunpack.c.l.b16 %v78
  %v214 = vunpack.c.h.b16 %v78
  %v215 = vunpack.c.l.b16 %v79
  %v216 = vunpack.c.h.b16 %v79
  %v217 = vunpack.c.l.b16 %v80
  %v218 = vunpack.c.h.b16 %v80
  %v219 = vunpack.c.l.b16 %v81
  %v220 = vunpack.c.h.b16 %v81
  %v221 = vunpack.c.l.b16 %v82
  %v222 = vunpack.c.h.b16 %v82
  %v223 = vunpack.c.l.b16 %v83
  %v224 = vunpack.c.h.b16 %v83
  %v225 = vunpack.c.l.b16 %v84
  %v226 = vunpack.c.h.b16 %v84
  %v227 = vunpack.c.l.b16 %v85
  %v228 = vunpack.c.h.b16 %v85
  %v229 = vunpack.c.l.b16 %v86
  %v230 = vunpack.c.h.b16 %v86
  %v231 = vunpack.c.l.b16 %v87
  %v232 = vunpack.c.h.b16 %v87
  %v233 = vunpack.c.l.b16 %v88
  %v234 = vunpack.c.h.b16 %v88
  %v235 = vunpack.c.l.b16 %v89
  %v236 = vunpack.c.h.b16 %v89
  %v237 = vunpack.c.l.b16 %v90
  %v238 = vunpack.c.h.b16 %v90
  %v239 = vunpack.c.l.b16 %v91
  %v240 = vunpack.c.h.b16 %v91
  %v241 = vunpack.c.l.b16 %v92
  %v242 = vunpack.c.h.b16 %v92
  %v243 = vunpack.c.l.b16 %v93
  %v244 = vunpack.c.h.b16 %v93
  %v245 = vunpack.c.l.b16 %v94
  %v246 = vunpack.c.h.b16 %v94
  %v247 = vpack.c.b16 %v187, %v183
  %v248 = vpack.c.b16 %v188, %v184
  %v249 = vpack.c.b16 %v189, %v185
  %v250 = vpack.c.b16 %v190, %v186
  %v251 = vpack.c.b16 %v195, %v191
  %v252 = vpack.c.b16 %v196, %v192
  %v253 = vpack.c.b16 %v197, %v193
  %v254 = vpack.c.b16 %v198, %v194
  %v255 = vpack.c.b16 %v203, %v199
  %v256 = vpack.c.b16 %v204, %v200
  %v257 = vpack.c.b16 %v205, %v201
  %v258 = vpack.c.b16 %v206, %v202
  %v259 = vpack.c.b16 %v211, %v207
  %v260 = vpack.c.b16 %v212, %v208
  %v261 = vpack.c.b16 %v213, %v209
  %v262 = vpack.c.b16 %v214, %v210
  %v263 = vpack.c.b16 %v219, %v215
  %v264 = vpack.c.b16 %v220, %v216
  %v265 = vpack.c.b16 %v221, %v217
  %v266 = vpack.c.b16 %v222, %v218
  %v267 = vpack.c.b16 %v227, %v223
  %v268 = vpack.c.b16 %v228, %v224
  %v269 = vpack.c.b16 %v229, %v225
  %v270 = vpack.c.b16 %v230, %v226
  %v271 = vpack.c.b16 %v235, %v231
  %v272 = vpack.c.b16 %v236, %v232
  %v273 = vpack.c.b16 %v237, %v233
  %v274 = vpack.c.b16 %v238, %v234
  %v275 = vpack.c.b16 %v243, %v239
  %v276 = vpack.c.b16 %v244, %v240
  %v277 = vpack.c.b16 %v245, %v241
  %v278 = vpack.c.b16 %v246, %v242
  %311 = vmatprep.subr.bf16.mxu0 %v248
  %312 = vmatpush1.bf16.msra.mxu0 %v247
  %313 = vmatprep.subr.bf16.mxu0 %v252
  %314 = vmatpush1.bf16.msra.mxu0 %v251
  %315 = vmatprep.subr.bf16.mxu0 %v256
  %316 = vmatpush1.bf16.msra.mxu0 %v255
  %317 = vmatprep.subr.bf16.mxu0 %v260
  %318 = vmatpush1.bf16.msra.mxu0 %v259
  %319 = vmatprep.subr.bf16.mxu0 %v264
  %320 = vmatpush1.bf16.msra.mxu0 %v263
  %321 = vmatprep.subr.bf16.mxu0 %v268
  %322 = vmatpush1.bf16.msra.mxu0 %v267
  %323 = vmatprep.subr.bf16.mxu0 %v272
  %324 = vmatpush1.bf16.msra.mxu0 %v271
  %325 = vmatprep.subr.bf16.mxu0 %v276
  %326 = vmatpush1.bf16.msra.mxu0 %v275
  %327 = vmatprep.subr.bf16.mxu0 0
  %328 = vmatpush1.bf16.msra.mxu0 0
  %329 = vmatprep.subr.bf16.mxu0 0
  %330 = vmatpush1.bf16.msra.mxu0 0
  %331 = vmatprep.subr.bf16.mxu0 0
  %332 = vmatpush1.bf16.msra.mxu0 0
  %333 = vmatprep.subr.bf16.mxu0 0
  %334 = vmatpush1.bf16.msra.mxu0 0
  %335 = vmatprep.subr.bf16.mxu0 0
  %336 = vmatpush1.bf16.msra.mxu0 0
  %337 = vmatprep.subr.bf16.mxu0 0
  %338 = vmatpush1.bf16.msra.mxu0 0
  %339 = vmatprep.subr.bf16.mxu0 0
  %340 = vmatpush1.bf16.msra.mxu0 0
  %341 = vmatprep.subr.bf16.mxu0 0
  %342 = vmatpush1.bf16.msra.mxu0 0
  %343 = vmatprep.mubr.bf16.mxu0 0
  %344 = vmatmul.mubr.bf16.gmra.mrb[0].mxu0 %v127
  %v345 = vpop.f32.mrb[0].mxu0
  %v346 = vadd.f32 0.0, %v345
  %v347 = vpop.f32.mrb[0].mxu0
  %v348 = vadd.f32 0.0, %v347
  %v349 = vpop.f32.mrb[0].mxu0
  %v350 = vadd.f32 0.0, %v349
  %v351 = vpop.f32.mrb[0].mxu0
  %v352 = vadd.f32 0.0, %v351
  %353 = vmatprep.mubr.bf16.mxu0 0
  %354 = vmatmul.mubr.bf16.gmra.mrb[0].mxu0 %v135
  %v355 = vpop.f32.mrb[0].mxu0
  %v356 = vadd.f32 0.0, %v355
  %v357 = vpop.f32.mrb[0].mxu0
  %v358 = vadd.f32 0.0, %v357
  %v359 = vpop.f32.mrb[0].mxu0
  %v360 = vadd.f32 0.0, %v359
  %v361 = vpop.f32.mrb[0].mxu0
  %v362 = vadd.f32 0.0, %v361
  %363 = vmatprep.mubr.bf16.mxu0 0
  %364 = vmatmul.mubr.bf16.gmra.mrb[0].mxu0 %v143
  %v365 = vpop.f32.mrb[0].mxu0
  %v366 = vadd.f32 0.0, %v365
  %v367 = vpop.f32.mrb[0].mxu0
  %v368 = vadd.f32 0.0, %v367
  %v369 = vpop.f32.mrb[0].mxu0
  %v370 = vadd.f32 0.0, %v369
  %v371 = vpop.f32.mrb[0].mxu0
  %v372 = vadd.f32 0.0, %v371
  %373 = vmatprep.mubr.bf16.mxu0 0
  %374 = vmatmul.mubr.bf16.gmra.mrb[0].mxu0 %v146
  %v375 = vpop.f32.mrb[0].mxu0
  %v376 = vadd.f32 0.0, %v375
  %v377 = vpop.f32.mrb[0].mxu0
  %v378 = vadd.f32 0.0, %v377
  %v379 = vpop.f32.mrb[0].mxu0
  %v380 = vpop.f32.mrb[0].mxu0
  %381 = vdwg.mxu0
  %382 = vmatprep.subr.bf16.mxu0 %v250
  %383 = vmatpush1.bf16.msra.mxu0 %v249
  %384 = vmatprep.subr.bf16.mxu0 %v254
  %385 = vmatpush1.bf16.msra.mxu0 %v253
  %386 = vmatprep.subr.bf16.mxu0 %v258
  %387 = vmatpush1.bf16.msra.mxu0 %v257
  %388 = vmatprep.subr.bf16.mxu0 %v262
  %389 = vmatpush1.bf16.msra.mxu0 %v261
  %390 = vmatprep.subr.bf16.mxu0 %v266
  %391 = vmatpush1.bf16.msra.mxu0 %v265
  %392 = vmatprep.subr.bf16.mxu0 %v270
  %393 = vmatpush1.bf16.msra.mxu0 %v269
  %394 = vmatprep.subr.bf16.mxu0 %v274
  %395 = vmatpush1.bf16.msra.mxu0 %v273
  %396 = vmatprep.subr.bf16.mxu0 %v278
  %397 = vmatpush1.bf16.msra.mxu0 %v277
  %398 = vmatprep.subr.bf16.mxu0 0
  %399 = vmatpush1.bf16.msra.mxu0 0
  %400 = vmatprep.subr.bf16.mxu0 0
  %401 = vmatpush1.bf16.msra.mxu0 0
  %402 = vmatprep.subr.bf16.mxu0 0
  %403 = vmatpush1.bf16.msra.mxu0 0
  %404 = vmatprep.subr.bf16.mxu0 0
  %405 = vmatpush1.bf16.msra.mxu0 0
  %406 = vmatprep.subr.bf16.mxu0 0
  %407 = vmatpush1.bf16.msra.mxu0 0
  %408 = vmatprep.subr.bf16.mxu0 0
  %409 = vmatpush1.bf16.msra.mxu0 0
  %410 = vmatprep.subr.bf16.mxu0 0
  %411 = vmatpush1.bf16.msra.mxu0 0
  %412 = vmatprep.subr.bf16.mxu0 0
  %413 = vmatpush1.bf16.msra.mxu0 0
  %414 = vmatprep.mubr.bf16.mxu0 0
  %415 = vmatmul.mubr.bf16.gmra.mrb[0].mxu0 %v127
  %v416 = vpop.f32.mrb[0].mxu0
  %v417 = vadd.f32 0.0, %v416
  %v418 = vpop.f32.mrb[0].mxu0
  %v419 = vadd.f32 0.0, %v418
  %v420 = vpop.f32.mrb[0].mxu0
  %v421 = vadd.f32 0.0, %v420
  %v422 = vpop.f32.mrb[0].mxu0
  %v423 = vadd.f32 0.0, %v422
  %424 = vmatprep.mubr.bf16.mxu0 0
  %425 = vmatmul.mubr.bf16.gmra.mrb[0].mxu0 %v135
  %v426 = vpop.f32.mrb[0].mxu0
  %v427 = vadd.f32 0.0, %v426
  %v428 = vpop.f32.mrb[0].mxu0
  %v429 = vadd.f32 0.0, %v428
  %v430 = vpop.f32.mrb[0].mxu0
  %v431 = vadd.f32 0.0, %v430
  %v432 = vpop.f32.mrb[0].mxu0
  %v433 = vadd.f32 0.0, %v432
  %434 = vmatprep.mubr.bf16.mxu0 0
  %435 = vmatmul.mubr.bf16.gmra.mrb[0].mxu0 %v143
  %v436 = vpop.f32.mrb[0].mxu0
  %v437 = vadd.f32 0.0, %v436
  %v438 = vpop.f32.mrb[0].mxu0
  %v439 = vadd.f32 0.0, %v438
  %v440 = vpop.f32.mrb[0].mxu0
  %v441 = vadd.f32 0.0, %v440
  %v442 = vpop.f32.mrb[0].mxu0
  %v443 = vadd.f32 0.0, %v442
  %444 = vmatprep.mubr.bf16.mxu0 0
  %445 = vmatmul.mubr.bf16.gmra.mrb[0].mxu0 %v146
  %v446 = vpop.f32.mrb[0].mxu0
  %v447 = vadd.f32 0.0, %v446
  %v448 = vpop.f32.mrb[0].mxu0
  %v449 = vadd.f32 0.0, %v448
  %v450 = vpop.f32.mrb[0].mxu0
  %v451 = vpop.f32.mrb[0].mxu0
  %452 = vdwg.mxu0
  %v460 = vunpack.c.l.b16 %v15
  %v461 = vunpack.c.l.b16 %v16
  %v462 = vunpack.c.l.b16 %v17
  %v463 = vunpack.c.l.b16 %v18
  %v464 = vunpack.c.l.b16 %v19
  %v465 = vunpack.c.l.b16 %v20
  %v466 = vunpack.c.l.b16 %v21
  %v467 = vpack.c.b16 %v461, %v460
  %v468 = vpack.c.b16 %v463, %v462
  %v469 = vpack.c.b16 %v465, %v464
  %v470 = vpack.c.b16 %v466, %v466
  %v507 = vunpack.c.l.b16 %v22
  %v508 = vunpack.c.h.b16 %v22
  %v509 = vunpack.c.l.b16 %v23
  %v510 = vunpack.c.h.b16 %v23
  %v511 = vunpack.c.l.b16 %v24
  %v512 = vunpack.c.h.b16 %v24
  %v513 = vunpack.c.l.b16 %v25
  %v514 = vunpack.c.h.b16 %v25
  %v515 = vunpack.c.l.b16 %v26
  %v516 = vunpack.c.h.b16 %v26
  %v517 = vunpack.c.l.b16 %v27
  %v518 = vunpack.c.h.b16 %v27
  %v519 = vunpack.c.l.b16 %v28
  %v520 = vunpack.c.h.b16 %v28
  %v521 = vunpack.c.l.b16 %v29
  %v522 = vunpack.c.h.b16 %v29
  %v523 = vunpack.c.l.b16 %v30
  %v524 = vunpack.c.h.b16 %v30
  %v525 = vunpack.c.l.b16 %v31
  %v526 = vunpack.c.h.b16 %v31
  %v527 = vunpack.c.l.b16 %v32
  %v528 = vunpack.c.h.b16 %v32
  %v529 = vunpack.c.l.b16 %v33
  %v530 = vunpack.c.h.b16 %v33
  %v531 = vunpack.c.l.b16 %v34
  %v532 = vunpack.c.h.b16 %v34
  %v533 = vunpack.c.l.b16 %v35
  %v534 = vunpack.c.h.b16 %v35
  %v535 = vunpack.c.l.b16 %v36
  %v536 = vunpack.c.h.b16 %v36
  %v537 = vunpack.c.l.b16 %v37
  %v538 = vunpack.c.h.b16 %v37
  %v539 = vunpack.c.l.b16 %v38
  %v540 = vunpack.c.h.b16 %v38
  %v541 = vunpack.c.l.b16 %v39
  %v542 = vunpack.c.h.b16 %v39
  %v543 = vunpack.c.l.b16 %v40
  %v544 = vunpack.c.h.b16 %v40
  %v545 = vunpack.c.l.b16 %v41
  %v546 = vunpack.c.h.b16 %v41
  %v547 = vunpack.c.l.b16 %v42
  %v548 = vunpack.c.h.b16 %v42
  %v549 = vunpack.c.l.b16 %v43
  %v550 = vunpack.c.h.b16 %v43
  %v551 = vunpack.c.l.b16 %v44
  %v552 = vunpack.c.h.b16 %v44
  %v553 = vunpack.c.l.b16 %v45
  %v554 = vunpack.c.h.b16 %v45
  %v555 = vunpack.c.l.b16 %v46
  %v556 = vunpack.c.h.b16 %v46
  %v557 = vunpack.c.l.b16 %v47
  %v558 = vunpack.c.h.b16 %v47
  %v559 = vunpack.c.l.b16 %v48
  %v560 = vunpack.c.h.b16 %v48
  %v561 = vunpack.c.l.b16 %v49
  %v562 = vunpack.c.h.b16 %v49
  %v563 = vunpack.c.l.b16 %v50
  %v564 = vunpack.c.h.b16 %v50
  %v565 = vunpack.c.l.b16 %v51
  %v566 = vunpack.c.h.b16 %v51
  %v567 = vunpack.c.l.b16 %v52
  %v568 = vunpack.c.h.b16 %v52
  %v569 = vunpack.c.l.b16 %v53
  %v570 = vunpack.c.h.b16 %v53
  %v571 = vpack.c.b16 %v511, %v507
  %v572 = vpack.c.b16 %v512, %v508
  %v573 = vpack.c.b16 %v513, %v509
  %v574 = vpack.c.b16 %v514, %v510
  %v575 = vpack.c.b16 %v519, %v515
  %v576 = vpack.c.b16 %v520, %v516
  %v577 = vpack.c.b16 %v521, %v517
  %v578 = vpack.c.b16 %v522, %v518
  %v579 = vpack.c.b16 %v527, %v523
  %v580 = vpack.c.b16 %v528, %v524
  %v581 = vpack.c.b16 %v529, %v525
  %v582 = vpack.c.b16 %v530, %v526
  %v583 = vpack.c.b16 %v535, %v531
  %v584 = vpack.c.b16 %v536, %v532
  %v585 = vpack.c.b16 %v537, %v533
  %v586 = vpack.c.b16 %v538, %v534
  %v587 = vpack.c.b16 %v543, %v539
  %v588 = vpack.c.b16 %v544, %v540
  %v589 = vpack.c.b16 %v545, %v541
  %v590 = vpack.c.b16 %v546, %v542
  %v591 = vpack.c.b16 %v551, %v547
  %v592 = vpack.c.b16 %v552, %v548
  %v593 = vpack.c.b16 %v553, %v549
  %v594 = vpack.c.b16 %v554, %v550
  %v595 = vpack.c.b16 %v559, %v555
  %v596 = vpack.c.b16 %v560, %v556
  %v597 = vpack.c.b16 %v561, %v557
  %v598 = vpack.c.b16 %v562, %v558
  %v599 = vpack.c.b16 %v567, %v563
  %v600 = vpack.c.b16 %v568, %v564
  %v601 = vpack.c.b16 %v569, %v565
  %v602 = vpack.c.b16 %v570, %v566
  %635 = vmatprep.subr.bf16.mxu0 %v572
  %636 = vmatpush1.bf16.msra.mxu0 %v571
  %637 = vmatprep.subr.bf16.mxu0 %v576
  %638 = vmatpush1.bf16.msra.mxu0 %v575
  %639 = vmatprep.subr.bf16.mxu0 %v580
  %640 = vmatpush1.bf16.msra.mxu0 %v579
  %641 = vmatprep.subr.bf16.mxu0 %v584
  %642 = vmatpush1.bf16.msra.mxu0 %v583
  %643 = vmatprep.subr.bf16.mxu0 %v588
  %644 = vmatpush1.bf16.msra.mxu0 %v587
  %645 = vmatprep.subr.bf16.mxu0 %v592
  %646 = vmatpush1.bf16.msra.mxu0 %v591
  %647 = vmatprep.subr.bf16.mxu0 %v596
  %648 = vmatpush1.bf16.msra.mxu0 %v595
  %649 = vmatprep.subr.bf16.mxu0 %v600
  %650 = vmatpush1.bf16.msra.mxu0 %v599
  %651 = vmatprep.subr.bf16.mxu0 0
  %652 = vmatpush1.bf16.msra.mxu0 0
  %653 = vmatprep.subr.bf16.mxu0 0
  %654 = vmatpush1.bf16.msra.mxu0 0
  %655 = vmatprep.subr.bf16.mxu0 0
  %656 = vmatpush1.bf16.msra.mxu0 0
  %657 = vmatprep.subr.bf16.mxu0 0
  %658 = vmatpush1.bf16.msra.mxu0 0
  %659 = vmatprep.subr.bf16.mxu0 0
  %660 = vmatpush1.bf16.msra.mxu0 0
  %661 = vmatprep.subr.bf16.mxu0 0
  %662 = vmatpush1.bf16.msra.mxu0 0
  %663 = vmatprep.subr.bf16.mxu0 0
  %664 = vmatpush1.bf16.msra.mxu0 0
  %665 = vmatprep.subr.bf16.mxu0 0
  %666 = vmatpush1.bf16.msra.mxu0 0
  %667 = vmatprep.mubr.bf16.mxu0 0
  %668 = vmatmul.mubr.bf16.gmra.mrb[0].mxu0 %v467
  %v669 = vpop.f32.mrb[0].mxu0
  %v670 = vadd.f32 %v346, %v669
  %v671 = vpop.f32.mrb[0].mxu0
  %v672 = vadd.f32 %v348, %v671
  %v673 = vpop.f32.mrb[0].mxu0
  %v674 = vadd.f32 %v350, %v673
  %v675 = vpop.f32.mrb[0].mxu0
  %v676 = vadd.f32 %v352, %v675
  %677 = vmatprep.mubr.bf16.mxu0 0
  %678 = vmatmul.mubr.bf16.gmra.mrb[0].mxu0 %v468
  %v679 = vpop.f32.mrb[0].mxu0
  %v680 = vadd.f32 %v356, %v679
  %v681 = vpop.f32.mrb[0].mxu0
  %v682 = vadd.f32 %v358, %v681
  %v683 = vpop.f32.mrb[0].mxu0
  %v684 = vadd.f32 %v360, %v683
  %v685 = vpop.f32.mrb[0].mxu0
  %v686 = vadd.f32 %v362, %v685
  %687 = vmatprep.mubr.bf16.mxu0 0
  %688 = vmatmul.mubr.bf16.gmra.mrb[0].mxu0 %v469
  %v689 = vpop.f32.mrb[0].mxu0
  %v690 = vadd.f32 %v366, %v689
  %v691 = vpop.f32.mrb[0].mxu0
  %v692 = vadd.f32 %v368, %v691
  %v693 = vpop.f32.mrb[0].mxu0
  %v694 = vadd.f32 %v370, %v693
  %v695 = vpop.f32.mrb[0].mxu0
  %v696 = vadd.f32 %v372, %v695
  %697 = vmatprep.mubr.bf16.mxu0 0
  %698 = vmatmul.mubr.bf16.gmra.mrb[0].mxu0 %v470
  %v699 = vpop.f32.mrb[0].mxu0
  %v700 = vadd.f32 %v376, %v699
  %v701 = vpop.f32.mrb[0].mxu0
  %v702 = vadd.f32 %v378, %v701
  %v703 = vpop.f32.mrb[0].mxu0
  %v704 = vpop.f32.mrb[0].mxu0
  %705 = vdwg.mxu0
  %706 = vmatprep.subr.bf16.mxu0 %v574
  %707 = vmatpush1.bf16.msra.mxu0 %v573
  %708 = vmatprep.subr.bf16.mxu0 %v578
  %709 = vmatpush1.bf16.msra.mxu0 %v577
  %710 = vmatprep.subr.bf16.mxu0 %v582
  %711 = vmatpush1.bf16.msra.mxu0 %v581
  %712 = vmatprep.subr.bf16.mxu0 %v586
  %713 = vmatpush1.bf16.msra.mxu0 %v585
  %714 = vmatprep.subr.bf16.mxu0 %v590
  %715 = vmatpush1.bf16.msra.mxu0 %v589
  %716 = vmatprep.subr.bf16.mxu0 %v594
  %717 = vmatpush1.bf16.msra.mxu0 %v593
  %718 = vmatprep.subr.bf16.mxu0 %v598
  %719 = vmatpush1.bf16.msra.mxu0 %v597
  %720 = vmatprep.subr.bf16.mxu0 %v602
  %721 = vmatpush1.bf16.msra.mxu0 %v601
  %722 = vmatprep.subr.bf16.mxu0 0
  %723 = vmatpush1.bf16.msra.mxu0 0
  %724 = vmatprep.subr.bf16.mxu0 0
  %725 = vmatpush1.bf16.msra.mxu0 0
  %726 = vmatprep.subr.bf16.mxu0 0
  %727 = vmatpush1.bf16.msra.mxu0 0
  %728 = vmatprep.subr.bf16.mxu0 0
  %729 = vmatpush1.bf16.msra.mxu0 0
  %730 = vmatprep.subr.bf16.mxu0 0
  %731 = vmatpush1.bf16.msra.mxu0 0
  %732 = vmatprep.subr.bf16.mxu0 0
  %733 = vmatpush1.bf16.msra.mxu0 0
  %734 = vmatprep.subr.bf16.mxu0 0
  %735 = vmatpush1.bf16.msra.mxu0 0
  %736 = vmatprep.subr.bf16.mxu0 0
  %737 = vmatpush1.bf16.msra.mxu0 0
  %738 = vmatprep.mubr.bf16.mxu0 0
  %739 = vmatmul.mubr.bf16.gmra.mrb[0].mxu0 %v467
  %v740 = vpop.f32.mrb[0].mxu0
  %v741 = vadd.f32 %v417, %v740
  %v742 = vpop.f32.mrb[0].mxu0
  %v743 = vadd.f32 %v419, %v742
  %v744 = vpop.f32.mrb[0].mxu0
  %v745 = vadd.f32 %v421, %v744
  %v746 = vpop.f32.mrb[0].mxu0
  %v747 = vadd.f32 %v423, %v746
  %748 = vmatprep.mubr.bf16.mxu0 0
  %749 = vmatmul.mubr.bf16.gmra.mrb[0].mxu0 %v468
  %v750 = vpop.f32.mrb[0].mxu0
  %v751 = vadd.f32 %v427, %v750
  %v752 = vpop.f32.mrb[0].mxu0
  %v753 = vadd.f32 %v429, %v752
  %v754 = vpop.f32.mrb[0].mxu0
  %v755 = vadd.f32 %v431, %v754
  %v756 = vpop.f32.mrb[0].mxu0
  %v757 = vadd.f32 %v433, %v756
  %758 = vmatprep.mubr.bf16.mxu0 0
  %759 = vmatmul.mubr.bf16.gmra.mrb[0].mxu0 %v469
  %v760 = vpop.f32.mrb[0].mxu0
  %v761 = vadd.f32 %v437, %v760
  %v762 = vpop.f32.mrb[0].mxu0
  %v763 = vadd.f32 %v439, %v762
  %v764 = vpop.f32.mrb[0].mxu0
  %v765 = vadd.f32 %v441, %v764
  %v766 = vpop.f32.mrb[0].mxu0
  %v767 = vadd.f32 %v443, %v766
  %768 = vmatprep.mubr.bf16.mxu0 0
  %769 = vmatmul.mubr.bf16.gmra.mrb[0].mxu0 %v470
  %v770 = vpop.f32.mrb[0].mxu0
  %v771 = vadd.f32 %v447, %v770
  %v772 = vpop.f32.mrb[0].mxu0
  %v773 = vadd.f32 %v449, %v772
  %v774 = vpop.f32.mrb[0].mxu0
  %v775 = vpop.f32.mrb[0].mxu0
  %776 = vdwg.mxu0
  %v777 = vld [vmem:[%s0] sm:$0xc]
  %v778 = vld [vmem:[%s0 + $0x1c] sm:$0x7]
  %s779 = scalar_lea.vmem %s1, 512
  %v780 = vld [vmem:[%s779] sm:$0xff]
  %v781 = vld [vmem:[%s779 + $0x8] sm:$0xff]
  %v782 = vld [vmem:[%s779 + $0x10] sm:$0xff]
  %v783 = vld [vmem:[%s779 + $0x18] sm:$0xff]
  %v784 = vld [vmem:[%s779 + $0x20] sm:$0xff]
  %v785 = vld [vmem:[%s779 + $0x28] sm:$0xff]
  %v786 = vld [vmem:[%s779 + $0x30] sm:$0xff]
  %v787 = vld [vmem:[%s779 + $0x38] sm:$0xff]
  %v788 = vld [vmem:[%s779 + $0x40] sm:$0xff]
  %v789 = vld [vmem:[%s779 + $0x48] sm:$0xff]
  %v790 = vld [vmem:[%s779 + $0x50] sm:$0xff]
  %v791 = vld [vmem:[%s779 + $0x58] sm:$0xff]
  %v792 = vld [vmem:[%s779 + $0x60] sm:$0xff]
  %v793 = vld [vmem:[%s779 + $0x68] sm:$0xff]
  %v794 = vld [vmem:[%s779 + $0x70] sm:$0xff]
  %v795 = vld [vmem:[%s779 + $0x78] sm:$0xff]
  %v796 = vld [vmem:[%s779 + $0x80] sm:$0xff]
  %v797 = vld [vmem:[%s779 + $0x88] sm:$0xff]
  %v798 = vld [vmem:[%s779 + $0x90] sm:$0xff]
  %v799 = vld [vmem:[%s779 + $0x98] sm:$0xff]
  %v800 = vld [vmem:[%s779 + $0xa0] sm:$0xff]
  %v801 = vld [vmem:[%s779 + $0xa8] sm:$0xff]
  %v802 = vld [vmem:[%s779 + $0xb0] sm:$0xff]
  %v803 = vld [vmem:[%s779 + $0xb8] sm:$0xff]
  %v804 = vld [vmem:[%s779 + $0xc0] sm:$0xff]
  %v805 = vld [vmem:[%s779 + $0xc8] sm:$0xff]
  %v806 = vld [vmem:[%s779 + $0xd0] sm:$0xff]
  %v807 = vld [vmem:[%s779 + $0xd8] sm:$0xff]
  %v808 = vld [vmem:[%s779 + $0xe0] sm:$0xff]
  %v809 = vld [vmem:[%s779 + $0xe8] sm:$0xff]
  %v810 = vld [vmem:[%s779 + $0xf0] sm:$0xff]
  %v811 = vld [vmem:[%s779 + $0xf8] sm:$0xff]
  %v814 = vunpack.c.l.b16 %v777
  %v815 = vunpack.c.l.b16 %v778
  %v816 = vpack.c.b16 %v104, %v814
  %v817 = vpack.c.b16 %v815, %v109
  %vm818 = vsmask.f32 5376
  %v820 = vshrl.u32 %v816, 16
  %v822 = vrot.slane %v820, 2
  %v823 = vshll.u32 %v816, 16
  %v825 = vrot.slane %v823, 3
  %v826 = vor.u32 %v822, %v825
  %v827 = vrot.slane %v128, 2
  %v828 = vrot.slane %v124, 3
  %v829 = vor.u32 %v827, %v828
  %v830 = vsel %vm818, %v826, %v829
  %v831 = vrot.slane %v136, 2
  %v832 = vrot.slane %v132, 3
  %v833 = vor.u32 %v831, %v832
  %v834 = vsel %vm818, %v829, %v833
  %v836 = vshrl.u32 %v817, 16
  %v838 = vrot.slane %v836, 2
  %v839 = vshll.u32 %v817, 16
  %v841 = vrot.slane %v839, 3
  %v842 = vor.u32 %v838, %v841
  %v843 = vsel %vm818, %v833, %v842
  %v880 = vunpack.c.l.b16 %v780
  %v881 = vunpack.c.h.b16 %v780
  %v882 = vunpack.c.l.b16 %v781
  %v883 = vunpack.c.h.b16 %v781
  %v884 = vunpack.c.l.b16 %v782
  %v885 = vunpack.c.h.b16 %v782
  %v886 = vunpack.c.l.b16 %v783
  %v887 = vunpack.c.h.b16 %v783
  %v888 = vunpack.c.l.b16 %v784
  %v889 = vunpack.c.h.b16 %v784
  %v890 = vunpack.c.l.b16 %v785
  %v891 = vunpack.c.h.b16 %v785
  %v892 = vunpack.c.l.b16 %v786
  %v893 = vunpack.c.h.b16 %v786
  %v894 = vunpack.c.l.b16 %v787
  %v895 = vunpack.c.h.b16 %v787
  %v896 = vunpack.c.l.b16 %v788
  %v897 = vunpack.c.h.b16 %v788
  %v898 = vunpack.c.l.b16 %v789
  %v899 = vunpack.c.h.b16 %v789
  %v900 = vunpack.c.l.b16 %v790
  %v901 = vunpack.c.h.b16 %v790
  %v902 = vunpack.c.l.b16 %v791
  %v903 = vunpack.c.h.b16 %v791
  %v904 = vunpack.c.l.b16 %v792
  %v905 = vunpack.c.h.b16 %v792
  %v906 = vunpack.c.l.b16 %v793
  %v907 = vunpack.c.h.b16 %v793
  %v908 = vunpack.c.l.b16 %v794
  %v909 = vunpack.c.h.b16 %v794
  %v910 = vunpack.c.l.b16 %v795
  %v911 = vunpack.c.h.b16 %v795
  %v912 = vunpack.c.l.b16 %v796
  %v913 = vunpack.c.h.b16 %v796
  %v914 = vunpack.c.l.b16 %v797
  %v915 = vunpack.c.h.b16 %v797
  %v916 = vunpack.c.l.b16 %v798
  %v917 = vunpack.c.h.b16 %v798
  %v918 = vunpack.c.l.b16 %v799
  %v919 = vunpack.c.h.b16 %v799
  %v920 = vunpack.c.l.b16 %v800
  %v921 = vunpack.c.h.b16 %v800
  %v922 = vunpack.c.l.b16 %v801
  %v923 = vunpack.c.h.b16 %v801
  %v924 = vunpack.c.l.b16 %v802
  %v925 = vunpack.c.h.b16 %v802
  %v926 = vunpack.c.l.b16 %v803
  %v927 = vunpack.c.h.b16 %v803
  %v928 = vunpack.c.l.b16 %v804
  %v929 = vunpack.c.h.b16 %v804
  %v930 = vunpack.c.l.b16 %v805
  %v931 = vunpack.c.h.b16 %v805
  %v932 = vunpack.c.l.b16 %v806
  %v933 = vunpack.c.h.b16 %v806
  %v934 = vunpack.c.l.b16 %v807
  %v935 = vunpack.c.h.b16 %v807
  %v936 = vunpack.c.l.b16 %v808
  %v937 = vunpack.c.h.b16 %v808
  %v938 = vunpack.c.l.b16 %v809
  %v939 = vunpack.c.h.b16 %v809
  %v940 = vunpack.c.l.b16 %v810
  %v941 = vunpack.c.h.b16 %v810
  %v942 = vunpack.c.l.b16 %v811
  %v943 = vunpack.c.h.b16 %v811
  %v944 = vpack.c.b16 %v884, %v880
  %v945 = vpack.c.b16 %v885, %v881
  %v946 = vpack.c.b16 %v886, %v882
  %v947 = vpack.c.b16 %v887, %v883
  %v948 = vpack.c.b16 %v892, %v888
  %v949 = vpack.c.b16 %v893, %v889
  %v950 = vpack.c.b16 %v894, %v890
  %v951 = vpack.c.b16 %v895, %v891
  %v952 = vpack.c.b16 %v900, %v896
  %v953 = vpack.c.b16 %v901, %v897
  %v954 = vpack.c.b16 %v902, %v898
  %v955 = vpack.c.b16 %v903, %v899
  %v956 = vpack.c.b16 %v908, %v904
  %v957 = vpack.c.b16 %v909, %v905
  %v958 = vpack.c.b16 %v910, %v906
  %v959 = vpack.c.b16 %v911, %v907
  %v960 = vpack.c.b16 %v916, %v912
  %v961 = vpack.c.b16 %v917, %v913
  %v962 = vpack.c.b16 %v918, %v914
  %v963 = vpack.c.b16 %v919, %v915
  %v964 = vpack.c.b16 %v924, %v920
  %v965 = vpack.c.b16 %v925, %v921
  %v966 = vpack.c.b16 %v926, %v922
  %v967 = vpack.c.b16 %v927, %v923
  %v968 = vpack.c.b16 %v932, %v928
  %v969 = vpack.c.b16 %v933, %v929
  %v970 = vpack.c.b16 %v934, %v930
  %v971 = vpack.c.b16 %v935, %v931
  %v972 = vpack.c.b16 %v940, %v936
  %v973 = vpack.c.b16 %v941, %v937
  %v974 = vpack.c.b16 %v942, %v938
  %v975 = vpack.c.b16 %v943, %v939
  %1008 = vmatprep.subr.bf16.mxu0 %v945
  %1009 = vmatpush1.bf16.msra.mxu0 %v944
  %1010 = vmatprep.subr.bf16.mxu0 %v949
  %1011 = vmatpush1.bf16.msra.mxu0 %v948
  %1012 = vmatprep.subr.bf16.mxu0 %v953
  %1013 = vmatpush1.bf16.msra.mxu0 %v952
  %1014 = vmatprep.subr.bf16.mxu0 %v957
  %1015 = vmatpush1.bf16.msra.mxu0 %v956
  %1016 = vmatprep.subr.bf16.mxu0 %v961
  %1017 = vmatpush1.bf16.msra.mxu0 %v960
  %1018 = vmatprep.subr.bf16.mxu0 %v965
  %1019 = vmatpush1.bf16.msra.mxu0 %v964
  %1020 = vmatprep.subr.bf16.mxu0 %v969
  %1021 = vmatpush1.bf16.msra.mxu0 %v968
  %1022 = vmatprep.subr.bf16.mxu0 %v973
  %1023 = vmatpush1.bf16.msra.mxu0 %v972
  %1024 = vmatprep.subr.bf16.mxu0 0
  %1025 = vmatpush1.bf16.msra.mxu0 0
  %1026 = vmatprep.subr.bf16.mxu0 0
  %1027 = vmatpush1.bf16.msra.mxu0 0
  %1028 = vmatprep.subr.bf16.mxu0 0
  %1029 = vmatpush1.bf16.msra.mxu0 0
  %1030 = vmatprep.subr.bf16.mxu0 0
  %1031 = vmatpush1.bf16.msra.mxu0 0
  %1032 = vmatprep.subr.bf16.mxu0 0
  %1033 = vmatpush1.bf16.msra.mxu0 0
  %1034 = vmatprep.subr.bf16.mxu0 0
  %1035 = vmatpush1.bf16.msra.mxu0 0
  %1036 = vmatprep.subr.bf16.mxu0 0
  %1037 = vmatpush1.bf16.msra.mxu0 0
  %1038 = vmatprep.subr.bf16.mxu0 0
  %1039 = vmatpush1.bf16.msra.mxu0 0
  %1040 = vmatprep.mubr.bf16.mxu0 0
  %1041 = vmatmul.mubr.bf16.gmra.mrb[0].mxu0 %v830
  %v1042 = vpop.f32.mrb[0].mxu0
  %v1043 = vadd.f32 0.0, %v1042
  %v1044 = vpop.f32.mrb[0].mxu0
  %v1045 = vadd.f32 0.0, %v1044
  %v1046 = vpop.f32.mrb[0].mxu0
  %v1047 = vadd.f32 0.0, %v1046
  %v1048 = vpop.f32.mrb[0].mxu0
  %v1049 = vadd.f32 0.0, %v1048
  %1050 = vmatprep.mubr.bf16.mxu0 0
  %1051 = vmatmul.mubr.bf16.gmra.mrb[0].mxu0 %v834
  %v1052 = vpop.f32.mrb[0].mxu0
  %v1053 = vadd.f32 0.0, %v1052
  %v1054 = vpop.f32.mrb[0].mxu0
  %v1055 = vadd.f32 0.0, %v1054
  %v1056 = vpop.f32.mrb[0].mxu0
  %v1057 = vadd.f32 0.0, %v1056
  %v1058 = vpop.f32.mrb[0].mxu0
  %v1059 = vadd.f32 0.0, %v1058
  %1060 = vmatprep.mubr.bf16.mxu0 0
  %1061 = vmatmul.mubr.bf16.gmra.mrb[0].mxu0 %v843
  %v1062 = vpop.f32.mrb[0].mxu0
  %v1063 = vadd.f32 0.0, %v1062
  %v1064 = vpop.f32.mrb[0].mxu0
  %v1065 = vadd.f32 0.0, %v1064
  %v1066 = vpop.f32.mrb[0].mxu0
  %v1067 = vadd.f32 0.0, %v1066
  %v1068 = vpop.f32.mrb[0].mxu0
  %v1069 = vadd.f32 0.0, %v1068
  %1070 = vmatprep.mubr.bf16.mxu0 0
  %1071 = vmatmul.mubr.bf16.gmra.mrb[0].mxu0 %v842
  %v1072 = vpop.f32.mrb[0].mxu0
  %v1073 = vadd.f32 0.0, %v1072
  %v1074 = vpop.f32.mrb[0].mxu0
  %v1075 = vadd.f32 0.0, %v1074
  %v1076 = vpop.f32.mrb[0].mxu0
  %v1077 = vpop.f32.mrb[0].mxu0
  %1078 = vdwg.mxu0
  %1079 = vmatprep.subr.bf16.mxu0 %v947
  %1080 = vmatpush1.bf16.msra.mxu0 %v946
  %1081 = vmatprep.subr.bf16.mxu0 %v951
  %1082 = vmatpush1.bf16.msra.mxu0 %v950
  %1083 = vmatprep.subr.bf16.mxu0 %v955
  %1084 = vmatpush1.bf16.msra.mxu0 %v954
  %1085 = vmatprep.subr.bf16.mxu0 %v959
  %1086 = vmatpush1.bf16.msra.mxu0 %v958
  %1087 = vmatprep.subr.bf16.mxu0 %v963
  %1088 = vmatpush1.bf16.msra.mxu0 %v962
  %1089 = vmatprep.subr.bf16.mxu0 %v967
  %1090 = vmatpush1.bf16.msra.mxu0 %v966
  %1091 = vmatprep.subr.bf16.mxu0 %v971
  %1092 = vmatpush1.bf16.msra.mxu0 %v970
  %1093 = vmatprep.subr.bf16.mxu0 %v975
  %1094 = vmatpush1.bf16.msra.mxu0 %v974
  %1095 = vmatprep.subr.bf16.mxu0 0
  %1096 = vmatpush1.bf16.msra.mxu0 0
  %1097 = vmatprep.subr.bf16.mxu0 0
  %1098 = vmatpush1.bf16.msra.mxu0 0
  %1099 = vmatprep.subr.bf16.mxu0 0
  %1100 = vmatpush1.bf16.msra.mxu0 0
  %1101 = vmatprep.subr.bf16.mxu0 0
  %1102 = vmatpush1.bf16.msra.mxu0 0
  %1103 = vmatprep.subr.bf16.mxu0 0
  %1104 = vmatpush1.bf16.msra.mxu0 0
  %1105 = vmatprep.subr.bf16.mxu0 0
  %1106 = vmatpush1.bf16.msra.mxu0 0
  %1107 = vmatprep.subr.bf16.mxu0 0
  %1108 = vmatpush1.bf16.msra.mxu0 0
  %1109 = vmatprep.subr.bf16.mxu0 0
  %1110 = vmatpush1.bf16.msra.mxu0 0
  %1111 = vmatprep.mubr.bf16.mxu0 0
  %1112 = vmatmul.mubr.bf16.gmra.mrb[0].mxu0 %v830
  %v1113 = vpop.f32.mrb[0].mxu0
  %v1114 = vadd.f32 0.0, %v1113
  %v1115 = vpop.f32.mrb[0].mxu0
  %v1116 = vadd.f32 0.0, %v1115
  %v1117 = vpop.f32.mrb[0].mxu0
  %v1118 = vadd.f32 0.0, %v1117
  %v1119 = vpop.f32.mrb[0].mxu0
  %v1120 = vadd.f32 0.0, %v1119
  %1121 = vmatprep.mubr.bf16.mxu0 0
  %1122 = vmatmul.mubr.bf16.gmra.mrb[0].mxu0 %v834
  %v1123 = vpop.f32.mrb[0].mxu0
  %v1124 = vadd.f32 0.0, %v1123
  %v1125 = vpop.f32.mrb[0].mxu0
  %v1126 = vadd.f32 0.0, %v1125
  %v1127 = vpop.f32.mrb[0].mxu0
  %v1128 = vadd.f32 0.0, %v1127
  %v1129 = vpop.f32.mrb[0].mxu0
  %v1130 = vadd.f32 0.0, %v1129
  %1131 = vmatprep.mubr.bf16.mxu0 0
  %1132 = vmatmul.mubr.bf16.gmra.mrb[0].mxu0 %v843
  %v1133 = vpop.f32.mrb[0].mxu0
  %v1134 = vadd.f32 0.0, %v1133
  %v1135 = vpop.f32.mrb[0].mxu0
  %v1136 = vadd.f32 0.0, %v1135
  %v1137 = vpop.f32.mrb[0].mxu0
  %v1138 = vadd.f32 0.0, %v1137
  %v1139 = vpop.f32.mrb[0].mxu0
  %v1140 = vadd.f32 0.0, %v1139
  %1141 = vmatprep.mubr.bf16.mxu0 0
  %1142 = vmatmul.mubr.bf16.gmra.mrb[0].mxu0 %v842
  %v1143 = vpop.f32.mrb[0].mxu0
  %v1144 = vadd.f32 0.0, %v1143
  %v1145 = vpop.f32.mrb[0].mxu0
  %v1146 = vadd.f32 0.0, %v1145
  %v1147 = vpop.f32.mrb[0].mxu0
  %v1148 = vpop.f32.mrb[0].mxu0
  %1149 = vdwg.mxu0
  %v1150 = vadd.f32 %v670, %v1043
  %v1151 = vadd.f32 %v672, %v1045
  %v1152 = vadd.f32 %v741, %v1114
  %v1153 = vadd.f32 %v743, %v1116
  %v1154 = vadd.f32 %v674, %v1047
  %v1155 = vadd.f32 %v676, %v1049
  %v1156 = vadd.f32 %v745, %v1118
  %v1157 = vadd.f32 %v747, %v1120
  %v1158 = vadd.f32 %v680, %v1053
  %v1159 = vadd.f32 %v682, %v1055
  %v1160 = vadd.f32 %v751, %v1124
  %v1161 = vadd.f32 %v753, %v1126
  %v1162 = vadd.f32 %v684, %v1057
  %v1163 = vadd.f32 %v686, %v1059
  %v1164 = vadd.f32 %v755, %v1128
  %v1165 = vadd.f32 %v757, %v1130
  %v1166 = vadd.f32 %v690, %v1063
  %v1167 = vadd.f32 %v692, %v1065
  %v1168 = vadd.f32 %v761, %v1134
  %v1169 = vadd.f32 %v763, %v1136
  %v1170 = vadd.f32 %v694, %v1067
  %v1171 = vadd.f32 %v696, %v1069
  %v1172 = vadd.f32 %v765, %v1138
  %v1173 = vadd.f32 %v767, %v1140
  %v1174 = vadd.f32 %v700, %v1073
  %v1175 = vadd.f32 %v702, %v1075
  %v1176 = vadd.f32 %v771, %v1144
  %v1177 = vadd.f32 %v773, %v1146
  %v1178 = vld [vmem:[%s0] sm:$0x8]
  %s1179 = scalar_lea.vmem %s1, 768
  %v1180 = vld [vmem:[%s1179] sm:$0xff]
  %v1181 = vld [vmem:[%s1179 + $0x8] sm:$0xff]
  %v1182 = vld [vmem:[%s1179 + $0x10] sm:$0xff]
  %v1183 = vld [vmem:[%s1179 + $0x18] sm:$0xff]
  %v1184 = vld [vmem:[%s1179 + $0x20] sm:$0xff]
  %v1185 = vld [vmem:[%s1179 + $0x28] sm:$0xff]
  %v1186 = vld [vmem:[%s1179 + $0x30] sm:$0xff]
  %v1187 = vld [vmem:[%s1179 + $0x38] sm:$0xff]
  %v1188 = vld [vmem:[%s1179 + $0x40] sm:$0xff]
  %v1189 = vld [vmem:[%s1179 + $0x48] sm:$0xff]
  %v1190 = vld [vmem:[%s1179 + $0x50] sm:$0xff]
  %v1191 = vld [vmem:[%s1179 + $0x58] sm:$0xff]
  %v1192 = vld [vmem:[%s1179 + $0x60] sm:$0xff]
  %v1193 = vld [vmem:[%s1179 + $0x68] sm:$0xff]
  %v1194 = vld [vmem:[%s1179 + $0x70] sm:$0xff]
  %v1195 = vld [vmem:[%s1179 + $0x78] sm:$0xff]
  %v1196 = vld [vmem:[%s1179 + $0x80] sm:$0xff]
  %v1197 = vld [vmem:[%s1179 + $0x88] sm:$0xff]
  %v1198 = vld [vmem:[%s1179 + $0x90] sm:$0xff]
  %v1199 = vld [vmem:[%s1179 + $0x98] sm:$0xff]
  %v1200 = vld [vmem:[%s1179 + $0xa0] sm:$0xff]
  %v1201 = vld [vmem:[%s1179 + $0xa8] sm:$0xff]
  %v1202 = vld [vmem:[%s1179 + $0xb0] sm:$0xff]
  %v1203 = vld [vmem:[%s1179 + $0xb8] sm:$0xff]
  %v1204 = vld [vmem:[%s1179 + $0xc0] sm:$0xff]
  %v1205 = vld [vmem:[%s1179 + $0xc8] sm:$0xff]
  %v1206 = vld [vmem:[%s1179 + $0xd0] sm:$0xff]
  %v1207 = vld [vmem:[%s1179 + $0xd8] sm:$0xff]
  %v1208 = vld [vmem:[%s1179 + $0xe0] sm:$0xff]
  %v1209 = vld [vmem:[%s1179 + $0xe8] sm:$0xff]
  %v1210 = vld [vmem:[%s1179 + $0xf0] sm:$0xff]
  %v1211 = vld [vmem:[%s1179 + $0xf8] sm:$0xff]
  %v1213 = vunpack.c.l.b16 %v1178
  %v1214 = vpack.c.b16 %v104, %v1213
  %vm1215 = vcmask 1044480
  %v1216 = vrot.slane %v1214, 3
  %v1217 = vrot.slane %v112, 3
  %v1218 = vsel %vm1215, %v1216, %v1217
  %v1219 = vrot.slane %v113, 3
  %v1220 = vsel %vm1215, %v1217, %v1219
  %v1221 = vrot.slane %v817, 3
  %v1222 = vsel %vm1215, %v1219, %v1221
  %v1259 = vunpack.c.l.b16 %v1180
  %v1260 = vunpack.c.h.b16 %v1180
  %v1261 = vunpack.c.l.b16 %v1181
  %v1262 = vunpack.c.h.b16 %v1181
  %v1263 = vunpack.c.l.b16 %v1182
  %v1264 = vunpack.c.h.b16 %v1182
  %v1265 = vunpack.c.l.b16 %v1183
  %v1266 = vunpack.c.h.b16 %v1183
  %v1267 = vunpack.c.l.b16 %v1184
  %v1268 = vunpack.c.h.b16 %v1184
  %v1269 = vunpack.c.l.b16 %v1185
  %v1270 = vunpack.c.h.b16 %v1185
  %v1271 = vunpack.c.l.b16 %v1186
  %v1272 = vunpack.c.h.b16 %v1186
  %v1273 = vunpack.c.l.b16 %v1187
  %v1274 = vunpack.c.h.b16 %v1187
  %v1275 = vunpack.c.l.b16 %v1188
  %v1276 = vunpack.c.h.b16 %v1188
  %v1277 = vunpack.c.l.b16 %v1189
  %v1278 = vunpack.c.h.b16 %v1189
  %v1279 = vunpack.c.l.b16 %v1190
  %v1280 = vunpack.c.h.b16 %v1190
  %v1281 = vunpack.c.l.b16 %v1191
  %v1282 = vunpack.c.h.b16 %v1191
  %v1283 = vunpack.c.l.b16 %v1192
  %v1284 = vunpack.c.h.b16 %v1192
  %v1285 = vunpack.c.l.b16 %v1193
  %v1286 = vunpack.c.h.b16 %v1193
  %v1287 = vunpack.c.l.b16 %v1194
  %v1288 = vunpack.c.h.b16 %v1194
  %v1289 = vunpack.c.l.b16 %v1195
  %v1290 = vunpack.c.h.b16 %v1195
  %v1291 = vunpack.c.l.b16 %v1196
  %v1292 = vunpack.c.h.b16 %v1196
  %v1293 = vunpack.c.l.b16 %v1197
  %v1294 = vunpack.c.h.b16 %v1197
  %v1295 = vunpack.c.l.b16 %v1198
  %v1296 = vunpack.c.h.b16 %v1198
  %v1297 = vunpack.c.l.b16 %v1199
  %v1298 = vunpack.c.h.b16 %v1199
  %v1299 = vunpack.c.l.b16 %v1200
  %v1300 = vunpack.c.h.b16 %v1200
  %v1301 = vunpack.c.l.b16 %v1201
  %v1302 = vunpack.c.h.b16 %v1201
  %v1303 = vunpack.c.l.b16 %v1202
  %v1304 = vunpack.c.h.b16 %v1202
  %v1305 = vunpack.c.l.b16 %v1203
  %v1306 = vunpack.c.h.b16 %v1203
  %v1307 = vunpack.c.l.b16 %v1204
  %v1308 = vunpack.c.h.b16 %v1204
  %v1309 = vunpack.c.l.b16 %v1205
  %v1310 = vunpack.c.h.b16 %v1205
  %v1311 = vunpack.c.l.b16 %v1206
  %v1312 = vunpack.c.h.b16 %v1206
  %v1313 = vunpack.c.l.b16 %v1207
  %v1314 = vunpack.c.h.b16 %v1207
  %v1315 = vunpack.c.l.b16 %v1208
  %v1316 = vunpack.c.h.b16 %v1208
  %v1317 = vunpack.c.l.b16 %v1209
  %v1318 = vunpack.c.h.b16 %v1209
  %v1319 = vunpack.c.l.b16 %v1210
  %v1320 = vunpack.c.h.b16 %v1210
  %v1321 = vunpack.c.l.b16 %v1211
  %v1322 = vunpack.c.h.b16 %v1211
  %v1323 = vpack.c.b16 %v1263, %v1259
  %v1324 = vpack.c.b16 %v1264, %v1260
  %v1325 = vpack.c.b16 %v1265, %v1261
  %v1326 = vpack.c.b16 %v1266, %v1262
  %v1327 = vpack.c.b16 %v1271, %v1267
  %v1328 = vpack.c.b16 %v1272, %v1268
  %v1329 = vpack.c.b16 %v1273, %v1269
  %v1330 = vpack.c.b16 %v1274, %v1270
  %v1331 = vpack.c.b16 %v1279, %v1275
  %v1332 = vpack.c.b16 %v1280, %v1276
  %v1333 = vpack.c.b16 %v1281, %v1277
  %v1334 = vpack.c.b16 %v1282, %v1278
  %v1335 = vpack.c.b16 %v1287, %v1283
  %v1336 = vpack.c.b16 %v1288, %v1284
  %v1337 = vpack.c.b16 %v1289, %v1285
  %v1338 = vpack.c.b16 %v1290, %v1286
  %v1339 = vpack.c.b16 %v1295, %v1291
  %v1340 = vpack.c.b16 %v1296, %v1292
  %v1341 = vpack.c.b16 %v1297, %v1293
  %v1342 = vpack.c.b16 %v1298, %v1294
  %v1343 = vpack.c.b16 %v1303, %v1299
  %v1344 = vpack.c.b16 %v1304, %v1300
  %v1345 = vpack.c.b16 %v1305, %v1301
  %v1346 = vpack.c.b16 %v1306, %v1302
  %v1347 = vpack.c.b16 %v1311, %v1307
  %v1348 = vpack.c.b16 %v1312, %v1308
  %v1349 = vpack.c.b16 %v1313, %v1309
  %v1350 = vpack.c.b16 %v1314, %v1310
  %v1351 = vpack.c.b16 %v1319, %v1315
  %v1352 = vpack.c.b16 %v1320, %v1316
  %v1353 = vpack.c.b16 %v1321, %v1317
  %v1354 = vpack.c.b16 %v1322, %v1318
  %1387 = vmatprep.subr.bf16.mxu0 %v1324
  %1388 = vmatpush1.bf16.msra.mxu0 %v1323
  %1389 = vmatprep.subr.bf16.mxu0 %v1328
  %1390 = vmatpush1.bf16.msra.mxu0 %v1327
  %1391 = vmatprep.subr.bf16.mxu0 %v1332
  %1392 = vmatpush1.bf16.msra.mxu0 %v1331
  %1393 = vmatprep.subr.bf16.mxu0 %v1336
  %1394 = vmatpush1.bf16.msra.mxu0 %v1335
  %1395 = vmatprep.subr.bf16.mxu0 %v1340
  %1396 = vmatpush1.bf16.msra.mxu0 %v1339
  %1397 = vmatprep.subr.bf16.mxu0 %v1344
  %1398 = vmatpush1.bf16.msra.mxu0 %v1343
  %1399 = vmatprep.subr.bf16.mxu0 %v1348
  %1400 = vmatpush1.bf16.msra.mxu0 %v1347
  %1401 = vmatprep.subr.bf16.mxu0 %v1352
  %1402 = vmatpush1.bf16.msra.mxu0 %v1351
  %1403 = vmatprep.subr.bf16.mxu0 0
  %1404 = vmatpush1.bf16.msra.mxu0 0
  %1405 = vmatprep.subr.bf16.mxu0 0
  %1406 = vmatpush1.bf16.msra.mxu0 0
  %1407 = vmatprep.subr.bf16.mxu0 0
  %1408 = vmatpush1.bf16.msra.mxu0 0
  %1409 = vmatprep.subr.bf16.mxu0 0
  %1410 = vmatpush1.bf16.msra.mxu0 0
  %1411 = vmatprep.subr.bf16.mxu0 0
  %1412 = vmatpush1.bf16.msra.mxu0 0
  %1413 = vmatprep.subr.bf16.mxu0 0
  %1414 = vmatpush1.bf16.msra.mxu0 0
  %1415 = vmatprep.subr.bf16.mxu0 0
  %1416 = vmatpush1.bf16.msra.mxu0 0
  %1417 = vmatprep.subr.bf16.mxu0 0
  %1418 = vmatpush1.bf16.msra.mxu0 0
  %1419 = vmatprep.mubr.bf16.mxu0 0
  %1420 = vmatmul.mubr.bf16.gmra.mrb[0].mxu0 %v1218
  %v1421 = vpop.f32.mrb[0].mxu0
  %v1422 = vadd.f32 0.0, %v1421
  %v1423 = vpop.f32.mrb[0].mxu0
  %v1424 = vadd.f32 0.0, %v1423
  %v1425 = vpop.f32.mrb[0].mxu0
  %v1426 = vadd.f32 0.0, %v1425
  %v1427 = vpop.f32.mrb[0].mxu0
  %v1428 = vadd.f32 0.0, %v1427
  %1429 = vmatprep.mubr.bf16.mxu0 0
  %1430 = vmatmul.mubr.bf16.gmra.mrb[0].mxu0 %v1220
  %v1431 = vpop.f32.mrb[0].mxu0
  %v1432 = vadd.f32 0.0, %v1431
  %v1433 = vpop.f32.mrb[0].mxu0
  %v1434 = vadd.f32 0.0, %v1433
  %v1435 = vpop.f32.mrb[0].mxu0
  %v1436 = vadd.f32 0.0, %v1435
  %v1437 = vpop.f32.mrb[0].mxu0
  %v1438 = vadd.f32 0.0, %v1437
  %1439 = vmatprep.mubr.bf16.mxu0 0
  %1440 = vmatmul.mubr.bf16.gmra.mrb[0].mxu0 %v1222
  %v1441 = vpop.f32.mrb[0].mxu0
  %v1442 = vadd.f32 0.0, %v1441
  %v1443 = vpop.f32.mrb[0].mxu0
  %v1444 = vadd.f32 0.0, %v1443
  %v1445 = vpop.f32.mrb[0].mxu0
  %v1446 = vadd.f32 0.0, %v1445
  %v1447 = vpop.f32.mrb[0].mxu0
  %v1448 = vadd.f32 0.0, %v1447
  %1449 = vmatprep.mubr.bf16.mxu0 0
  %1450 = vmatmul.mubr.bf16.gmra.mrb[0].mxu0 %v1221
  %v1451 = vpop.f32.mrb[0].mxu0
  %v1452 = vadd.f32 0.0, %v1451
  %v1453 = vpop.f32.mrb[0].mxu0
  %v1454 = vadd.f32 0.0, %v1453
  %v1455 = vpop.f32.mrb[0].mxu0
  %v1456 = vpop.f32.mrb[0].mxu0
  %1457 = vdwg.mxu0
  %1458 = vmatprep.subr.bf16.mxu0 %v1326
  %1459 = vmatpush1.bf16.msra.mxu0 %v1325
  %1460 = vmatprep.subr.bf16.mxu0 %v1330
  %1461 = vmatpush1.bf16.msra.mxu0 %v1329
  %1462 = vmatprep.subr.bf16.mxu0 %v1334
  %1463 = vmatpush1.bf16.msra.mxu0 %v1333
  %1464 = vmatprep.subr.bf16.mxu0 %v1338
  %1465 = vmatpush1.bf16.msra.mxu0 %v1337
  %1466 = vmatprep.subr.bf16.mxu0 %v1342
  %1467 = vmatpush1.bf16.msra.mxu0 %v1341
  %1468 = vmatprep.subr.bf16.mxu0 %v1346
  %1469 = vmatpush1.bf16.msra.mxu0 %v1345
  %1470 = vmatprep.subr.bf16.mxu0 %v1350
  %1471 = vmatpush1.bf16.msra.mxu0 %v1349
  %1472 = vmatprep.subr.bf16.mxu0 %v1354
  %1473 = vmatpush1.bf16.msra.mxu0 %v1353
  %1474 = vmatprep.subr.bf16.mxu0 0
  %1475 = vmatpush1.bf16.msra.mxu0 0
  %1476 = vmatprep.subr.bf16.mxu0 0
  %1477 = vmatpush1.bf16.msra.mxu0 0
  %1478 = vmatprep.subr.bf16.mxu0 0
  %1479 = vmatpush1.bf16.msra.mxu0 0
  %1480 = vmatprep.subr.bf16.mxu0 0
  %1481 = vmatpush1.bf16.msra.mxu0 0
  %1482 = vmatprep.subr.bf16.mxu0 0
  %1483 = vmatpush1.bf16.msra.mxu0 0
  %1484 = vmatprep.subr.bf16.mxu0 0
  %1485 = vmatpush1.bf16.msra.mxu0 0
  %1486 = vmatprep.subr.bf16.mxu0 0
  %1487 = vmatpush1.bf16.msra.mxu0 0
  %1488 = vmatprep.subr.bf16.mxu0 0
  %1489 = vmatpush1.bf16.msra.mxu0 0
  %1490 = vmatprep.mubr.bf16.mxu0 0
  %1491 = vmatmul.mubr.bf16.gmra.mrb[0].mxu0 %v1218
  %v1492 = vpop.f32.mrb[0].mxu0
  %v1493 = vadd.f32 0.0, %v1492
  %v1494 = vpop.f32.mrb[0].mxu0
  %v1495 = vadd.f32 0.0, %v1494
  %v1496 = vpop.f32.mrb[0].mxu0
  %v1497 = vadd.f32 0.0, %v1496
  %v1498 = vpop.f32.mrb[0].mxu0
  %v1499 = vadd.f32 0.0, %v1498
  %1500 = vmatprep.mubr.bf16.mxu0 0
  %1501 = vmatmul.mubr.bf16.gmra.mrb[0].mxu0 %v1220
  %v1502 = vpop.f32.mrb[0].mxu0
  %v1503 = vadd.f32 0.0, %v1502
  %v1504 = vpop.f32.mrb[0].mxu0
  %v1505 = vadd.f32 0.0, %v1504
  %v1506 = vpop.f32.mrb[0].mxu0
  %v1507 = vadd.f32 0.0, %v1506
  %v1508 = vpop.f32.mrb[0].mxu0
  %v1509 = vadd.f32 0.0, %v1508
  %1510 = vmatprep.mubr.bf16.mxu0 0
  %1511 = vmatmul.mubr.bf16.gmra.mrb[0].mxu0 %v1222
  %v1512 = vpop.f32.mrb[0].mxu0
  %v1513 = vadd.f32 0.0, %v1512
  %v1514 = vpop.f32.mrb[0].mxu0
  %v1515 = vadd.f32 0.0, %v1514
  %v1516 = vpop.f32.mrb[0].mxu0
  %v1517 = vadd.f32 0.0, %v1516
  %v1518 = vpop.f32.mrb[0].mxu0
  %v1519 = vadd.f32 0.0, %v1518
  %1520 = vmatprep.mubr.bf16.mxu0 0
  %1521 = vmatmul.mubr.bf16.gmra.mrb[0].mxu0 %v1221
  %v1522 = vpop.f32.mrb[0].mxu0
  %v1523 = vadd.f32 0.0, %v1522
  %v1524 = vpop.f32.mrb[0].mxu0
  %v1525 = vadd.f32 0.0, %v1524
  %v1526 = vpop.f32.mrb[0].mxu0
  %v1527 = vpop.f32.mrb[0].mxu0
  %1528 = vdwg.mxu0
  %v1529 = vadd.f32 %v1150, %v1422
  %v1530 = vadd.f32 %v1151, %v1424
  %v1531 = vadd.f32 %v1152, %v1493
  %v1532 = vadd.f32 %v1153, %v1495
  %v1533 = vadd.f32 %v1154, %v1426
  %v1534 = vadd.f32 %v1155, %v1428
  %v1535 = vadd.f32 %v1156, %v1497
  %v1536 = vadd.f32 %v1157, %v1499
  %v1537 = vadd.f32 %v1158, %v1432
  %v1538 = vadd.f32 %v1159, %v1434
  %v1539 = vadd.f32 %v1160, %v1503
  %v1540 = vadd.f32 %v1161, %v1505
  %v1541 = vadd.f32 %v1162, %v1436
  %v1542 = vadd.f32 %v1163, %v1438
  %v1543 = vadd.f32 %v1164, %v1507
  %v1544 = vadd.f32 %v1165, %v1509
  %v1545 = vadd.f32 %v1166, %v1442
  %v1546 = vadd.f32 %v1167, %v1444
  %v1547 = vadd.f32 %v1168, %v1513
  %v1548 = vadd.f32 %v1169, %v1515
  %v1549 = vadd.f32 %v1170, %v1446
  %v1550 = vadd.f32 %v1171, %v1448
  %v1551 = vadd.f32 %v1172, %v1517
  %v1552 = vadd.f32 %v1173, %v1519
  %v1553 = vadd.f32 %v1174, %v1452
  %v1554 = vadd.f32 %v1175, %v1454
  %v1555 = vadd.f32 %v1176, %v1523
  %v1556 = vadd.f32 %v1177, %v1525
  %v1557 = vmax.f32 %v1529, %v1530
  %v1558 = vmax.f32 %v1533, %v1534
  %v1559 = vmax.f32 %v1537, %v1538
  %v1560 = vmax.f32 %v1541, %v1542
  %v1561 = vmax.f32 %v1545, %v1546
  %v1562 = vmax.f32 %v1549, %v1550
  %v1563 = vmax.f32 %v1553, %v1554
  %v1564 = vmax.f32 %v1531, %v1532
  %v1565 = vmax.f32 %v1535, %v1536
  %v1566 = vmax.f32 %v1539, %v1540
  %v1567 = vmax.f32 %v1543, %v1544
  %v1568 = vmax.f32 %v1547, %v1548
  %v1569 = vmax.f32 %v1551, %v1552
  %v1570 = vmax.f32 %v1555, %v1556
  %v1571 = vmax.f32 %v1557, %v1564
  %v1572 = vmax.f32 %v1558, %v1565
  %v1573 = vmax.f32 %v1559, %v1566
  %v1574 = vmax.f32 %v1560, %v1567
  %v1575 = vmax.f32 %v1561, %v1568
  %v1576 = vmax.f32 %v1562, %v1569
  %v1577 = vmax.f32 %v1563, %v1570
  %v1578 = vld [vmem:[%s2] sm:$0x1]
  %v1580 = vlaneseq
  %v1581 = vshrl.u32 %v1580, 7
  %v1582 = vsub.s32 0, %v1581
  %v1583 = vrot.slane %v1578, %v1582
  %v1585 = vadd.f32 %v1571, %v1583
  %v1586 = vadd.f32 %v1572, %v1583
  %v1587 = vadd.f32 %v1573, %v1583
  %v1588 = vadd.f32 %v1574, %v1583
  %v1589 = vadd.f32 %v1575, %v1583
  %v1590 = vadd.f32 %v1576, %v1583
  %v1591 = vadd.f32 %v1577, %v1583
  %v1592 = vmax.f32 %v1585, 0.0
  %v1593 = vmax.f32 %v1586, 0.0
  %v1594 = vmax.f32 %v1587, 0.0
  %v1595 = vmax.f32 %v1588, 0.0
  %v1596 = vmax.f32 %v1589, 0.0
  %v1597 = vmax.f32 %v1590, 0.0
  %v1598 = vmax.f32 %v1591, 0.0
  %v1599 = vpack.c.bf16 %v1593, %v1592
  %v1600 = vpack.c.bf16 %v1595, %v1594
  %v1601 = vpack.c.bf16 %v1597, %v1596
  %v1602 = vpack.c.bf16 %v1598, %v1598
  %v1607 = vunpack.c.l.b16 %v1599
  %v1608 = vunpack.c.h.b16 %v1599
  %v1609 = vunpack.c.l.b16 %v1600
  %v1610 = vunpack.c.h.b16 %v1600
  %v1611 = vunpack.c.l.b16 %v1601
  %v1612 = vunpack.c.h.b16 %v1601
  %v1613 = vunpack.c.l.b16 %v1602
  %v1614 = vpack.c.b16 %v1607, %v1607
  %v1615 = vpack.c.b16 %v1608, %v1608
  %v1616 = vpack.c.b16 %v1609, %v1609
  %v1617 = vpack.c.b16 %v1610, %v1610
  %v1618 = vpack.c.b16 %v1611, %v1611
  %v1619 = vpack.c.b16 %v1612, %v1612
  %v1620 = vpack.c.b16 %v1613, %v1613
  %1628 = vst [vmem:[%s3] sm:$0xf] %v1614
  %1629 = vst [vmem:[%s3 + $0x4] sm:$0xf] %v1615
  %1630 = vst [vmem:[%s3 + $0x8] sm:$0xf] %v1616
  %1631 = vst [vmem:[%s3 + $0xc] sm:$0xf] %v1617
  %1632 = vst [vmem:[%s3 + $0x10] sm:$0xf] %v1618
  %1633 = vst [vmem:[%s3 + $0x14] sm:$0xf] %v1619
  %1634 = vst [vmem:[%s3 + $0x18] sm:$0xf] %v1620
  // Predicated region
  $region14: #{simple_cnn_forward.6} parent=0 // pred_check
    _
  $region15: #{simple_cnn_forward.6} parent=0 // pred_check_branch
    %1636 = sbr.rel (0) target = $region17
  $region16: #{simple_cnn_forward.6} parent=0 // pred_region
    _
  $region17: #{simple_cnn_forward.6} parent=0 // pred_fallthru
    _
  // Predicated region
  $region18: #{simple_cnn_forward.6} parent=0 // pred_check
    _
  $region19: #{simple_cnn_forward.6} parent=0 // pred_check_branch
    %1638 = sbr.rel (0) target = $region21
  $region20: #{simple_cnn_forward.6} parent=0 // pred_region
    _
  $region21: #{simple_cnn_forward.6} parent=0 // pred_fallthru
    _

// kernel: simple_cnn_forward.7
$region0: #{simple_cnn_forward.7}
  #allocation0 [shape = 'u32[]', space=smem, size = 0x4, offset = 0x4, fixed_abs, tag = 'smem constant byte address 0x4 - core index']
  #allocation1 [shape = 'u32[144,128]{1,0:T(1,128)}', space=vmem, size = 0x12000, scoped, tag = 'internal scratch']
  %s0 = inlined_call_operand.vmem [shape: bf16[2,2048], index: 0, kind: input, shape index: {}]
  %s1 = inlined_call_operand.vmem [shape: bf16[2048,128], index: 1, kind: input, shape index: {}]
  %s2 = inlined_call_operand.vmem [shape: f32[1,128], index: 2, kind: input, shape index: {}]
  %s3 = inlined_call_operand.vmem [shape: bf16[128,128], index: 3, kind: input, shape index: {}]
  %s4 = inlined_call_operand.vmem [shape: f32[1,128], index: 4, kind: input, shape index: {}]
  %s5 = inlined_call_operand.hbm [shape: f32[2,128], index: 5, kind: output, shape index: {}]
  %s6 = sld [smem:[#allocation0]]
  $region30: #{simple_cnn_forward.7} parent=0
    _
  %s8 = ssub.s32 1, %s6
  %s9 = scalar_select 0, %s8, %s6
  $region1: #{simple_cnn_forward.7} parent=0
    #allocation2 [shape = 'u8[1024]{0}', space=vmem, size = 0x400, scoped, tag = 'output window, operand 0, single buffered']
    #allocation3 [shape = 's32[1]{0}', space=sflag, size = 0x4, scoped, tag = 'scoped memory for simple_cnn_forward.7']
    %10 = vsyncpa [#allocation3], 0
    // Predicated region
    $region2: #{simple_cnn_forward.7} parent=1 // pred_check
      _
    $region3: #{simple_cnn_forward.7} parent=1 // pred_check_branch
      %12 = sbr.rel (0) target = $region5
    $region4: #{simple_cnn_forward.7} parent=1 // pred_region
      _
    $region5: #{simple_cnn_forward.7} parent=1 // pred_fallthru
      _
    // Predicated region
    $region6: #{simple_cnn_forward.7} parent=1 // pred_check
      _
    $region7: #{simple_cnn_forward.7} parent=1 // pred_check_branch
      %14 = sbr.rel (0) target = $region9
    $region8: #{simple_cnn_forward.7} parent=1 // pred_region
      _
    $region9: #{simple_cnn_forward.7} parent=1 // pred_fallthru
      _
    // Predicated region
    $region10: #{simple_cnn_forward.7} parent=1 // pred_check
      _
    $region11: #{simple_cnn_forward.7} parent=1 // pred_check_branch
      %16 = sbr.rel (0) target = $region13
    $region12: #{simple_cnn_forward.7} parent=1 // pred_region
      _
    $region13: #{simple_cnn_forward.7} parent=1 // pred_fallthru
      _
    // Predicated region
    $region14: #{simple_cnn_forward.7} parent=1 // pred_check
      _
    $region15: #{simple_cnn_forward.7} parent=1 // pred_check_branch
      %18 = sbr.rel (0) target = $region17
    $region16: #{simple_cnn_forward.7} parent=1 // pred_region
      _
    $region17: #{simple_cnn_forward.7} parent=1 // pred_fallthru
      _
    // Predicated region
    $region18: #{simple_cnn_forward.7} parent=1 // pred_check
      _
    $region19: #{simple_cnn_forward.7} parent=1 // pred_check_branch
      %20 = sbr.rel (0) target = $region21
    $region20: #{simple_cnn_forward.7} parent=1 // pred_region
      _
    $region21: #{simple_cnn_forward.7} parent=1 // pred_fallthru
      _
    %v22 = vld [vmem:[%s0] sm:$0xff]
    %v23 = vld [vmem:[%s0 + $0x8] sm:$0xff]
    %v24 = vld [vmem:[%s1] sm:$0xf]
    %v25 = vld [vmem:[%s1 + $0x4] sm:$0xf]
    %v26 = vld [vmem:[%s1 + $0x8] sm:$0xf]
    %v27 = vld [vmem:[%s1 + $0xc] sm:$0xf]
    %v28 = vld [vmem:[%s1 + $0x10] sm:$0xf]
    %v29 = vld [vmem:[%s1 + $0x14] sm:$0xf]
    %v30 = vld [vmem:[%s1 + $0x18] sm:$0xf]
    %v31 = vld [vmem:[%s1 + $0x1c] sm:$0xf]
    %v32 = vld [vmem:[%s1 + $0x20] sm:$0xf]
    %v33 = vld [vmem:[%s1 + $0x24] sm:$0xf]
    %v34 = vld [vmem:[%s1 + $0x28] sm:$0xf]
    %v35 = vld [vmem:[%s1 + $0x2c] sm:$0xf]
    %v36 = vld [vmem:[%s1 + $0x30] sm:$0xf]
    %v37 = vld [vmem:[%s1 + $0x34] sm:$0xf]
    %v38 = vld [vmem:[%s1 + $0x38] sm:$0xf]
    %v39 = vld [vmem:[%s1 + $0x3c] sm:$0xf]
    %v40 = vld [vmem:[%s1 + $0x40] sm:$0xf]
    %v41 = vld [vmem:[%s1 + $0x44] sm:$0xf]
    %v42 = vld [vmem:[%s1 + $0x48] sm:$0xf]
    %v43 = vld [vmem:[%s1 + $0x4c] sm:$0xf]
    %v44 = vld [vmem:[%s1 + $0x50] sm:$0xf]
    %v45 = vld [vmem:[%s1 + $0x54] sm:$0xf]
    %v46 = vld [vmem:[%s1 + $0x58] sm:$0xf]
    %v47 = vld [vmem:[%s1 + $0x5c] sm:$0xf]
    %v48 = vld [vmem:[%s1 + $0x60] sm:$0xf]
    %v49 = vld [vmem:[%s1 + $0x64] sm:$0xf]
    %v50 = vld [vmem:[%s1 + $0x68] sm:$0xf]
    %v51 = vld [vmem:[%s1 + $0x6c] sm:$0xf]
    %v52 = vld [vmem:[%s1 + $0x70] sm:$0xf]
    %v53 = vld [vmem:[%s1 + $0x74] sm:$0xf]
    %v54 = vld [vmem:[%s1 + $0x78] sm:$0xf]
    %v55 = vld [vmem:[%s1 + $0x7c] sm:$0xf]
    %v56 = vld [vmem:[%s1 + $0x80] sm:$0xf]
    %v57 = vld [vmem:[%s1 + $0x84] sm:$0xf]
    %v58 = vld [vmem:[%s1 + $0x88] sm:$0xf]
    %v59 = vld [vmem:[%s1 + $0x8c] sm:$0xf]
    %v60 = vld [vmem:[%s1 + $0x90] sm:$0xf]
    %v61 = vld [vmem:[%s1 + $0x94] sm:$0xf]
    %v62 = vld [vmem:[%s1 + $0x98] sm:$0xf]
    %v63 = vld [vmem:[%s1 + $0x9c] sm:$0xf]
    %v64 = vld [vmem:[%s1 + $0xa0] sm:$0xf]
    %v65 = vld [vmem:[%s1 + $0xa4] sm:$0xf]
    %v66 = vld [vmem:[%s1 + $0xa8] sm:$0xf]
    %v67 = vld [vmem:[%s1 + $0xac] sm:$0xf]
    %v68 = vld [vmem:[%s1 + $0xb0] sm:$0xf]
    %v69 = vld [vmem:[%s1 + $0xb4] sm:$0xf]
    %v70 = vld [vmem:[%s1 + $0xb8] sm:$0xf]
    %v71 = vld [vmem:[%s1 + $0xbc] sm:$0xf]
    %v72 = vld [vmem:[%s1 + $0xc0] sm:$0xf]
    %v73 = vld [vmem:[%s1 + $0xc4] sm:$0xf]
    %v74 = vld [vmem:[%s1 + $0xc8] sm:$0xf]
    %v75 = vld [vmem:[%s1 + $0xcc] sm:$0xf]
    %v76 = vld [vmem:[%s1 + $0xd0] sm:$0xf]
    %v77 = vld [vmem:[%s1 + $0xd4] sm:$0xf]
    %v78 = vld [vmem:[%s1 + $0xd8] sm:$0xf]
    %v79 = vld [vmem:[%s1 + $0xdc] sm:$0xf]
    %v80 = vld [vmem:[%s1 + $0xe0] sm:$0xf]
    %v81 = vld [vmem:[%s1 + $0xe4] sm:$0xf]
    %v82 = vld [vmem:[%s1 + $0xe8] sm:$0xf]
    %v83 = vld [vmem:[%s1 + $0xec] sm:$0xf]
    %v84 = vld [vmem:[%s1 + $0xf0] sm:$0xf]
    %v85 = vld [vmem:[%s1 + $0xf4] sm:$0xf]
    %v86 = vld [vmem:[%s1 + $0xf8] sm:$0xf]
    %v87 = vld [vmem:[%s1 + $0xfc] sm:$0xf]
    %v88 = vld [vmem:[%s1 + $0x100] sm:$0xf]
    %v89 = vld [vmem:[%s1 + $0x104] sm:$0xf]
    %v90 = vld [vmem:[%s1 + $0x108] sm:$0xf]
    %v91 = vld [vmem:[%s1 + $0x10c] sm:$0xf]
    %v92 = vld [vmem:[%s1 + $0x110] sm:$0xf]
    %v93 = vld [vmem:[%s1 + $0x114] sm:$0xf]
    %v94 = vld [vmem:[%s1 + $0x118] sm:$0xf]
    %v95 = vld [vmem:[%s1 + $0x11c] sm:$0xf]
    %v96 = vld [vmem:[%s1 + $0x120] sm:$0xf]
    %v97 = vld [vmem:[%s1 + $0x124] sm:$0xf]
    %v98 = vld [vmem:[%s1 + $0x128] sm:$0xf]
    %v99 = vld [vmem:[%s1 + $0x12c] sm:$0xf]
    %v100 = vld [vmem:[%s1 + $0x130] sm:$0xf]
    %v101 = vld [vmem:[%s1 + $0x134] sm:$0xf]
    %v102 = vld [vmem:[%s1 + $0x138] sm:$0xf]
    %v103 = vld [vmem:[%s1 + $0x13c] sm:$0xf]
    %v104 = vld [vmem:[%s1 + $0x140] sm:$0xf]
    %v105 = vld [vmem:[%s1 + $0x144] sm:$0xf]
    %v106 = vld [vmem:[%s1 + $0x148] sm:$0xf]
    %v107 = vld [vmem:[%s1 + $0x14c] sm:$0xf]
    %v108 = vld [vmem:[%s1 + $0x150] sm:$0xf]
    %v109 = vld [vmem:[%s1 + $0x154] sm:$0xf]
    %v110 = vld [vmem:[%s1 + $0x158] sm:$0xf]
    %v111 = vld [vmem:[%s1 + $0x15c] sm:$0xf]
    %v112 = vld [vmem:[%s1 + $0x160] sm:$0xf]
    %v113 = vld [vmem:[%s1 + $0x164] sm:$0xf]
    %v114 = vld [vmem:[%s1 + $0x168] sm:$0xf]
    %v115 = vld [vmem:[%s1 + $0x16c] sm:$0xf]
    %v116 = vld [vmem:[%s1 + $0x170] sm:$0xf]
    %v117 = vld [vmem:[%s1 + $0x174] sm:$0xf]
    %v118 = vld [vmem:[%s1 + $0x178] sm:$0xf]
    %v119 = vld [vmem:[%s1 + $0x17c] sm:$0xf]
    %v120 = vld [vmem:[%s1 + $0x180] sm:$0xf]
    %v121 = vld [vmem:[%s1 + $0x184] sm:$0xf]
    %v122 = vld [vmem:[%s1 + $0x188] sm:$0xf]
    %v123 = vld [vmem:[%s1 + $0x18c] sm:$0xf]
    %v124 = vld [vmem:[%s1 + $0x190] sm:$0xf]
    %v125 = vld [vmem:[%s1 + $0x194] sm:$0xf]
    %v126 = vld [vmem:[%s1 + $0x198] sm:$0xf]
    %v127 = vld [vmem:[%s1 + $0x19c] sm:$0xf]
    %v128 = vld [vmem:[%s1 + $0x1a0] sm:$0xf]
    %v129 = vld [vmem:[%s1 + $0x1a4] sm:$0xf]
    %v130 = vld [vmem:[%s1 + $0x1a8] sm:$0xf]
    %v131 = vld [vmem:[%s1 + $0x1ac] sm:$0xf]
    %v132 = vld [vmem:[%s1 + $0x1b0] sm:$0xf]
    %v133 = vld [vmem:[%s1 + $0x1b4] sm:$0xf]
    %v134 = vld [vmem:[%s1 + $0x1b8] sm:$0xf]
    %v135 = vld [vmem:[%s1 + $0x1bc] sm:$0xf]
    %v136 = vld [vmem:[%s1 + $0x1c0] sm:$0xf]
    %v137 = vld [vmem:[%s1 + $0x1c4] sm:$0xf]
    %v138 = vld [vmem:[%s1 + $0x1c8] sm:$0xf]
    %v139 = vld [vmem:[%s1 + $0x1cc] sm:$0xf]
    %v140 = vld [vmem:[%s1 + $0x1d0] sm:$0xf]
    %v141 = vld [vmem:[%s1 + $0x1d4] sm:$0xf]
    %v142 = vld [vmem:[%s1 + $0x1d8] sm:$0xf]
    %v143 = vld [vmem:[%s1 + $0x1dc] sm:$0xf]
    %v144 = vld [vmem:[%s1 + $0x1e0] sm:$0xf]
    %v145 = vld [vmem:[%s1 + $0x1e4] sm:$0xf]
    %v146 = vld [vmem:[%s1 + $0x1e8] sm:$0xf]
    %v147 = vld [vmem:[%s1 + $0x1ec] sm:$0xf]
    %v148 = vld [vmem:[%s1 + $0x1f0] sm:$0xf]
    %v149 = vld [vmem:[%s1 + $0x1f4] sm:$0xf]
    %v150 = vld [vmem:[%s1 + $0x1f8] sm:$0xf]
    %v151 = vld [vmem:[%s1 + $0x1fc] sm:$0xf]
    %v152 = vld [vmem:[%s1 + $0x200] sm:$0xf]
    %v153 = vld [vmem:[%s1 + $0x204] sm:$0xf]
    %v154 = vld [vmem:[%s1 + $0x208] sm:$0xf]
    %v155 = vld [vmem:[%s1 + $0x20c] sm:$0xf]
    %v156 = vld [vmem:[%s1 + $0x210] sm:$0xf]
    %v157 = vld [vmem:[%s1 + $0x214] sm:$0xf]
    %v158 = vld [vmem:[%s1 + $0x218] sm:$0xf]
    %v159 = vld [vmem:[%s1 + $0x21c] sm:$0xf]
    %v160 = vld [vmem:[%s1 + $0x220] sm:$0xf]
    %v161 = vld [vmem:[%s1 + $0x224] sm:$0xf]
    %v162 = vld [vmem:[%s1 + $0x228] sm:$0xf]
    %v163 = vld [vmem:[%s1 + $0x22c] sm:$0xf]
    %v164 = vld [vmem:[%s1 + $0x230] sm:$0xf]
    %v165 = vld [vmem:[%s1 + $0x234] sm:$0xf]
    %v166 = vld [vmem:[%s1 + $0x238] sm:$0xf]
    %v167 = vld [vmem:[%s1 + $0x23c] sm:$0xf]
    %v168 = vld [vmem:[%s1 + $0x240] sm:$0xf]
    %v169 = vld [vmem:[%s1 + $0x244] sm:$0xf]
    %v170 = vld [vmem:[%s1 + $0x248] sm:$0xf]
    %v171 = vld [vmem:[%s1 + $0x24c] sm:$0xf]
    %v172 = vld [vmem:[%s1 + $0x250] sm:$0xf]
    %v173 = vld [vmem:[%s1 + $0x254] sm:$0xf]
    %v174 = vld [vmem:[%s1 + $0x258] sm:$0xf]
    %v175 = vld [vmem:[%s1 + $0x25c] sm:$0xf]
    %v176 = vld [vmem:[%s1 + $0x260] sm:$0xf]
    %v177 = vld [vmem:[%s1 + $0x264] sm:$0xf]
    %v178 = vld [vmem:[%s1 + $0x268] sm:$0xf]
    %v179 = vld [vmem:[%s1 + $0x26c] sm:$0xf]
    %v180 = vld [vmem:[%s1 + $0x270] sm:$0xf]
    %v181 = vld [vmem:[%s1 + $0x274] sm:$0xf]
    %v182 = vld [vmem:[%s1 + $0x278] sm:$0xf]
    %v183 = vld [vmem:[%s1 + $0x27c] sm:$0xf]
    %v184 = vld [vmem:[%s1 + $0x280] sm:$0xf]
    %v185 = vld [vmem:[%s1 + $0x284] sm:$0xf]
    %v186 = vld [vmem:[%s1 + $0x288] sm:$0xf]
    %v187 = vld [vmem:[%s1 + $0x28c] sm:$0xf]
    %v188 = vld [vmem:[%s1 + $0x290] sm:$0xf]
    %v189 = vld [vmem:[%s1 + $0x294] sm:$0xf]
    %v190 = vld [vmem:[%s1 + $0x298] sm:$0xf]
    %v191 = vld [vmem:[%s1 + $0x29c] sm:$0xf]
    %v192 = vld [vmem:[%s1 + $0x2a0] sm:$0xf]
    %v193 = vld [vmem:[%s1 + $0x2a4] sm:$0xf]
    %v194 = vld [vmem:[%s1 + $0x2a8] sm:$0xf]
    %v195 = vld [vmem:[%s1 + $0x2ac] sm:$0xf]
    %v196 = vld [vmem:[%s1 + $0x2b0] sm:$0xf]
    %v197 = vld [vmem:[%s1 + $0x2b4] sm:$0xf]
    %v198 = vld [vmem:[%s1 + $0x2b8] sm:$0xf]
    %v199 = vld [vmem:[%s1 + $0x2bc] sm:$0xf]
    %v200 = vld [vmem:[%s1 + $0x2c0] sm:$0xf]
    %v201 = vld [vmem:[%s1 + $0x2c4] sm:$0xf]
    %v202 = vld [vmem:[%s1 + $0x2c8] sm:$0xf]
    %v203 = vld [vmem:[%s1 + $0x2cc] sm:$0xf]
    %v204 = vld [vmem:[%s1 + $0x2d0] sm:$0xf]
    %v205 = vld [vmem:[%s1 + $0x2d4] sm:$0xf]
    %v206 = vld [vmem:[%s1 + $0x2d8] sm:$0xf]
    %v207 = vld [vmem:[%s1 + $0x2dc] sm:$0xf]
    %v208 = vld [vmem:[%s1 + $0x2e0] sm:$0xf]
    %v209 = vld [vmem:[%s1 + $0x2e4] sm:$0xf]
    %v210 = vld [vmem:[%s1 + $0x2e8] sm:$0xf]
    %v211 = vld [vmem:[%s1 + $0x2ec] sm:$0xf]
    %v212 = vld [vmem:[%s1 + $0x2f0] sm:$0xf]
    %v213 = vld [vmem:[%s1 + $0x2f4] sm:$0xf]
    %v214 = vld [vmem:[%s1 + $0x2f8] sm:$0xf]
    %v215 = vld [vmem:[%s1 + $0x2fc] sm:$0xf]
    %v216 = vld [vmem:[%s1 + $0x300] sm:$0xf]
    %v217 = vld [vmem:[%s1 + $0x304] sm:$0xf]
    %v218 = vld [vmem:[%s1 + $0x308] sm:$0xf]
    %v219 = vld [vmem:[%s1 + $0x30c] sm:$0xf]
    %v220 = vld [vmem:[%s1 + $0x310] sm:$0xf]
    %v221 = vld [vmem:[%s1 + $0x314] sm:$0xf]
    %v222 = vld [vmem:[%s1 + $0x318] sm:$0xf]
    %v223 = vld [vmem:[%s1 + $0x31c] sm:$0xf]
    %v224 = vld [vmem:[%s1 + $0x320] sm:$0xf]
    %v225 = vld [vmem:[%s1 + $0x324] sm:$0xf]
    %v226 = vld [vmem:[%s1 + $0x328] sm:$0xf]
    %v227 = vld [vmem:[%s1 + $0x32c] sm:$0xf]
    %v228 = vld [vmem:[%s1 + $0x330] sm:$0xf]
    %v229 = vld [vmem:[%s1 + $0x334] sm:$0xf]
    %v230 = vld [vmem:[%s1 + $0x338] sm:$0xf]
    %v231 = vld [vmem:[%s1 + $0x33c] sm:$0xf]
    %v232 = vld [vmem:[%s1 + $0x340] sm:$0xf]
    %v233 = vld [vmem:[%s1 + $0x344] sm:$0xf]
    %v234 = vld [vmem:[%s1 + $0x348] sm:$0xf]
    %v235 = vld [vmem:[%s1 + $0x34c] sm:$0xf]
    %v236 = vld [vmem:[%s1 + $0x350] sm:$0xf]
    %v237 = vld [vmem:[%s1 + $0x354] sm:$0xf]
    %v238 = vld [vmem:[%s1 + $0x358] sm:$0xf]
    %v239 = vld [vmem:[%s1 + $0x35c] sm:$0xf]
    %v240 = vld [vmem:[%s1 + $0x360] sm:$0xf]
    %v241 = vld [vmem:[%s1 + $0x364] sm:$0xf]
    %v242 = vld [vmem:[%s1 + $0x368] sm:$0xf]
    %v243 = vld [vmem:[%s1 + $0x36c] sm:$0xf]
    %v244 = vld [vmem:[%s1 + $0x370] sm:$0xf]
    %v245 = vld [vmem:[%s1 + $0x374] sm:$0xf]
    %v246 = vld [vmem:[%s1 + $0x378] sm:$0xf]
    %v247 = vld [vmem:[%s1 + $0x37c] sm:$0xf]
    %v248 = vld [vmem:[%s1 + $0x380] sm:$0xf]
    %v249 = vld [vmem:[%s1 + $0x384] sm:$0xf]
    %v250 = vld [vmem:[%s1 + $0x388] sm:$0xf]
    %v251 = vld [vmem:[%s1 + $0x38c] sm:$0xf]
    %v252 = vld [vmem:[%s1 + $0x390] sm:$0xf]
    %v253 = vld [vmem:[%s1 + $0x394] sm:$0xf]
    %v254 = vld [vmem:[%s1 + $0x398] sm:$0xf]
    %v255 = vld [vmem:[%s1 + $0x39c] sm:$0xf]
    %v256 = vld [vmem:[%s1 + $0x3a0] sm:$0xf]
    %v257 = vld [vmem:[%s1 + $0x3a4] sm:$0xf]
    %v258 = vld [vmem:[%s1 + $0x3a8] sm:$0xf]
    %v259 = vld [vmem:[%s1 + $0x3ac] sm:$0xf]
    %v260 = vld [vmem:[%s1 + $0x3b0] sm:$0xf]
    %v261 = vld [vmem:[%s1 + $0x3b4] sm:$0xf]
    %v262 = vld [vmem:[%s1 + $0x3b8] sm:$0xf]
    %v263 = vld [vmem:[%s1 + $0x3bc] sm:$0xf]
    %v264 = vld [vmem:[%s1 + $0x3c0] sm:$0xf]
    %v265 = vld [vmem:[%s1 + $0x3c4] sm:$0xf]
    %v266 = vld [vmem:[%s1 + $0x3c8] sm:$0xf]
    %v267 = vld [vmem:[%s1 + $0x3cc] sm:$0xf]
    %v268 = vld [vmem:[%s1 + $0x3d0] sm:$0xf]
    %v269 = vld [vmem:[%s1 + $0x3d4] sm:$0xf]
    %v270 = vld [vmem:[%s1 + $0x3d8] sm:$0xf]
    %v271 = vld [vmem:[%s1 + $0x3dc] sm:$0xf]
    %v272 = vld [vmem:[%s1 + $0x3e0] sm:$0xf]
    %v273 = vld [vmem:[%s1 + $0x3e4] sm:$0xf]
    %v274 = vld [vmem:[%s1 + $0x3e8] sm:$0xf]
    %v275 = vld [vmem:[%s1 + $0x3ec] sm:$0xf]
    %v276 = vld [vmem:[%s1 + $0x3f0] sm:$0xf]
    %v277 = vld [vmem:[%s1 + $0x3f4] sm:$0xf]
    %v278 = vld [vmem:[%s1 + $0x3f8] sm:$0xf]
    %v279 = vld [vmem:[%s1 + $0x3fc] sm:$0xf]
    %v280 = vld [vmem:[%s2] sm:$0x1]
    %v282 = vlaneseq
    %v283 = vshrl.u32 %v282, 7
    %v284 = vsub.s32 0, %v283
    %v285 = vrot.slane %v280, %v284
    %v289 = vcombine.high %v22, %v22
    %v291 = vunpack.c.l.s4 1966171168
    %v292 = vunpack.c.0.s8 %v291
    %v293 = vlaneseq
    %v294 = vshrl.u32 %v293, 7
    %v295 = vsub.s32 %v292, %v294
    %v296 = vrot.slane %v22, %v295
    %v298 = vunpack.c.l.s4 1966171168
    %v299 = vunpack.c.0.s8 %v298
    %v300 = vlaneseq
    %v301 = vshrl.u32 %v300, 7
    %v302 = vsub.s32 %v299, %v301
    %v303 = vrot.slane %v289, %v302
    %v304 = vcombine.high %v296, %v296
    %v305 = vcombine.high %v303, %v303
    %v307 = vunpack.c.l.s4 1966171168
    %v308 = vunpack.c.0.s8 %v307
    %v309 = vlaneseq
    %v310 = vshrl.u32 %v309, 7
    %v311 = vsub.s32 %v308, %v310
    %v312 = vrot.slane %v296, %v311
    %v314 = vunpack.c.l.s4 1966171168
    %v315 = vunpack.c.0.s8 %v314
    %v316 = vlaneseq
    %v317 = vshrl.u32 %v316, 7
    %v318 = vsub.s32 %v315, %v317
    %v319 = vrot.slane %v303, %v318
    %v321 = vunpack.c.l.s4 1966171168
    %v322 = vunpack.c.0.s8 %v321
    %v323 = vlaneseq
    %v324 = vshrl.u32 %v323, 7
    %v325 = vsub.s32 %v322, %v324
    %v326 = vrot.slane %v304, %v325
    %v328 = vunpack.c.l.s4 1966171168
    %v329 = vunpack.c.0.s8 %v328
    %v330 = vlaneseq
    %v331 = vshrl.u32 %v330, 7
    %v332 = vsub.s32 %v329, %v331
    %v333 = vrot.slane %v305, %v332
    %v334 = vcombine.high %v312, %v312
    %v335 = vcombine.high %v319, %v319
    %v336 = vcombine.high %v326, %v326
    %v337 = vcombine.high %v333, %v333
    %v338 = vcombine.high %v23, %v23
    %v340 = vunpack.c.l.s4 1966171168
    %v341 = vunpack.c.0.s8 %v340
    %v342 = vlaneseq
    %v343 = vshrl.u32 %v342, 7
    %v344 = vsub.s32 %v341, %v343
    %v345 = vrot.slane %v23, %v344
    %v347 = vunpack.c.l.s4 1966171168
    %v348 = vunpack.c.0.s8 %v347
    %v349 = vlaneseq
    %v350 = vshrl.u32 %v349, 7
    %v351 = vsub.s32 %v348, %v350
    %v352 = vrot.slane %v338, %v351
    %v353 = vcombine.high %v345, %v345
    %v354 = vcombine.high %v352, %v352
    %v356 = vunpack.c.l.s4 1966171168
    %v357 = vunpack.c.0.s8 %v356
    %v358 = vlaneseq
    %v359 = vshrl.u32 %v358, 7
    %v360 = vsub.s32 %v357, %v359
    %v361 = vrot.slane %v345, %v360
    %v363 = vunpack.c.l.s4 1966171168
    %v364 = vunpack.c.0.s8 %v363
    %v365 = vlaneseq
    %v366 = vshrl.u32 %v365, 7
    %v367 = vsub.s32 %v364, %v366
    %v368 = vrot.slane %v352, %v367
    %v370 = vunpack.c.l.s4 1966171168
    %v371 = vunpack.c.0.s8 %v370
    %v372 = vlaneseq
    %v373 = vshrl.u32 %v372, 7
    %v374 = vsub.s32 %v371, %v373
    %v375 = vrot.slane %v353, %v374
    %v377 = vunpack.c.l.s4 1966171168
    %v378 = vunpack.c.0.s8 %v377
    %v379 = vlaneseq
    %v380 = vshrl.u32 %v379, 7
    %v381 = vsub.s32 %v378, %v380
    %v382 = vrot.slane %v354, %v381
    %v383 = vcombine.high %v361, %v361
    %v384 = vcombine.high %v368, %v368
    %v385 = vcombine.high %v375, %v375
    %v386 = vcombine.high %v382, %v382
    %v659 = vunpack.c.l.b16 %v24
    %v660 = vunpack.c.l.b16 %v25
    %v661 = vunpack.c.l.b16 %v26
    %v662 = vunpack.c.l.b16 %v27
    %v663 = vunpack.c.l.b16 %v28
    %v664 = vunpack.c.l.b16 %v29
    %v665 = vunpack.c.l.b16 %v30
    %v666 = vunpack.c.l.b16 %v31
    %v667 = vunpack.c.l.b16 %v32
    %v668 = vunpack.c.l.b16 %v33
    %v669 = vunpack.c.l.b16 %v34
    %v670 = vunpack.c.l.b16 %v35
    %v671 = vunpack.c.l.b16 %v36
    %v672 = vunpack.c.l.b16 %v37
    %v673 = vunpack.c.l.b16 %v38
    %v674 = vunpack.c.l.b16 %v39
    %v675 = vunpack.c.l.b16 %v40
    %v676 = vunpack.c.l.b16 %v41
    %v677 = vunpack.c.l.b16 %v42
    %v678 = vunpack.c.l.b16 %v43
    %v679 = vunpack.c.l.b16 %v44
    %v680 = vunpack.c.l.b16 %v45
    %v681 = vunpack.c.l.b16 %v46
    %v682 = vunpack.c.l.b16 %v47
    %v683 = vunpack.c.l.b16 %v48
    %v684 = vunpack.c.l.b16 %v49
    %v685 = vunpack.c.l.b16 %v50
    %v686 = vunpack.c.l.b16 %v51
    %v687 = vunpack.c.l.b16 %v52
    %v688 = vunpack.c.l.b16 %v53
    %v689 = vunpack.c.l.b16 %v54
    %v690 = vunpack.c.l.b16 %v55
    %v691 = vunpack.c.l.b16 %v56
    %v692 = vunpack.c.l.b16 %v57
    %v693 = vunpack.c.l.b16 %v58
    %v694 = vunpack.c.l.b16 %v59
    %v695 = vunpack.c.l.b16 %v60
    %v696 = vunpack.c.l.b16 %v61
    %v697 = vunpack.c.l.b16 %v62
    %v698 = vunpack.c.l.b16 %v63
    %v699 = vunpack.c.l.b16 %v64
    %v700 = vunpack.c.l.b16 %v65
    %v701 = vunpack.c.l.b16 %v66
    %v702 = vunpack.c.l.b16 %v67
    %v703 = vunpack.c.l.b16 %v68
    %v704 = vunpack.c.l.b16 %v69
    %v705 = vunpack.c.l.b16 %v70
    %v706 = vunpack.c.l.b16 %v71
    %v707 = vunpack.c.l.b16 %v72
    %v708 = vunpack.c.l.b16 %v73
    %v709 = vunpack.c.l.b16 %v74
    %v710 = vunpack.c.l.b16 %v75
    %v711 = vunpack.c.l.b16 %v76
    %v712 = vunpack.c.l.b16 %v77
    %v713 = vunpack.c.l.b16 %v78
    %v714 = vunpack.c.l.b16 %v79
    %v715 = vunpack.c.l.b16 %v80
    %v716 = vunpack.c.l.b16 %v81
    %v717 = vunpack.c.l.b16 %v82
    %v718 = vunpack.c.l.b16 %v83
    %v719 = vunpack.c.l.b16 %v84
    %v720 = vunpack.c.l.b16 %v85
    %v721 = vunpack.c.l.b16 %v86
    %v722 = vunpack.c.l.b16 %v87
    %v723 = vunpack.c.l.b16 %v88
    %v724 = vunpack.c.l.b16 %v89
    %v725 = vunpack.c.l.b16 %v90
    %v726 = vunpack.c.l.b16 %v91
    %v727 = vunpack.c.l.b16 %v92
    %v728 = vunpack.c.l.b16 %v93
    %v729 = vunpack.c.l.b16 %v94
    %v730 = vunpack.c.l.b16 %v95
    %v731 = vunpack.c.l.b16 %v96
    %v732 = vunpack.c.l.b16 %v97
    %v733 = vunpack.c.l.b16 %v98
    %v734 = vunpack.c.l.b16 %v99
    %v735 = vunpack.c.l.b16 %v100
    %v736 = vunpack.c.l.b16 %v101
    %v737 = vunpack.c.l.b16 %v102
    %v738 = vunpack.c.l.b16 %v103
    %v739 = vunpack.c.l.b16 %v104
    %v740 = vunpack.c.l.b16 %v105
    %v741 = vunpack.c.l.b16 %v106
    %v742 = vunpack.c.l.b16 %v107
    %v743 = vunpack.c.l.b16 %v108
    %v744 = vunpack.c.l.b16 %v109
    %v745 = vunpack.c.l.b16 %v110
    %v746 = vunpack.c.l.b16 %v111
    %v747 = vunpack.c.l.b16 %v112
    %v748 = vunpack.c.l.b16 %v113
    %v749 = vunpack.c.l.b16 %v114
    %v750 = vunpack.c.l.b16 %v115
    %v751 = vunpack.c.l.b16 %v116
    %v752 = vunpack.c.l.b16 %v117
    %v753 = vunpack.c.l.b16 %v118
    %v754 = vunpack.c.l.b16 %v119
    %v755 = vunpack.c.l.b16 %v120
    %v756 = vunpack.c.l.b16 %v121
    %v757 = vunpack.c.l.b16 %v122
    %v758 = vunpack.c.l.b16 %v123
    %v759 = vunpack.c.l.b16 %v124
    %v760 = vunpack.c.l.b16 %v125
    %v761 = vunpack.c.l.b16 %v126
    %v762 = vunpack.c.l.b16 %v127
    %v763 = vunpack.c.l.b16 %v128
    %v764 = vunpack.c.l.b16 %v129
    %v765 = vunpack.c.l.b16 %v130
    %v766 = vunpack.c.l.b16 %v131
    %v767 = vunpack.c.l.b16 %v132
    %v768 = vunpack.c.l.b16 %v133
    %v769 = vunpack.c.l.b16 %v134
    %v770 = vunpack.c.l.b16 %v135
    %v771 = vunpack.c.l.b16 %v136
    %v772 = vunpack.c.l.b16 %v137
    %v773 = vunpack.c.l.b16 %v138
    %v774 = vunpack.c.l.b16 %v139
    %v775 = vunpack.c.l.b16 %v140
    %v776 = vunpack.c.l.b16 %v141
    %v777 = vunpack.c.l.b16 %v142
    %v778 = vunpack.c.l.b16 %v143
    %v779 = vunpack.c.l.b16 %v144
    %v780 = vunpack.c.l.b16 %v145
    %v781 = vunpack.c.l.b16 %v146
    %v782 = vunpack.c.l.b16 %v147
    %v783 = vunpack.c.l.b16 %v148
    %v784 = vunpack.c.l.b16 %v149
    %v785 = vunpack.c.l.b16 %v150
    %v786 = vunpack.c.l.b16 %v151
    %v787 = vunpack.c.l.b16 %v152
    %v788 = vunpack.c.l.b16 %v153
    %v789 = vunpack.c.l.b16 %v154
    %v790 = vunpack.c.l.b16 %v155
    %v791 = vunpack.c.l.b16 %v156
    %v792 = vunpack.c.l.b16 %v157
    %v793 = vunpack.c.l.b16 %v158
    %v794 = vunpack.c.l.b16 %v159
    %v795 = vunpack.c.l.b16 %v160
    %v796 = vunpack.c.l.b16 %v161
    %v797 = vunpack.c.l.b16 %v162
    %v798 = vunpack.c.l.b16 %v163
    %v799 = vunpack.c.l.b16 %v164
    %v800 = vunpack.c.l.b16 %v165
    %v801 = vunpack.c.l.b16 %v166
    %v802 = vunpack.c.l.b16 %v167
    %v803 = vunpack.c.l.b16 %v168
    %v804 = vunpack.c.l.b16 %v169
    %v805 = vunpack.c.l.b16 %v170
    %v806 = vunpack.c.l.b16 %v171
    %v807 = vunpack.c.l.b16 %v172
    %v808 = vunpack.c.l.b16 %v173
    %v809 = vunpack.c.l.b16 %v174
    %v810 = vunpack.c.l.b16 %v175
    %v811 = vunpack.c.l.b16 %v176
    %v812 = vunpack.c.l.b16 %v177
    %v813 = vunpack.c.l.b16 %v178
    %v814 = vunpack.c.l.b16 %v179
    %v815 = vunpack.c.l.b16 %v180
    %v816 = vunpack.c.l.b16 %v181
    %v817 = vunpack.c.l.b16 %v182
    %v818 = vunpack.c.l.b16 %v183
    %v819 = vunpack.c.l.b16 %v184
    %v820 = vunpack.c.l.b16 %v185
    %v821 = vunpack.c.l.b16 %v186
    %v822 = vunpack.c.l.b16 %v187
    %v823 = vunpack.c.l.b16 %v188
    %v824 = vunpack.c.l.b16 %v189
    %v825 = vunpack.c.l.b16 %v190
    %v826 = vunpack.c.l.b16 %v191
    %v827 = vunpack.c.l.b16 %v192
    %v828 = vunpack.c.l.b16 %v193
    %v829 = vunpack.c.l.b16 %v194
    %v830 = vunpack.c.l.b16 %v195
    %v831 = vunpack.c.l.b16 %v196
    %v832 = vunpack.c.l.b16 %v197
    %v833 = vunpack.c.l.b16 %v198
    %v834 = vunpack.c.l.b16 %v199
    %v835 = vunpack.c.l.b16 %v200
    %v836 = vunpack.c.l.b16 %v201
    %v837 = vunpack.c.l.b16 %v202
    %v838 = vunpack.c.l.b16 %v203
    %v839 = vunpack.c.l.b16 %v204
    %v840 = vunpack.c.l.b16 %v205
    %v841 = vunpack.c.l.b16 %v206
    %v842 = vunpack.c.l.b16 %v207
    %v843 = vunpack.c.l.b16 %v208
    %v844 = vunpack.c.l.b16 %v209
    %v845 = vunpack.c.l.b16 %v210
    %v846 = vunpack.c.l.b16 %v211
    %v847 = vunpack.c.l.b16 %v212
    %v848 = vunpack.c.l.b16 %v213
    %v849 = vunpack.c.l.b16 %v214
    %v850 = vunpack.c.l.b16 %v215
    %v851 = vunpack.c.l.b16 %v216
    %v852 = vunpack.c.l.b16 %v217
    %v853 = vunpack.c.l.b16 %v218
    %v854 = vunpack.c.l.b16 %v219
    %v855 = vunpack.c.l.b16 %v220
    %v856 = vunpack.c.l.b16 %v221
    %v857 = vunpack.c.l.b16 %v222
    %v858 = vunpack.c.l.b16 %v223
    %v859 = vunpack.c.l.b16 %v224
    %v860 = vunpack.c.l.b16 %v225
    %v861 = vunpack.c.l.b16 %v226
    %v862 = vunpack.c.l.b16 %v227
    %v863 = vunpack.c.l.b16 %v228
    %v864 = vunpack.c.l.b16 %v229
    %v865 = vunpack.c.l.b16 %v230
    %v866 = vunpack.c.l.b16 %v231
    %v867 = vunpack.c.l.b16 %v232
    %v868 = vunpack.c.l.b16 %v233
    %v869 = vunpack.c.l.b16 %v234
    %v870 = vunpack.c.l.b16 %v235
    %v871 = vunpack.c.l.b16 %v236
    %v872 = vunpack.c.l.b16 %v237
    %v873 = vunpack.c.l.b16 %v238
    %v874 = vunpack.c.l.b16 %v239
    %v875 = vunpack.c.l.b16 %v240
    %v876 = vunpack.c.l.b16 %v241
    %v877 = vunpack.c.l.b16 %v242
    %v878 = vunpack.c.l.b16 %v243
    %v879 = vunpack.c.l.b16 %v244
    %v880 = vunpack.c.l.b16 %v245
    %v881 = vunpack.c.l.b16 %v246
    %v882 = vunpack.c.l.b16 %v247
    %v883 = vunpack.c.l.b16 %v248
    %v884 = vunpack.c.l.b16 %v249
    %v885 = vunpack.c.l.b16 %v250
    %v886 = vunpack.c.l.b16 %v251
    %v887 = vunpack.c.l.b16 %v252
    %v888 = vunpack.c.l.b16 %v253
    %v889 = vunpack.c.l.b16 %v254
    %v890 = vunpack.c.l.b16 %v255
    %v891 = vunpack.c.l.b16 %v256
    %v892 = vunpack.c.l.b16 %v257
    %v893 = vunpack.c.l.b16 %v258
    %v894 = vunpack.c.l.b16 %v259
    %v895 = vunpack.c.l.b16 %v260
    %v896 = vunpack.c.l.b16 %v261
    %v897 = vunpack.c.l.b16 %v262
    %v898 = vunpack.c.l.b16 %v263
    %v899 = vunpack.c.l.b16 %v264
    %v900 = vunpack.c.l.b16 %v265
    %v901 = vunpack.c.l.b16 %v266
    %v902 = vunpack.c.l.b16 %v267
    %v903 = vunpack.c.l.b16 %v268
    %v904 = vunpack.c.l.b16 %v269
    %v905 = vunpack.c.l.b16 %v270
    %v906 = vunpack.c.l.b16 %v271
    %v907 = vunpack.c.l.b16 %v272
    %v908 = vunpack.c.l.b16 %v273
    %v909 = vunpack.c.l.b16 %v274
    %v910 = vunpack.c.l.b16 %v275
    %v911 = vunpack.c.l.b16 %v276
    %v912 = vunpack.c.l.b16 %v277
    %v913 = vunpack.c.l.b16 %v278
    %v914 = vunpack.c.l.b16 %v279
    %v915 = vpack.c.b16 %v660, %v659
    %v916 = vpack.c.b16 %v662, %v661
    %v917 = vpack.c.b16 %v664, %v663
    %v918 = vpack.c.b16 %v666, %v665
    %v919 = vpack.c.b16 %v668, %v667
    %v920 = vpack.c.b16 %v670, %v669
    %v921 = vpack.c.b16 %v672, %v671
    %v922 = vpack.c.b16 %v674, %v673
    %v923 = vpack.c.b16 %v676, %v675
    %v924 = vpack.c.b16 %v678, %v677
    %v925 = vpack.c.b16 %v680, %v679
    %v926 = vpack.c.b16 %v682, %v681
    %v927 = vpack.c.b16 %v684, %v683
    %v928 = vpack.c.b16 %v686, %v685
    %v929 = vpack.c.b16 %v688, %v687
    %v930 = vpack.c.b16 %v690, %v689
    %v931 = vpack.c.b16 %v692, %v691
    %v932 = vpack.c.b16 %v694, %v693
    %v933 = vpack.c.b16 %v696, %v695
    %v934 = vpack.c.b16 %v698, %v697
    %v935 = vpack.c.b16 %v700, %v699
    %v936 = vpack.c.b16 %v702, %v701
    %v937 = vpack.c.b16 %v704, %v703
    %v938 = vpack.c.b16 %v706, %v705
    %v939 = vpack.c.b16 %v708, %v707
    %v940 = vpack.c.b16 %v710, %v709
    %v941 = vpack.c.b16 %v712, %v711
    %v942 = vpack.c.b16 %v714, %v713
    %v943 = vpack.c.b16 %v716, %v715
    %v944 = vpack.c.b16 %v718, %v717
    %v945 = vpack.c.b16 %v720, %v719
    %v946 = vpack.c.b16 %v722, %v721
    %v947 = vpack.c.b16 %v724, %v723
    %v948 = vpack.c.b16 %v726, %v725
    %v949 = vpack.c.b16 %v728, %v727
    %v950 = vpack.c.b16 %v730, %v729
    %v951 = vpack.c.b16 %v732, %v731
    %v952 = vpack.c.b16 %v734, %v733
    %v953 = vpack.c.b16 %v736, %v735
    %v954 = vpack.c.b16 %v738, %v737
    %v955 = vpack.c.b16 %v740, %v739
    %v956 = vpack.c.b16 %v742, %v741
    %v957 = vpack.c.b16 %v744, %v743
    %v958 = vpack.c.b16 %v746, %v745
    %v959 = vpack.c.b16 %v748, %v747
    %v960 = vpack.c.b16 %v750, %v749
    %v961 = vpack.c.b16 %v752, %v751
    %v962 = vpack.c.b16 %v754, %v753
    %v963 = vpack.c.b16 %v756, %v755
    %v964 = vpack.c.b16 %v758, %v757
    %v965 = vpack.c.b16 %v760, %v759
    %v966 = vpack.c.b16 %v762, %v761
    %v967 = vpack.c.b16 %v764, %v763
    %v968 = vpack.c.b16 %v766, %v765
    %v969 = vpack.c.b16 %v768, %v767
    %v970 = vpack.c.b16 %v770, %v769
    %v971 = vpack.c.b16 %v772, %v771
    %v972 = vpack.c.b16 %v774, %v773
    %v973 = vpack.c.b16 %v776, %v775
    %v974 = vpack.c.b16 %v778, %v777
    %v975 = vpack.c.b16 %v780, %v779
    %v976 = vpack.c.b16 %v782, %v781
    %v977 = vpack.c.b16 %v784, %v783
    %v978 = vpack.c.b16 %v786, %v785
    %v979 = vpack.c.b16 %v788, %v787
    %v980 = vpack.c.b16 %v790, %v789
    %v981 = vpack.c.b16 %v792, %v791
    %v982 = vpack.c.b16 %v794, %v793
    %v983 = vpack.c.b16 %v796, %v795
    %v984 = vpack.c.b16 %v798, %v797
    %v985 = vpack.c.b16 %v800, %v799
    %v986 = vpack.c.b16 %v802, %v801
    %v987 = vpack.c.b16 %v804, %v803
    %v988 = vpack.c.b16 %v806, %v805
    %v989 = vpack.c.b16 %v808, %v807
    %v990 = vpack.c.b16 %v810, %v809
    %v991 = vpack.c.b16 %v812, %v811
    %v992 = vpack.c.b16 %v814, %v813
    %v993 = vpack.c.b16 %v816, %v815
    %v994 = vpack.c.b16 %v818, %v817
    %v995 = vpack.c.b16 %v820, %v819
    %v996 = vpack.c.b16 %v822, %v821
    %v997 = vpack.c.b16 %v824, %v823
    %v998 = vpack.c.b16 %v826, %v825
    %v999 = vpack.c.b16 %v828, %v827
    %v1000 = vpack.c.b16 %v830, %v829
    %v1001 = vpack.c.b16 %v832, %v831
    %v1002 = vpack.c.b16 %v834, %v833
    %v1003 = vpack.c.b16 %v836, %v835
    %v1004 = vpack.c.b16 %v838, %v837
    %v1005 = vpack.c.b16 %v840, %v839
    %v1006 = vpack.c.b16 %v842, %v841
    %v1007 = vpack.c.b16 %v844, %v843
    %v1008 = vpack.c.b16 %v846, %v845
    %v1009 = vpack.c.b16 %v848, %v847
    %v1010 = vpack.c.b16 %v850, %v849
    %v1011 = vpack.c.b16 %v852, %v851
    %v1012 = vpack.c.b16 %v854, %v853
    %v1013 = vpack.c.b16 %v856, %v855
    %v1014 = vpack.c.b16 %v858, %v857
    %v1015 = vpack.c.b16 %v860, %v859
    %v1016 = vpack.c.b16 %v862, %v861
    %v1017 = vpack.c.b16 %v864, %v863
    %v1018 = vpack.c.b16 %v866, %v865
    %v1019 = vpack.c.b16 %v868, %v867
    %v1020 = vpack.c.b16 %v870, %v869
    %v1021 = vpack.c.b16 %v872, %v871
    %v1022 = vpack.c.b16 %v874, %v873
    %v1023 = vpack.c.b16 %v876, %v875
    %v1024 = vpack.c.b16 %v878, %v877
    %v1025 = vpack.c.b16 %v880, %v879
    %v1026 = vpack.c.b16 %v882, %v881
    %v1027 = vpack.c.b16 %v884, %v883
    %v1028 = vpack.c.b16 %v886, %v885
    %v1029 = vpack.c.b16 %v888, %v887
    %v1030 = vpack.c.b16 %v890, %v889
    %v1031 = vpack.c.b16 %v892, %v891
    %v1032 = vpack.c.b16 %v894, %v893
    %v1033 = vpack.c.b16 %v896, %v895
    %v1034 = vpack.c.b16 %v898, %v897
    %v1035 = vpack.c.b16 %v900, %v899
    %v1036 = vpack.c.b16 %v902, %v901
    %v1037 = vpack.c.b16 %v904, %v903
    %v1038 = vpack.c.b16 %v906, %v905
    %v1039 = vpack.c.b16 %v908, %v907
    %v1040 = vpack.c.b16 %v910, %v909
    %v1041 = vpack.c.b16 %v912, %v911
    %v1042 = vpack.c.b16 %v914, %v913
    %1171 = vmatprep.subr.bf16.mxu0 0
    %1172 = vmatpush1.bf16.msra.mxu0 %v915
    %1173 = vmatprep.subr.bf16.mxu0 0
    %1174 = vmatpush1.bf16.msra.mxu0 %v916
    %1175 = vmatprep.subr.bf16.mxu0 0
    %1176 = vmatpush1.bf16.msra.mxu0 %v917
    %1177 = vmatprep.subr.bf16.mxu0 0
    %1178 = vmatpush1.bf16.msra.mxu0 %v918
    %1179 = vmatprep.subr.bf16.mxu0 0
    %1180 = vmatpush1.bf16.msra.mxu0 %v919
    %1181 = vmatprep.subr.bf16.mxu0 0
    %1182 = vmatpush1.bf16.msra.mxu0 %v920
    %1183 = vmatprep.subr.bf16.mxu0 0
    %1184 = vmatpush1.bf16.msra.mxu0 %v921
    %1185 = vmatprep.subr.bf16.mxu0 0
    %1186 = vmatpush1.bf16.msra.mxu0 %v922
    %1187 = vmatprep.subr.bf16.mxu0 0
    %1188 = vmatpush1.bf16.msra.mxu0 %v923
    %1189 = vmatprep.subr.bf16.mxu0 0
    %1190 = vmatpush1.bf16.msra.mxu0 %v924
    %1191 = vmatprep.subr.bf16.mxu0 0
    %1192 = vmatpush1.bf16.msra.mxu0 %v925
    %1193 = vmatprep.subr.bf16.mxu0 0
    %1194 = vmatpush1.bf16.msra.mxu0 %v926
    %1195 = vmatprep.subr.bf16.mxu0 0
    %1196 = vmatpush1.bf16.msra.mxu0 %v927
    %1197 = vmatprep.subr.bf16.mxu0 0
    %1198 = vmatpush1.bf16.msra.mxu0 %v928
    %1199 = vmatprep.subr.bf16.mxu0 0
    %1200 = vmatpush1.bf16.msra.mxu0 %v929
    %1201 = vmatprep.subr.bf16.mxu0 0
    %1202 = vmatpush1.bf16.msra.mxu0 %v930
    %1203 = vmatprep.mubr.bf16.mxu0 %v326
    %1204 = vmatmul.mubr.bf16.gmra.mrb[0].mxu0 %v312
    %v1205 = vpop.f32.mrb[0].mxu0
    %v1206 = vadd.f32 %v285, %v1205
    %v1207 = vpop.f32.mrb[0].mxu0
    %v1208 = vpop.f32.mrb[0].mxu0
    %v1209 = vpop.f32.mrb[0].mxu0
    %1210 = vdwg.mxu0
    %1211 = vmatprep.subr.bf16.mxu0 0
    %1212 = vmatpush1.bf16.msra.mxu0 %v931
    %1213 = vmatprep.subr.bf16.mxu0 0
    %1214 = vmatpush1.bf16.msra.mxu0 %v932
    %1215 = vmatprep.subr.bf16.mxu0 0
    %1216 = vmatpush1.bf16.msra.mxu0 %v933
    %1217 = vmatprep.subr.bf16.mxu0 0
    %1218 = vmatpush1.bf16.msra.mxu0 %v934
    %1219 = vmatprep.subr.bf16.mxu0 0
    %1220 = vmatpush1.bf16.msra.mxu0 %v935
    %1221 = vmatprep.subr.bf16.mxu0 0
    %1222 = vmatpush1.bf16.msra.mxu0 %v936
    %1223 = vmatprep.subr.bf16.mxu0 0
    %1224 = vmatpush1.bf16.msra.mxu0 %v937
    %1225 = vmatprep.subr.bf16.mxu0 0
    %1226 = vmatpush1.bf16.msra.mxu0 %v938
    %1227 = vmatprep.subr.bf16.mxu0 0
    %1228 = vmatpush1.bf16.msra.mxu0 %v939
    %1229 = vmatprep.subr.bf16.mxu0 0
    %1230 = vmatpush1.bf16.msra.mxu0 %v940
    %1231 = vmatprep.subr.bf16.mxu0 0
    %1232 = vmatpush1.bf16.msra.mxu0 %v941
    %1233 = vmatprep.subr.bf16.mxu0 0
    %1234 = vmatpush1.bf16.msra.mxu0 %v942
    %1235 = vmatprep.subr.bf16.mxu0 0
    %1236 = vmatpush1.bf16.msra.mxu0 %v943
    %1237 = vmatprep.subr.bf16.mxu0 0
    %1238 = vmatpush1.bf16.msra.mxu0 %v944
    %1239 = vmatprep.subr.bf16.mxu0 0
    %1240 = vmatpush1.bf16.msra.mxu0 %v945
    %1241 = vmatprep.subr.bf16.mxu0 0
    %1242 = vmatpush1.bf16.msra.mxu0 %v946
    %1243 = vmatprep.mubr.bf16.mxu0 %v336
    %1244 = vmatmul.mubr.bf16.gmra.mrb[0].mxu0 %v334
    %v1245 = vpop.f32.mrb[0].mxu0
    %v1246 = vadd.f32 %v1206, %v1245
    %v1247 = vpop.f32.mrb[0].mxu0
    %v1248 = vpop.f32.mrb[0].mxu0
    %v1249 = vpop.f32.mrb[0].mxu0
    %1250 = vdwg.mxu0
    %1251 = vmatprep.subr.bf16.mxu0 0
    %1252 = vmatpush1.bf16.msra.mxu0 %v947
    %1253 = vmatprep.subr.bf16.mxu0 0
    %1254 = vmatpush1.bf16.msra.mxu0 %v948
    %1255 = vmatprep.subr.bf16.mxu0 0
    %1256 = vmatpush1.bf16.msra.mxu0 %v949
    %1257 = vmatprep.subr.bf16.mxu0 0
    %1258 = vmatpush1.bf16.msra.mxu0 %v950
    %1259 = vmatprep.subr.bf16.mxu0 0
    %1260 = vmatpush1.bf16.msra.mxu0 %v951
    %1261 = vmatprep.subr.bf16.mxu0 0
    %1262 = vmatpush1.bf16.msra.mxu0 %v952
    %1263 = vmatprep.subr.bf16.mxu0 0
    %1264 = vmatpush1.bf16.msra.mxu0 %v953
    %1265 = vmatprep.subr.bf16.mxu0 0
    %1266 = vmatpush1.bf16.msra.mxu0 %v954
    %1267 = vmatprep.subr.bf16.mxu0 0
    %1268 = vmatpush1.bf16.msra.mxu0 %v955
    %1269 = vmatprep.subr.bf16.mxu0 0
    %1270 = vmatpush1.bf16.msra.mxu0 %v956
    %1271 = vmatprep.subr.bf16.mxu0 0
    %1272 = vmatpush1.bf16.msra.mxu0 %v957
    %1273 = vmatprep.subr.bf16.mxu0 0
    %1274 = vmatpush1.bf16.msra.mxu0 %v958
    %1275 = vmatprep.subr.bf16.mxu0 0
    %1276 = vmatpush1.bf16.msra.mxu0 %v959
    %1277 = vmatprep.subr.bf16.mxu0 0
    %1278 = vmatpush1.bf16.msra.mxu0 %v960
    %1279 = vmatprep.subr.bf16.mxu0 0
    %1280 = vmatpush1.bf16.msra.mxu0 %v961
    %1281 = vmatprep.subr.bf16.mxu0 0
    %1282 = vmatpush1.bf16.msra.mxu0 %v962
    %1283 = vmatprep.mubr.bf16.mxu0 %v333
    %1284 = vmatmul.mubr.bf16.gmra.mrb[0].mxu0 %v319
    %v1285 = vpop.f32.mrb[0].mxu0
    %v1286 = vadd.f32 %v1246, %v1285
    %v1287 = vpop.f32.mrb[0].mxu0
    %v1288 = vpop.f32.mrb[0].mxu0
    %v1289 = vpop.f32.mrb[0].mxu0
    %1290 = vdwg.mxu0
    %1291 = vmatprep.subr.bf16.mxu0 0
    %1292 = vmatpush1.bf16.msra.mxu0 %v963
    %1293 = vmatprep.subr.bf16.mxu0 0
    %1294 = vmatpush1.bf16.msra.mxu0 %v964
    %1295 = vmatprep.subr.bf16.mxu0 0
    %1296 = vmatpush1.bf16.msra.mxu0 %v965
    %1297 = vmatprep.subr.bf16.mxu0 0
    %1298 = vmatpush1.bf16.msra.mxu0 %v966
    %1299 = vmatprep.subr.bf16.mxu0 0
    %1300 = vmatpush1.bf16.msra.mxu0 %v967
    %1301 = vmatprep.subr.bf16.mxu0 0
    %1302 = vmatpush1.bf16.msra.mxu0 %v968
    %1303 = vmatprep.subr.bf16.mxu0 0
    %1304 = vmatpush1.bf16.msra.mxu0 %v969
    %1305 = vmatprep.subr.bf16.mxu0 0
    %1306 = vmatpush1.bf16.msra.mxu0 %v970
    %1307 = vmatprep.subr.bf16.mxu0 0
    %1308 = vmatpush1.bf16.msra.mxu0 %v971
    %1309 = vmatprep.subr.bf16.mxu0 0
    %1310 = vmatpush1.bf16.msra.mxu0 %v972
    %1311 = vmatprep.subr.bf16.mxu0 0
    %1312 = vmatpush1.bf16.msra.mxu0 %v973
    %1313 = vmatprep.subr.bf16.mxu0 0
    %1314 = vmatpush1.bf16.msra.mxu0 %v974
    %1315 = vmatprep.subr.bf16.mxu0 0
    %1316 = vmatpush1.bf16.msra.mxu0 %v975
    %1317 = vmatprep.subr.bf16.mxu0 0
    %1318 = vmatpush1.bf16.msra.mxu0 %v976
    %1319 = vmatprep.subr.bf16.mxu0 0
    %1320 = vmatpush1.bf16.msra.mxu0 %v977
    %1321 = vmatprep.subr.bf16.mxu0 0
    %1322 = vmatpush1.bf16.msra.mxu0 %v978
    %1323 = vmatprep.mubr.bf16.mxu0 %v337
    %1324 = vmatmul.mubr.bf16.gmra.mrb[0].mxu0 %v335
    %v1325 = vpop.f32.mrb[0].mxu0
    %v1326 = vadd.f32 %v1286, %v1325
    %v1327 = vpop.f32.mrb[0].mxu0
    %v1328 = vpop.f32.mrb[0].mxu0
    %v1329 = vpop.f32.mrb[0].mxu0
    %1330 = vdwg.mxu0
    %1331 = vmatprep.subr.bf16.mxu0 0
    %1332 = vmatpush1.bf16.msra.mxu0 %v979
    %1333 = vmatprep.subr.bf16.mxu0 0
    %1334 = vmatpush1.bf16.msra.mxu0 %v980
    %1335 = vmatprep.subr.bf16.mxu0 0
    %1336 = vmatpush1.bf16.msra.mxu0 %v981
    %1337 = vmatprep.subr.bf16.mxu0 0
    %1338 = vmatpush1.bf16.msra.mxu0 %v982
    %1339 = vmatprep.subr.bf16.mxu0 0
    %1340 = vmatpush1.bf16.msra.mxu0 %v983
    %1341 = vmatprep.subr.bf16.mxu0 0
    %1342 = vmatpush1.bf16.msra.mxu0 %v984
    %1343 = vmatprep.subr.bf16.mxu0 0
    %1344 = vmatpush1.bf16.msra.mxu0 %v985
    %1345 = vmatprep.subr.bf16.mxu0 0
    %1346 = vmatpush1.bf16.msra.mxu0 %v986
    %1347 = vmatprep.subr.bf16.mxu0 0
    %1348 = vmatpush1.bf16.msra.mxu0 %v987
    %1349 = vmatprep.subr.bf16.mxu0 0
    %1350 = vmatpush1.bf16.msra.mxu0 %v988
    %1351 = vmatprep.subr.bf16.mxu0 0
    %1352 = vmatpush1.bf16.msra.mxu0 %v989
    %1353 = vmatprep.subr.bf16.mxu0 0
    %1354 = vmatpush1.bf16.msra.mxu0 %v990
    %1355 = vmatprep.subr.bf16.mxu0 0
    %1356 = vmatpush1.bf16.msra.mxu0 %v991
    %1357 = vmatprep.subr.bf16.mxu0 0
    %1358 = vmatpush1.bf16.msra.mxu0 %v992
    %1359 = vmatprep.subr.bf16.mxu0 0
    %1360 = vmatpush1.bf16.msra.mxu0 %v993
    %1361 = vmatprep.subr.bf16.mxu0 0
    %1362 = vmatpush1.bf16.msra.mxu0 %v994
    %1363 = vmatprep.mubr.bf16.mxu0 %v375
    %1364 = vmatmul.mubr.bf16.gmra.mrb[0].mxu0 %v361
    %v1365 = vpop.f32.mrb[0].mxu0
    %v1366 = vadd.f32 %v1326, %v1365
    %v1367 = vpop.f32.mrb[0].mxu0
    %v1368 = vpop.f32.mrb[0].mxu0
    %v1369 = vpop.f32.mrb[0].mxu0
    %1370 = vdwg.mxu0
    %1371 = vmatprep.subr.bf16.mxu0 0
    %1372 = vmatpush1.bf16.msra.mxu0 %v995
    %1373 = vmatprep.subr.bf16.mxu0 0
    %1374 = vmatpush1.bf16.msra.mxu0 %v996
    %1375 = vmatprep.subr.bf16.mxu0 0
    %1376 = vmatpush1.bf16.msra.mxu0 %v997
    %1377 = vmatprep.subr.bf16.mxu0 0
    %1378 = vmatpush1.bf16.msra.mxu0 %v998
    %1379 = vmatprep.subr.bf16.mxu0 0
    %1380 = vmatpush1.bf16.msra.mxu0 %v999
    %1381 = vmatprep.subr.bf16.mxu0 0
    %1382 = vmatpush1.bf16.msra.mxu0 %v1000
    %1383 = vmatprep.subr.bf16.mxu0 0
    %1384 = vmatpush1.bf16.msra.mxu0 %v1001
    %1385 = vmatprep.subr.bf16.mxu0 0
    %1386 = vmatpush1.bf16.msra.mxu0 %v1002
    %1387 = vmatprep.subr.bf16.mxu0 0
    %1388 = vmatpush1.bf16.msra.mxu0 %v1003
    %1389 = vmatprep.subr.bf16.mxu0 0
    %1390 = vmatpush1.bf16.msra.mxu0 %v1004
    %1391 = vmatprep.subr.bf16.mxu0 0
    %1392 = vmatpush1.bf16.msra.mxu0 %v1005
    %1393 = vmatprep.subr.bf16.mxu0 0
    %1394 = vmatpush1.bf16.msra.mxu0 %v1006
    %1395 = vmatprep.subr.bf16.mxu0 0
    %1396 = vmatpush1.bf16.msra.mxu0 %v1007
    %1397 = vmatprep.subr.bf16.mxu0 0
    %1398 = vmatpush1.bf16.msra.mxu0 %v1008
    %1399 = vmatprep.subr.bf16.mxu0 0
    %1400 = vmatpush1.bf16.msra.mxu0 %v1009
    %1401 = vmatprep.subr.bf16.mxu0 0
    %1402 = vmatpush1.bf16.msra.mxu0 %v1010
    %1403 = vmatprep.mubr.bf16.mxu0 %v385
    %1404 = vmatmul.mubr.bf16.gmra.mrb[0].mxu0 %v383
    %v1405 = vpop.f32.mrb[0].mxu0
    %v1406 = vadd.f32 %v1366, %v1405
    %v1407 = vpop.f32.mrb[0].mxu0
    %v1408 = vpop.f32.mrb[0].mxu0
    %v1409 = vpop.f32.mrb[0].mxu0
    %1410 = vdwg.mxu0
    %1411 = vmatprep.subr.bf16.mxu0 0
    %1412 = vmatpush1.bf16.msra.mxu0 %v1011
    %1413 = vmatprep.subr.bf16.mxu0 0
    %1414 = vmatpush1.bf16.msra.mxu0 %v1012
    %1415 = vmatprep.subr.bf16.mxu0 0
    %1416 = vmatpush1.bf16.msra.mxu0 %v1013
    %1417 = vmatprep.subr.bf16.mxu0 0
    %1418 = vmatpush1.bf16.msra.mxu0 %v1014
    %1419 = vmatprep.subr.bf16.mxu0 0
    %1420 = vmatpush1.bf16.msra.mxu0 %v1015
    %1421 = vmatprep.subr.bf16.mxu0 0
    %1422 = vmatpush1.bf16.msra.mxu0 %v1016
    %1423 = vmatprep.subr.bf16.mxu0 0
    %1424 = vmatpush1.bf16.msra.mxu0 %v1017
    %1425 = vmatprep.subr.bf16.mxu0 0
    %1426 = vmatpush1.bf16.msra.mxu0 %v1018
    %1427 = vmatprep.subr.bf16.mxu0 0
    %1428 = vmatpush1.bf16.msra.mxu0 %v1019
    %1429 = vmatprep.subr.bf16.mxu0 0
    %1430 = vmatpush1.bf16.msra.mxu0 %v1020
    %1431 = vmatprep.subr.bf16.mxu0 0
    %1432 = vmatpush1.bf16.msra.mxu0 %v1021
    %1433 = vmatprep.subr.bf16.mxu0 0
    %1434 = vmatpush1.bf16.msra.mxu0 %v1022
    %1435 = vmatprep.subr.bf16.mxu0 0
    %1436 = vmatpush1.bf16.msra.mxu0 %v1023
    %1437 = vmatprep.subr.bf16.mxu0 0
    %1438 = vmatpush1.bf16.msra.mxu0 %v1024
    %1439 = vmatprep.subr.bf16.mxu0 0
    %1440 = vmatpush1.bf16.msra.mxu0 %v1025
    %1441 = vmatprep.subr.bf16.mxu0 0
    %1442 = vmatpush1.bf16.msra.mxu0 %v1026
    %1443 = vmatprep.mubr.bf16.mxu0 %v382
    %1444 = vmatmul.mubr.bf16.gmra.mrb[0].mxu0 %v368
    %v1445 = vpop.f32.mrb[0].mxu0
    %v1446 = vadd.f32 %v1406, %v1445
    %v1447 = vpop.f32.mrb[0].mxu0
    %v1448 = vpop.f32.mrb[0].mxu0
    %v1449 = vpop.f32.mrb[0].mxu0
    %1450 = vdwg.mxu0
    %1451 = vmatprep.subr.bf16.mxu0 0
    %1452 = vmatpush1.bf16.msra.mxu0 %v1027
    %1453 = vmatprep.subr.bf16.mxu0 0
    %1454 = vmatpush1.bf16.msra.mxu0 %v1028
    %1455 = vmatprep.subr.bf16.mxu0 0
    %1456 = vmatpush1.bf16.msra.mxu0 %v1029
    %1457 = vmatprep.subr.bf16.mxu0 0
    %1458 = vmatpush1.bf16.msra.mxu0 %v1030
    %1459 = vmatprep.subr.bf16.mxu0 0
    %1460 = vmatpush1.bf16.msra.mxu0 %v1031
    %1461 = vmatprep.subr.bf16.mxu0 0
    %1462 = vmatpush1.bf16.msra.mxu0 %v1032
    %1463 = vmatprep.subr.bf16.mxu0 0
    %1464 = vmatpush1.bf16.msra.mxu0 %v1033
    %1465 = vmatprep.subr.bf16.mxu0 0
    %1466 = vmatpush1.bf16.msra.mxu0 %v1034
    %1467 = vmatprep.subr.bf16.mxu0 0
    %1468 = vmatpush1.bf16.msra.mxu0 %v1035
    %1469 = vmatprep.subr.bf16.mxu0 0
    %1470 = vmatpush1.bf16.msra.mxu0 %v1036
    %1471 = vmatprep.subr.bf16.mxu0 0
    %1472 = vmatpush1.bf16.msra.mxu0 %v1037
    %1473 = vmatprep.subr.bf16.mxu0 0
    %1474 = vmatpush1.bf16.msra.mxu0 %v1038
    %1475 = vmatprep.subr.bf16.mxu0 0
    %1476 = vmatpush1.bf16.msra.mxu0 %v1039
    %1477 = vmatprep.subr.bf16.mxu0 0
    %1478 = vmatpush1.bf16.msra.mxu0 %v1040
    %1479 = vmatprep.subr.bf16.mxu0 0
    %1480 = vmatpush1.bf16.msra.mxu0 %v1041
    %1481 = vmatprep.subr.bf16.mxu0 0
    %1482 = vmatpush1.bf16.msra.mxu0 %v1042
    %1483 = vmatprep.mubr.bf16.mxu0 %v386
    %1484 = vmatmul.mubr.bf16.gmra.mrb[0].mxu0 %v384
    %v1485 = vpop.f32.mrb[0].mxu0
    %v1486 = vadd.f32 %v1446, %v1485
    %v1487 = vpop.f32.mrb[0].mxu0
    %v1488 = vpop.f32.mrb[0].mxu0
    %v1489 = vpop.f32.mrb[0].mxu0
    %1490 = vdwg.mxu0
    %v1491 = vmax.f32 %v1486, 0.0
    %v1492 = vpack.c.bf16 %v1491, %v1491
    %v1493 = vld [vmem:[%s3] sm:$0xf]
    %v1494 = vld [vmem:[%s3 + $0x4] sm:$0xf]
    %v1495 = vld [vmem:[%s3 + $0x8] sm:$0xf]
    %v1496 = vld [vmem:[%s3 + $0xc] sm:$0xf]
    %v1497 = vld [vmem:[%s3 + $0x10] sm:$0xf]
    %v1498 = vld [vmem:[%s3 + $0x14] sm:$0xf]
    %v1499 = vld [vmem:[%s3 + $0x18] sm:$0xf]
    %v1500 = vld [vmem:[%s3 + $0x1c] sm:$0xf]
    %v1501 = vld [vmem:[%s3 + $0x20] sm:$0xf]
    %v1502 = vld [vmem:[%s3 + $0x24] sm:$0xf]
    %v1503 = vld [vmem:[%s3 + $0x28] sm:$0xf]
    %v1504 = vld [vmem:[%s3 + $0x2c] sm:$0xf]
    %v1505 = vld [vmem:[%s3 + $0x30] sm:$0xf]
    %v1506 = vld [vmem:[%s3 + $0x34] sm:$0xf]
    %v1507 = vld [vmem:[%s3 + $0x38] sm:$0xf]
    %v1508 = vld [vmem:[%s3 + $0x3c] sm:$0xf]
    %v1509 = vld [vmem:[%s4] sm:$0x1]
    %v1511 = vlaneseq
    %v1512 = vshrl.u32 %v1511, 7
    %v1513 = vsub.s32 0, %v1512
    %v1514 = vrot.slane %v1509, %v1513
    %v1532 = vunpack.c.l.b16 %v1493
    %v1533 = vunpack.c.l.b16 %v1494
    %v1534 = vunpack.c.l.b16 %v1495
    %v1535 = vunpack.c.l.b16 %v1496
    %v1536 = vunpack.c.l.b16 %v1497
    %v1537 = vunpack.c.l.b16 %v1498
    %v1538 = vunpack.c.l.b16 %v1499
    %v1539 = vunpack.c.l.b16 %v1500
    %v1540 = vunpack.c.l.b16 %v1501
    %v1541 = vunpack.c.l.b16 %v1502
    %v1542 = vunpack.c.l.b16 %v1503
    %v1543 = vunpack.c.l.b16 %v1504
    %v1544 = vunpack.c.l.b16 %v1505
    %v1545 = vunpack.c.l.b16 %v1506
    %v1546 = vunpack.c.l.b16 %v1507
    %v1547 = vunpack.c.l.b16 %v1508
    %v1548 = vpack.c.b16 %v1533, %v1532
    %v1549 = vpack.c.b16 %v1535, %v1534
    %v1550 = vpack.c.b16 %v1537, %v1536
    %v1551 = vpack.c.b16 %v1539, %v1538
    %v1552 = vpack.c.b16 %v1541, %v1540
    %v1553 = vpack.c.b16 %v1543, %v1542
    %v1554 = vpack.c.b16 %v1545, %v1544
    %v1555 = vpack.c.b16 %v1547, %v1546
    %1564 = vmatprep.subr.bf16.mxu0 0
    %1565 = vmatpush1.bf16.msra.mxu0 %v1548
    %1566 = vmatprep.subr.bf16.mxu0 0
    %1567 = vmatpush1.bf16.msra.mxu0 %v1549
    %1568 = vmatprep.subr.bf16.mxu0 0
    %1569 = vmatpush1.bf16.msra.mxu0 %v1550
    %1570 = vmatprep.subr.bf16.mxu0 0
    %1571 = vmatpush1.bf16.msra.mxu0 %v1551
    %1572 = vmatprep.subr.bf16.mxu0 0
    %1573 = vmatpush1.bf16.msra.mxu0 %v1552
    %1574 = vmatprep.subr.bf16.mxu0 0
    %1575 = vmatpush1.bf16.msra.mxu0 %v1553
    %1576 = vmatprep.subr.bf16.mxu0 0
    %1577 = vmatpush1.bf16.msra.mxu0 %v1554
    %1578 = vmatprep.subr.bf16.mxu0 0
    %1579 = vmatpush1.bf16.msra.mxu0 %v1555
    %1580 = vmatprep.subr.bf16.mxu0 0
    %1581 = vmatpush1.bf16.msra.mxu0 0
    %1582 = vmatprep.subr.bf16.mxu0 0
    %1583 = vmatpush1.bf16.msra.mxu0 0
    %1584 = vmatprep.subr.bf16.mxu0 0
    %1585 = vmatpush1.bf16.msra.mxu0 0
    %1586 = vmatprep.subr.bf16.mxu0 0
    %1587 = vmatpush1.bf16.msra.mxu0 0
    %1588 = vmatprep.subr.bf16.mxu0 0
    %1589 = vmatpush1.bf16.msra.mxu0 0
    %1590 = vmatprep.subr.bf16.mxu0 0
    %1591 = vmatpush1.bf16.msra.mxu0 0
    %1592 = vmatprep.subr.bf16.mxu0 0
    %1593 = vmatpush1.bf16.msra.mxu0 0
    %1594 = vmatprep.subr.bf16.mxu0 0
    %1595 = vmatpush1.bf16.msra.mxu0 0
    %1596 = vmatprep.mubr.bf16.mxu0 0
    %1597 = vmatmul.mubr.bf16.gmra.mrb[0].mxu0 %v1492
    %v1598 = vpop.f32.mrb[0].mxu0
    %v1599 = vadd.f32 %v1514, %v1598
    %v1600 = vpop.f32.mrb[0].mxu0
    %v1601 = vpop.f32.mrb[0].mxu0
    %v1602 = vpop.f32.mrb[0].mxu0
    %1603 = vdwg.mxu0
    %1604 = vst [vmem:[#allocation2] sm:$0x3] %v1599
    // Predicated region
    $region22: #{simple_cnn_forward.7} parent=1 // pred_check
      _
    $region23: #{simple_cnn_forward.7} parent=1 // pred_check_branch
      %1606 = sbr.rel (0) target = $region25
    $region24: #{simple_cnn_forward.7} parent=1 // pred_region
      %s1608 = ssub.s32 32, 32
      %1609 = vsyncadd [#allocation3], %s1608
      %s1611 = sshll.u32 [#allocation2], 4
      %s1612 = int_to_ptr.vmem [resolvable:$true] %s1611
      %1614 = dma.vmem_to_hbm [thread:$0]  %s1612, 32, %s5, [#allocation3]
    $region25: #{simple_cnn_forward.7} parent=1 // pred_fallthru
      _
    // Predicated region
    $region26: #{simple_cnn_forward.7} parent=1 // pred_check
      _
    $region27: #{simple_cnn_forward.7} parent=1 // pred_check_branch
      %1616 = sbr.rel (0) target = $region29
    $region28: #{simple_cnn_forward.7} parent=1 // pred_region
      %1617 = dma.done [#allocation3], 32
    $region29: #{simple_cnn_forward.7} parent=1 // pred_fallthru
      _
    %1618 = vsyncpa [#allocation3], 1

</llo_original>
